<compile_context>
chip_gen: v7x
topology: tpu7x:2x2x1
jax: 0.10.0
libtpu: 0.0.40
codegen_flags: <defaults>
</compile_context>

<pallas_src>
import math
import numpy as np
import jax
import jax.numpy as jnp
from jax import lax
from jax.experimental import pallas as pl
from jax.experimental.pallas import tpu as pltpu

# ----------------------------- model hyper-params ---------------------------
BATCH = 2
TIME_LEN = 8
JOINT_NUM = 4
SEQ = TIME_LEN * JOINT_NUM            # 32 tokens
NODE_FEAT_DIM = 4                     # node_feature_dim
D = 32                                # node_embedding_dim
HEADS = 4                             # params.heads
LATENT = 8                            # params.latent_dim
HL = HEADS * LATENT                   # 32
NUM_CLASSES = 10
LN_EPS = 1e-6
NEG = -9e15
SCALE = 1.0 / math.sqrt(LATENT)
OUT_ROWS = 8                          # sublane-padded logits rows per program

_FRAME_SHIFT = JOINT_NUM.bit_length() - 1     # JOINT_NUM == 4  -> 2
_BLOCK_SHIFT = SEQ.bit_length() - 1           # SEQ == 32       -> 5
assert (1 << _FRAME_SHIFT) == JOINT_NUM and (1 << _BLOCK_SHIFT) == SEQ

# indices into the packed weight / bias slabs
W_IN, WQ_S, WK_S, WV_S, WFT_S, WQ_T, WK_T, WV_T, WFT_T, W_CLS = range(10)
(B_IN, G_IN, BE_IN,
 BQ_S, BK_S, BV_S, BFT_S, G_S, BE_S,
 BQ_T, BK_T, BV_T, BFT_T, G_T, BE_T,
 B_CLS) = range(16)


# ------------------------ traced helpers (used in-kernel) -------------------
def _mxdot(a, b):
    """MXU matmul with bf16 operands, f32 accumulate."""
    return jnp.dot(a.astype(jnp.bfloat16), b.astype(jnp.bfloat16),
                   preferred_element_type=jnp.float32)


def _mxdot_nt(a, b):
    """a (M,K) . b (N,K)^T -> (M,N), bf16 operands, f32 accumulate."""
    return lax.dot_general(a.astype(jnp.bfloat16), b.astype(jnp.bfloat16),
                           (((1,), (1,)), ((), ())),
                           preferred_element_type=jnp.float32)


def _f32dot(a, b):
    return jnp.dot(a, b, preferred_element_type=jnp.float32)


def _layer_norm(x, gamma, beta):
    # custom LayerNorm: unbiased std, eps added to std; exact divide on the
    # (rows, 1) denominator (essentially free, tighter than approx recip).
    mean = jnp.mean(x, axis=-1, keepdims=True)
    d = x - mean
    var = jnp.sum(d * d, axis=-1, keepdims=True) * (1.0 / (x.shape[-1] - 1))
    inv = 1.0 / (jnp.sqrt(var) + LN_EPS)
    return gamma * d * inv + beta


def _allowed_mask(rows, domain):
    """(rows, rows) bool mask for the batch+head folded score matrix.

    Row/col order is (batch, head, token): contiguous blocks of SEQ rows per
    (b, h), contiguous frames of JOINT_NUM rows inside each block, so
      same frame <=> ri >> 2 == ci >> 2   (implies same block)
      same block <=> ri >> 5 == ci >> 5
    spatial : attend within the same frame
    temporal: attend within the same (batch, head) block to other frames + self
    Every row keeps its diagonal entry, so no row is fully masked.
    """
    ri = lax.broadcasted_iota(jnp.int32, (rows, rows), 0)
    ci = lax.broadcasted_iota(jnp.int32, (rows, rows), 1)
    same_frame = (jnp.right_shift(ri, _FRAME_SHIFT) ==
                  jnp.right_shift(ci, _FRAME_SHIFT))
    if domain == "spatial":
        return same_frame
    same_block = (jnp.right_shift(ri, _BLOCK_SHIFT) ==
                  jnp.right_shift(ci, _BLOCK_SHIFT))
    return same_block & (jnp.logical_not(same_frame) | (ri == ci))


def _att_layer(h, pe, wq, bq, wk, bk, wv, bv, wft, bft, gamma, beta,
               rep, lblk, fold, domain):
    """One fused ST_ATT_Layer over all resident batches and heads at once.

    rep  : (rows, nb*SEQ) bf16 0/1, rep[(b*H+h)*SEQ+s, b*SEQ+s] = 1.
    lblk : (rows, D) f32 0/1, keeps only head-h's 8 lanes on head-h rows.
    fold : (nb*SEQ, rows) bf16 0/1 = rep.T, sums heads back per token.
    """
    rows = rep.shape[0]                               # nb * HEADS * SEQ
    hp = h + pe                                       # (nb*SEQ, D)
    q = _f32dot(hp, wq) + bq                          # 1/sqrt(latent) pre-folded
    k = _f32dot(hp, wk) + bk
    v = jnp.maximum(_f32dot(hp, wv) + bv, 0.0)

    # Head replication on the MXU (idle vmatmul slot), head-lane selection on
    # k/v only (q keeps all lanes; zeroed k lanes kill the cross-head terms).
    qr = _mxdot(rep, q)                               # (rows, D)
    kr = _mxdot(rep, k) * lblk
    vr = _mxdot(rep, v) * lblk
    vw = _mxdot(vr, wft)                              # per-head v @ wft_h

    s = _mxdot_nt(qr, kr)                             # (rows, rows) f32
    s = jnp.where(_allowed_mask(rows, domain), s, NEG)
    s = s - jnp.max(s, axis=-1, keepdims=True)
    p32 = jnp.exp(s)
    denom = jnp.sum(p32, axis=-1, keepdims=True)      # (rows, 1) f32
    p = p32.astype(jnp.bfloat16)                      # halve live footprint

    t = _mxdot(p, vw)                                 # (rows, D) f32 accumulate
    t = t * pl.reciprocal(denom, approx=True)         # deferred softmax norm

    o = _mxdot(fold, t) + bft                         # (nb*SEQ, D) head sum
    o = jnp.maximum(o, 0.0)
    return _layer_norm(o, gamma, beta)


# --------------------------------- kernel -----------------------------------
def net_kernel(x_ref, w_ref, b_ref, pe_ref, rep_ref, lblk_ref, fold_ref,
               pool_ref, o_ref):
    rep = rep_ref[...]                                # (rows, nb*SEQ) bf16
    lblk = lblk_ref[...]                              # (rows, D) f32
    fold = fold_ref[...]                              # (nb*SEQ, rows) bf16

    def w(i):
        return w_ref[i]

    def bvec(i):
        return b_ref[i:i + 1, :]

    # input_map: Linear -> ReLU -> LayerNorm (Dropout = identity in eval)
    h = _f32dot(x_ref[...], w(W_IN)) + bvec(B_IN)     # (nb*SEQ, D)
    h = jnp.maximum(h, 0.0)
    h = _layer_norm(h, bvec(G_IN), bvec(BE_IN))

    # spatial then temporal attention
    h = _att_layer(h, pe_ref[0], w(WQ_S), bvec(BQ_S), w(WK_S), bvec(BK_S),
                   w(WV_S), bvec(BV_S), w(WFT_S), bvec(BFT_S),
                   bvec(G_S), bvec(BE_S), rep, lblk, fold, "spatial")
    h = _att_layer(h, pe_ref[1], w(WQ_T), bvec(BQ_T), w(WK_T), bvec(BK_T),
                   w(WV_T), bvec(BV_T), w(WFT_T), bvec(BFT_T),
                   bvec(G_T), bvec(BE_T), rep, lblk, fold, "temporal")

    # x.sum(1) / seq_len via the (OUT_ROWS, nb*SEQ) pooling matrix (rows >= nb
    # are all-zero padding), then the classifier into the padded logits block.
    pooled = _f32dot(pool_ref[...], h)                # (OUT_ROWS, D)
    o_ref[...] = _f32dot(pooled, w(W_CLS)) + bvec(B_CLS)


# ------------------------------- wrapper -------------------------------------
def pick_grid_b():
    """Split the batch across TensorCores only on v7x (2 TCs per chip)."""
    try:
        kind = jax.devices()[0].device_kind.lower().replace(" ", "")
    except Exception:
        kind = ""
    if ("v7" in kind or "tpu7" in kind) and BATCH % 2 == 0:
        return 2
    return 1


def net_forward(x, packed, grid_b):
    """x: (B, T, J, F) float32 -> logits (B, num_classes)."""
    lin_w, lin_b, pe_bb, rep, lblk, fold, pool = packed
    nb = BATCH // grid_b                               # batches per program
    r_l = nb * SEQ

    x2 = x.reshape(BATCH * SEQ, NODE_FEAT_DIM).astype(jnp.float32)
    x_pad = jnp.pad(x2, ((0, 0), (0, D - NODE_FEAT_DIM)))   # lane-pad to 32

    bcast2 = lambda g: (0, 0)
    bcast3 = lambda g: (0, 0, 0)

    out = pl.pallas_call(
        net_kernel,
        out_shape=jax.ShapeDtypeStruct((grid_b * OUT_ROWS, D), jnp.float32),
        grid=(grid_b,),
        in_specs=[
            pl.BlockSpec((r_l, D), lambda g: (g, 0)),        # per-program batches
            pl.BlockSpec(lin_w.shape, bcast3),               # weight slab (bcast)
            pl.BlockSpec(lin_b.shape, bcast2),               # bias slab
            pl.BlockSpec(pe_bb.shape, bcast3),               # positional encodings
            pl.BlockSpec(rep.shape, bcast2),                 # head replication
            pl.BlockSpec(lblk.shape, bcast2),                # head lane selector
            pl.BlockSpec(fold.shape, bcast2),                # head fold
            pl.BlockSpec(pool.shape, bcast2),                # mean pooling
        ],
        out_specs=pl.BlockSpec((OUT_ROWS, D), lambda g: (g, 0)),
        compiler_params=pltpu.CompilerParams(
            dimension_semantics=("parallel",)),
    )(x_pad, lin_w, lin_b, pe_bb, rep, lblk, fold, pool)

    logits = out.reshape(grid_b, OUT_ROWS, D)[:, :nb, :].reshape(BATCH, D)
    return logits[:, :NUM_CLASSES]


# --------------------------- parameter construction --------------------------
def make_pe(d_model, time_len, joint_num, domain):
    if domain == "spatial":
        pos = np.tile(np.arange(joint_num), time_len)
    else:  # temporal
        pos = np.repeat(np.arange(time_len), joint_num)
    pos = pos[:, None].astype(np.float32)
    div = np.exp(np.arange(0, d_model, 2).astype(np.float32)
                 * -(math.log(10000.0) / d_model))
    pe = np.zeros((time_len * joint_num, d_model), np.float32)
    pe[:, 0::2] = np.sin(pos * div)
    pe[:, 1::2] = np.cos(pos * div)
    return jnp.asarray(pe)


def make_masks(time_len, joint_num):
    s = time_len * joint_num
    t_mask = np.ones((s, s), np.float32)
    for i in range(time_len):
        r = i * joint_num
        t_mask[r:r + joint_num, r:r + joint_num] = 0.0   # zero same-frame block
    s_mask = 1.0 - t_mask                                # attend within frame
    t_mask = t_mask + np.eye(s, dtype=np.float32)        # cross-frame + self
    return jnp.asarray(s_mask), jnp.asarray(t_mask)


def init_params(key):
    keys = iter(jax.random.split(key, 16))

    def lin(k, fan_in, fan_out):
        kw, kb = jax.random.split(k)
        bound = 1.0 / math.sqrt(fan_in)
        w = jax.random.uniform(kw, (fan_in, fan_out), jnp.float32, -bound, bound)
        b = jax.random.uniform(kb, (1, fan_out), jnp.float32, -bound, bound)
        return w, b

    s_mask, t_mask = make_masks(TIME_LEN, JOINT_NUM)
    ones = jnp.ones((1, D), jnp.float32)
    zeros = jnp.zeros((1, D), jnp.float32)

    params = []
    w, b = lin(next(keys), NODE_FEAT_DIM, D)             # input_map
    params += [w, b, ones, zeros]

    for domain, mask in (("spatial", s_mask), ("temporal", t_mask)):
        params += [make_pe(D, TIME_LEN, JOINT_NUM, domain), mask]
        for _ in range(3):                               # q, k, v maps
            w, b = lin(next(keys), D, HL)
            params += [w, b]
        w, b = lin(next(keys), HL, D)                    # ft_map
        params += [w, b, ones, zeros]

    w, b = lin(next(keys), D, NUM_CLASSES)               # cls
    params += [w, b]
    return params


def pack_params(params, nb):
    """Pack the 30 original parameter arrays into 7 kernel inputs.

    nb = batches resident per kernel program (2 for the single-shot form,
    1 when the batch is split across v7x's two TensorCores).
    """
    p = [np.asarray(a, np.float32) for a in params]
    r_l = nb * SEQ
    rh_l = nb * HEADS * SEQ

    def pad_mat(w):
        out = np.zeros((D, D), np.float32)
        out[:w.shape[0], :w.shape[1]] = w
        return out

    def pad_vec(v):
        out = np.zeros((D,), np.float32)
        v = np.asarray(v).reshape(-1)
        out[:v.shape[0]] = v
        return out

    lin_w = np.stack([
        pad_mat(p[0]),                            # W_IN  (4,32) zero-padded
        p[6] * SCALE, p[8], p[10], p[12],         # spatial  q(scaled), k, v, ft
        p[18] * SCALE, p[20], p[22], p[24],       # temporal q(scaled), k, v, ft
        pad_mat(p[28]),                           # W_CLS (32,10) zero-padded
    ]).astype(np.float32)

    lin_b = np.stack([
        pad_vec(p[1]), pad_vec(p[2]), pad_vec(p[3]),
        pad_vec(p[7]) * SCALE, pad_vec(p[9]), pad_vec(p[11]),
        pad_vec(p[13]), pad_vec(p[14]), pad_vec(p[15]),
        pad_vec(p[19]) * SCALE, pad_vec(p[21]), pad_vec(p[23]),
        pad_vec(p[25]), pad_vec(p[26]), pad_vec(p[27]),
        pad_vec(p[29]),
    ]).astype(np.float32)

    pe_bb = np.stack([np.tile(p[4], (nb, 1)),            # (2, nb*SEQ, D)
                      np.tile(p[16], (nb, 1))]).astype(np.float32)

    rep = np.zeros((rh_l, r_l), np.float32)              # token -> (b,h,token)
    lblk = np.zeros((rh_l, D), np.float32)               # head lane selector
    for b in range(nb):
        for hd in range(HEADS):
            r0 = (b * HEADS + hd) * SEQ
            lblk[r0:r0 + SEQ, hd * LATENT:(hd + 1) * LATENT] = 1.0
            for s in range(SEQ):
                rep[r0 + s, b * SEQ + s] = 1.0
    fold = rep.T.copy()                                  # (nb*SEQ, rh_l)

    pool = np.zeros((OUT_ROWS, r_l), np.float32)         # mean over tokens
    for b in range(nb):
        pool[b, b * SEQ:(b + 1) * SEQ] = 1.0 / SEQ

    return (jnp.asarray(lin_w), jnp.asarray(lin_b), jnp.asarray(pe_bb),
            jnp.asarray(rep, jnp.bfloat16), jnp.asarray(lblk),
            jnp.asarray(fold, jnp.bfloat16), jnp.asarray(pool))


# ----------------------------- pure-JAX reference ----------------------------
def _ln_ref(x, g, b):
    mean = jnp.mean(x, axis=-1, keepdims=True)
    var = jnp.sum((x - mean) ** 2, axis=-1, keepdims=True) / (x.shape[-1] - 1)
    return g * (x - mean) / (jnp.sqrt(var) + LN_EPS) + b


def _att_ref(h, pe, mask, wq, bq, wk, bk, wv, bv, wft, bft, g, be):
    h = h + pe
    q = h @ wq + bq
    k = h @ wk + bk
    v = jnp.maximum(h @ wv + bv, 0.0)
    outs = []
    for hd in range(HEADS):
        sl = slice(hd * LATENT, (hd + 1) * LATENT)
        sc = (q[:, sl] @ k[:, sl].T) / math.sqrt(LATENT)
        sc = sc * mask
        sc = jnp.where(mask == 0.0, -9e15, sc)
        pr = jax.nn.softmax(sc, axis=-1)
        outs.append(pr @ v[:, sl])
    o = jnp.concatenate(outs, axis=-1) @ wft + bft
    o = jnp.maximum(o, 0.0)
    return _ln_ref(o, g, be)


def net_reference(x, params):
    p = params
    xb = x.reshape(x.shape[0], SEQ, NODE_FEAT_DIM)

    def one(x1):
        h = jnp.maximum(x1 @ p[0] + p[1], 0.0)
        h = _ln_ref(h, p[2], p[3])
        h = _att_ref(h, *p[4:16])
        h = _att_ref(h, *p[16:28])
        pooled = jnp.sum(h, axis=0, keepdims=True) / SEQ
        return (pooled @ p[28] + p[29])[0]

    return jax.vmap(one)(xb)


# ------------------------------------ main -----------------------------------
if __name__ == "__main__":
    key = jax.random.PRNGKey(0)
    kx, kp = jax.random.split(key)
    x = jax.random.normal(kx, (BATCH, TIME_LEN, JOINT_NUM, NODE_FEAT_DIM),
                          jnp.float32)
    params = init_params(kp)

    grid_b = pick_grid_b()                     # 2 on v7x, 1 on v5e/v6e
    packed = pack_params(params, BATCH // grid_b)

    pred = jax.block_until_ready(net_forward(x, packed, grid_b))
    ref = jax.block_until_ready(net_reference(x, params))

    assert pred.shape == (BATCH, NUM_CLASSES)
    np.testing.assert_allclose(np.asarray(pred), np.asarray(ref),
                               rtol=2e-2, atol=2e-2)
    print("KERNEL_OK")
</pallas_src>

<mosaic_0001>
module attributes {stable_mosaic.version = 11 : i64} {
  func.func @net_kernel(%arg0: i32, %arg1: memref<64x32xf32, #tpu.memory_space<vmem>>, %arg2: memref<10x32x32xf32, #tpu.memory_space<vmem>>, %arg3: memref<16x32xf32, #tpu.memory_space<vmem>>, %arg4: memref<2x64x32xf32, #tpu.memory_space<vmem>>, %arg5: memref<256x64xbf16, #tpu.memory_space<vmem>>, %arg6: memref<256x32xf32, #tpu.memory_space<vmem>>, %arg7: memref<64x256xbf16, #tpu.memory_space<vmem>>, %arg8: memref<8x64xf32, #tpu.memory_space<vmem>>, %arg9: memref<8x32xf32, #tpu.memory_space<vmem>>) attributes {dimension_semantics = [#tpu.dimension_semantics<parallel>], iteration_bounds = array<i64: 1>, scalar_prefetch = 0 : i64, scratch_operands = 0 : i64, tpu.core_type = #tpu.core_type<tc>, window_params = [{transform_indices = @transform_0, window_bounds = array<i64: 64, 32>}, {pipeline_mode = #tpu.pipeline_mode<synchronous>, transform_indices = @transform_1, window_bounds = array<i64: 10, 32, 32>}, {pipeline_mode = #tpu.pipeline_mode<synchronous>, transform_indices = @transform_2, window_bounds = array<i64: 16, 32>}, {pipeline_mode = #tpu.pipeline_mode<synchronous>, transform_indices = @transform_3, window_bounds = array<i64: 2, 64, 32>}, {pipeline_mode = #tpu.pipeline_mode<synchronous>, transform_indices = @transform_4, window_bounds = array<i64: 256, 64>}, {pipeline_mode = #tpu.pipeline_mode<synchronous>, transform_indices = @transform_5, window_bounds = array<i64: 256, 32>}, {pipeline_mode = #tpu.pipeline_mode<synchronous>, transform_indices = @transform_6, window_bounds = array<i64: 64, 256>}, {pipeline_mode = #tpu.pipeline_mode<synchronous>, transform_indices = @transform_7, window_bounds = array<i64: 8, 64>}, {transform_indices = @transform_8, window_bounds = array<i64: 8, 32>}]} {
    %c0 = arith.constant 0 : index
    %c0_0 = arith.constant 0 : index
    %0 = vector.load %arg5[%c0, %c0_0] : memref<256x64xbf16, #tpu.memory_space<vmem>>, vector<256x64xbf16>
    %c0_1 = arith.constant 0 : index
    %c0_2 = arith.constant 0 : index
    %1 = vector.load %arg6[%c0_1, %c0_2] : memref<256x32xf32, #tpu.memory_space<vmem>>, vector<256x32xf32>
    %c0_3 = arith.constant 0 : index
    %c0_4 = arith.constant 0 : index
    %2 = vector.load %arg7[%c0_3, %c0_4] : memref<64x256xbf16, #tpu.memory_space<vmem>>, vector<64x256xbf16>
    %c0_5 = arith.constant 0 : index
    %c0_6 = arith.constant 0 : index
    %3 = vector.load %arg1[%c0_5, %c0_6] : memref<64x32xf32, #tpu.memory_space<vmem>>, vector<64x32xf32>
    %c0_7 = arith.constant 0 : index
    %c0_8 = arith.constant 0 : index
    %c0_9 = arith.constant 0 : index
    %4 = vector.load %arg2[%c0_7, %c0_8, %c0_9] : memref<10x32x32xf32, #tpu.memory_space<vmem>>, vector<1x32x32xf32>
    %5 = vector.shape_cast %4 : vector<1x32x32xf32> to vector<32x32xf32>
    %cst = arith.constant dense<0.000000e+00> : vector<64x32xf32>
    %6 = tpu.matmul %3, %5, %cst {dimension_numbers = #tpu.dot_dimension_numbers<[1], [0], [0], [1], [0, 0, 1, 1], [], []>} : vector<64x32xf32>, vector<32x32xf32>, vector<64x32xf32> -> vector<64x32xf32>
    %c0_10 = arith.constant 0 : index
    %c0_11 = arith.constant 0 : index
    %7 = vector.load %arg3[%c0_10, %c0_11] : memref<16x32xf32, #tpu.memory_space<vmem>>, vector<1x32xf32>
    %8 = vector.broadcast %7 : vector<1x32xf32> to vector<64x32xf32>
    %9 = arith.addf %6, %8 : vector<64x32xf32>
    %cst_12 = arith.constant 0.000000e+00 : f32
    %10 = vector.broadcast %cst_12 : f32 to vector<64x32xf32>
    %11 = arith.maximumf %9, %10 : vector<64x32xf32>
    %c1 = arith.constant 1 : index
    %c0_13 = arith.constant 0 : index
    %12 = vector.load %arg3[%c1, %c0_13] : memref<16x32xf32, #tpu.memory_space<vmem>>, vector<1x32xf32>
    %c2 = arith.constant 2 : index
    %c0_14 = arith.constant 0 : index
    %13 = vector.load %arg3[%c2, %c0_14] : memref<16x32xf32, #tpu.memory_space<vmem>>, vector<1x32xf32>
    %cst_15 = arith.constant dense<0.000000e+00> : vector<64xf32>
    %14 = vector.multi_reduction <add>, %11, %cst_15 [1] : vector<64x32xf32> to vector<64xf32>
    %15 = vector.shape_cast %14 : vector<64xf32> to vector<64x1xf32>
    %cst_16 = arith.constant 3.200000e+01 : f32
    %16 = vector.broadcast %cst_16 : f32 to vector<64x1xf32>
    %17 = arith.divf %15, %16 : vector<64x1xf32>
    %18 = vector.broadcast %17 : vector<64x1xf32> to vector<64x32xf32>
    %19 = arith.subf %11, %18 : vector<64x32xf32>
    %20 = arith.mulf %19, %19 : vector<64x32xf32>
    %cst_17 = arith.constant dense<0.000000e+00> : vector<64xf32>
    %21 = vector.multi_reduction <add>, %20, %cst_17 [1] : vector<64x32xf32> to vector<64xf32>
    %22 = vector.shape_cast %21 : vector<64xf32> to vector<64x1xf32>
    %cst_18 = arith.constant 0.0322580636 : f32
    %23 = vector.broadcast %cst_18 : f32 to vector<64x1xf32>
    %24 = arith.mulf %22, %23 : vector<64x1xf32>
    %25 = math.sqrt %24 : vector<64x1xf32>
    %cst_19 = arith.constant 9.99999997E-7 : f32
    %26 = vector.broadcast %cst_19 : f32 to vector<64x1xf32>
    %27 = arith.addf %25, %26 : vector<64x1xf32>
    %cst_20 = arith.constant 1.000000e+00 : f32
    %28 = vector.broadcast %cst_20 : f32 to vector<64x1xf32>
    %29 = arith.divf %28, %27 : vector<64x1xf32>
    %30 = vector.broadcast %12 : vector<1x32xf32> to vector<64x32xf32>
    %31 = arith.mulf %30, %19 : vector<64x32xf32>
    %32 = vector.broadcast %29 : vector<64x1xf32> to vector<64x32xf32>
    %33 = arith.mulf %31, %32 : vector<64x32xf32>
    %34 = vector.broadcast %13 : vector<1x32xf32> to vector<64x32xf32>
    %35 = arith.addf %33, %34 : vector<64x32xf32>
    %c0_21 = arith.constant 0 : index
    %c0_22 = arith.constant 0 : index
    %c0_23 = arith.constant 0 : index
    %36 = vector.load %arg4[%c0_21, %c0_22, %c0_23] : memref<2x64x32xf32, #tpu.memory_space<vmem>>, vector<1x64x32xf32>
    %37 = vector.shape_cast %36 : vector<1x64x32xf32> to vector<64x32xf32>
    %c1_24 = arith.constant 1 : index
    %c0_25 = arith.constant 0 : index
    %c0_26 = arith.constant 0 : index
    %38 = vector.load %arg2[%c1_24, %c0_25, %c0_26] : memref<10x32x32xf32, #tpu.memory_space<vmem>>, vector<1x32x32xf32>
    %39 = vector.shape_cast %38 : vector<1x32x32xf32> to vector<32x32xf32>
    %c3 = arith.constant 3 : index
    %c0_27 = arith.constant 0 : index
    %40 = vector.load %arg3[%c3, %c0_27] : memref<16x32xf32, #tpu.memory_space<vmem>>, vector<1x32xf32>
    %c2_28 = arith.constant 2 : index
    %c0_29 = arith.constant 0 : index
    %c0_30 = arith.constant 0 : index
    %41 = vector.load %arg2[%c2_28, %c0_29, %c0_30] : memref<10x32x32xf32, #tpu.memory_space<vmem>>, vector<1x32x32xf32>
    %42 = vector.shape_cast %41 : vector<1x32x32xf32> to vector<32x32xf32>
    %c4 = arith.constant 4 : index
    %c0_31 = arith.constant 0 : index
    %43 = vector.load %arg3[%c4, %c0_31] : memref<16x32xf32, #tpu.memory_space<vmem>>, vector<1x32xf32>
    %c3_32 = arith.constant 3 : index
    %c0_33 = arith.constant 0 : index
    %c0_34 = arith.constant 0 : index
    %44 = vector.load %arg2[%c3_32, %c0_33, %c0_34] : memref<10x32x32xf32, #tpu.memory_space<vmem>>, vector<1x32x32xf32>
    %45 = vector.shape_cast %44 : vector<1x32x32xf32> to vector<32x32xf32>
    %c5 = arith.constant 5 : index
    %c0_35 = arith.constant 0 : index
    %46 = vector.load %arg3[%c5, %c0_35] : memref<16x32xf32, #tpu.memory_space<vmem>>, vector<1x32xf32>
    %c4_36 = arith.constant 4 : index
    %c0_37 = arith.constant 0 : index
    %c0_38 = arith.constant 0 : index
    %47 = vector.load %arg2[%c4_36, %c0_37, %c0_38] : memref<10x32x32xf32, #tpu.memory_space<vmem>>, vector<1x32x32xf32>
    %48 = vector.shape_cast %47 : vector<1x32x32xf32> to vector<32x32xf32>
    %c6 = arith.constant 6 : index
    %c0_39 = arith.constant 0 : index
    %49 = vector.load %arg3[%c6, %c0_39] : memref<16x32xf32, #tpu.memory_space<vmem>>, vector<1x32xf32>
    %c7 = arith.constant 7 : index
    %c0_40 = arith.constant 0 : index
    %50 = vector.load %arg3[%c7, %c0_40] : memref<16x32xf32, #tpu.memory_space<vmem>>, vector<1x32xf32>
    %c8 = arith.constant 8 : index
    %c0_41 = arith.constant 0 : index
    %51 = vector.load %arg3[%c8, %c0_41] : memref<16x32xf32, #tpu.memory_space<vmem>>, vector<1x32xf32>
    %52 = arith.addf %35, %37 : vector<64x32xf32>
    %cst_42 = arith.constant dense<0.000000e+00> : vector<64x32xf32>
    %53 = tpu.matmul %52, %39, %cst_42 {dimension_numbers = #tpu.dot_dimension_numbers<[1], [0], [0], [1], [0, 0, 1, 1], [], []>} : vector<64x32xf32>, vector<32x32xf32>, vector<64x32xf32> -> vector<64x32xf32>
    %54 = vector.broadcast %40 : vector<1x32xf32> to vector<64x32xf32>
    %55 = arith.addf %53, %54 : vector<64x32xf32>
    %cst_43 = arith.constant dense<0.000000e+00> : vector<64x32xf32>
    %56 = tpu.matmul %52, %42, %cst_43 {dimension_numbers = #tpu.dot_dimension_numbers<[1], [0], [0], [1], [0, 0, 1, 1], [], []>} : vector<64x32xf32>, vector<32x32xf32>, vector<64x32xf32> -> vector<64x32xf32>
    %57 = vector.broadcast %43 : vector<1x32xf32> to vector<64x32xf32>
    %58 = arith.addf %56, %57 : vector<64x32xf32>
    %cst_44 = arith.constant dense<0.000000e+00> : vector<64x32xf32>
    %59 = tpu.matmul %52, %45, %cst_44 {dimension_numbers = #tpu.dot_dimension_numbers<[1], [0], [0], [1], [0, 0, 1, 1], [], []>} : vector<64x32xf32>, vector<32x32xf32>, vector<64x32xf32> -> vector<64x32xf32>
    %60 = vector.broadcast %46 : vector<1x32xf32> to vector<64x32xf32>
    %61 = arith.addf %59, %60 : vector<64x32xf32>
    %cst_45 = arith.constant 0.000000e+00 : f32
    %62 = vector.broadcast %cst_45 : f32 to vector<64x32xf32>
    %63 = arith.maximumf %61, %62 : vector<64x32xf32>
    %64 = arith.truncf %55 : vector<64x32xf32> to vector<64x32xbf16>
    %cst_46 = arith.constant dense<0.000000e+00> : vector<256x32xf32>
    %65 = tpu.matmul %0, %64, %cst_46 {dimension_numbers = #tpu.dot_dimension_numbers<[1], [0], [0], [1], [0, 0, 1, 1], [], []>} : vector<256x64xbf16>, vector<64x32xbf16>, vector<256x32xf32> -> vector<256x32xf32>
    %66 = arith.truncf %58 : vector<64x32xf32> to vector<64x32xbf16>
    %cst_47 = arith.constant dense<0.000000e+00> : vector<256x32xf32>
    %67 = tpu.matmul %0, %66, %cst_47 {dimension_numbers = #tpu.dot_dimension_numbers<[1], [0], [0], [1], [0, 0, 1, 1], [], []>} : vector<256x64xbf16>, vector<64x32xbf16>, vector<256x32xf32> -> vector<256x32xf32>
    %68 = arith.mulf %67, %1 : vector<256x32xf32>
    %69 = arith.truncf %63 : vector<64x32xf32> to vector<64x32xbf16>
    %cst_48 = arith.constant dense<0.000000e+00> : vector<256x32xf32>
    %70 = tpu.matmul %0, %69, %cst_48 {dimension_numbers = #tpu.dot_dimension_numbers<[1], [0], [0], [1], [0, 0, 1, 1], [], []>} : vector<256x64xbf16>, vector<64x32xbf16>, vector<256x32xf32> -> vector<256x32xf32>
    %71 = arith.mulf %70, %1 : vector<256x32xf32>
    %72 = arith.truncf %71 : vector<256x32xf32> to vector<256x32xbf16>
    %73 = arith.truncf %48 : vector<32x32xf32> to vector<32x32xbf16>
    %cst_49 = arith.constant dense<0.000000e+00> : vector<256x32xf32>
    %74 = tpu.matmul %72, %73, %cst_49 {dimension_numbers = #tpu.dot_dimension_numbers<[1], [0], [0], [1], [0, 0, 1, 1], [], []>} : vector<256x32xbf16>, vector<32x32xbf16>, vector<256x32xf32> -> vector<256x32xf32>
    %75 = arith.truncf %65 : vector<256x32xf32> to vector<256x32xbf16>
    %76 = arith.truncf %68 : vector<256x32xf32> to vector<256x32xbf16>
    %cst_50 = arith.constant dense<0.000000e+00> : vector<256x256xf32>
    %77 = tpu.matmul %75, %76, %cst_50 {dimension_numbers = #tpu.dot_dimension_numbers<[1], [1], [0], [0], [0, 0, 1, 0], [], []>} : vector<256x32xbf16>, vector<256x32xbf16>, vector<256x256xf32> -> vector<256x256xf32>
    %78 = tpu.iota {dimensions = array<i32: 0>} : vector<256x256xi32>
    %79 = tpu.iota {dimensions = array<i32: 1>} : vector<256x256xi32>
    %c2_i32 = arith.constant 2 : i32
    %80 = vector.broadcast %c2_i32 : i32 to vector<256x256xi32>
    %81 = arith.shrsi %78, %80 : vector<256x256xi32>
    %c2_i32_51 = arith.constant 2 : i32
    %82 = vector.broadcast %c2_i32_51 : i32 to vector<256x256xi32>
    %83 = arith.shrsi %79, %82 : vector<256x256xi32>
    %84 = arith.cmpi eq, %81, %83 : vector<256x256xi32>
    %cst_52 = arith.constant -9.000000e+15 : f32
    %85 = vector.broadcast %cst_52 : f32 to vector<256x256xf32>
    %86 = arith.select %84, %77, %85 : vector<256x256xi1>, vector<256x256xf32>
    %cst_53 = arith.constant dense<0xFF800000> : vector<256xf32>
    %87 = vector.multi_reduction <maximumf>, %86, %cst_53 [1] : vector<256x256xf32> to vector<256xf32>
    %88 = vector.shape_cast %87 : vector<256xf32> to vector<256x1xf32>
    %89 = vector.broadcast %88 : vector<256x1xf32> to vector<256x256xf32>
    %90 = arith.subf %86, %89 : vector<256x256xf32>
    %91 = math.exp %90 : vector<256x256xf32>
    %cst_54 = arith.constant dense<0.000000e+00> : vector<256xf32>
    %92 = vector.multi_reduction <add>, %91, %cst_54 [1] : vector<256x256xf32> to vector<256xf32>
    %93 = vector.shape_cast %92 : vector<256xf32> to vector<256x1xf32>
    %94 = arith.truncf %91 : vector<256x256xf32> to vector<256x256xbf16>
    %95 = arith.truncf %74 : vector<256x32xf32> to vector<256x32xbf16>
    %cst_55 = arith.constant dense<0.000000e+00> : vector<256x32xf32>
    %96 = tpu.matmul %94, %95, %cst_55 {dimension_numbers = #tpu.dot_dimension_numbers<[1], [0], [0], [1], [0, 0, 1, 1], [], []>} : vector<256x256xbf16>, vector<256x32xbf16>, vector<256x32xf32> -> vector<256x32xf32>
    %97 = tpu.reciprocal %93 {approx = true} : vector<256x1xf32> -> vector<256x1xf32>
    %98 = vector.broadcast %97 : vector<256x1xf32> to vector<256x32xf32>
    %99 = arith.mulf %96, %98 : vector<256x32xf32>
    %100 = arith.truncf %99 : vector<256x32xf32> to vector<256x32xbf16>
    %cst_56 = arith.constant dense<0.000000e+00> : vector<64x32xf32>
    %101 = tpu.matmul %2, %100, %cst_56 {dimension_numbers = #tpu.dot_dimension_numbers<[1], [0], [0], [1], [0, 0, 1, 1], [], []>} : vector<64x256xbf16>, vector<256x32xbf16>, vector<64x32xf32> -> vector<64x32xf32>
    %102 = vector.broadcast %49 : vector<1x32xf32> to vector<64x32xf32>
    %103 = arith.addf %101, %102 : vector<64x32xf32>
    %cst_57 = arith.constant 0.000000e+00 : f32
    %104 = vector.broadcast %cst_57 : f32 to vector<64x32xf32>
    %105 = arith.maximumf %103, %104 : vector<64x32xf32>
    %cst_58 = arith.constant dense<0.000000e+00> : vector<64xf32>
    %106 = vector.multi_reduction <add>, %105, %cst_58 [1] : vector<64x32xf32> to vector<64xf32>
    %107 = vector.shape_cast %106 : vector<64xf32> to vector<64x1xf32>
    %cst_59 = arith.constant 3.200000e+01 : f32
    %108 = vector.broadcast %cst_59 : f32 to vector<64x1xf32>
    %109 = arith.divf %107, %108 : vector<64x1xf32>
    %110 = vector.broadcast %109 : vector<64x1xf32> to vector<64x32xf32>
    %111 = arith.subf %105, %110 : vector<64x32xf32>
    %112 = arith.mulf %111, %111 : vector<64x32xf32>
    %cst_60 = arith.constant dense<0.000000e+00> : vector<64xf32>
    %113 = vector.multi_reduction <add>, %112, %cst_60 [1] : vector<64x32xf32> to vector<64xf32>
    %114 = vector.shape_cast %113 : vector<64xf32> to vector<64x1xf32>
    %cst_61 = arith.constant 0.0322580636 : f32
    %115 = vector.broadcast %cst_61 : f32 to vector<64x1xf32>
    %116 = arith.mulf %114, %115 : vector<64x1xf32>
    %117 = math.sqrt %116 : vector<64x1xf32>
    %cst_62 = arith.constant 9.99999997E-7 : f32
    %118 = vector.broadcast %cst_62 : f32 to vector<64x1xf32>
    %119 = arith.addf %117, %118 : vector<64x1xf32>
    %cst_63 = arith.constant 1.000000e+00 : f32
    %120 = vector.broadcast %cst_63 : f32 to vector<64x1xf32>
    %121 = arith.divf %120, %119 : vector<64x1xf32>
    %122 = vector.broadcast %50 : vector<1x32xf32> to vector<64x32xf32>
    %123 = arith.mulf %122, %111 : vector<64x32xf32>
    %124 = vector.broadcast %121 : vector<64x1xf32> to vector<64x32xf32>
    %125 = arith.mulf %123, %124 : vector<64x32xf32>
    %126 = vector.broadcast %51 : vector<1x32xf32> to vector<64x32xf32>
    %127 = arith.addf %125, %126 : vector<64x32xf32>
    %c1_64 = arith.constant 1 : index
    %c0_65 = arith.constant 0 : index
    %c0_66 = arith.constant 0 : index
    %128 = vector.load %arg4[%c1_64, %c0_65, %c0_66] : memref<2x64x32xf32, #tpu.memory_space<vmem>>, vector<1x64x32xf32>
    %129 = vector.shape_cast %128 : vector<1x64x32xf32> to vector<64x32xf32>
    %c5_67 = arith.constant 5 : index
    %c0_68 = arith.constant 0 : index
    %c0_69 = arith.constant 0 : index
    %130 = vector.load %arg2[%c5_67, %c0_68, %c0_69] : memref<10x32x32xf32, #tpu.memory_space<vmem>>, vector<1x32x32xf32>
    %131 = vector.shape_cast %130 : vector<1x32x32xf32> to vector<32x32xf32>
    %c9 = arith.constant 9 : index
    %c0_70 = arith.constant 0 : index
    %132 = vector.load %arg3[%c9, %c0_70] : memref<16x32xf32, #tpu.memory_space<vmem>>, vector<1x32xf32>
    %c6_71 = arith.constant 6 : index
    %c0_72 = arith.constant 0 : index
    %c0_73 = arith.constant 0 : index
    %133 = vector.load %arg2[%c6_71, %c0_72, %c0_73] : memref<10x32x32xf32, #tpu.memory_space<vmem>>, vector<1x32x32xf32>
    %134 = vector.shape_cast %133 : vector<1x32x32xf32> to vector<32x32xf32>
    %c10 = arith.constant 10 : index
    %c0_74 = arith.constant 0 : index
    %135 = vector.load %arg3[%c10, %c0_74] : memref<16x32xf32, #tpu.memory_space<vmem>>, vector<1x32xf32>
    %c7_75 = arith.constant 7 : index
    %c0_76 = arith.constant 0 : index
    %c0_77 = arith.constant 0 : index
    %136 = vector.load %arg2[%c7_75, %c0_76, %c0_77] : memref<10x32x32xf32, #tpu.memory_space<vmem>>, vector<1x32x32xf32>
    %137 = vector.shape_cast %136 : vector<1x32x32xf32> to vector<32x32xf32>
    %c11 = arith.constant 11 : index
    %c0_78 = arith.constant 0 : index
    %138 = vector.load %arg3[%c11, %c0_78] : memref<16x32xf32, #tpu.memory_space<vmem>>, vector<1x32xf32>
    %c8_79 = arith.constant 8 : index
    %c0_80 = arith.constant 0 : index
    %c0_81 = arith.constant 0 : index
    %139 = vector.load %arg2[%c8_79, %c0_80, %c0_81] : memref<10x32x32xf32, #tpu.memory_space<vmem>>, vector<1x32x32xf32>
    %140 = vector.shape_cast %139 : vector<1x32x32xf32> to vector<32x32xf32>
    %c12 = arith.constant 12 : index
    %c0_82 = arith.constant 0 : index
    %141 = vector.load %arg3[%c12, %c0_82] : memref<16x32xf32, #tpu.memory_space<vmem>>, vector<1x32xf32>
    %c13 = arith.constant 13 : index
    %c0_83 = arith.constant 0 : index
    %142 = vector.load %arg3[%c13, %c0_83] : memref<16x32xf32, #tpu.memory_space<vmem>>, vector<1x32xf32>
    %c14 = arith.constant 14 : index
    %c0_84 = arith.constant 0 : index
    %143 = vector.load %arg3[%c14, %c0_84] : memref<16x32xf32, #tpu.memory_space<vmem>>, vector<1x32xf32>
    %144 = arith.addf %127, %129 : vector<64x32xf32>
    %cst_85 = arith.constant dense<0.000000e+00> : vector<64x32xf32>
    %145 = tpu.matmul %144, %131, %cst_85 {dimension_numbers = #tpu.dot_dimension_numbers<[1], [0], [0], [1], [0, 0, 1, 1], [], []>} : vector<64x32xf32>, vector<32x32xf32>, vector<64x32xf32> -> vector<64x32xf32>
    %146 = vector.broadcast %132 : vector<1x32xf32> to vector<64x32xf32>
    %147 = arith.addf %145, %146 : vector<64x32xf32>
    %cst_86 = arith.constant dense<0.000000e+00> : vector<64x32xf32>
    %148 = tpu.matmul %144, %134, %cst_86 {dimension_numbers = #tpu.dot_dimension_numbers<[1], [0], [0], [1], [0, 0, 1, 1], [], []>} : vector<64x32xf32>, vector<32x32xf32>, vector<64x32xf32> -> vector<64x32xf32>
    %149 = vector.broadcast %135 : vector<1x32xf32> to vector<64x32xf32>
    %150 = arith.addf %148, %149 : vector<64x32xf32>
    %cst_87 = arith.constant dense<0.000000e+00> : vector<64x32xf32>
    %151 = tpu.matmul %144, %137, %cst_87 {dimension_numbers = #tpu.dot_dimension_numbers<[1], [0], [0], [1], [0, 0, 1, 1], [], []>} : vector<64x32xf32>, vector<32x32xf32>, vector<64x32xf32> -> vector<64x32xf32>
    %152 = vector.broadcast %138 : vector<1x32xf32> to vector<64x32xf32>
    %153 = arith.addf %151, %152 : vector<64x32xf32>
    %cst_88 = arith.constant 0.000000e+00 : f32
    %154 = vector.broadcast %cst_88 : f32 to vector<64x32xf32>
    %155 = arith.maximumf %153, %154 : vector<64x32xf32>
    %156 = arith.truncf %147 : vector<64x32xf32> to vector<64x32xbf16>
    %cst_89 = arith.constant dense<0.000000e+00> : vector<256x32xf32>
    %157 = tpu.matmul %0, %156, %cst_89 {dimension_numbers = #tpu.dot_dimension_numbers<[1], [0], [0], [1], [0, 0, 1, 1], [], []>} : vector<256x64xbf16>, vector<64x32xbf16>, vector<256x32xf32> -> vector<256x32xf32>
    %158 = arith.truncf %150 : vector<64x32xf32> to vector<64x32xbf16>
    %cst_90 = arith.constant dense<0.000000e+00> : vector<256x32xf32>
    %159 = tpu.matmul %0, %158, %cst_90 {dimension_numbers = #tpu.dot_dimension_numbers<[1], [0], [0], [1], [0, 0, 1, 1], [], []>} : vector<256x64xbf16>, vector<64x32xbf16>, vector<256x32xf32> -> vector<256x32xf32>
    %160 = arith.mulf %159, %1 : vector<256x32xf32>
    %161 = arith.truncf %155 : vector<64x32xf32> to vector<64x32xbf16>
    %cst_91 = arith.constant dense<0.000000e+00> : vector<256x32xf32>
    %162 = tpu.matmul %0, %161, %cst_91 {dimension_numbers = #tpu.dot_dimension_numbers<[1], [0], [0], [1], [0, 0, 1, 1], [], []>} : vector<256x64xbf16>, vector<64x32xbf16>, vector<256x32xf32> -> vector<256x32xf32>
    %163 = arith.mulf %162, %1 : vector<256x32xf32>
    %164 = arith.truncf %163 : vector<256x32xf32> to vector<256x32xbf16>
    %165 = arith.truncf %140 : vector<32x32xf32> to vector<32x32xbf16>
    %cst_92 = arith.constant dense<0.000000e+00> : vector<256x32xf32>
    %166 = tpu.matmul %164, %165, %cst_92 {dimension_numbers = #tpu.dot_dimension_numbers<[1], [0], [0], [1], [0, 0, 1, 1], [], []>} : vector<256x32xbf16>, vector<32x32xbf16>, vector<256x32xf32> -> vector<256x32xf32>
    %167 = arith.truncf %157 : vector<256x32xf32> to vector<256x32xbf16>
    %168 = arith.truncf %160 : vector<256x32xf32> to vector<256x32xbf16>
    %cst_93 = arith.constant dense<0.000000e+00> : vector<256x256xf32>
    %169 = tpu.matmul %167, %168, %cst_93 {dimension_numbers = #tpu.dot_dimension_numbers<[1], [1], [0], [0], [0, 0, 1, 0], [], []>} : vector<256x32xbf16>, vector<256x32xbf16>, vector<256x256xf32> -> vector<256x256xf32>
    %170 = tpu.iota {dimensions = array<i32: 0>} : vector<256x256xi32>
    %171 = tpu.iota {dimensions = array<i32: 1>} : vector<256x256xi32>
    %c2_i32_94 = arith.constant 2 : i32
    %172 = vector.broadcast %c2_i32_94 : i32 to vector<256x256xi32>
    %173 = arith.shrsi %170, %172 : vector<256x256xi32>
    %c2_i32_95 = arith.constant 2 : i32
    %174 = vector.broadcast %c2_i32_95 : i32 to vector<256x256xi32>
    %175 = arith.shrsi %171, %174 : vector<256x256xi32>
    %176 = arith.cmpi eq, %173, %175 : vector<256x256xi32>
    %c5_i32 = arith.constant 5 : i32
    %177 = vector.broadcast %c5_i32 : i32 to vector<256x256xi32>
    %178 = arith.shrsi %170, %177 : vector<256x256xi32>
    %c5_i32_96 = arith.constant 5 : i32
    %179 = vector.broadcast %c5_i32_96 : i32 to vector<256x256xi32>
    %180 = arith.shrsi %171, %179 : vector<256x256xi32>
    %181 = arith.cmpi eq, %178, %180 : vector<256x256xi32>
    %cst_97 = arith.constant dense<true> : vector<256x256xi1>
    %182 = arith.xori %176, %cst_97 : vector<256x256xi1>
    %183 = arith.cmpi eq, %170, %171 : vector<256x256xi32>
    %184 = arith.ori %182, %183 : vector<256x256xi1>
    %185 = arith.andi %181, %184 : vector<256x256xi1>
    %cst_98 = arith.constant -9.000000e+15 : f32
    %186 = vector.broadcast %cst_98 : f32 to vector<256x256xf32>
    %187 = arith.select %185, %169, %186 : vector<256x256xi1>, vector<256x256xf32>
    %cst_99 = arith.constant dense<0xFF800000> : vector<256xf32>
    %188 = vector.multi_reduction <maximumf>, %187, %cst_99 [1] : vector<256x256xf32> to vector<256xf32>
    %189 = vector.shape_cast %188 : vector<256xf32> to vector<256x1xf32>
    %190 = vector.broadcast %189 : vector<256x1xf32> to vector<256x256xf32>
    %191 = arith.subf %187, %190 : vector<256x256xf32>
    %192 = math.exp %191 : vector<256x256xf32>
    %cst_100 = arith.constant dense<0.000000e+00> : vector<256xf32>
    %193 = vector.multi_reduction <add>, %192, %cst_100 [1] : vector<256x256xf32> to vector<256xf32>
    %194 = vector.shape_cast %193 : vector<256xf32> to vector<256x1xf32>
    %195 = arith.truncf %192 : vector<256x256xf32> to vector<256x256xbf16>
    %196 = arith.truncf %166 : vector<256x32xf32> to vector<256x32xbf16>
    %cst_101 = arith.constant dense<0.000000e+00> : vector<256x32xf32>
    %197 = tpu.matmul %195, %196, %cst_101 {dimension_numbers = #tpu.dot_dimension_numbers<[1], [0], [0], [1], [0, 0, 1, 1], [], []>} : vector<256x256xbf16>, vector<256x32xbf16>, vector<256x32xf32> -> vector<256x32xf32>
    %198 = tpu.reciprocal %194 {approx = true} : vector<256x1xf32> -> vector<256x1xf32>
    %199 = vector.broadcast %198 : vector<256x1xf32> to vector<256x32xf32>
    %200 = arith.mulf %197, %199 : vector<256x32xf32>
    %201 = arith.truncf %200 : vector<256x32xf32> to vector<256x32xbf16>
    %cst_102 = arith.constant dense<0.000000e+00> : vector<64x32xf32>
    %202 = tpu.matmul %2, %201, %cst_102 {dimension_numbers = #tpu.dot_dimension_numbers<[1], [0], [0], [1], [0, 0, 1, 1], [], []>} : vector<64x256xbf16>, vector<256x32xbf16>, vector<64x32xf32> -> vector<64x32xf32>
    %203 = vector.broadcast %141 : vector<1x32xf32> to vector<64x32xf32>
    %204 = arith.addf %202, %203 : vector<64x32xf32>
    %cst_103 = arith.constant 0.000000e+00 : f32
    %205 = vector.broadcast %cst_103 : f32 to vector<64x32xf32>
    %206 = arith.maximumf %204, %205 : vector<64x32xf32>
    %cst_104 = arith.constant dense<0.000000e+00> : vector<64xf32>
    %207 = vector.multi_reduction <add>, %206, %cst_104 [1] : vector<64x32xf32> to vector<64xf32>
    %208 = vector.shape_cast %207 : vector<64xf32> to vector<64x1xf32>
    %cst_105 = arith.constant 3.200000e+01 : f32
    %209 = vector.broadcast %cst_105 : f32 to vector<64x1xf32>
    %210 = arith.divf %208, %209 : vector<64x1xf32>
    %211 = vector.broadcast %210 : vector<64x1xf32> to vector<64x32xf32>
    %212 = arith.subf %206, %211 : vector<64x32xf32>
    %213 = arith.mulf %212, %212 : vector<64x32xf32>
    %cst_106 = arith.constant dense<0.000000e+00> : vector<64xf32>
    %214 = vector.multi_reduction <add>, %213, %cst_106 [1] : vector<64x32xf32> to vector<64xf32>
    %215 = vector.shape_cast %214 : vector<64xf32> to vector<64x1xf32>
    %cst_107 = arith.constant 0.0322580636 : f32
    %216 = vector.broadcast %cst_107 : f32 to vector<64x1xf32>
    %217 = arith.mulf %215, %216 : vector<64x1xf32>
    %218 = math.sqrt %217 : vector<64x1xf32>
    %cst_108 = arith.constant 9.99999997E-7 : f32
    %219 = vector.broadcast %cst_108 : f32 to vector<64x1xf32>
    %220 = arith.addf %218, %219 : vector<64x1xf32>
    %cst_109 = arith.constant 1.000000e+00 : f32
    %221 = vector.broadcast %cst_109 : f32 to vector<64x1xf32>
    %222 = arith.divf %221, %220 : vector<64x1xf32>
    %223 = vector.broadcast %142 : vector<1x32xf32> to vector<64x32xf32>
    %224 = arith.mulf %223, %212 : vector<64x32xf32>
    %225 = vector.broadcast %222 : vector<64x1xf32> to vector<64x32xf32>
    %226 = arith.mulf %224, %225 : vector<64x32xf32>
    %227 = vector.broadcast %143 : vector<1x32xf32> to vector<64x32xf32>
    %228 = arith.addf %226, %227 : vector<64x32xf32>
    %c0_110 = arith.constant 0 : index
    %c0_111 = arith.constant 0 : index
    %229 = vector.load %arg8[%c0_110, %c0_111] : memref<8x64xf32, #tpu.memory_space<vmem>>, vector<8x64xf32>
    %cst_112 = arith.constant dense<0.000000e+00> : vector<8x32xf32>
    %230 = tpu.matmul %229, %228, %cst_112 {dimension_numbers = #tpu.dot_dimension_numbers<[1], [0], [0], [1], [0, 0, 1, 1], [], []>} : vector<8x64xf32>, vector<64x32xf32>, vector<8x32xf32> -> vector<8x32xf32>
    %c9_113 = arith.constant 9 : index
    %c0_114 = arith.constant 0 : index
    %c0_115 = arith.constant 0 : index
    %231 = vector.load %arg2[%c9_113, %c0_114, %c0_115] : memref<10x32x32xf32, #tpu.memory_space<vmem>>, vector<1x32x32xf32>
    %232 = vector.shape_cast %231 : vector<1x32x32xf32> to vector<32x32xf32>
    %cst_116 = arith.constant dense<0.000000e+00> : vector<8x32xf32>
    %233 = tpu.matmul %230, %232, %cst_116 {dimension_numbers = #tpu.dot_dimension_numbers<[1], [0], [0], [1], [0, 0, 1, 1], [], []>} : vector<8x32xf32>, vector<32x32xf32>, vector<8x32xf32> -> vector<8x32xf32>
    %c15 = arith.constant 15 : index
    %c0_117 = arith.constant 0 : index
    %234 = vector.load %arg3[%c15, %c0_117] : memref<16x32xf32, #tpu.memory_space<vmem>>, vector<1x32xf32>
    %235 = vector.broadcast %234 : vector<1x32xf32> to vector<8x32xf32>
    %236 = arith.addf %233, %235 : vector<8x32xf32>
    %c0_118 = arith.constant 0 : index
    %c0_119 = arith.constant 0 : index
    %237 = vector.load %arg9[%c0_118, %c0_119] : memref<8x32xf32, #tpu.memory_space<vmem>>, vector<8x32xf32>
    tpu.vector_store %arg9[%c0_118, %c0_119], %236 {strides = array<i32>} : memref<8x32xf32, #tpu.memory_space<vmem>>, vector<8x32xf32>,
    return
  }
  func.func @transform_0(%arg0: i32) -> (i32, i32) {
    %c0_i32 = arith.constant 0 : i32
    %c0_i32_0 = arith.constant 0 : i32
    return %arg0, %c0_i32 : i32, i32
  }
  func.func @transform_1(%arg0: i32) -> (i32, i32, i32) {
    %c0_i32 = arith.constant 0 : i32
    %c0_i32_0 = arith.constant 0 : i32
    %c0_i32_1 = arith.constant 0 : i32
    %c0_i32_2 = arith.constant 0 : i32
    return %c0_i32, %c0_i32_0, %c0_i32_1 : i32, i32, i32
  }
  func.func @transform_2(%arg0: i32) -> (i32, i32) {
    %c0_i32 = arith.constant 0 : i32
    %c0_i32_0 = arith.constant 0 : i32
    %c0_i32_1 = arith.constant 0 : i32
    return %c0_i32, %c0_i32_0 : i32, i32
  }
  func.func @transform_3(%arg0: i32) -> (i32, i32, i32) {
    %c0_i32 = arith.constant 0 : i32
    %c0_i32_0 = arith.constant 0 : i32
    %c0_i32_1 = arith.constant 0 : i32
    %c0_i32_2 = arith.constant 0 : i32
    return %c0_i32, %c0_i32_0, %c0_i32_1 : i32, i32, i32
  }
  func.func @transform_4(%arg0: i32) -> (i32, i32) {
    %c0_i32 = arith.constant 0 : i32
    %c0_i32_0 = arith.constant 0 : i32
    %c0_i32_1 = arith.constant 0 : i32
    return %c0_i32, %c0_i32_0 : i32, i32
  }
  func.func @transform_5(%arg0: i32) -> (i32, i32) {
    %c0_i32 = arith.constant 0 : i32
    %c0_i32_0 = arith.constant 0 : i32
    %c0_i32_1 = arith.constant 0 : i32
    return %c0_i32, %c0_i32_0 : i32, i32
  }
  func.func @transform_6(%arg0: i32) -> (i32, i32) {
    %c0_i32 = arith.constant 0 : i32
    %c0_i32_0 = arith.constant 0 : i32
    %c0_i32_1 = arith.constant 0 : i32
    return %c0_i32, %c0_i32_0 : i32, i32
  }
  func.func @transform_7(%arg0: i32) -> (i32, i32) {
    %c0_i32 = arith.constant 0 : i32
    %c0_i32_0 = arith.constant 0 : i32
    %c0_i32_1 = arith.constant 0 : i32
    return %c0_i32, %c0_i32_0 : i32, i32
  }
  func.func @transform_8(%arg0: i32) -> (i32, i32) {
    %c0_i32 = arith.constant 0 : i32
    %c0_i32_0 = arith.constant 0 : i32
    return %arg0, %c0_i32 : i32, i32
  }
}

</mosaic_0001>

<llo_original>
// kernel: tpu_custom_call.1
$region0: #{tpu_custom_call.1}
  #allocation0 [shape = 'u32[]', space=smem, size = 0x4, offset = 0x4, fixed_abs, tag = 'smem constant byte address 0x4 - core index']
  #allocation1 [shape = 'u32[144,128]{1,0:T(1,128)}', space=vmem, size = 0x12000, scoped, tag = 'internal scratch']
  %s0 = inlined_call_operand.vmem [shape: f32[64,32], index: 0, kind: input, shape index: {}]
  %s1 = inlined_call_operand.vmem [shape: f32[10,32,32], index: 1, kind: input, shape index: {}]
  %s2 = inlined_call_operand.vmem [shape: f32[16,32], index: 2, kind: input, shape index: {}]
  %s3 = inlined_call_operand.vmem [shape: f32[2,64,32], index: 3, kind: input, shape index: {}]
  %s4 = inlined_call_operand.vmem [shape: bf16[256,64], index: 4, kind: input, shape index: {}]
  %s5 = inlined_call_operand.vmem [shape: f32[256,32], index: 5, kind: input, shape index: {}]
  %s6 = inlined_call_operand.vmem [shape: bf16[64,256], index: 6, kind: input, shape index: {}]
  %s7 = inlined_call_operand.vmem [shape: f32[8,64], index: 7, kind: input, shape index: {}]
  %s8 = inlined_call_operand.hbm [shape: f32[8,32], index: 8, kind: output, shape index: {}]
  %s9 = sld [smem:[#allocation0]]
  $region42: #{tpu_custom_call.1} parent=0
    _
  %s11 = ssub.s32 1, %s9
  %s12 = scalar_select 0, %s11, %s9
  $region1: #{tpu_custom_call.1} parent=0
    #allocation2 [shape = 'u8[4096]{0}', space=vmem, size = 0x1000, scoped, tag = 'output window, operand 0, single buffered']
    #allocation3 [shape = 's32[1]{0}', space=sflag, size = 0x4, scoped, tag = 'scoped memory for tpu_custom_call.1']
    %13 = vsyncpa [#allocation3], 0
    // Predicated region
    $region2: #{tpu_custom_call.1} parent=1 // pred_check
      _
    $region3: #{tpu_custom_call.1} parent=1 // pred_check_branch
      %15 = sbr.rel (0) target = $region5
    $region4: #{tpu_custom_call.1} parent=1 // pred_region
      _
    $region5: #{tpu_custom_call.1} parent=1 // pred_fallthru
      _
    // Predicated region
    $region6: #{tpu_custom_call.1} parent=1 // pred_check
      _
    $region7: #{tpu_custom_call.1} parent=1 // pred_check_branch
      %17 = sbr.rel (0) target = $region9
    $region8: #{tpu_custom_call.1} parent=1 // pred_region
      _
    $region9: #{tpu_custom_call.1} parent=1 // pred_fallthru
      _
    // Predicated region
    $region10: #{tpu_custom_call.1} parent=1 // pred_check
      _
    $region11: #{tpu_custom_call.1} parent=1 // pred_check_branch
      %19 = sbr.rel (0) target = $region13
    $region12: #{tpu_custom_call.1} parent=1 // pred_region
      _
    $region13: #{tpu_custom_call.1} parent=1 // pred_fallthru
      _
    // Predicated region
    $region14: #{tpu_custom_call.1} parent=1 // pred_check
      _
    $region15: #{tpu_custom_call.1} parent=1 // pred_check_branch
      %21 = sbr.rel (0) target = $region17
    $region16: #{tpu_custom_call.1} parent=1 // pred_region
      _
    $region17: #{tpu_custom_call.1} parent=1 // pred_fallthru
      _
    // Predicated region
    $region18: #{tpu_custom_call.1} parent=1 // pred_check
      _
    $region19: #{tpu_custom_call.1} parent=1 // pred_check_branch
      %23 = sbr.rel (0) target = $region21
    $region20: #{tpu_custom_call.1} parent=1 // pred_region
      _
    $region21: #{tpu_custom_call.1} parent=1 // pred_fallthru
      _
    // Predicated region
    $region22: #{tpu_custom_call.1} parent=1 // pred_check
      _
    $region23: #{tpu_custom_call.1} parent=1 // pred_check_branch
      %25 = sbr.rel (0) target = $region25
    $region24: #{tpu_custom_call.1} parent=1 // pred_region
      _
    $region25: #{tpu_custom_call.1} parent=1 // pred_fallthru
      _
    // Predicated region
    $region26: #{tpu_custom_call.1} parent=1 // pred_check
      _
    $region27: #{tpu_custom_call.1} parent=1 // pred_check_branch
      %27 = sbr.rel (0) target = $region29
    $region28: #{tpu_custom_call.1} parent=1 // pred_region
      _
    $region29: #{tpu_custom_call.1} parent=1 // pred_fallthru
      _
    // Predicated region
    $region30: #{tpu_custom_call.1} parent=1 // pred_check
      _
    $region31: #{tpu_custom_call.1} parent=1 // pred_check_branch
      %29 = sbr.rel (0) target = $region33
    $region32: #{tpu_custom_call.1} parent=1 // pred_region
      _
    $region33: #{tpu_custom_call.1} parent=1 // pred_fallthru
      _
    %v31 = vld [vmem:[%s4] sm:$0xf]
    %v32 = vld [vmem:[%s4 + $0x4] sm:$0xf]
    %v33 = vld [vmem:[%s4 + $0x8] sm:$0xf]
    %v34 = vld [vmem:[%s4 + $0xc] sm:$0xf]
    %v35 = vld [vmem:[%s4 + $0x10] sm:$0xf]
    %v36 = vld [vmem:[%s4 + $0x14] sm:$0xf]
    %v37 = vld [vmem:[%s4 + $0x18] sm:$0xf]
    %v38 = vld [vmem:[%s4 + $0x1c] sm:$0xf]
    %v39 = vld [vmem:[%s4 + $0x20] sm:$0xf]
    %v40 = vld [vmem:[%s4 + $0x24] sm:$0xf]
    %v41 = vld [vmem:[%s4 + $0x28] sm:$0xf]
    %v42 = vld [vmem:[%s4 + $0x2c] sm:$0xf]
    %v43 = vld [vmem:[%s4 + $0x30] sm:$0xf]
    %v44 = vld [vmem:[%s4 + $0x34] sm:$0xf]
    %v45 = vld [vmem:[%s4 + $0x38] sm:$0xf]
    %v46 = vld [vmem:[%s4 + $0x3c] sm:$0xf]
    %v47 = vld [vmem:[%s4 + $0x40] sm:$0xf]
    %v48 = vld [vmem:[%s4 + $0x44] sm:$0xf]
    %v49 = vld [vmem:[%s4 + $0x48] sm:$0xf]
    %v50 = vld [vmem:[%s4 + $0x4c] sm:$0xf]
    %v51 = vld [vmem:[%s4 + $0x50] sm:$0xf]
    %v52 = vld [vmem:[%s4 + $0x54] sm:$0xf]
    %v53 = vld [vmem:[%s4 + $0x58] sm:$0xf]
    %v54 = vld [vmem:[%s4 + $0x5c] sm:$0xf]
    %v55 = vld [vmem:[%s4 + $0x60] sm:$0xf]
    %v56 = vld [vmem:[%s4 + $0x64] sm:$0xf]
    %v57 = vld [vmem:[%s4 + $0x68] sm:$0xf]
    %v58 = vld [vmem:[%s4 + $0x6c] sm:$0xf]
    %v59 = vld [vmem:[%s4 + $0x70] sm:$0xf]
    %v60 = vld [vmem:[%s4 + $0x74] sm:$0xf]
    %v61 = vld [vmem:[%s4 + $0x78] sm:$0xf]
    %v62 = vld [vmem:[%s4 + $0x7c] sm:$0xf]
    %v63 = vld [vmem:[%s5] sm:$0xff]
    %v64 = vld [vmem:[%s5 + $0x8] sm:$0xff]
    %v65 = vld [vmem:[%s5 + $0x10] sm:$0xff]
    %v66 = vld [vmem:[%s5 + $0x18] sm:$0xff]
    %v67 = vld [vmem:[%s5 + $0x20] sm:$0xff]
    %v68 = vld [vmem:[%s5 + $0x28] sm:$0xff]
    %v69 = vld [vmem:[%s5 + $0x30] sm:$0xff]
    %v70 = vld [vmem:[%s5 + $0x38] sm:$0xff]
    %v71 = vld [vmem:[%s5 + $0x40] sm:$0xff]
    %v72 = vld [vmem:[%s5 + $0x48] sm:$0xff]
    %v73 = vld [vmem:[%s5 + $0x50] sm:$0xff]
    %v74 = vld [vmem:[%s5 + $0x58] sm:$0xff]
    %v75 = vld [vmem:[%s5 + $0x60] sm:$0xff]
    %v76 = vld [vmem:[%s5 + $0x68] sm:$0xff]
    %v77 = vld [vmem:[%s5 + $0x70] sm:$0xff]
    %v78 = vld [vmem:[%s5 + $0x78] sm:$0xff]
    %v79 = vld [vmem:[%s5 + $0x80] sm:$0xff]
    %v80 = vld [vmem:[%s5 + $0x88] sm:$0xff]
    %v81 = vld [vmem:[%s5 + $0x90] sm:$0xff]
    %v82 = vld [vmem:[%s5 + $0x98] sm:$0xff]
    %v83 = vld [vmem:[%s5 + $0xa0] sm:$0xff]
    %v84 = vld [vmem:[%s5 + $0xa8] sm:$0xff]
    %v85 = vld [vmem:[%s5 + $0xb0] sm:$0xff]
    %v86 = vld [vmem:[%s5 + $0xb8] sm:$0xff]
    %v87 = vld [vmem:[%s5 + $0xc0] sm:$0xff]
    %v88 = vld [vmem:[%s5 + $0xc8] sm:$0xff]
    %v89 = vld [vmem:[%s5 + $0xd0] sm:$0xff]
    %v90 = vld [vmem:[%s5 + $0xd8] sm:$0xff]
    %v91 = vld [vmem:[%s5 + $0xe0] sm:$0xff]
    %v92 = vld [vmem:[%s5 + $0xe8] sm:$0xff]
    %v93 = vld [vmem:[%s5 + $0xf0] sm:$0xff]
    %v94 = vld [vmem:[%s5 + $0xf8] sm:$0xff]
    %v95 = vld [vmem:[%s6] sm:$0xff]
    %v96 = vld [vmem:[%s6 + $0x8] sm:$0xff]
    %v97 = vld [vmem:[%s6 + $0x10] sm:$0xff]
    %v98 = vld [vmem:[%s6 + $0x18] sm:$0xff]
    %v99 = vld [vmem:[%s6 + $0x20] sm:$0xff]
    %v100 = vld [vmem:[%s6 + $0x28] sm:$0xff]
    %v101 = vld [vmem:[%s6 + $0x30] sm:$0xff]
    %v102 = vld [vmem:[%s6 + $0x38] sm:$0xff]
    %v103 = vld [vmem:[%s0] sm:$0xff]
    %v104 = vld [vmem:[%s0 + $0x8] sm:$0xff]
    %v105 = vld [vmem:[%s0 + $0x10] sm:$0xff]
    %v106 = vld [vmem:[%s0 + $0x18] sm:$0xff]
    %v107 = vld [vmem:[%s0 + $0x20] sm:$0xff]
    %v108 = vld [vmem:[%s0 + $0x28] sm:$0xff]
    %v109 = vld [vmem:[%s0 + $0x30] sm:$0xff]
    %v110 = vld [vmem:[%s0 + $0x38] sm:$0xff]
    %v111 = vld [vmem:[%s1] sm:$0xff]
    %v112 = vld [vmem:[%s1 + $0x8] sm:$0xff]
    %v113 = vld [vmem:[%s1 + $0x10] sm:$0xff]
    %v114 = vld [vmem:[%s1 + $0x18] sm:$0xff]
    %v115 = vld [vmem:[%s2] sm:$0x1]
    %v116 = vlaneseq
    %v117 = vshrl.u32 %v116, 7
    %v118 = vsub.s32 0, %v117
    %v119 = vrot.slane %v115, %v118
    %vm120 = vcmask 261120
    %v122 = vsel %vm120, %v103, 0
    %v125 = vsel %vm120, %v104, 0
    %v128 = vsel %vm120, %v105, 0
    %v131 = vsel %vm120, %v106, 0
    %v134 = vsel %vm120, %v107, 0
    %v137 = vsel %vm120, %v108, 0
    %v140 = vsel %vm120, %v109, 0
    %v143 = vsel %vm120, %v110, 0
    %145 = vmatprep.subr.mxu0 0.0
    %146 = vmatpush1.msra.mxu0 %v111
    %147 = vmatprep.subr.mxu0 0.0
    %148 = vmatpush1.msra.mxu0 %v112
    %149 = vmatprep.subr.mxu0 0.0
    %150 = vmatpush1.msra.mxu0 %v113
    %151 = vmatprep.subr.mxu0 0.0
    %152 = vmatpush1.msra.mxu0 %v114
    %153 = vmatprep.subr.mxu0 0.0
    %154 = vmatpush1.msra.mxu0 0.0
    %155 = vmatprep.subr.mxu0 0.0
    %156 = vmatpush1.msra.mxu0 0.0
    %157 = vmatprep.subr.mxu0 0.0
    %158 = vmatpush1.msra.mxu0 0.0
    %159 = vmatprep.subr.mxu0 0.0
    %160 = vmatpush1.msra.mxu0 0.0
    %161 = vmatprep.subr.mxu0 0.0
    %162 = vmatpush1.msra.mxu0 0.0
    %163 = vmatprep.subr.mxu0 0.0
    %164 = vmatpush1.msra.mxu0 0.0
    %165 = vmatprep.subr.mxu0 0.0
    %166 = vmatpush1.msra.mxu0 0.0
    %167 = vmatprep.subr.mxu0 0.0
    %168 = vmatpush1.msra.mxu0 0.0
    %169 = vmatprep.subr.mxu0 0.0
    %170 = vmatpush1.msra.mxu0 0.0
    %171 = vmatprep.subr.mxu0 0.0
    %172 = vmatpush1.msra.mxu0 0.0
    %173 = vmatprep.subr.mxu0 0.0
    %174 = vmatpush1.msra.mxu0 0.0
    %175 = vmatprep.subr.mxu0 0.0
    %176 = vmatpush1.msra.mxu0 0.0
    %177 = vmatprep.subr.mxu0 0.0
    %178 = vmatpush1.msra.mxu0 0.0
    %179 = vmatprep.subr.mxu0 0.0
    %180 = vmatpush1.msra.mxu0 0.0
    %181 = vmatprep.subr.mxu0 0.0
    %182 = vmatpush1.msra.mxu0 0.0
    %183 = vmatprep.subr.mxu0 0.0
    %184 = vmatpush1.msra.mxu0 0.0
    %185 = vmatprep.subr.mxu0 0.0
    %186 = vmatpush1.msra.mxu0 0.0
    %187 = vmatprep.subr.mxu0 0.0
    %188 = vmatpush1.msra.mxu0 0.0
    %189 = vmatprep.subr.mxu0 0.0
    %190 = vmatpush1.msra.mxu0 0.0
    %191 = vmatprep.subr.mxu0 0.0
    %192 = vmatpush1.msra.mxu0 0.0
    %193 = vmatprep.subr.mxu0 0.0
    %194 = vmatpush1.msra.mxu0 0.0
    %195 = vmatprep.subr.mxu0 0.0
    %196 = vmatpush1.msra.mxu0 0.0
    %197 = vmatprep.subr.mxu0 0.0
    %198 = vmatpush1.msra.mxu0 0.0
    %199 = vmatprep.subr.mxu0 0.0
    %200 = vmatpush1.msra.mxu0 0.0
    %201 = vmatprep.subr.mxu0 0.0
    %202 = vmatpush1.msra.mxu0 0.0
    %203 = vmatprep.subr.mxu0 0.0
    %204 = vmatpush1.msra.mxu0 0.0
    %205 = vmatprep.subr.mxu0 0.0
    %206 = vmatpush1.msra.mxu0 0.0
    %207 = vmatprep.subr.mxu0 0.0
    %208 = vmatpush1.msra.mxu0 0.0
    %209 = vmatprep.mubr.f32.mxu0 0.0
    %210 = vmatmul.mubr.f32.gmra.mrb[0].mxu0 %v122
    %v211 = vpop.f32.mrb[0].mxu0
    %v212 = vadd.f32 %v119, %v211
    %v213 = vpop.f32.mrb[0].mxu0
    %214 = vmatprep.mubr.f32.mxu0 0.0
    %215 = vmatmul.mubr.f32.gmra.mrb[0].mxu0 %v125
    %v216 = vpop.f32.mrb[0].mxu0
    %v217 = vadd.f32 %v119, %v216
    %v218 = vpop.f32.mrb[0].mxu0
    %219 = vmatprep.mubr.f32.mxu0 0.0
    %220 = vmatmul.mubr.f32.gmra.mrb[0].mxu0 %v128
    %v221 = vpop.f32.mrb[0].mxu0
    %v222 = vadd.f32 %v119, %v221
    %v223 = vpop.f32.mrb[0].mxu0
    %224 = vmatprep.mubr.f32.mxu0 0.0
    %225 = vmatmul.mubr.f32.gmra.mrb[0].mxu0 %v131
    %v226 = vpop.f32.mrb[0].mxu0
    %v227 = vadd.f32 %v119, %v226
    %v228 = vpop.f32.mrb[0].mxu0
    %229 = vmatprep.mubr.f32.mxu0 0.0
    %230 = vmatmul.mubr.f32.gmra.mrb[0].mxu0 %v134
    %v231 = vpop.f32.mrb[0].mxu0
    %v232 = vadd.f32 %v119, %v231
    %v233 = vpop.f32.mrb[0].mxu0
    %234 = vmatprep.mubr.f32.mxu0 0.0
    %235 = vmatmul.mubr.f32.gmra.mrb[0].mxu0 %v137
    %v236 = vpop.f32.mrb[0].mxu0
    %v237 = vadd.f32 %v119, %v236
    %v238 = vpop.f32.mrb[0].mxu0
    %239 = vmatprep.mubr.f32.mxu0 0.0
    %240 = vmatmul.mubr.f32.gmra.mrb[0].mxu0 %v140
    %v241 = vpop.f32.mrb[0].mxu0
    %v242 = vadd.f32 %v119, %v241
    %v243 = vpop.f32.mrb[0].mxu0
    %244 = vmatprep.mubr.f32.mxu0 0.0
    %245 = vmatmul.mubr.f32.gmra.mrb[0].mxu0 %v143
    %v246 = vpop.f32.mrb[0].mxu0
    %v247 = vadd.f32 %v119, %v246
    %v248 = vpop.f32.mrb[0].mxu0
    %249 = vdwg.mxu0
    %v250 = vmax.f32 %v212, 0.0
    %v251 = vmax.f32 %v217, 0.0
    %v252 = vmax.f32 %v222, 0.0
    %v253 = vmax.f32 %v227, 0.0
    %v254 = vmax.f32 %v232, 0.0
    %v255 = vmax.f32 %v237, 0.0
    %v256 = vmax.f32 %v242, 0.0
    %v257 = vmax.f32 %v247, 0.0
    %v258 = vld [vmem:[%s2 + $0x1] sm:$0x1]
    %v259 = vld [vmem:[%s2 + $0x2] sm:$0x1]
    %v260 = vsel %vm120, %v250, 0.0
    %261 = vadd.xlane.f32.xlu0 %v260
    %v262 = vpop.xlane.xlu0 %261
    %v263 = vsel %vm120, %v251, 0.0
    %264 = vadd.xlane.f32.xlu0 %v263
    %v265 = vpop.xlane.xlu0 %264
    %v266 = vsel %vm120, %v252, 0.0
    %267 = vadd.xlane.f32.xlu0 %v266
    %v268 = vpop.xlane.xlu0 %267
    %v269 = vsel %vm120, %v253, 0.0
    %270 = vadd.xlane.f32.xlu0 %v269
    %v271 = vpop.xlane.xlu0 %270
    %v272 = vsel %vm120, %v254, 0.0
    %273 = vadd.xlane.f32.xlu0 %v272
    %v274 = vpop.xlane.xlu0 %273
    %v275 = vsel %vm120, %v255, 0.0
    %276 = vadd.xlane.f32.xlu0 %v275
    %v277 = vpop.xlane.xlu0 %276
    %v278 = vsel %vm120, %v256, 0.0
    %279 = vadd.xlane.f32.xlu0 %v278
    %v280 = vpop.xlane.xlu0 %279
    %v281 = vsel %vm120, %v257, 0.0
    %282 = vadd.xlane.f32.xlu0 %v281
    %v283 = vpop.xlane.xlu0 %282
    %v284 = vrcp.pop 32.0
    %v285 = vmul.f32 %v262, %v284
    %v286 = vmul.f32 %v265, %v284
    %v287 = vmul.f32 %v268, %v284
    %v288 = vmul.f32 %v271, %v284
    %v289 = vmul.f32 %v274, %v284
    %v290 = vmul.f32 %v277, %v284
    %v291 = vmul.f32 %v280, %v284
    %v292 = vmul.f32 %v283, %v284
    %v293 = vsub.f32 %v250, %v285
    %v294 = vsub.f32 %v251, %v286
    %v295 = vsub.f32 %v252, %v287
    %v296 = vsub.f32 %v253, %v288
    %v297 = vsub.f32 %v254, %v289
    %v298 = vsub.f32 %v255, %v290
    %v299 = vsub.f32 %v256, %v291
    %v300 = vsub.f32 %v257, %v292
    %v301 = vmul.f32 %v293, %v293
    %v302 = vmul.f32 %v294, %v294
    %v303 = vmul.f32 %v295, %v295
    %v304 = vmul.f32 %v296, %v296
    %v305 = vmul.f32 %v297, %v297
    %v306 = vmul.f32 %v298, %v298
    %v307 = vmul.f32 %v299, %v299
    %v308 = vmul.f32 %v300, %v300
    %v309 = vsel %vm120, %v301, 0.0
    %310 = vadd.xlane.f32.xlu0 %v309
    %v311 = vpop.xlane.xlu0 %310
    %v312 = vsel %vm120, %v302, 0.0
    %313 = vadd.xlane.f32.xlu0 %v312
    %v314 = vpop.xlane.xlu0 %313
    %v315 = vsel %vm120, %v303, 0.0
    %316 = vadd.xlane.f32.xlu0 %v315
    %v317 = vpop.xlane.xlu0 %316
    %v318 = vsel %vm120, %v304, 0.0
    %319 = vadd.xlane.f32.xlu0 %v318
    %v320 = vpop.xlane.xlu0 %319
    %v321 = vsel %vm120, %v305, 0.0
    %322 = vadd.xlane.f32.xlu0 %v321
    %v323 = vpop.xlane.xlu0 %322
    %v324 = vsel %vm120, %v306, 0.0
    %325 = vadd.xlane.f32.xlu0 %v324
    %v326 = vpop.xlane.xlu0 %325
    %v327 = vsel %vm120, %v307, 0.0
    %328 = vadd.xlane.f32.xlu0 %v327
    %v329 = vpop.xlane.xlu0 %328
    %v330 = vsel %vm120, %v308, 0.0
    %331 = vadd.xlane.f32.xlu0 %v330
    %v332 = vpop.xlane.xlu0 %331
    %v333 = vmul.f32 %v311, 0.032258064
    %v334 = vmul.f32 %v314, 0.032258064
    %v335 = vmul.f32 %v317, 0.032258064
    %v336 = vmul.f32 %v320, 0.032258064
    %v337 = vmul.f32 %v323, 0.032258064
    %v338 = vmul.f32 %v326, 0.032258064
    %v339 = vmul.f32 %v329, 0.032258064
    %v340 = vmul.f32 %v332, 0.032258064
    %v341 = vrsqrt.pop %v333
    %v342 = vmul.f32 %v333, %v341
    %vm343 = vcmp.eq.f32.partialorder %v333, inf
    %v344 = vsel %vm343, %v333, %v342
    %vm345 = vcmp.eq.f32.partialorder %v333, 0.0
    %v346 = vand.u32 %v333, 2147483648
    %v347 = vsel %vm345, %v346, %v344
    %v348 = vrsqrt.pop %v334
    %v349 = vmul.f32 %v334, %v348
    %vm350 = vcmp.eq.f32.partialorder %v334, inf
    %v351 = vsel %vm350, %v334, %v349
    %vm352 = vcmp.eq.f32.partialorder %v334, 0.0
    %v353 = vand.u32 %v334, 2147483648
    %v354 = vsel %vm352, %v353, %v351
    %v355 = vrsqrt.pop %v335
    %v356 = vmul.f32 %v335, %v355
    %vm357 = vcmp.eq.f32.partialorder %v335, inf
    %v358 = vsel %vm357, %v335, %v356
    %vm359 = vcmp.eq.f32.partialorder %v335, 0.0
    %v360 = vand.u32 %v335, 2147483648
    %v361 = vsel %vm359, %v360, %v358
    %v362 = vrsqrt.pop %v336
    %v363 = vmul.f32 %v336, %v362
    %vm364 = vcmp.eq.f32.partialorder %v336, inf
    %v365 = vsel %vm364, %v336, %v363
    %vm366 = vcmp.eq.f32.partialorder %v336, 0.0
    %v367 = vand.u32 %v336, 2147483648
    %v368 = vsel %vm366, %v367, %v365
    %v369 = vrsqrt.pop %v337
    %v370 = vmul.f32 %v337, %v369
    %vm371 = vcmp.eq.f32.partialorder %v337, inf
    %v372 = vsel %vm371, %v337, %v370
    %vm373 = vcmp.eq.f32.partialorder %v337, 0.0
    %v374 = vand.u32 %v337, 2147483648
    %v375 = vsel %vm373, %v374, %v372
    %v376 = vrsqrt.pop %v338
    %v377 = vmul.f32 %v338, %v376
    %vm378 = vcmp.eq.f32.partialorder %v338, inf
    %v379 = vsel %vm378, %v338, %v377
    %vm380 = vcmp.eq.f32.partialorder %v338, 0.0
    %v381 = vand.u32 %v338, 2147483648
    %v382 = vsel %vm380, %v381, %v379
    %v383 = vrsqrt.pop %v339
    %v384 = vmul.f32 %v339, %v383
    %vm385 = vcmp.eq.f32.partialorder %v339, inf
    %v386 = vsel %vm385, %v339, %v384
    %vm387 = vcmp.eq.f32.partialorder %v339, 0.0
    %v388 = vand.u32 %v339, 2147483648
    %v389 = vsel %vm387, %v388, %v386
    %v390 = vrsqrt.pop %v340
    %v391 = vmul.f32 %v340, %v390
    %vm392 = vcmp.eq.f32.partialorder %v340, inf
    %v393 = vsel %vm392, %v340, %v391
    %vm394 = vcmp.eq.f32.partialorder %v340, 0.0
    %v395 = vand.u32 %v340, 2147483648
    %v396 = vsel %vm394, %v395, %v393
    %v397 = vadd.f32 %v347, 1e-06
    %v398 = vadd.f32 %v354, 1e-06
    %v399 = vadd.f32 %v361, 1e-06
    %v400 = vadd.f32 %v368, 1e-06
    %v401 = vadd.f32 %v375, 1e-06
    %v402 = vadd.f32 %v382, 1e-06
    %v403 = vadd.f32 %v389, 1e-06
    %v404 = vadd.f32 %v396, 1e-06
    %v405 = vrcp.pop %v397
    %v406 = vmul.f32 1.0, %v405
    %v407 = vrcp.pop %v398
    %v408 = vmul.f32 1.0, %v407
    %v409 = vrcp.pop %v399
    %v410 = vmul.f32 1.0, %v409
    %v411 = vrcp.pop %v400
    %v412 = vmul.f32 1.0, %v411
    %v413 = vrcp.pop %v401
    %v414 = vmul.f32 1.0, %v413
    %v415 = vrcp.pop %v402
    %v416 = vmul.f32 1.0, %v415
    %v417 = vrcp.pop %v403
    %v418 = vmul.f32 1.0, %v417
    %v419 = vrcp.pop %v404
    %v420 = vmul.f32 1.0, %v419
    %v421 = vlaneseq
    %v422 = vshrl.u32 %v421, 7
    %v423 = vsub.s32 0, %v422
    %v424 = vrot.slane %v258, %v423
    %v425 = vmul.f32 %v424, %v293
    %v426 = vmul.f32 %v424, %v294
    %v427 = vmul.f32 %v424, %v295
    %v428 = vmul.f32 %v424, %v296
    %v429 = vmul.f32 %v424, %v297
    %v430 = vmul.f32 %v424, %v298
    %v431 = vmul.f32 %v424, %v299
    %v432 = vmul.f32 %v424, %v300
    %v433 = vmul.f32 %v425, %v406
    %v434 = vmul.f32 %v426, %v408
    %v435 = vmul.f32 %v427, %v410
    %v436 = vmul.f32 %v428, %v412
    %v437 = vmul.f32 %v429, %v414
    %v438 = vmul.f32 %v430, %v416
    %v439 = vmul.f32 %v431, %v418
    %v440 = vmul.f32 %v432, %v420
    %v441 = vlaneseq
    %v442 = vshrl.u32 %v441, 7
    %v443 = vsub.s32 0, %v442
    %v444 = vrot.slane %v259, %v443
    %v445 = vadd.f32 %v433, %v444
    %v446 = vadd.f32 %v434, %v444
    %v447 = vadd.f32 %v435, %v444
    %v448 = vadd.f32 %v436, %v444
    %v449 = vadd.f32 %v437, %v444
    %v450 = vadd.f32 %v438, %v444
    %v451 = vadd.f32 %v439, %v444
    %v452 = vadd.f32 %v440, %v444
    %v453 = vld [vmem:[%s3] sm:$0xff]
    %v454 = vld [vmem:[%s3 + $0x8] sm:$0xff]
    %v455 = vld [vmem:[%s3 + $0x10] sm:$0xff]
    %v456 = vld [vmem:[%s3 + $0x18] sm:$0xff]
    %v457 = vld [vmem:[%s3 + $0x20] sm:$0xff]
    %v458 = vld [vmem:[%s3 + $0x28] sm:$0xff]
    %v459 = vld [vmem:[%s3 + $0x30] sm:$0xff]
    %v460 = vld [vmem:[%s3 + $0x38] sm:$0xff]
    %s461 = scalar_lea.vmem %s1, 32
    %v462 = vld [vmem:[%s461] sm:$0xff]
    %v463 = vld [vmem:[%s461 + $0x8] sm:$0xff]
    %v464 = vld [vmem:[%s461 + $0x10] sm:$0xff]
    %v465 = vld [vmem:[%s461 + $0x18] sm:$0xff]
    %v466 = vld [vmem:[%s2 + $0x3] sm:$0x1]
    %s467 = scalar_lea.vmem %s1, 64
    %v468 = vld [vmem:[%s467] sm:$0xff]
    %v469 = vld [vmem:[%s467 + $0x8] sm:$0xff]
    %v470 = vld [vmem:[%s467 + $0x10] sm:$0xff]
    %v471 = vld [vmem:[%s467 + $0x18] sm:$0xff]
    %v472 = vld [vmem:[%s2 + $0x4] sm:$0x1]
    %s473 = scalar_lea.vmem %s1, 96
    %v474 = vld [vmem:[%s473] sm:$0xff]
    %v475 = vld [vmem:[%s473 + $0x8] sm:$0xff]
    %v476 = vld [vmem:[%s473 + $0x10] sm:$0xff]
    %v477 = vld [vmem:[%s473 + $0x18] sm:$0xff]
    %v478 = vld [vmem:[%s2 + $0x5] sm:$0x1]
    %s479 = scalar_lea.vmem %s1, 128
    %v480 = vld [vmem:[%s479] sm:$0xff]
    %v481 = vld [vmem:[%s479 + $0x8] sm:$0xff]
    %v482 = vld [vmem:[%s479 + $0x10] sm:$0xff]
    %v483 = vld [vmem:[%s479 + $0x18] sm:$0xff]
    %v484 = vld [vmem:[%s2 + $0x6] sm:$0x1]
    %v485 = vld [vmem:[%s2 + $0x7] sm:$0x1]
    %v486 = vld [vmem:[%s2 + $0x8] sm:$0x1]
    %v487 = vadd.f32 %v445, %v453
    %v488 = vadd.f32 %v446, %v454
    %v489 = vadd.f32 %v447, %v455
    %v490 = vadd.f32 %v448, %v456
    %v491 = vadd.f32 %v449, %v457
    %v492 = vadd.f32 %v450, %v458
    %v493 = vadd.f32 %v451, %v459
    %v494 = vadd.f32 %v452, %v460
    %v495 = vlaneseq
    %v496 = vshrl.u32 %v495, 7
    %v497 = vsub.s32 0, %v496
    %v498 = vrot.slane %v466, %v497
    %v500 = vsel %vm120, %v487, 0
    %v503 = vsel %vm120, %v488, 0
    %v506 = vsel %vm120, %v489, 0
    %v509 = vsel %vm120, %v490, 0
    %v512 = vsel %vm120, %v491, 0
    %v515 = vsel %vm120, %v492, 0
    %v518 = vsel %vm120, %v493, 0
    %v521 = vsel %vm120, %v494, 0
    %523 = vmatprep.subr.mxu0 0.0
    %524 = vmatpush1.msra.mxu0 %v462
    %525 = vmatprep.subr.mxu0 0.0
    %526 = vmatpush1.msra.mxu0 %v463
    %527 = vmatprep.subr.mxu0 0.0
    %528 = vmatpush1.msra.mxu0 %v464
    %529 = vmatprep.subr.mxu0 0.0
    %530 = vmatpush1.msra.mxu0 %v465
    %531 = vmatprep.subr.mxu0 0.0
    %532 = vmatpush1.msra.mxu0 0.0
    %533 = vmatprep.subr.mxu0 0.0
    %534 = vmatpush1.msra.mxu0 0.0
    %535 = vmatprep.subr.mxu0 0.0
    %536 = vmatpush1.msra.mxu0 0.0
    %537 = vmatprep.subr.mxu0 0.0
    %538 = vmatpush1.msra.mxu0 0.0
    %539 = vmatprep.subr.mxu0 0.0
    %540 = vmatpush1.msra.mxu0 0.0
    %541 = vmatprep.subr.mxu0 0.0
    %542 = vmatpush1.msra.mxu0 0.0
    %543 = vmatprep.subr.mxu0 0.0
    %544 = vmatpush1.msra.mxu0 0.0
    %545 = vmatprep.subr.mxu0 0.0
    %546 = vmatpush1.msra.mxu0 0.0
    %547 = vmatprep.subr.mxu0 0.0
    %548 = vmatpush1.msra.mxu0 0.0
    %549 = vmatprep.subr.mxu0 0.0
    %550 = vmatpush1.msra.mxu0 0.0
    %551 = vmatprep.subr.mxu0 0.0
    %552 = vmatpush1.msra.mxu0 0.0
    %553 = vmatprep.subr.mxu0 0.0
    %554 = vmatpush1.msra.mxu0 0.0
    %555 = vmatprep.subr.mxu0 0.0
    %556 = vmatpush1.msra.mxu0 0.0
    %557 = vmatprep.subr.mxu0 0.0
    %558 = vmatpush1.msra.mxu0 0.0
    %559 = vmatprep.subr.mxu0 0.0
    %560 = vmatpush1.msra.mxu0 0.0
    %561 = vmatprep.subr.mxu0 0.0
    %562 = vmatpush1.msra.mxu0 0.0
    %563 = vmatprep.subr.mxu0 0.0
    %564 = vmatpush1.msra.mxu0 0.0
    %565 = vmatprep.subr.mxu0 0.0
    %566 = vmatpush1.msra.mxu0 0.0
    %567 = vmatprep.subr.mxu0 0.0
    %568 = vmatpush1.msra.mxu0 0.0
    %569 = vmatprep.subr.mxu0 0.0
    %570 = vmatpush1.msra.mxu0 0.0
    %571 = vmatprep.subr.mxu0 0.0
    %572 = vmatpush1.msra.mxu0 0.0
    %573 = vmatprep.subr.mxu0 0.0
    %574 = vmatpush1.msra.mxu0 0.0
    %575 = vmatprep.subr.mxu0 0.0
    %576 = vmatpush1.msra.mxu0 0.0
    %577 = vmatprep.subr.mxu0 0.0
    %578 = vmatpush1.msra.mxu0 0.0
    %579 = vmatprep.subr.mxu0 0.0
    %580 = vmatpush1.msra.mxu0 0.0
    %581 = vmatprep.subr.mxu0 0.0
    %582 = vmatpush1.msra.mxu0 0.0
    %583 = vmatprep.subr.mxu0 0.0
    %584 = vmatpush1.msra.mxu0 0.0
    %585 = vmatprep.subr.mxu0 0.0
    %586 = vmatpush1.msra.mxu0 0.0
    %587 = vmatprep.mubr.f32.mxu0 0.0
    %588 = vmatmul.mubr.f32.gmra.mrb[0].mxu0 %v500
    %v589 = vpop.f32.mrb[0].mxu0
    %v590 = vadd.f32 %v498, %v589
    %v591 = vpop.f32.mrb[0].mxu0
    %592 = vmatprep.mubr.f32.mxu0 0.0
    %593 = vmatmul.mubr.f32.gmra.mrb[0].mxu0 %v503
    %v594 = vpop.f32.mrb[0].mxu0
    %v595 = vadd.f32 %v498, %v594
    %v596 = vpop.f32.mrb[0].mxu0
    %597 = vmatprep.mubr.f32.mxu0 0.0
    %598 = vmatmul.mubr.f32.gmra.mrb[0].mxu0 %v506
    %v599 = vpop.f32.mrb[0].mxu0
    %v600 = vadd.f32 %v498, %v599
    %v601 = vpop.f32.mrb[0].mxu0
    %602 = vmatprep.mubr.f32.mxu0 0.0
    %603 = vmatmul.mubr.f32.gmra.mrb[0].mxu0 %v509
    %v604 = vpop.f32.mrb[0].mxu0
    %v605 = vadd.f32 %v498, %v604
    %v606 = vpop.f32.mrb[0].mxu0
    %607 = vmatprep.mubr.f32.mxu0 0.0
    %608 = vmatmul.mubr.f32.gmra.mrb[0].mxu0 %v512
    %v609 = vpop.f32.mrb[0].mxu0
    %v610 = vadd.f32 %v498, %v609
    %v611 = vpop.f32.mrb[0].mxu0
    %612 = vmatprep.mubr.f32.mxu0 0.0
    %613 = vmatmul.mubr.f32.gmra.mrb[0].mxu0 %v515
    %v614 = vpop.f32.mrb[0].mxu0
    %v615 = vadd.f32 %v498, %v614
    %v616 = vpop.f32.mrb[0].mxu0
    %617 = vmatprep.mubr.f32.mxu0 0.0
    %618 = vmatmul.mubr.f32.gmra.mrb[0].mxu0 %v518
    %v619 = vpop.f32.mrb[0].mxu0
    %v620 = vadd.f32 %v498, %v619
    %v621 = vpop.f32.mrb[0].mxu0
    %622 = vmatprep.mubr.f32.mxu0 0.0
    %623 = vmatmul.mubr.f32.gmra.mrb[0].mxu0 %v521
    %v624 = vpop.f32.mrb[0].mxu0
    %v625 = vadd.f32 %v498, %v624
    %v626 = vpop.f32.mrb[0].mxu0
    %627 = vdwg.mxu0
    %v628 = vlaneseq
    %v629 = vshrl.u32 %v628, 7
    %v630 = vsub.s32 0, %v629
    %v631 = vrot.slane %v472, %v630
    %632 = vmatprep.subr.mxu0 0.0
    %633 = vmatpush1.msra.mxu0 %v468
    %634 = vmatprep.subr.mxu0 0.0
    %635 = vmatpush1.msra.mxu0 %v469
    %636 = vmatprep.subr.mxu0 0.0
    %637 = vmatpush1.msra.mxu0 %v470
    %638 = vmatprep.subr.mxu0 0.0
    %639 = vmatpush1.msra.mxu0 %v471
    %640 = vmatprep.subr.mxu0 0.0
    %641 = vmatpush1.msra.mxu0 0.0
    %642 = vmatprep.subr.mxu0 0.0
    %643 = vmatpush1.msra.mxu0 0.0
    %644 = vmatprep.subr.mxu0 0.0
    %645 = vmatpush1.msra.mxu0 0.0
    %646 = vmatprep.subr.mxu0 0.0
    %647 = vmatpush1.msra.mxu0 0.0
    %648 = vmatprep.subr.mxu0 0.0
    %649 = vmatpush1.msra.mxu0 0.0
    %650 = vmatprep.subr.mxu0 0.0
    %651 = vmatpush1.msra.mxu0 0.0
    %652 = vmatprep.subr.mxu0 0.0
    %653 = vmatpush1.msra.mxu0 0.0
    %654 = vmatprep.subr.mxu0 0.0
    %655 = vmatpush1.msra.mxu0 0.0
    %656 = vmatprep.subr.mxu0 0.0
    %657 = vmatpush1.msra.mxu0 0.0
    %658 = vmatprep.subr.mxu0 0.0
    %659 = vmatpush1.msra.mxu0 0.0
    %660 = vmatprep.subr.mxu0 0.0
    %661 = vmatpush1.msra.mxu0 0.0
    %662 = vmatprep.subr.mxu0 0.0
    %663 = vmatpush1.msra.mxu0 0.0
    %664 = vmatprep.subr.mxu0 0.0
    %665 = vmatpush1.msra.mxu0 0.0
    %666 = vmatprep.subr.mxu0 0.0
    %667 = vmatpush1.msra.mxu0 0.0
    %668 = vmatprep.subr.mxu0 0.0
    %669 = vmatpush1.msra.mxu0 0.0
    %670 = vmatprep.subr.mxu0 0.0
    %671 = vmatpush1.msra.mxu0 0.0
    %672 = vmatprep.subr.mxu0 0.0
    %673 = vmatpush1.msra.mxu0 0.0
    %674 = vmatprep.subr.mxu0 0.0
    %675 = vmatpush1.msra.mxu0 0.0
    %676 = vmatprep.subr.mxu0 0.0
    %677 = vmatpush1.msra.mxu0 0.0
    %678 = vmatprep.subr.mxu0 0.0
    %679 = vmatpush1.msra.mxu0 0.0
    %680 = vmatprep.subr.mxu0 0.0
    %681 = vmatpush1.msra.mxu0 0.0
    %682 = vmatprep.subr.mxu0 0.0
    %683 = vmatpush1.msra.mxu0 0.0
    %684 = vmatprep.subr.mxu0 0.0
    %685 = vmatpush1.msra.mxu0 0.0
    %686 = vmatprep.subr.mxu0 0.0
    %687 = vmatpush1.msra.mxu0 0.0
    %688 = vmatprep.subr.mxu0 0.0
    %689 = vmatpush1.msra.mxu0 0.0
    %690 = vmatprep.subr.mxu0 0.0
    %691 = vmatpush1.msra.mxu0 0.0
    %692 = vmatprep.subr.mxu0 0.0
    %693 = vmatpush1.msra.mxu0 0.0
    %694 = vmatprep.subr.mxu0 0.0
    %695 = vmatpush1.msra.mxu0 0.0
    %696 = vmatprep.mubr.f32.mxu0 0.0
    %697 = vmatmul.mubr.f32.gmra.mrb[0].mxu0 %v500
    %v698 = vpop.f32.mrb[0].mxu0
    %v699 = vadd.f32 %v631, %v698
    %v700 = vpop.f32.mrb[0].mxu0
    %701 = vmatprep.mubr.f32.mxu0 0.0
    %702 = vmatmul.mubr.f32.gmra.mrb[0].mxu0 %v503
    %v703 = vpop.f32.mrb[0].mxu0
    %v704 = vadd.f32 %v631, %v703
    %v705 = vpop.f32.mrb[0].mxu0
    %706 = vmatprep.mubr.f32.mxu0 0.0
    %707 = vmatmul.mubr.f32.gmra.mrb[0].mxu0 %v506
    %v708 = vpop.f32.mrb[0].mxu0
    %v709 = vadd.f32 %v631, %v708
    %v710 = vpop.f32.mrb[0].mxu0
    %711 = vmatprep.mubr.f32.mxu0 0.0
    %712 = vmatmul.mubr.f32.gmra.mrb[0].mxu0 %v509
    %v713 = vpop.f32.mrb[0].mxu0
    %v714 = vadd.f32 %v631, %v713
    %v715 = vpop.f32.mrb[0].mxu0
    %716 = vmatprep.mubr.f32.mxu0 0.0
    %717 = vmatmul.mubr.f32.gmra.mrb[0].mxu0 %v512
    %v718 = vpop.f32.mrb[0].mxu0
    %v719 = vadd.f32 %v631, %v718
    %v720 = vpop.f32.mrb[0].mxu0
    %721 = vmatprep.mubr.f32.mxu0 0.0
    %722 = vmatmul.mubr.f32.gmra.mrb[0].mxu0 %v515
    %v723 = vpop.f32.mrb[0].mxu0
    %v724 = vadd.f32 %v631, %v723
    %v725 = vpop.f32.mrb[0].mxu0
    %726 = vmatprep.mubr.f32.mxu0 0.0
    %727 = vmatmul.mubr.f32.gmra.mrb[0].mxu0 %v518
    %v728 = vpop.f32.mrb[0].mxu0
    %v729 = vadd.f32 %v631, %v728
    %v730 = vpop.f32.mrb[0].mxu0
    %731 = vmatprep.mubr.f32.mxu0 0.0
    %732 = vmatmul.mubr.f32.gmra.mrb[0].mxu0 %v521
    %v733 = vpop.f32.mrb[0].mxu0
    %v734 = vadd.f32 %v631, %v733
    %v735 = vpop.f32.mrb[0].mxu0
    %736 = vdwg.mxu0
    %v737 = vlaneseq
    %v738 = vshrl.u32 %v737, 7
    %v739 = vsub.s32 0, %v738
    %v740 = vrot.slane %v478, %v739
    %741 = vmatprep.subr.mxu0 0.0
    %742 = vmatpush1.msra.mxu0 %v474
    %743 = vmatprep.subr.mxu0 0.0
    %744 = vmatpush1.msra.mxu0 %v475
    %745 = vmatprep.subr.mxu0 0.0
    %746 = vmatpush1.msra.mxu0 %v476
    %747 = vmatprep.subr.mxu0 0.0
    %748 = vmatpush1.msra.mxu0 %v477
    %749 = vmatprep.subr.mxu0 0.0
    %750 = vmatpush1.msra.mxu0 0.0
    %751 = vmatprep.subr.mxu0 0.0
    %752 = vmatpush1.msra.mxu0 0.0
    %753 = vmatprep.subr.mxu0 0.0
    %754 = vmatpush1.msra.mxu0 0.0
    %755 = vmatprep.subr.mxu0 0.0
    %756 = vmatpush1.msra.mxu0 0.0
    %757 = vmatprep.subr.mxu0 0.0
    %758 = vmatpush1.msra.mxu0 0.0
    %759 = vmatprep.subr.mxu0 0.0
    %760 = vmatpush1.msra.mxu0 0.0
    %761 = vmatprep.subr.mxu0 0.0
    %762 = vmatpush1.msra.mxu0 0.0
    %763 = vmatprep.subr.mxu0 0.0
    %764 = vmatpush1.msra.mxu0 0.0
    %765 = vmatprep.subr.mxu0 0.0
    %766 = vmatpush1.msra.mxu0 0.0
    %767 = vmatprep.subr.mxu0 0.0
    %768 = vmatpush1.msra.mxu0 0.0
    %769 = vmatprep.subr.mxu0 0.0
    %770 = vmatpush1.msra.mxu0 0.0
    %771 = vmatprep.subr.mxu0 0.0
    %772 = vmatpush1.msra.mxu0 0.0
    %773 = vmatprep.subr.mxu0 0.0
    %774 = vmatpush1.msra.mxu0 0.0
    %775 = vmatprep.subr.mxu0 0.0
    %776 = vmatpush1.msra.mxu0 0.0
    %777 = vmatprep.subr.mxu0 0.0
    %778 = vmatpush1.msra.mxu0 0.0
    %779 = vmatprep.subr.mxu0 0.0
    %780 = vmatpush1.msra.mxu0 0.0
    %781 = vmatprep.subr.mxu0 0.0
    %782 = vmatpush1.msra.mxu0 0.0
    %783 = vmatprep.subr.mxu0 0.0
    %784 = vmatpush1.msra.mxu0 0.0
    %785 = vmatprep.subr.mxu0 0.0
    %786 = vmatpush1.msra.mxu0 0.0
    %787 = vmatprep.subr.mxu0 0.0
    %788 = vmatpush1.msra.mxu0 0.0
    %789 = vmatprep.subr.mxu0 0.0
    %790 = vmatpush1.msra.mxu0 0.0
    %791 = vmatprep.subr.mxu0 0.0
    %792 = vmatpush1.msra.mxu0 0.0
    %793 = vmatprep.subr.mxu0 0.0
    %794 = vmatpush1.msra.mxu0 0.0
    %795 = vmatprep.subr.mxu0 0.0
    %796 = vmatpush1.msra.mxu0 0.0
    %797 = vmatprep.subr.mxu0 0.0
    %798 = vmatpush1.msra.mxu0 0.0
    %799 = vmatprep.subr.mxu0 0.0
    %800 = vmatpush1.msra.mxu0 0.0
    %801 = vmatprep.subr.mxu0 0.0
    %802 = vmatpush1.msra.mxu0 0.0
    %803 = vmatprep.subr.mxu0 0.0
    %804 = vmatpush1.msra.mxu0 0.0
    %805 = vmatprep.mubr.f32.mxu0 0.0
    %806 = vmatmul.mubr.f32.gmra.mrb[0].mxu0 %v500
    %v807 = vpop.f32.mrb[0].mxu0
    %v808 = vadd.f32 %v740, %v807
    %v809 = vpop.f32.mrb[0].mxu0
    %810 = vmatprep.mubr.f32.mxu0 0.0
    %811 = vmatmul.mubr.f32.gmra.mrb[0].mxu0 %v503
    %v812 = vpop.f32.mrb[0].mxu0
    %v813 = vadd.f32 %v740, %v812
    %v814 = vpop.f32.mrb[0].mxu0
    %815 = vmatprep.mubr.f32.mxu0 0.0
    %816 = vmatmul.mubr.f32.gmra.mrb[0].mxu0 %v506
    %v817 = vpop.f32.mrb[0].mxu0
    %v818 = vadd.f32 %v740, %v817
    %v819 = vpop.f32.mrb[0].mxu0
    %820 = vmatprep.mubr.f32.mxu0 0.0
    %821 = vmatmul.mubr.f32.gmra.mrb[0].mxu0 %v509
    %v822 = vpop.f32.mrb[0].mxu0
    %v823 = vadd.f32 %v740, %v822
    %v824 = vpop.f32.mrb[0].mxu0
    %825 = vmatprep.mubr.f32.mxu0 0.0
    %826 = vmatmul.mubr.f32.gmra.mrb[0].mxu0 %v512
    %v827 = vpop.f32.mrb[0].mxu0
    %v828 = vadd.f32 %v740, %v827
    %v829 = vpop.f32.mrb[0].mxu0
    %830 = vmatprep.mubr.f32.mxu0 0.0
    %831 = vmatmul.mubr.f32.gmra.mrb[0].mxu0 %v515
    %v832 = vpop.f32.mrb[0].mxu0
    %v833 = vadd.f32 %v740, %v832
    %v834 = vpop.f32.mrb[0].mxu0
    %835 = vmatprep.mubr.f32.mxu0 0.0
    %836 = vmatmul.mubr.f32.gmra.mrb[0].mxu0 %v518
    %v837 = vpop.f32.mrb[0].mxu0
    %v838 = vadd.f32 %v740, %v837
    %v839 = vpop.f32.mrb[0].mxu0
    %840 = vmatprep.mubr.f32.mxu0 0.0
    %841 = vmatmul.mubr.f32.gmra.mrb[0].mxu0 %v521
    %v842 = vpop.f32.mrb[0].mxu0
    %v843 = vadd.f32 %v740, %v842
    %v844 = vpop.f32.mrb[0].mxu0
    %845 = vdwg.mxu0
    %v846 = vmax.f32 %v808, 0.0
    %v847 = vmax.f32 %v813, 0.0
    %v848 = vmax.f32 %v818, 0.0
    %v849 = vmax.f32 %v823, 0.0
    %v850 = vmax.f32 %v828, 0.0
    %v851 = vmax.f32 %v833, 0.0
    %v852 = vmax.f32 %v838, 0.0
    %v853 = vmax.f32 %v843, 0.0
    %v854 = vpack.c.bf16 %v595, %v590
    %v855 = vpack.c.bf16 %v605, %v600
    %v856 = vpack.c.bf16 %v615, %v610
    %v857 = vpack.c.bf16 %v625, %v620
    %v890 = vunpack.c.l.b16 %v31
    %v891 = vunpack.c.l.b16 %v32
    %v892 = vunpack.c.l.b16 %v33
    %v893 = vunpack.c.l.b16 %v34
    %v894 = vunpack.c.l.b16 %v35
    %v895 = vunpack.c.l.b16 %v36
    %v896 = vunpack.c.l.b16 %v37
    %v897 = vunpack.c.l.b16 %v38
    %v898 = vunpack.c.l.b16 %v39
    %v899 = vunpack.c.l.b16 %v40
    %v900 = vunpack.c.l.b16 %v41
    %v901 = vunpack.c.l.b16 %v42
    %v902 = vunpack.c.l.b16 %v43
    %v903 = vunpack.c.l.b16 %v44
    %v904 = vunpack.c.l.b16 %v45
    %v905 = vunpack.c.l.b16 %v46
    %v906 = vunpack.c.l.b16 %v47
    %v907 = vunpack.c.l.b16 %v48
    %v908 = vunpack.c.l.b16 %v49
    %v909 = vunpack.c.l.b16 %v50
    %v910 = vunpack.c.l.b16 %v51
    %v911 = vunpack.c.l.b16 %v52
    %v912 = vunpack.c.l.b16 %v53
    %v913 = vunpack.c.l.b16 %v54
    %v914 = vunpack.c.l.b16 %v55
    %v915 = vunpack.c.l.b16 %v56
    %v916 = vunpack.c.l.b16 %v57
    %v917 = vunpack.c.l.b16 %v58
    %v918 = vunpack.c.l.b16 %v59
    %v919 = vunpack.c.l.b16 %v60
    %v920 = vunpack.c.l.b16 %v61
    %v921 = vunpack.c.l.b16 %v62
    %v922 = vpack.c.b16 %v891, %v890
    %v923 = vpack.c.b16 %v893, %v892
    %v924 = vpack.c.b16 %v895, %v894
    %v925 = vpack.c.b16 %v897, %v896
    %v926 = vpack.c.b16 %v899, %v898
    %v927 = vpack.c.b16 %v901, %v900
    %v928 = vpack.c.b16 %v903, %v902
    %v929 = vpack.c.b16 %v905, %v904
    %v930 = vpack.c.b16 %v907, %v906
    %v931 = vpack.c.b16 %v909, %v908
    %v932 = vpack.c.b16 %v911, %v910
    %v933 = vpack.c.b16 %v913, %v912
    %v934 = vpack.c.b16 %v915, %v914
    %v935 = vpack.c.b16 %v917, %v916
    %v936 = vpack.c.b16 %v919, %v918
    %v937 = vpack.c.b16 %v921, %v920
    %vm938 = vcmask 523264
    %v940 = vsel %vm938, %v922, 0
    %v943 = vsel %vm938, %v923, 0
    %v946 = vsel %vm938, %v924, 0
    %v949 = vsel %vm938, %v925, 0
    %v952 = vsel %vm938, %v926, 0
    %v955 = vsel %vm938, %v927, 0
    %v958 = vsel %vm938, %v928, 0
    %v961 = vsel %vm938, %v929, 0
    %v964 = vsel %vm938, %v930, 0
    %v967 = vsel %vm938, %v931, 0
    %v970 = vsel %vm938, %v932, 0
    %v973 = vsel %vm938, %v933, 0
    %v976 = vsel %vm938, %v934, 0
    %v979 = vsel %vm938, %v935, 0
    %v982 = vsel %vm938, %v936, 0
    %v985 = vsel %vm938, %v937, 0
    %987 = vmatprep.subr.bf16.mxu0 0
    %988 = vmatpush1.bf16.msra.mxu0 %v854
    %989 = vmatprep.subr.bf16.mxu0 0
    %990 = vmatpush1.bf16.msra.mxu0 %v855
    %991 = vmatprep.subr.bf16.mxu0 0
    %992 = vmatpush1.bf16.msra.mxu0 %v856
    %993 = vmatprep.subr.bf16.mxu0 0
    %994 = vmatpush1.bf16.msra.mxu0 %v857
    %995 = vmatprep.subr.bf16.mxu0 0
    %996 = vmatpush1.bf16.msra.mxu0 0
    %997 = vmatprep.subr.bf16.mxu0 0
    %998 = vmatpush1.bf16.msra.mxu0 0
    %999 = vmatprep.subr.bf16.mxu0 0
    %1000 = vmatpush1.bf16.msra.mxu0 0
    %1001 = vmatprep.subr.bf16.mxu0 0
    %1002 = vmatpush1.bf16.msra.mxu0 0
    %1003 = vmatprep.subr.bf16.mxu0 0
    %1004 = vmatpush1.bf16.msra.mxu0 0
    %1005 = vmatprep.subr.bf16.mxu0 0
    %1006 = vmatpush1.bf16.msra.mxu0 0
    %1007 = vmatprep.subr.bf16.mxu0 0
    %1008 = vmatpush1.bf16.msra.mxu0 0
    %1009 = vmatprep.subr.bf16.mxu0 0
    %1010 = vmatpush1.bf16.msra.mxu0 0
    %1011 = vmatprep.subr.bf16.mxu0 0
    %1012 = vmatpush1.bf16.msra.mxu0 0
    %1013 = vmatprep.subr.bf16.mxu0 0
    %1014 = vmatpush1.bf16.msra.mxu0 0
    %1015 = vmatprep.subr.bf16.mxu0 0
    %1016 = vmatpush1.bf16.msra.mxu0 0
    %1017 = vmatprep.subr.bf16.mxu0 0
    %1018 = vmatpush1.bf16.msra.mxu0 0
    %1019 = vmatprep.mubr.bf16.mxu0 0
    %1020 = vmatmul.mubr.bf16.gmra.mrb[0].mxu0 %v940
    %v1021 = vpop.f32.mrb[0].mxu0
    %v1022 = vadd.f32 0.0, %v1021
    %v1023 = vpop.f32.mrb[0].mxu0
    %v1024 = vpop.f32.mrb[0].mxu0
    %v1025 = vadd.f32 0.0, %v1024
    %v1026 = vpop.f32.mrb[0].mxu0
    %1027 = vmatprep.mubr.bf16.mxu0 0
    %1028 = vmatmul.mubr.bf16.gmra.mrb[0].mxu0 %v943
    %v1029 = vpop.f32.mrb[0].mxu0
    %v1030 = vadd.f32 0.0, %v1029
    %v1031 = vpop.f32.mrb[0].mxu0
    %v1032 = vpop.f32.mrb[0].mxu0
    %v1033 = vadd.f32 0.0, %v1032
    %v1034 = vpop.f32.mrb[0].mxu0
    %1035 = vmatprep.mubr.bf16.mxu0 0
    %1036 = vmatmul.mubr.bf16.gmra.mrb[0].mxu0 %v946
    %v1037 = vpop.f32.mrb[0].mxu0
    %v1038 = vadd.f32 0.0, %v1037
    %v1039 = vpop.f32.mrb[0].mxu0
    %v1040 = vpop.f32.mrb[0].mxu0
    %v1041 = vadd.f32 0.0, %v1040
    %v1042 = vpop.f32.mrb[0].mxu0
    %1043 = vmatprep.mubr.bf16.mxu0 0
    %1044 = vmatmul.mubr.bf16.gmra.mrb[0].mxu0 %v949
    %v1045 = vpop.f32.mrb[0].mxu0
    %v1046 = vadd.f32 0.0, %v1045
    %v1047 = vpop.f32.mrb[0].mxu0
    %v1048 = vpop.f32.mrb[0].mxu0
    %v1049 = vadd.f32 0.0, %v1048
    %v1050 = vpop.f32.mrb[0].mxu0
    %1051 = vmatprep.mubr.bf16.mxu0 0
    %1052 = vmatmul.mubr.bf16.gmra.mrb[0].mxu0 %v952
    %v1053 = vpop.f32.mrb[0].mxu0
    %v1054 = vadd.f32 0.0, %v1053
    %v1055 = vpop.f32.mrb[0].mxu0
    %v1056 = vpop.f32.mrb[0].mxu0
    %v1057 = vadd.f32 0.0, %v1056
    %v1058 = vpop.f32.mrb[0].mxu0
    %1059 = vmatprep.mubr.bf16.mxu0 0
    %1060 = vmatmul.mubr.bf16.gmra.mrb[0].mxu0 %v955
    %v1061 = vpop.f32.mrb[0].mxu0
    %v1062 = vadd.f32 0.0, %v1061
    %v1063 = vpop.f32.mrb[0].mxu0
    %v1064 = vpop.f32.mrb[0].mxu0
    %v1065 = vadd.f32 0.0, %v1064
    %v1066 = vpop.f32.mrb[0].mxu0
    %1067 = vmatprep.mubr.bf16.mxu0 0
    %1068 = vmatmul.mubr.bf16.gmra.mrb[0].mxu0 %v958
    %v1069 = vpop.f32.mrb[0].mxu0
    %v1070 = vadd.f32 0.0, %v1069
    %v1071 = vpop.f32.mrb[0].mxu0
    %v1072 = vpop.f32.mrb[0].mxu0
    %v1073 = vadd.f32 0.0, %v1072
    %v1074 = vpop.f32.mrb[0].mxu0
    %1075 = vmatprep.mubr.bf16.mxu0 0
    %1076 = vmatmul.mubr.bf16.gmra.mrb[0].mxu0 %v961
    %v1077 = vpop.f32.mrb[0].mxu0
    %v1078 = vadd.f32 0.0, %v1077
    %v1079 = vpop.f32.mrb[0].mxu0
    %v1080 = vpop.f32.mrb[0].mxu0
    %v1081 = vadd.f32 0.0, %v1080
    %v1082 = vpop.f32.mrb[0].mxu0
    %1083 = vmatprep.mubr.bf16.mxu0 0
    %1084 = vmatmul.mubr.bf16.gmra.mrb[0].mxu0 %v964
    %v1085 = vpop.f32.mrb[0].mxu0
    %v1086 = vadd.f32 0.0, %v1085
    %v1087 = vpop.f32.mrb[0].mxu0
    %v1088 = vpop.f32.mrb[0].mxu0
    %v1089 = vadd.f32 0.0, %v1088
    %v1090 = vpop.f32.mrb[0].mxu0
    %1091 = vmatprep.mubr.bf16.mxu0 0
    %1092 = vmatmul.mubr.bf16.gmra.mrb[0].mxu0 %v967
    %v1093 = vpop.f32.mrb[0].mxu0
    %v1094 = vadd.f32 0.0, %v1093
    %v1095 = vpop.f32.mrb[0].mxu0
    %v1096 = vpop.f32.mrb[0].mxu0
    %v1097 = vadd.f32 0.0, %v1096
    %v1098 = vpop.f32.mrb[0].mxu0
    %1099 = vmatprep.mubr.bf16.mxu0 0
    %1100 = vmatmul.mubr.bf16.gmra.mrb[0].mxu0 %v970
    %v1101 = vpop.f32.mrb[0].mxu0
    %v1102 = vadd.f32 0.0, %v1101
    %v1103 = vpop.f32.mrb[0].mxu0
    %v1104 = vpop.f32.mrb[0].mxu0
    %v1105 = vadd.f32 0.0, %v1104
    %v1106 = vpop.f32.mrb[0].mxu0
    %1107 = vmatprep.mubr.bf16.mxu0 0
    %1108 = vmatmul.mubr.bf16.gmra.mrb[0].mxu0 %v973
    %v1109 = vpop.f32.mrb[0].mxu0
    %v1110 = vadd.f32 0.0, %v1109
    %v1111 = vpop.f32.mrb[0].mxu0
    %v1112 = vpop.f32.mrb[0].mxu0
    %v1113 = vadd.f32 0.0, %v1112
    %v1114 = vpop.f32.mrb[0].mxu0
    %1115 = vmatprep.mubr.bf16.mxu0 0
    %1116 = vmatmul.mubr.bf16.gmra.mrb[0].mxu0 %v976
    %v1117 = vpop.f32.mrb[0].mxu0
    %v1118 = vadd.f32 0.0, %v1117
    %v1119 = vpop.f32.mrb[0].mxu0
    %v1120 = vpop.f32.mrb[0].mxu0
    %v1121 = vadd.f32 0.0, %v1120
    %v1122 = vpop.f32.mrb[0].mxu0
    %1123 = vmatprep.mubr.bf16.mxu0 0
    %1124 = vmatmul.mubr.bf16.gmra.mrb[0].mxu0 %v979
    %v1125 = vpop.f32.mrb[0].mxu0
    %v1126 = vadd.f32 0.0, %v1125
    %v1127 = vpop.f32.mrb[0].mxu0
    %v1128 = vpop.f32.mrb[0].mxu0
    %v1129 = vadd.f32 0.0, %v1128
    %v1130 = vpop.f32.mrb[0].mxu0
    %1131 = vmatprep.mubr.bf16.mxu0 0
    %1132 = vmatmul.mubr.bf16.gmra.mrb[0].mxu0 %v982
    %v1133 = vpop.f32.mrb[0].mxu0
    %v1134 = vadd.f32 0.0, %v1133
    %v1135 = vpop.f32.mrb[0].mxu0
    %v1136 = vpop.f32.mrb[0].mxu0
    %v1137 = vadd.f32 0.0, %v1136
    %v1138 = vpop.f32.mrb[0].mxu0
    %1139 = vmatprep.mubr.bf16.mxu0 0
    %1140 = vmatmul.mubr.bf16.gmra.mrb[0].mxu0 %v985
    %v1141 = vpop.f32.mrb[0].mxu0
    %v1142 = vadd.f32 0.0, %v1141
    %v1143 = vpop.f32.mrb[0].mxu0
    %v1144 = vpop.f32.mrb[0].mxu0
    %v1145 = vadd.f32 0.0, %v1144
    %v1146 = vpop.f32.mrb[0].mxu0
    %1147 = vdwg.mxu0
    %v1148 = vpack.c.bf16 %v704, %v699
    %v1149 = vpack.c.bf16 %v714, %v709
    %v1150 = vpack.c.bf16 %v724, %v719
    %v1151 = vpack.c.bf16 %v734, %v729
    %1152 = vmatprep.subr.bf16.mxu0 0
    %1153 = vmatpush1.bf16.msra.mxu0 %v1148
    %1154 = vmatprep.subr.bf16.mxu0 0
    %1155 = vmatpush1.bf16.msra.mxu0 %v1149
    %1156 = vmatprep.subr.bf16.mxu0 0
    %1157 = vmatpush1.bf16.msra.mxu0 %v1150
    %1158 = vmatprep.subr.bf16.mxu0 0
    %1159 = vmatpush1.bf16.msra.mxu0 %v1151
    %1160 = vmatprep.subr.bf16.mxu0 0
    %1161 = vmatpush1.bf16.msra.mxu0 0
    %1162 = vmatprep.subr.bf16.mxu0 0
    %1163 = vmatpush1.bf16.msra.mxu0 0
    %1164 = vmatprep.subr.bf16.mxu0 0
    %1165 = vmatpush1.bf16.msra.mxu0 0
    %1166 = vmatprep.subr.bf16.mxu0 0
    %1167 = vmatpush1.bf16.msra.mxu0 0
    %1168 = vmatprep.subr.bf16.mxu0 0
    %1169 = vmatpush1.bf16.msra.mxu0 0
    %1170 = vmatprep.subr.bf16.mxu0 0
    %1171 = vmatpush1.bf16.msra.mxu0 0
    %1172 = vmatprep.subr.bf16.mxu0 0
    %1173 = vmatpush1.bf16.msra.mxu0 0
    %1174 = vmatprep.subr.bf16.mxu0 0
    %1175 = vmatpush1.bf16.msra.mxu0 0
    %1176 = vmatprep.subr.bf16.mxu0 0
    %1177 = vmatpush1.bf16.msra.mxu0 0
    %1178 = vmatprep.subr.bf16.mxu0 0
    %1179 = vmatpush1.bf16.msra.mxu0 0
    %1180 = vmatprep.subr.bf16.mxu0 0
    %1181 = vmatpush1.bf16.msra.mxu0 0
    %1182 = vmatprep.subr.bf16.mxu0 0
    %1183 = vmatpush1.bf16.msra.mxu0 0
    %1184 = vmatprep.mubr.bf16.mxu0 0
    %1185 = vmatmul.mubr.bf16.gmra.mrb[0].mxu0 %v940
    %v1186 = vpop.f32.mrb[0].mxu0
    %v1187 = vadd.f32 0.0, %v1186
    %v1188 = vpop.f32.mrb[0].mxu0
    %v1189 = vpop.f32.mrb[0].mxu0
    %v1190 = vadd.f32 0.0, %v1189
    %v1191 = vpop.f32.mrb[0].mxu0
    %1192 = vmatprep.mubr.bf16.mxu0 0
    %1193 = vmatmul.mubr.bf16.gmra.mrb[0].mxu0 %v943
    %v1194 = vpop.f32.mrb[0].mxu0
    %v1195 = vadd.f32 0.0, %v1194
    %v1196 = vpop.f32.mrb[0].mxu0
    %v1197 = vpop.f32.mrb[0].mxu0
    %v1198 = vadd.f32 0.0, %v1197
    %v1199 = vpop.f32.mrb[0].mxu0
    %1200 = vmatprep.mubr.bf16.mxu0 0
    %1201 = vmatmul.mubr.bf16.gmra.mrb[0].mxu0 %v946
    %v1202 = vpop.f32.mrb[0].mxu0
    %v1203 = vadd.f32 0.0, %v1202
    %v1204 = vpop.f32.mrb[0].mxu0
    %v1205 = vpop.f32.mrb[0].mxu0
    %v1206 = vadd.f32 0.0, %v1205
    %v1207 = vpop.f32.mrb[0].mxu0
    %1208 = vmatprep.mubr.bf16.mxu0 0
    %1209 = vmatmul.mubr.bf16.gmra.mrb[0].mxu0 %v949
    %v1210 = vpop.f32.mrb[0].mxu0
    %v1211 = vadd.f32 0.0, %v1210
    %v1212 = vpop.f32.mrb[0].mxu0
    %v1213 = vpop.f32.mrb[0].mxu0
    %v1214 = vadd.f32 0.0, %v1213
    %v1215 = vpop.f32.mrb[0].mxu0
    %1216 = vmatprep.mubr.bf16.mxu0 0
    %1217 = vmatmul.mubr.bf16.gmra.mrb[0].mxu0 %v952
    %v1218 = vpop.f32.mrb[0].mxu0
    %v1219 = vadd.f32 0.0, %v1218
    %v1220 = vpop.f32.mrb[0].mxu0
    %v1221 = vpop.f32.mrb[0].mxu0
    %v1222 = vadd.f32 0.0, %v1221
    %v1223 = vpop.f32.mrb[0].mxu0
    %1224 = vmatprep.mubr.bf16.mxu0 0
    %1225 = vmatmul.mubr.bf16.gmra.mrb[0].mxu0 %v955
    %v1226 = vpop.f32.mrb[0].mxu0
    %v1227 = vadd.f32 0.0, %v1226
    %v1228 = vpop.f32.mrb[0].mxu0
    %v1229 = vpop.f32.mrb[0].mxu0
    %v1230 = vadd.f32 0.0, %v1229
    %v1231 = vpop.f32.mrb[0].mxu0
    %1232 = vmatprep.mubr.bf16.mxu0 0
    %1233 = vmatmul.mubr.bf16.gmra.mrb[0].mxu0 %v958
    %v1234 = vpop.f32.mrb[0].mxu0
    %v1235 = vadd.f32 0.0, %v1234
    %v1236 = vpop.f32.mrb[0].mxu0
    %v1237 = vpop.f32.mrb[0].mxu0
    %v1238 = vadd.f32 0.0, %v1237
    %v1239 = vpop.f32.mrb[0].mxu0
    %1240 = vmatprep.mubr.bf16.mxu0 0
    %1241 = vmatmul.mubr.bf16.gmra.mrb[0].mxu0 %v961
    %v1242 = vpop.f32.mrb[0].mxu0
    %v1243 = vadd.f32 0.0, %v1242
    %v1244 = vpop.f32.mrb[0].mxu0
    %v1245 = vpop.f32.mrb[0].mxu0
    %v1246 = vadd.f32 0.0, %v1245
    %v1247 = vpop.f32.mrb[0].mxu0
    %1248 = vmatprep.mubr.bf16.mxu0 0
    %1249 = vmatmul.mubr.bf16.gmra.mrb[0].mxu0 %v964
    %v1250 = vpop.f32.mrb[0].mxu0
    %v1251 = vadd.f32 0.0, %v1250
    %v1252 = vpop.f32.mrb[0].mxu0
    %v1253 = vpop.f32.mrb[0].mxu0
    %v1254 = vadd.f32 0.0, %v1253
    %v1255 = vpop.f32.mrb[0].mxu0
    %1256 = vmatprep.mubr.bf16.mxu0 0
    %1257 = vmatmul.mubr.bf16.gmra.mrb[0].mxu0 %v967
    %v1258 = vpop.f32.mrb[0].mxu0
    %v1259 = vadd.f32 0.0, %v1258
    %v1260 = vpop.f32.mrb[0].mxu0
    %v1261 = vpop.f32.mrb[0].mxu0
    %v1262 = vadd.f32 0.0, %v1261
    %v1263 = vpop.f32.mrb[0].mxu0
    %1264 = vmatprep.mubr.bf16.mxu0 0
    %1265 = vmatmul.mubr.bf16.gmra.mrb[0].mxu0 %v970
    %v1266 = vpop.f32.mrb[0].mxu0
    %v1267 = vadd.f32 0.0, %v1266
    %v1268 = vpop.f32.mrb[0].mxu0
    %v1269 = vpop.f32.mrb[0].mxu0
    %v1270 = vadd.f32 0.0, %v1269
    %v1271 = vpop.f32.mrb[0].mxu0
    %1272 = vmatprep.mubr.bf16.mxu0 0
    %1273 = vmatmul.mubr.bf16.gmra.mrb[0].mxu0 %v973
    %v1274 = vpop.f32.mrb[0].mxu0
    %v1275 = vadd.f32 0.0, %v1274
    %v1276 = vpop.f32.mrb[0].mxu0
    %v1277 = vpop.f32.mrb[0].mxu0
    %v1278 = vadd.f32 0.0, %v1277
    %v1279 = vpop.f32.mrb[0].mxu0
    %1280 = vmatprep.mubr.bf16.mxu0 0
    %1281 = vmatmul.mubr.bf16.gmra.mrb[0].mxu0 %v976
    %v1282 = vpop.f32.mrb[0].mxu0
    %v1283 = vadd.f32 0.0, %v1282
    %v1284 = vpop.f32.mrb[0].mxu0
    %v1285 = vpop.f32.mrb[0].mxu0
    %v1286 = vadd.f32 0.0, %v1285
    %v1287 = vpop.f32.mrb[0].mxu0
    %1288 = vmatprep.mubr.bf16.mxu0 0
    %1289 = vmatmul.mubr.bf16.gmra.mrb[0].mxu0 %v979
    %v1290 = vpop.f32.mrb[0].mxu0
    %v1291 = vadd.f32 0.0, %v1290
    %v1292 = vpop.f32.mrb[0].mxu0
    %v1293 = vpop.f32.mrb[0].mxu0
    %v1294 = vadd.f32 0.0, %v1293
    %v1295 = vpop.f32.mrb[0].mxu0
    %1296 = vmatprep.mubr.bf16.mxu0 0
    %1297 = vmatmul.mubr.bf16.gmra.mrb[0].mxu0 %v982
    %v1298 = vpop.f32.mrb[0].mxu0
    %v1299 = vadd.f32 0.0, %v1298
    %v1300 = vpop.f32.mrb[0].mxu0
    %v1301 = vpop.f32.mrb[0].mxu0
    %v1302 = vadd.f32 0.0, %v1301
    %v1303 = vpop.f32.mrb[0].mxu0
    %1304 = vmatprep.mubr.bf16.mxu0 0
    %1305 = vmatmul.mubr.bf16.gmra.mrb[0].mxu0 %v985
    %v1306 = vpop.f32.mrb[0].mxu0
    %v1307 = vadd.f32 0.0, %v1306
    %v1308 = vpop.f32.mrb[0].mxu0
    %v1309 = vpop.f32.mrb[0].mxu0
    %v1310 = vadd.f32 0.0, %v1309
    %v1311 = vpop.f32.mrb[0].mxu0
    %1312 = vdwg.mxu0
    %v1313 = vmul.f32 %v1187, %v63
    %v1314 = vmul.f32 %v1190, %v64
    %v1315 = vmul.f32 %v1195, %v65
    %v1316 = vmul.f32 %v1198, %v66
    %v1317 = vmul.f32 %v1203, %v67
    %v1318 = vmul.f32 %v1206, %v68
    %v1319 = vmul.f32 %v1211, %v69
    %v1320 = vmul.f32 %v1214, %v70
    %v1321 = vmul.f32 %v1219, %v71
    %v1322 = vmul.f32 %v1222, %v72
    %v1323 = vmul.f32 %v1227, %v73
    %v1324 = vmul.f32 %v1230, %v74
    %v1325 = vmul.f32 %v1235, %v75
    %v1326 = vmul.f32 %v1238, %v76
    %v1327 = vmul.f32 %v1243, %v77
    %v1328 = vmul.f32 %v1246, %v78
    %v1329 = vmul.f32 %v1251, %v79
    %v1330 = vmul.f32 %v1254, %v80
    %v1331 = vmul.f32 %v1259, %v81
    %v1332 = vmul.f32 %v1262, %v82
    %v1333 = vmul.f32 %v1267, %v83
    %v1334 = vmul.f32 %v1270, %v84
    %v1335 = vmul.f32 %v1275, %v85
    %v1336 = vmul.f32 %v1278, %v86
    %v1337 = vmul.f32 %v1283, %v87
    %v1338 = vmul.f32 %v1286, %v88
    %v1339 = vmul.f32 %v1291, %v89
    %v1340 = vmul.f32 %v1294, %v90
    %v1341 = vmul.f32 %v1299, %v91
    %v1342 = vmul.f32 %v1302, %v92
    %v1343 = vmul.f32 %v1307, %v93
    %v1344 = vmul.f32 %v1310, %v94
    %v1345 = vpack.c.bf16 %v847, %v846
    %v1346 = vpack.c.bf16 %v849, %v848
    %v1347 = vpack.c.bf16 %v851, %v850
    %v1348 = vpack.c.bf16 %v853, %v852
    %1349 = vmatprep.subr.bf16.mxu0 0
    %1350 = vmatpush1.bf16.msra.mxu0 %v1345
    %1351 = vmatprep.subr.bf16.mxu0 0
    %1352 = vmatpush1.bf16.msra.mxu0 %v1346
    %1353 = vmatprep.subr.bf16.mxu0 0
    %1354 = vmatpush1.bf16.msra.mxu0 %v1347
    %1355 = vmatprep.subr.bf16.mxu0 0
    %1356 = vmatpush1.bf16.msra.mxu0 %v1348
    %1357 = vmatprep.subr.bf16.mxu0 0
    %1358 = vmatpush1.bf16.msra.mxu0 0
    %1359 = vmatprep.subr.bf16.mxu0 0
    %1360 = vmatpush1.bf16.msra.mxu0 0
    %1361 = vmatprep.subr.bf16.mxu0 0
    %1362 = vmatpush1.bf16.msra.mxu0 0
    %1363 = vmatprep.subr.bf16.mxu0 0
    %1364 = vmatpush1.bf16.msra.mxu0 0
    %1365 = vmatprep.subr.bf16.mxu0 0
    %1366 = vmatpush1.bf16.msra.mxu0 0
    %1367 = vmatprep.subr.bf16.mxu0 0
    %1368 = vmatpush1.bf16.msra.mxu0 0
    %1369 = vmatprep.subr.bf16.mxu0 0
    %1370 = vmatpush1.bf16.msra.mxu0 0
    %1371 = vmatprep.subr.bf16.mxu0 0
    %1372 = vmatpush1.bf16.msra.mxu0 0
    %1373 = vmatprep.subr.bf16.mxu0 0
    %1374 = vmatpush1.bf16.msra.mxu0 0
    %1375 = vmatprep.subr.bf16.mxu0 0
    %1376 = vmatpush1.bf16.msra.mxu0 0
    %1377 = vmatprep.subr.bf16.mxu0 0
    %1378 = vmatpush1.bf16.msra.mxu0 0
    %1379 = vmatprep.subr.bf16.mxu0 0
    %1380 = vmatpush1.bf16.msra.mxu0 0
    %1381 = vmatprep.mubr.bf16.mxu0 0
    %1382 = vmatmul.mubr.bf16.gmra.mrb[0].mxu0 %v940
    %v1383 = vpop.f32.mrb[0].mxu0
    %v1384 = vadd.f32 0.0, %v1383
    %v1385 = vpop.f32.mrb[0].mxu0
    %v1386 = vpop.f32.mrb[0].mxu0
    %v1387 = vadd.f32 0.0, %v1386
    %v1388 = vpop.f32.mrb[0].mxu0
    %1389 = vmatprep.mubr.bf16.mxu0 0
    %1390 = vmatmul.mubr.bf16.gmra.mrb[0].mxu0 %v943
    %v1391 = vpop.f32.mrb[0].mxu0
    %v1392 = vadd.f32 0.0, %v1391
    %v1393 = vpop.f32.mrb[0].mxu0
    %v1394 = vpop.f32.mrb[0].mxu0
    %v1395 = vadd.f32 0.0, %v1394
    %v1396 = vpop.f32.mrb[0].mxu0
    %1397 = vmatprep.mubr.bf16.mxu0 0
    %1398 = vmatmul.mubr.bf16.gmra.mrb[0].mxu0 %v946
    %v1399 = vpop.f32.mrb[0].mxu0
    %v1400 = vadd.f32 0.0, %v1399
    %v1401 = vpop.f32.mrb[0].mxu0
    %v1402 = vpop.f32.mrb[0].mxu0
    %v1403 = vadd.f32 0.0, %v1402
    %v1404 = vpop.f32.mrb[0].mxu0
    %1405 = vmatprep.mubr.bf16.mxu0 0
    %1406 = vmatmul.mubr.bf16.gmra.mrb[0].mxu0 %v949
    %v1407 = vpop.f32.mrb[0].mxu0
    %v1408 = vadd.f32 0.0, %v1407
    %v1409 = vpop.f32.mrb[0].mxu0
    %v1410 = vpop.f32.mrb[0].mxu0
    %v1411 = vadd.f32 0.0, %v1410
    %v1412 = vpop.f32.mrb[0].mxu0
    %1413 = vmatprep.mubr.bf16.mxu0 0
    %1414 = vmatmul.mubr.bf16.gmra.mrb[0].mxu0 %v952
    %v1415 = vpop.f32.mrb[0].mxu0
    %v1416 = vadd.f32 0.0, %v1415
    %v1417 = vpop.f32.mrb[0].mxu0
    %v1418 = vpop.f32.mrb[0].mxu0
    %v1419 = vadd.f32 0.0, %v1418
    %v1420 = vpop.f32.mrb[0].mxu0
    %1421 = vmatprep.mubr.bf16.mxu0 0
    %1422 = vmatmul.mubr.bf16.gmra.mrb[0].mxu0 %v955
    %v1423 = vpop.f32.mrb[0].mxu0
    %v1424 = vadd.f32 0.0, %v1423
    %v1425 = vpop.f32.mrb[0].mxu0
    %v1426 = vpop.f32.mrb[0].mxu0
    %v1427 = vadd.f32 0.0, %v1426
    %v1428 = vpop.f32.mrb[0].mxu0
    %1429 = vmatprep.mubr.bf16.mxu0 0
    %1430 = vmatmul.mubr.bf16.gmra.mrb[0].mxu0 %v958
    %v1431 = vpop.f32.mrb[0].mxu0
    %v1432 = vadd.f32 0.0, %v1431
    %v1433 = vpop.f32.mrb[0].mxu0
    %v1434 = vpop.f32.mrb[0].mxu0
    %v1435 = vadd.f32 0.0, %v1434
    %v1436 = vpop.f32.mrb[0].mxu0
    %1437 = vmatprep.mubr.bf16.mxu0 0
    %1438 = vmatmul.mubr.bf16.gmra.mrb[0].mxu0 %v961
    %v1439 = vpop.f32.mrb[0].mxu0
    %v1440 = vadd.f32 0.0, %v1439
    %v1441 = vpop.f32.mrb[0].mxu0
    %v1442 = vpop.f32.mrb[0].mxu0
    %v1443 = vadd.f32 0.0, %v1442
    %v1444 = vpop.f32.mrb[0].mxu0
    %1445 = vmatprep.mubr.bf16.mxu0 0
    %1446 = vmatmul.mubr.bf16.gmra.mrb[0].mxu0 %v964
    %v1447 = vpop.f32.mrb[0].mxu0
    %v1448 = vadd.f32 0.0, %v1447
    %v1449 = vpop.f32.mrb[0].mxu0
    %v1450 = vpop.f32.mrb[0].mxu0
    %v1451 = vadd.f32 0.0, %v1450
    %v1452 = vpop.f32.mrb[0].mxu0
    %1453 = vmatprep.mubr.bf16.mxu0 0
    %1454 = vmatmul.mubr.bf16.gmra.mrb[0].mxu0 %v967
    %v1455 = vpop.f32.mrb[0].mxu0
    %v1456 = vadd.f32 0.0, %v1455
    %v1457 = vpop.f32.mrb[0].mxu0
    %v1458 = vpop.f32.mrb[0].mxu0
    %v1459 = vadd.f32 0.0, %v1458
    %v1460 = vpop.f32.mrb[0].mxu0
    %1461 = vmatprep.mubr.bf16.mxu0 0
    %1462 = vmatmul.mubr.bf16.gmra.mrb[0].mxu0 %v970
    %v1463 = vpop.f32.mrb[0].mxu0
    %v1464 = vadd.f32 0.0, %v1463
    %v1465 = vpop.f32.mrb[0].mxu0
    %v1466 = vpop.f32.mrb[0].mxu0
    %v1467 = vadd.f32 0.0, %v1466
    %v1468 = vpop.f32.mrb[0].mxu0
    %1469 = vmatprep.mubr.bf16.mxu0 0
    %1470 = vmatmul.mubr.bf16.gmra.mrb[0].mxu0 %v973
    %v1471 = vpop.f32.mrb[0].mxu0
    %v1472 = vadd.f32 0.0, %v1471
    %v1473 = vpop.f32.mrb[0].mxu0
    %v1474 = vpop.f32.mrb[0].mxu0
    %v1475 = vadd.f32 0.0, %v1474
    %v1476 = vpop.f32.mrb[0].mxu0
    %1477 = vmatprep.mubr.bf16.mxu0 0
    %1478 = vmatmul.mubr.bf16.gmra.mrb[0].mxu0 %v976
    %v1479 = vpop.f32.mrb[0].mxu0
    %v1480 = vadd.f32 0.0, %v1479
    %v1481 = vpop.f32.mrb[0].mxu0
    %v1482 = vpop.f32.mrb[0].mxu0
    %v1483 = vadd.f32 0.0, %v1482
    %v1484 = vpop.f32.mrb[0].mxu0
    %1485 = vmatprep.mubr.bf16.mxu0 0
    %1486 = vmatmul.mubr.bf16.gmra.mrb[0].mxu0 %v979
    %v1487 = vpop.f32.mrb[0].mxu0
    %v1488 = vadd.f32 0.0, %v1487
    %v1489 = vpop.f32.mrb[0].mxu0
    %v1490 = vpop.f32.mrb[0].mxu0
    %v1491 = vadd.f32 0.0, %v1490
    %v1492 = vpop.f32.mrb[0].mxu0
    %1493 = vmatprep.mubr.bf16.mxu0 0
    %1494 = vmatmul.mubr.bf16.gmra.mrb[0].mxu0 %v982
    %v1495 = vpop.f32.mrb[0].mxu0
    %v1496 = vadd.f32 0.0, %v1495
    %v1497 = vpop.f32.mrb[0].mxu0
    %v1498 = vpop.f32.mrb[0].mxu0
    %v1499 = vadd.f32 0.0, %v1498
    %v1500 = vpop.f32.mrb[0].mxu0
    %1501 = vmatprep.mubr.bf16.mxu0 0
    %1502 = vmatmul.mubr.bf16.gmra.mrb[0].mxu0 %v985
    %v1503 = vpop.f32.mrb[0].mxu0
    %v1504 = vadd.f32 0.0, %v1503
    %v1505 = vpop.f32.mrb[0].mxu0
    %v1506 = vpop.f32.mrb[0].mxu0
    %v1507 = vadd.f32 0.0, %v1506
    %v1508 = vpop.f32.mrb[0].mxu0
    %1509 = vdwg.mxu0
    %v1510 = vmul.f32 %v1384, %v63
    %v1511 = vmul.f32 %v1387, %v64
    %v1512 = vmul.f32 %v1392, %v65
    %v1513 = vmul.f32 %v1395, %v66
    %v1514 = vmul.f32 %v1400, %v67
    %v1515 = vmul.f32 %v1403, %v68
    %v1516 = vmul.f32 %v1408, %v69
    %v1517 = vmul.f32 %v1411, %v70
    %v1518 = vmul.f32 %v1416, %v71
    %v1519 = vmul.f32 %v1419, %v72
    %v1520 = vmul.f32 %v1424, %v73
    %v1521 = vmul.f32 %v1427, %v74
    %v1522 = vmul.f32 %v1432, %v75
    %v1523 = vmul.f32 %v1435, %v76
    %v1524 = vmul.f32 %v1440, %v77
    %v1525 = vmul.f32 %v1443, %v78
    %v1526 = vmul.f32 %v1448, %v79
    %v1527 = vmul.f32 %v1451, %v80
    %v1528 = vmul.f32 %v1456, %v81
    %v1529 = vmul.f32 %v1459, %v82
    %v1530 = vmul.f32 %v1464, %v83
    %v1531 = vmul.f32 %v1467, %v84
    %v1532 = vmul.f32 %v1472, %v85
    %v1533 = vmul.f32 %v1475, %v86
    %v1534 = vmul.f32 %v1480, %v87
    %v1535 = vmul.f32 %v1483, %v88
    %v1536 = vmul.f32 %v1488, %v89
    %v1537 = vmul.f32 %v1491, %v90
    %v1538 = vmul.f32 %v1496, %v91
    %v1539 = vmul.f32 %v1499, %v92
    %v1540 = vmul.f32 %v1504, %v93
    %v1541 = vmul.f32 %v1507, %v94
    %v1542 = vpack.c.bf16 %v1511, %v1510
    %v1543 = vpack.c.bf16 %v1513, %v1512
    %v1544 = vpack.c.bf16 %v1515, %v1514
    %v1545 = vpack.c.bf16 %v1517, %v1516
    %v1546 = vpack.c.bf16 %v1519, %v1518
    %v1547 = vpack.c.bf16 %v1521, %v1520
    %v1548 = vpack.c.bf16 %v1523, %v1522
    %v1549 = vpack.c.bf16 %v1525, %v1524
    %v1550 = vpack.c.bf16 %v1527, %v1526
    %v1551 = vpack.c.bf16 %v1529, %v1528
    %v1552 = vpack.c.bf16 %v1531, %v1530
    %v1553 = vpack.c.bf16 %v1533, %v1532
    %v1554 = vpack.c.bf16 %v1535, %v1534
    %v1555 = vpack.c.bf16 %v1537, %v1536
    %v1556 = vpack.c.bf16 %v1539, %v1538
    %v1557 = vpack.c.bf16 %v1541, %v1540
    %v1558 = vpack.c.bf16 %v481, %v480
    %v1559 = vpack.c.bf16 %v483, %v482
    %v1561 = vsel %vm120, %v1542, 0
    %v1564 = vsel %vm120, %v1543, 0
    %v1567 = vsel %vm120, %v1544, 0
    %v1570 = vsel %vm120, %v1545, 0
    %v1573 = vsel %vm120, %v1546, 0
    %v1576 = vsel %vm120, %v1547, 0
    %v1579 = vsel %vm120, %v1548, 0
    %v1582 = vsel %vm120, %v1549, 0
    %v1585 = vsel %vm120, %v1550, 0
    %v1588 = vsel %vm120, %v1551, 0
    %v1591 = vsel %vm120, %v1552, 0
    %v1594 = vsel %vm120, %v1553, 0
    %v1597 = vsel %vm120, %v1554, 0
    %v1600 = vsel %vm120, %v1555, 0
    %v1603 = vsel %vm120, %v1556, 0
    %v1606 = vsel %vm120, %v1557, 0
    %1608 = vmatprep.subr.bf16.mxu0 0
    %1609 = vmatpush1.bf16.msra.mxu0 %v1558
    %1610 = vmatprep.subr.bf16.mxu0 0
    %1611 = vmatpush1.bf16.msra.mxu0 %v1559
    %1612 = vmatprep.subr.bf16.mxu0 0
    %1613 = vmatpush1.bf16.msra.mxu0 0
    %1614 = vmatprep.subr.bf16.mxu0 0
    %1615 = vmatpush1.bf16.msra.mxu0 0
    %1616 = vmatprep.subr.bf16.mxu0 0
    %1617 = vmatpush1.bf16.msra.mxu0 0
    %1618 = vmatprep.subr.bf16.mxu0 0
    %1619 = vmatpush1.bf16.msra.mxu0 0
    %1620 = vmatprep.subr.bf16.mxu0 0
    %1621 = vmatpush1.bf16.msra.mxu0 0
    %1622 = vmatprep.subr.bf16.mxu0 0
    %1623 = vmatpush1.bf16.msra.mxu0 0
    %1624 = vmatprep.subr.bf16.mxu0 0
    %1625 = vmatpush1.bf16.msra.mxu0 0
    %1626 = vmatprep.subr.bf16.mxu0 0
    %1627 = vmatpush1.bf16.msra.mxu0 0
    %1628 = vmatprep.subr.bf16.mxu0 0
    %1629 = vmatpush1.bf16.msra.mxu0 0
    %1630 = vmatprep.subr.bf16.mxu0 0
    %1631 = vmatpush1.bf16.msra.mxu0 0
    %1632 = vmatprep.subr.bf16.mxu0 0
    %1633 = vmatpush1.bf16.msra.mxu0 0
    %1634 = vmatprep.subr.bf16.mxu0 0
    %1635 = vmatpush1.bf16.msra.mxu0 0
    %1636 = vmatprep.subr.bf16.mxu0 0
    %1637 = vmatpush1.bf16.msra.mxu0 0
    %1638 = vmatprep.subr.bf16.mxu0 0
    %1639 = vmatpush1.bf16.msra.mxu0 0
    %1640 = vmatprep.mubr.bf16.mxu0 0
    %1641 = vmatmul.mubr.bf16.gmra.mrb[0].mxu0 %v1561
    %v1642 = vpop.f32.mrb[0].mxu0
    %v1643 = vadd.f32 0.0, %v1642
    %v1644 = vpop.f32.mrb[0].mxu0
    %v1645 = vpop.f32.mrb[0].mxu0
    %v1646 = vadd.f32 0.0, %v1645
    %v1647 = vpop.f32.mrb[0].mxu0
    %1648 = vmatprep.mubr.bf16.mxu0 0
    %1649 = vmatmul.mubr.bf16.gmra.mrb[0].mxu0 %v1564
    %v1650 = vpop.f32.mrb[0].mxu0
    %v1651 = vadd.f32 0.0, %v1650
    %v1652 = vpop.f32.mrb[0].mxu0
    %v1653 = vpop.f32.mrb[0].mxu0
    %v1654 = vadd.f32 0.0, %v1653
    %v1655 = vpop.f32.mrb[0].mxu0
    %1656 = vmatprep.mubr.bf16.mxu0 0
    %1657 = vmatmul.mubr.bf16.gmra.mrb[0].mxu0 %v1567
    %v1658 = vpop.f32.mrb[0].mxu0
    %v1659 = vadd.f32 0.0, %v1658
    %v1660 = vpop.f32.mrb[0].mxu0
    %v1661 = vpop.f32.mrb[0].mxu0
    %v1662 = vadd.f32 0.0, %v1661
    %v1663 = vpop.f32.mrb[0].mxu0
    %1664 = vmatprep.mubr.bf16.mxu0 0
    %1665 = vmatmul.mubr.bf16.gmra.mrb[0].mxu0 %v1570
    %v1666 = vpop.f32.mrb[0].mxu0
    %v1667 = vadd.f32 0.0, %v1666
    %v1668 = vpop.f32.mrb[0].mxu0
    %v1669 = vpop.f32.mrb[0].mxu0
    %v1670 = vadd.f32 0.0, %v1669
    %v1671 = vpop.f32.mrb[0].mxu0
    %1672 = vmatprep.mubr.bf16.mxu0 0
    %1673 = vmatmul.mubr.bf16.gmra.mrb[0].mxu0 %v1573
    %v1674 = vpop.f32.mrb[0].mxu0
    %v1675 = vadd.f32 0.0, %v1674
    %v1676 = vpop.f32.mrb[0].mxu0
    %v1677 = vpop.f32.mrb[0].mxu0
    %v1678 = vadd.f32 0.0, %v1677
    %v1679 = vpop.f32.mrb[0].mxu0
    %1680 = vmatprep.mubr.bf16.mxu0 0
    %1681 = vmatmul.mubr.bf16.gmra.mrb[0].mxu0 %v1576
    %v1682 = vpop.f32.mrb[0].mxu0
    %v1683 = vadd.f32 0.0, %v1682
    %v1684 = vpop.f32.mrb[0].mxu0
    %v1685 = vpop.f32.mrb[0].mxu0
    %v1686 = vadd.f32 0.0, %v1685
    %v1687 = vpop.f32.mrb[0].mxu0
    %1688 = vmatprep.mubr.bf16.mxu0 0
    %1689 = vmatmul.mubr.bf16.gmra.mrb[0].mxu0 %v1579
    %v1690 = vpop.f32.mrb[0].mxu0
    %v1691 = vadd.f32 0.0, %v1690
    %v1692 = vpop.f32.mrb[0].mxu0
    %v1693 = vpop.f32.mrb[0].mxu0
    %v1694 = vadd.f32 0.0, %v1693
    %v1695 = vpop.f32.mrb[0].mxu0
    %1696 = vmatprep.mubr.bf16.mxu0 0
    %1697 = vmatmul.mubr.bf16.gmra.mrb[0].mxu0 %v1582
    %v1698 = vpop.f32.mrb[0].mxu0
    %v1699 = vadd.f32 0.0, %v1698
    %v1700 = vpop.f32.mrb[0].mxu0
    %v1701 = vpop.f32.mrb[0].mxu0
    %v1702 = vadd.f32 0.0, %v1701
    %v1703 = vpop.f32.mrb[0].mxu0
    %1704 = vmatprep.mubr.bf16.mxu0 0
    %1705 = vmatmul.mubr.bf16.gmra.mrb[0].mxu0 %v1585
    %v1706 = vpop.f32.mrb[0].mxu0
    %v1707 = vadd.f32 0.0, %v1706
    %v1708 = vpop.f32.mrb[0].mxu0
    %v1709 = vpop.f32.mrb[0].mxu0
    %v1710 = vadd.f32 0.0, %v1709
    %v1711 = vpop.f32.mrb[0].mxu0
    %1712 = vmatprep.mubr.bf16.mxu0 0
    %1713 = vmatmul.mubr.bf16.gmra.mrb[0].mxu0 %v1588
    %v1714 = vpop.f32.mrb[0].mxu0
    %v1715 = vadd.f32 0.0, %v1714
    %v1716 = vpop.f32.mrb[0].mxu0
    %v1717 = vpop.f32.mrb[0].mxu0
    %v1718 = vadd.f32 0.0, %v1717
    %v1719 = vpop.f32.mrb[0].mxu0
    %1720 = vmatprep.mubr.bf16.mxu0 0
    %1721 = vmatmul.mubr.bf16.gmra.mrb[0].mxu0 %v1591
    %v1722 = vpop.f32.mrb[0].mxu0
    %v1723 = vadd.f32 0.0, %v1722
    %v1724 = vpop.f32.mrb[0].mxu0
    %v1725 = vpop.f32.mrb[0].mxu0
    %v1726 = vadd.f32 0.0, %v1725
    %v1727 = vpop.f32.mrb[0].mxu0
    %1728 = vmatprep.mubr.bf16.mxu0 0
    %1729 = vmatmul.mubr.bf16.gmra.mrb[0].mxu0 %v1594
    %v1730 = vpop.f32.mrb[0].mxu0
    %v1731 = vadd.f32 0.0, %v1730
    %v1732 = vpop.f32.mrb[0].mxu0
    %v1733 = vpop.f32.mrb[0].mxu0
    %v1734 = vadd.f32 0.0, %v1733
    %v1735 = vpop.f32.mrb[0].mxu0
    %1736 = vmatprep.mubr.bf16.mxu0 0
    %1737 = vmatmul.mubr.bf16.gmra.mrb[0].mxu0 %v1597
    %v1738 = vpop.f32.mrb[0].mxu0
    %v1739 = vadd.f32 0.0, %v1738
    %v1740 = vpop.f32.mrb[0].mxu0
    %v1741 = vpop.f32.mrb[0].mxu0
    %v1742 = vadd.f32 0.0, %v1741
    %v1743 = vpop.f32.mrb[0].mxu0
    %1744 = vmatprep.mubr.bf16.mxu0 0
    %1745 = vmatmul.mubr.bf16.gmra.mrb[0].mxu0 %v1600
    %v1746 = vpop.f32.mrb[0].mxu0
    %v1747 = vadd.f32 0.0, %v1746
    %v1748 = vpop.f32.mrb[0].mxu0
    %v1749 = vpop.f32.mrb[0].mxu0
    %v1750 = vadd.f32 0.0, %v1749
    %v1751 = vpop.f32.mrb[0].mxu0
    %1752 = vmatprep.mubr.bf16.mxu0 0
    %1753 = vmatmul.mubr.bf16.gmra.mrb[0].mxu0 %v1603
    %v1754 = vpop.f32.mrb[0].mxu0
    %v1755 = vadd.f32 0.0, %v1754
    %v1756 = vpop.f32.mrb[0].mxu0
    %v1757 = vpop.f32.mrb[0].mxu0
    %v1758 = vadd.f32 0.0, %v1757
    %v1759 = vpop.f32.mrb[0].mxu0
    %1760 = vmatprep.mubr.bf16.mxu0 0
    %1761 = vmatmul.mubr.bf16.gmra.mrb[0].mxu0 %v1606
    %v1762 = vpop.f32.mrb[0].mxu0
    %v1763 = vadd.f32 0.0, %v1762
    %v1764 = vpop.f32.mrb[0].mxu0
    %v1765 = vpop.f32.mrb[0].mxu0
    %v1766 = vadd.f32 0.0, %v1765
    %v1767 = vpop.f32.mrb[0].mxu0
    %1768 = vdwg.mxu0
    %v1769 = vpack.c.bf16 %v1025, %v1022
    %v1770 = vpack.c.bf16 %v1033, %v1030
    %v1771 = vpack.c.bf16 %v1041, %v1038
    %v1772 = vpack.c.bf16 %v1049, %v1046
    %v1773 = vpack.c.bf16 %v1057, %v1054
    %v1774 = vpack.c.bf16 %v1065, %v1062
    %v1775 = vpack.c.bf16 %v1073, %v1070
    %v1776 = vpack.c.bf16 %v1081, %v1078
    %v1777 = vpack.c.bf16 %v1089, %v1086
    %v1778 = vpack.c.bf16 %v1097, %v1094
    %v1779 = vpack.c.bf16 %v1105, %v1102
    %v1780 = vpack.c.bf16 %v1113, %v1110
    %v1781 = vpack.c.bf16 %v1121, %v1118
    %v1782 = vpack.c.bf16 %v1129, %v1126
    %v1783 = vpack.c.bf16 %v1137, %v1134
    %v1784 = vpack.c.bf16 %v1145, %v1142
    %v1785 = vpack.c.bf16 %v1314, %v1313
    %v1786 = vpack.c.bf16 %v1316, %v1315
    %v1787 = vpack.c.bf16 %v1318, %v1317
    %v1788 = vpack.c.bf16 %v1320, %v1319
    %v1789 = vpack.c.bf16 %v1322, %v1321
    %v1790 = vpack.c.bf16 %v1324, %v1323
    %v1791 = vpack.c.bf16 %v1326, %v1325
    %v1792 = vpack.c.bf16 %v1328, %v1327
    %v1793 = vpack.c.bf16 %v1330, %v1329
    %v1794 = vpack.c.bf16 %v1332, %v1331
    %v1795 = vpack.c.bf16 %v1334, %v1333
    %v1796 = vpack.c.bf16 %v1336, %v1335
    %v1797 = vpack.c.bf16 %v1338, %v1337
    %v1798 = vpack.c.bf16 %v1340, %v1339
    %v1799 = vpack.c.bf16 %v1342, %v1341
    %v1800 = vpack.c.bf16 %v1344, %v1343
    %v1802 = vsel %vm120, %v1769, 0
    %v1805 = vsel %vm120, %v1770, 0
    %v1808 = vsel %vm120, %v1771, 0
    %v1811 = vsel %vm120, %v1772, 0
    %v1814 = vsel %vm120, %v1773, 0
    %v1817 = vsel %vm120, %v1774, 0
    %v1820 = vsel %vm120, %v1775, 0
    %v1823 = vsel %vm120, %v1776, 0
    %v1826 = vsel %vm120, %v1777, 0
    %v1829 = vsel %vm120, %v1778, 0
    %v1832 = vsel %vm120, %v1779, 0
    %v1835 = vsel %vm120, %v1780, 0
    %v1838 = vsel %vm120, %v1781, 0
    %v1841 = vsel %vm120, %v1782, 0
    %v1844 = vsel %vm120, %v1783, 0
    %v1847 = vsel %vm120, %v1784, 0
    %v1850 = vsel %vm120, %v1785, 0
    %v1853 = vsel %vm120, %v1786, 0
    %v1856 = vsel %vm120, %v1787, 0
    %v1859 = vsel %vm120, %v1788, 0
    %v1862 = vsel %vm120, %v1789, 0
    %v1865 = vsel %vm120, %v1790, 0
    %v1868 = vsel %vm120, %v1791, 0
    %v1871 = vsel %vm120, %v1792, 0
    %v1874 = vsel %vm120, %v1793, 0
    %v1877 = vsel %vm120, %v1794, 0
    %v1880 = vsel %vm120, %v1795, 0
    %v1883 = vsel %vm120, %v1796, 0
    %v1886 = vsel %vm120, %v1797, 0
    %v1889 = vsel %vm120, %v1798, 0
    %v1892 = vsel %vm120, %v1799, 0
    %v1895 = vsel %vm120, %v1800, 0
    %1897 = vmatprep.subr.bf16.mxu0 0
    %1898 = vmatpush1.bf16.xpose.msra.mxu0 %v1850
    %1899 = vmatprep.subr.bf16.mxu0 0
    %1900 = vmatpush1.bf16.xpose.msra.mxu0 %v1853
    %1901 = vmatprep.subr.bf16.mxu0 0
    %1902 = vmatpush1.bf16.xpose.msra.mxu0 %v1856
    %1903 = vmatprep.subr.bf16.mxu0 0
    %1904 = vmatpush1.bf16.xpose.msra.mxu0 %v1859
    %1905 = vmatprep.subr.bf16.mxu0 0
    %1906 = vmatpush1.bf16.xpose.msra.mxu0 %v1862
    %1907 = vmatprep.subr.bf16.mxu0 0
    %1908 = vmatpush1.bf16.xpose.msra.mxu0 %v1865
    %1909 = vmatprep.subr.bf16.mxu0 0
    %1910 = vmatpush1.bf16.xpose.msra.mxu0 %v1868
    %1911 = vmatprep.subr.bf16.mxu0 0
    %1912 = vmatpush1.bf16.xpose.msra.mxu0 %v1871
    %1913 = vmatprep.subr.bf16.mxu0 0
    %1914 = vmatpush1.bf16.xpose.msra.mxu0 %v1874
    %1915 = vmatprep.subr.bf16.mxu0 0
    %1916 = vmatpush1.bf16.xpose.msra.mxu0 %v1877
    %1917 = vmatprep.subr.bf16.mxu0 0
    %1918 = vmatpush1.bf16.xpose.msra.mxu0 %v1880
    %1919 = vmatprep.subr.bf16.mxu0 0
    %1920 = vmatpush1.bf16.xpose.msra.mxu0 %v1883
    %1921 = vmatprep.subr.bf16.mxu0 0
    %1922 = vmatpush1.bf16.xpose.msra.mxu0 %v1886
    %1923 = vmatprep.subr.bf16.mxu0 0
    %1924 = vmatpush1.bf16.xpose.msra.mxu0 %v1889
    %1925 = vmatprep.subr.bf16.mxu0 0
    %1926 = vmatpush1.bf16.xpose.msra.mxu0 %v1892
    %1927 = vmatprep.subr.bf16.mxu0 0
    %1928 = vmatpush1.bf16.xpose.msra.mxu0 %v1895
    %1929 = vmatprep.mubr.bf16.mxu0 0
    %1930 = vmatmul.mubr.bf16.gmra.mrb[0].mxu0 %v1802
    %v1931 = vpop.f32.mrb[0].mxu0
    %v1932 = vadd.f32 0.0, %v1931
    %v1933 = vpop.f32.mrb[0].mxu0
    %v1934 = vadd.f32 0.0, %v1933
    %v1935 = vpop.f32.mrb[0].mxu0
    %v1936 = vadd.f32 0.0, %v1935
    %v1937 = vpop.f32.mrb[0].mxu0
    %v1938 = vadd.f32 0.0, %v1937
    %1939 = vmatprep.mubr.bf16.mxu0 0
    %1940 = vmatmul.mubr.bf16.gmra.mrb[0].mxu0 %v1805
    %v1941 = vpop.f32.mrb[0].mxu0
    %v1942 = vadd.f32 0.0, %v1941
    %v1943 = vpop.f32.mrb[0].mxu0
    %v1944 = vadd.f32 0.0, %v1943
    %v1945 = vpop.f32.mrb[0].mxu0
    %v1946 = vadd.f32 0.0, %v1945
    %v1947 = vpop.f32.mrb[0].mxu0
    %v1948 = vadd.f32 0.0, %v1947
    %1949 = vmatprep.mubr.bf16.mxu0 0
    %1950 = vmatmul.mubr.bf16.gmra.mrb[0].mxu0 %v1808
    %v1951 = vpop.f32.mrb[0].mxu0
    %v1952 = vadd.f32 0.0, %v1951
    %v1953 = vpop.f32.mrb[0].mxu0
    %v1954 = vadd.f32 0.0, %v1953
    %v1955 = vpop.f32.mrb[0].mxu0
    %v1956 = vadd.f32 0.0, %v1955
    %v1957 = vpop.f32.mrb[0].mxu0
    %v1958 = vadd.f32 0.0, %v1957
    %1959 = vmatprep.mubr.bf16.mxu0 0
    %1960 = vmatmul.mubr.bf16.gmra.mrb[0].mxu0 %v1811
    %v1961 = vpop.f32.mrb[0].mxu0
    %v1962 = vadd.f32 0.0, %v1961
    %v1963 = vpop.f32.mrb[0].mxu0
    %v1964 = vadd.f32 0.0, %v1963
    %v1965 = vpop.f32.mrb[0].mxu0
    %v1966 = vadd.f32 0.0, %v1965
    %v1967 = vpop.f32.mrb[0].mxu0
    %v1968 = vadd.f32 0.0, %v1967
    %1969 = vmatprep.mubr.bf16.mxu0 0
    %1970 = vmatmul.mubr.bf16.gmra.mrb[0].mxu0 %v1814
    %v1971 = vpop.f32.mrb[0].mxu0
    %v1972 = vadd.f32 0.0, %v1971
    %v1973 = vpop.f32.mrb[0].mxu0
    %v1974 = vadd.f32 0.0, %v1973
    %v1975 = vpop.f32.mrb[0].mxu0
    %v1976 = vadd.f32 0.0, %v1975
    %v1977 = vpop.f32.mrb[0].mxu0
    %v1978 = vadd.f32 0.0, %v1977
    %1979 = vmatprep.mubr.bf16.mxu0 0
    %1980 = vmatmul.mubr.bf16.gmra.mrb[0].mxu0 %v1817
    %v1981 = vpop.f32.mrb[0].mxu0
    %v1982 = vadd.f32 0.0, %v1981
    %v1983 = vpop.f32.mrb[0].mxu0
    %v1984 = vadd.f32 0.0, %v1983
    %v1985 = vpop.f32.mrb[0].mxu0
    %v1986 = vadd.f32 0.0, %v1985
    %v1987 = vpop.f32.mrb[0].mxu0
    %v1988 = vadd.f32 0.0, %v1987
    %1989 = vmatprep.mubr.bf16.mxu0 0
    %1990 = vmatmul.mubr.bf16.gmra.mrb[0].mxu0 %v1820
    %v1991 = vpop.f32.mrb[0].mxu0
    %v1992 = vadd.f32 0.0, %v1991
    %v1993 = vpop.f32.mrb[0].mxu0
    %v1994 = vadd.f32 0.0, %v1993
    %v1995 = vpop.f32.mrb[0].mxu0
    %v1996 = vadd.f32 0.0, %v1995
    %v1997 = vpop.f32.mrb[0].mxu0
    %v1998 = vadd.f32 0.0, %v1997
    %1999 = vmatprep.mubr.bf16.mxu0 0
    %2000 = vmatmul.mubr.bf16.gmra.mrb[0].mxu0 %v1823
    %v2001 = vpop.f32.mrb[0].mxu0
    %v2002 = vadd.f32 0.0, %v2001
    %v2003 = vpop.f32.mrb[0].mxu0
    %v2004 = vadd.f32 0.0, %v2003
    %v2005 = vpop.f32.mrb[0].mxu0
    %v2006 = vadd.f32 0.0, %v2005
    %v2007 = vpop.f32.mrb[0].mxu0
    %v2008 = vadd.f32 0.0, %v2007
    %2009 = vmatprep.mubr.bf16.mxu0 0
    %2010 = vmatmul.mubr.bf16.gmra.mrb[0].mxu0 %v1826
    %v2011 = vpop.f32.mrb[0].mxu0
    %v2012 = vadd.f32 0.0, %v2011
    %v2013 = vpop.f32.mrb[0].mxu0
    %v2014 = vadd.f32 0.0, %v2013
    %v2015 = vpop.f32.mrb[0].mxu0
    %v2016 = vadd.f32 0.0, %v2015
    %v2017 = vpop.f32.mrb[0].mxu0
    %v2018 = vadd.f32 0.0, %v2017
    %2019 = vmatprep.mubr.bf16.mxu0 0
    %2020 = vmatmul.mubr.bf16.gmra.mrb[0].mxu0 %v1829
    %v2021 = vpop.f32.mrb[0].mxu0
    %v2022 = vadd.f32 0.0, %v2021
    %v2023 = vpop.f32.mrb[0].mxu0
    %v2024 = vadd.f32 0.0, %v2023
    %v2025 = vpop.f32.mrb[0].mxu0
    %v2026 = vadd.f32 0.0, %v2025
    %v2027 = vpop.f32.mrb[0].mxu0
    %v2028 = vadd.f32 0.0, %v2027
    %2029 = vmatprep.mubr.bf16.mxu0 0
    %2030 = vmatmul.mubr.bf16.gmra.mrb[0].mxu0 %v1832
    %v2031 = vpop.f32.mrb[0].mxu0
    %v2032 = vadd.f32 0.0, %v2031
    %v2033 = vpop.f32.mrb[0].mxu0
    %v2034 = vadd.f32 0.0, %v2033
    %v2035 = vpop.f32.mrb[0].mxu0
    %v2036 = vadd.f32 0.0, %v2035
    %v2037 = vpop.f32.mrb[0].mxu0
    %v2038 = vadd.f32 0.0, %v2037
    %2039 = vmatprep.mubr.bf16.mxu0 0
    %2040 = vmatmul.mubr.bf16.gmra.mrb[0].mxu0 %v1835
    %v2041 = vpop.f32.mrb[0].mxu0
    %v2042 = vadd.f32 0.0, %v2041
    %v2043 = vpop.f32.mrb[0].mxu0
    %v2044 = vadd.f32 0.0, %v2043
    %v2045 = vpop.f32.mrb[0].mxu0
    %v2046 = vadd.f32 0.0, %v2045
    %v2047 = vpop.f32.mrb[0].mxu0
    %v2048 = vadd.f32 0.0, %v2047
    %2049 = vmatprep.mubr.bf16.mxu0 0
    %2050 = vmatmul.mubr.bf16.gmra.mrb[0].mxu0 %v1838
    %v2051 = vpop.f32.mrb[0].mxu0
    %v2052 = vadd.f32 0.0, %v2051
    %v2053 = vpop.f32.mrb[0].mxu0
    %v2054 = vadd.f32 0.0, %v2053
    %v2055 = vpop.f32.mrb[0].mxu0
    %v2056 = vadd.f32 0.0, %v2055
    %v2057 = vpop.f32.mrb[0].mxu0
    %v2058 = vadd.f32 0.0, %v2057
    %2059 = vmatprep.mubr.bf16.mxu0 0
    %2060 = vmatmul.mubr.bf16.gmra.mrb[0].mxu0 %v1841
    %v2061 = vpop.f32.mrb[0].mxu0
    %v2062 = vadd.f32 0.0, %v2061
    %v2063 = vpop.f32.mrb[0].mxu0
    %v2064 = vadd.f32 0.0, %v2063
    %v2065 = vpop.f32.mrb[0].mxu0
    %v2066 = vadd.f32 0.0, %v2065
    %v2067 = vpop.f32.mrb[0].mxu0
    %v2068 = vadd.f32 0.0, %v2067
    %2069 = vmatprep.mubr.bf16.mxu0 0
    %2070 = vmatmul.mubr.bf16.gmra.mrb[0].mxu0 %v1844
    %v2071 = vpop.f32.mrb[0].mxu0
    %v2072 = vadd.f32 0.0, %v2071
    %v2073 = vpop.f32.mrb[0].mxu0
    %v2074 = vadd.f32 0.0, %v2073
    %v2075 = vpop.f32.mrb[0].mxu0
    %v2076 = vadd.f32 0.0, %v2075
    %v2077 = vpop.f32.mrb[0].mxu0
    %v2078 = vadd.f32 0.0, %v2077
    %2079 = vmatprep.mubr.bf16.mxu0 0
    %2080 = vmatmul.mubr.bf16.gmra.mrb[0].mxu0 %v1847
    %v2081 = vpop.f32.mrb[0].mxu0
    %v2082 = vadd.f32 0.0, %v2081
    %v2083 = vpop.f32.mrb[0].mxu0
    %v2084 = vadd.f32 0.0, %v2083
    %v2085 = vpop.f32.mrb[0].mxu0
    %v2086 = vadd.f32 0.0, %v2085
    %v2087 = vpop.f32.mrb[0].mxu0
    %v2088 = vadd.f32 0.0, %v2087
    %2089 = vdwg.mxu0
    %v2090 = vlaneseq
    %v2091 = vshrl.u32 %v2090, 7
    %v2092 = vadd.s32 %v2091, 8
    %v2093 = vadd.s32 %v2091, 16
    %v2094 = vadd.s32 %v2091, 24
    %v2095 = vadd.s32 %v2091, 32
    %v2096 = vadd.s32 %v2091, 40
    %v2097 = vadd.s32 %v2091, 48
    %v2098 = vadd.s32 %v2091, 56
    %v2099 = vadd.s32 %v2091, 64
    %v2100 = vadd.s32 %v2091, 72
    %v2101 = vadd.s32 %v2091, 80
    %v2102 = vadd.s32 %v2091, 88
    %v2103 = vadd.s32 %v2091, 96
    %v2104 = vadd.s32 %v2091, 104
    %v2105 = vadd.s32 %v2091, 112
    %v2106 = vadd.s32 %v2091, 120
    %v2107 = vadd.s32 %v2091, 128
    %v2108 = vadd.s32 %v2091, 136
    %v2109 = vadd.s32 %v2091, 144
    %v2110 = vadd.s32 %v2091, 152
    %v2111 = vadd.s32 %v2091, 160
    %v2112 = vadd.s32 %v2091, 168
    %v2113 = vadd.s32 %v2091, 176
    %v2114 = vadd.s32 %v2091, 184
    %v2115 = vadd.s32 %v2091, 192
    %v2116 = vadd.s32 %v2091, 200
    %v2117 = vadd.s32 %v2091, 208
    %v2118 = vadd.s32 %v2091, 216
    %v2119 = vadd.s32 %v2091, 224
    %v2120 = vadd.s32 %v2091, 232
    %v2121 = vadd.s32 %v2091, 240
    %v2122 = vadd.s32 %v2091, 248
    %v2123 = vlaneseq
    %v2124 = vand.u32 %v2123, 127
    %v2125 = vadd.s32 %v2124, 128
    %v2126 = vshra.s32 %v2091, 2
    %v2127 = vshra.s32 %v2092, 2
    %v2128 = vshra.s32 %v2093, 2
    %v2129 = vshra.s32 %v2094, 2
    %v2130 = vshra.s32 %v2095, 2
    %v2131 = vshra.s32 %v2096, 2
    %v2132 = vshra.s32 %v2097, 2
    %v2133 = vshra.s32 %v2098, 2
    %v2134 = vshra.s32 %v2099, 2
    %v2135 = vshra.s32 %v2100, 2
    %v2136 = vshra.s32 %v2101, 2
    %v2137 = vshra.s32 %v2102, 2
    %v2138 = vshra.s32 %v2103, 2
    %v2139 = vshra.s32 %v2104, 2
    %v2140 = vshra.s32 %v2105, 2
    %v2141 = vshra.s32 %v2106, 2
    %v2142 = vshra.s32 %v2107, 2
    %v2143 = vshra.s32 %v2108, 2
    %v2144 = vshra.s32 %v2109, 2
    %v2145 = vshra.s32 %v2110, 2
    %v2146 = vshra.s32 %v2111, 2
    %v2147 = vshra.s32 %v2112, 2
    %v2148 = vshra.s32 %v2113, 2
    %v2149 = vshra.s32 %v2114, 2
    %v2150 = vshra.s32 %v2115, 2
    %v2151 = vshra.s32 %v2116, 2
    %v2152 = vshra.s32 %v2117, 2
    %v2153 = vshra.s32 %v2118, 2
    %v2154 = vshra.s32 %v2119, 2
    %v2155 = vshra.s32 %v2120, 2
    %v2156 = vshra.s32 %v2121, 2
    %v2157 = vshra.s32 %v2122, 2
    %v2158 = vshra.s32 %v2124, 2
    %v2159 = vshra.s32 %v2125, 2
    %vm2160 = vcmp.eq.s32.totalorder %v2126, %v2158
    %vm2161 = vcmp.eq.s32.totalorder %v2126, %v2159
    %vm2162 = vcmp.eq.s32.totalorder %v2127, %v2158
    %vm2163 = vcmp.eq.s32.totalorder %v2127, %v2159
    %vm2164 = vcmp.eq.s32.totalorder %v2128, %v2158
    %vm2165 = vcmp.eq.s32.totalorder %v2128, %v2159
    %vm2166 = vcmp.eq.s32.totalorder %v2129, %v2158
    %vm2167 = vcmp.eq.s32.totalorder %v2129, %v2159
    %vm2168 = vcmp.eq.s32.totalorder %v2130, %v2158
    %vm2169 = vcmp.eq.s32.totalorder %v2130, %v2159
    %vm2170 = vcmp.eq.s32.totalorder %v2131, %v2158
    %vm2171 = vcmp.eq.s32.totalorder %v2131, %v2159
    %vm2172 = vcmp.eq.s32.totalorder %v2132, %v2158
    %vm2173 = vcmp.eq.s32.totalorder %v2132, %v2159
    %vm2174 = vcmp.eq.s32.totalorder %v2133, %v2158
    %vm2175 = vcmp.eq.s32.totalorder %v2133, %v2159
    %vm2176 = vcmp.eq.s32.totalorder %v2134, %v2158
    %vm2177 = vcmp.eq.s32.totalorder %v2134, %v2159
    %vm2178 = vcmp.eq.s32.totalorder %v2135, %v2158
    %vm2179 = vcmp.eq.s32.totalorder %v2135, %v2159
    %vm2180 = vcmp.eq.s32.totalorder %v2136, %v2158
    %vm2181 = vcmp.eq.s32.totalorder %v2136, %v2159
    %vm2182 = vcmp.eq.s32.totalorder %v2137, %v2158
    %vm2183 = vcmp.eq.s32.totalorder %v2137, %v2159
    %vm2184 = vcmp.eq.s32.totalorder %v2138, %v2158
    %vm2185 = vcmp.eq.s32.totalorder %v2138, %v2159
    %vm2186 = vcmp.eq.s32.totalorder %v2139, %v2158
    %vm2187 = vcmp.eq.s32.totalorder %v2139, %v2159
    %vm2188 = vcmp.eq.s32.totalorder %v2140, %v2158
    %vm2189 = vcmp.eq.s32.totalorder %v2140, %v2159
    %vm2190 = vcmp.eq.s32.totalorder %v2141, %v2158
    %vm2191 = vcmp.eq.s32.totalorder %v2141, %v2159
    %vm2192 = vcmp.eq.s32.totalorder %v2142, %v2158
    %vm2193 = vcmp.eq.s32.totalorder %v2142, %v2159
    %vm2194 = vcmp.eq.s32.totalorder %v2143, %v2158
    %vm2195 = vcmp.eq.s32.totalorder %v2143, %v2159
    %vm2196 = vcmp.eq.s32.totalorder %v2144, %v2158
    %vm2197 = vcmp.eq.s32.totalorder %v2144, %v2159
    %vm2198 = vcmp.eq.s32.totalorder %v2145, %v2158
    %vm2199 = vcmp.eq.s32.totalorder %v2145, %v2159
    %vm2200 = vcmp.eq.s32.totalorder %v2146, %v2158
    %vm2201 = vcmp.eq.s32.totalorder %v2146, %v2159
    %vm2202 = vcmp.eq.s32.totalorder %v2147, %v2158
    %vm2203 = vcmp.eq.s32.totalorder %v2147, %v2159
    %vm2204 = vcmp.eq.s32.totalorder %v2148, %v2158
    %vm2205 = vcmp.eq.s32.totalorder %v2148, %v2159
    %vm2206 = vcmp.eq.s32.totalorder %v2149, %v2158
    %vm2207 = vcmp.eq.s32.totalorder %v2149, %v2159
    %vm2208 = vcmp.eq.s32.totalorder %v2150, %v2158
    %vm2209 = vcmp.eq.s32.totalorder %v2150, %v2159
    %vm2210 = vcmp.eq.s32.totalorder %v2151, %v2158
    %vm2211 = vcmp.eq.s32.totalorder %v2151, %v2159
    %vm2212 = vcmp.eq.s32.totalorder %v2152, %v2158
    %vm2213 = vcmp.eq.s32.totalorder %v2152, %v2159
    %vm2214 = vcmp.eq.s32.totalorder %v2153, %v2158
    %vm2215 = vcmp.eq.s32.totalorder %v2153, %v2159
    %vm2216 = vcmp.eq.s32.totalorder %v2154, %v2158
    %vm2217 = vcmp.eq.s32.totalorder %v2154, %v2159
    %vm2218 = vcmp.eq.s32.totalorder %v2155, %v2158
    %vm2219 = vcmp.eq.s32.totalorder %v2155, %v2159
    %vm2220 = vcmp.eq.s32.totalorder %v2156, %v2158
    %vm2221 = vcmp.eq.s32.totalorder %v2156, %v2159
    %vm2222 = vcmp.eq.s32.totalorder %v2157, %v2158
    %vm2223 = vcmp.eq.s32.totalorder %v2157, %v2159
    %v2224 = vsel %vm2160, %v1932, -9e+15
    %v2225 = vsel %vm2161, %v1934, -9e+15
    %v2226 = vsel %vm2162, %v1936, -9e+15
    %v2227 = vsel %vm2163, %v1938, -9e+15
    %v2228 = vsel %vm2164, %v1942, -9e+15
    %v2229 = vsel %vm2165, %v1944, -9e+15
    %v2230 = vsel %vm2166, %v1946, -9e+15
    %v2231 = vsel %vm2167, %v1948, -9e+15
    %v2232 = vsel %vm2168, %v1952, -9e+15
    %v2233 = vsel %vm2169, %v1954, -9e+15
    %v2234 = vsel %vm2170, %v1956, -9e+15
    %v2235 = vsel %vm2171, %v1958, -9e+15
    %v2236 = vsel %vm2172, %v1962, -9e+15
    %v2237 = vsel %vm2173, %v1964, -9e+15
    %v2238 = vsel %vm2174, %v1966, -9e+15
    %v2239 = vsel %vm2175, %v1968, -9e+15
    %v2240 = vsel %vm2176, %v1972, -9e+15
    %v2241 = vsel %vm2177, %v1974, -9e+15
    %v2242 = vsel %vm2178, %v1976, -9e+15
    %v2243 = vsel %vm2179, %v1978, -9e+15
    %v2244 = vsel %vm2180, %v1982, -9e+15
    %v2245 = vsel %vm2181, %v1984, -9e+15
    %v2246 = vsel %vm2182, %v1986, -9e+15
    %v2247 = vsel %vm2183, %v1988, -9e+15
    %v2248 = vsel %vm2184, %v1992, -9e+15
    %v2249 = vsel %vm2185, %v1994, -9e+15
    %v2250 = vsel %vm2186, %v1996, -9e+15
    %v2251 = vsel %vm2187, %v1998, -9e+15
    %v2252 = vsel %vm2188, %v2002, -9e+15
    %v2253 = vsel %vm2189, %v2004, -9e+15
    %v2254 = vsel %vm2190, %v2006, -9e+15
    %v2255 = vsel %vm2191, %v2008, -9e+15
    %v2256 = vsel %vm2192, %v2012, -9e+15
    %v2257 = vsel %vm2193, %v2014, -9e+15
    %v2258 = vsel %vm2194, %v2016, -9e+15
    %v2259 = vsel %vm2195, %v2018, -9e+15
    %v2260 = vsel %vm2196, %v2022, -9e+15
    %v2261 = vsel %vm2197, %v2024, -9e+15
    %v2262 = vsel %vm2198, %v2026, -9e+15
    %v2263 = vsel %vm2199, %v2028, -9e+15
    %v2264 = vsel %vm2200, %v2032, -9e+15
    %v2265 = vsel %vm2201, %v2034, -9e+15
    %v2266 = vsel %vm2202, %v2036, -9e+15
    %v2267 = vsel %vm2203, %v2038, -9e+15
    %v2268 = vsel %vm2204, %v2042, -9e+15
    %v2269 = vsel %vm2205, %v2044, -9e+15
    %v2270 = vsel %vm2206, %v2046, -9e+15
    %v2271 = vsel %vm2207, %v2048, -9e+15
    %v2272 = vsel %vm2208, %v2052, -9e+15
    %v2273 = vsel %vm2209, %v2054, -9e+15
    %v2274 = vsel %vm2210, %v2056, -9e+15
    %v2275 = vsel %vm2211, %v2058, -9e+15
    %v2276 = vsel %vm2212, %v2062, -9e+15
    %v2277 = vsel %vm2213, %v2064, -9e+15
    %v2278 = vsel %vm2214, %v2066, -9e+15
    %v2279 = vsel %vm2215, %v2068, -9e+15
    %v2280 = vsel %vm2216, %v2072, -9e+15
    %v2281 = vsel %vm2217, %v2074, -9e+15
    %v2282 = vsel %vm2218, %v2076, -9e+15
    %v2283 = vsel %vm2219, %v2078, -9e+15
    %v2284 = vsel %vm2220, %v2082, -9e+15
    %v2285 = vsel %vm2221, %v2084, -9e+15
    %v2286 = vsel %vm2222, %v2086, -9e+15
    %v2287 = vsel %vm2223, %v2088, -9e+15
    %v2288 = vmax.f32 %v2224, %v2225
    %2289 = vmax.xlane.f32.xlu0 %v2288
    %v2290 = vpop.xlane.xlu0 %2289
    %v2291 = vmax.f32 %v2226, %v2227
    %2292 = vmax.xlane.f32.xlu0 %v2291
    %v2293 = vpop.xlane.xlu0 %2292
    %v2294 = vmax.f32 %v2228, %v2229
    %2295 = vmax.xlane.f32.xlu0 %v2294
    %v2296 = vpop.xlane.xlu0 %2295
    %v2297 = vmax.f32 %v2230, %v2231
    %2298 = vmax.xlane.f32.xlu0 %v2297
    %v2299 = vpop.xlane.xlu0 %2298
    %v2300 = vmax.f32 %v2232, %v2233
    %2301 = vmax.xlane.f32.xlu0 %v2300
    %v2302 = vpop.xlane.xlu0 %2301
    %v2303 = vmax.f32 %v2234, %v2235
    %2304 = vmax.xlane.f32.xlu0 %v2303
    %v2305 = vpop.xlane.xlu0 %2304
    %v2306 = vmax.f32 %v2236, %v2237
    %2307 = vmax.xlane.f32.xlu0 %v2306
    %v2308 = vpop.xlane.xlu0 %2307
    %v2309 = vmax.f32 %v2238, %v2239
    %2310 = vmax.xlane.f32.xlu0 %v2309
    %v2311 = vpop.xlane.xlu0 %2310
    %v2312 = vmax.f32 %v2240, %v2241
    %2313 = vmax.xlane.f32.xlu0 %v2312
    %v2314 = vpop.xlane.xlu0 %2313
    %v2315 = vmax.f32 %v2242, %v2243
    %2316 = vmax.xlane.f32.xlu0 %v2315
    %v2317 = vpop.xlane.xlu0 %2316
    %v2318 = vmax.f32 %v2244, %v2245
    %2319 = vmax.xlane.f32.xlu0 %v2318
    %v2320 = vpop.xlane.xlu0 %2319
    %v2321 = vmax.f32 %v2246, %v2247
    %2322 = vmax.xlane.f32.xlu0 %v2321
    %v2323 = vpop.xlane.xlu0 %2322
    %v2324 = vmax.f32 %v2248, %v2249
    %2325 = vmax.xlane.f32.xlu0 %v2324
    %v2326 = vpop.xlane.xlu0 %2325
    %v2327 = vmax.f32 %v2250, %v2251
    %2328 = vmax.xlane.f32.xlu0 %v2327
    %v2329 = vpop.xlane.xlu0 %2328
    %v2330 = vmax.f32 %v2252, %v2253
    %2331 = vmax.xlane.f32.xlu0 %v2330
    %v2332 = vpop.xlane.xlu0 %2331
    %v2333 = vmax.f32 %v2254, %v2255
    %2334 = vmax.xlane.f32.xlu0 %v2333
    %v2335 = vpop.xlane.xlu0 %2334
    %v2336 = vmax.f32 %v2256, %v2257
    %2337 = vmax.xlane.f32.xlu0 %v2336
    %v2338 = vpop.xlane.xlu0 %2337
    %v2339 = vmax.f32 %v2258, %v2259
    %2340 = vmax.xlane.f32.xlu0 %v2339
    %v2341 = vpop.xlane.xlu0 %2340
    %v2342 = vmax.f32 %v2260, %v2261
    %2343 = vmax.xlane.f32.xlu0 %v2342
    %v2344 = vpop.xlane.xlu0 %2343
    %v2345 = vmax.f32 %v2262, %v2263
    %2346 = vmax.xlane.f32.xlu0 %v2345
    %v2347 = vpop.xlane.xlu0 %2346
    %v2348 = vmax.f32 %v2264, %v2265
    %2349 = vmax.xlane.f32.xlu0 %v2348
    %v2350 = vpop.xlane.xlu0 %2349
    %v2351 = vmax.f32 %v2266, %v2267
    %2352 = vmax.xlane.f32.xlu0 %v2351
    %v2353 = vpop.xlane.xlu0 %2352
    %v2354 = vmax.f32 %v2268, %v2269
    %2355 = vmax.xlane.f32.xlu0 %v2354
    %v2356 = vpop.xlane.xlu0 %2355
    %v2357 = vmax.f32 %v2270, %v2271
    %2358 = vmax.xlane.f32.xlu0 %v2357
    %v2359 = vpop.xlane.xlu0 %2358
    %v2360 = vmax.f32 %v2272, %v2273
    %2361 = vmax.xlane.f32.xlu0 %v2360
    %v2362 = vpop.xlane.xlu0 %2361
    %v2363 = vmax.f32 %v2274, %v2275
    %2364 = vmax.xlane.f32.xlu0 %v2363
    %v2365 = vpop.xlane.xlu0 %2364
    %v2366 = vmax.f32 %v2276, %v2277
    %2367 = vmax.xlane.f32.xlu0 %v2366
    %v2368 = vpop.xlane.xlu0 %2367
    %v2369 = vmax.f32 %v2278, %v2279
    %2370 = vmax.xlane.f32.xlu0 %v2369
    %v2371 = vpop.xlane.xlu0 %2370
    %v2372 = vmax.f32 %v2280, %v2281
    %2373 = vmax.xlane.f32.xlu0 %v2372
    %v2374 = vpop.xlane.xlu0 %2373
    %v2375 = vmax.f32 %v2282, %v2283
    %2376 = vmax.xlane.f32.xlu0 %v2375
    %v2377 = vpop.xlane.xlu0 %2376
    %v2378 = vmax.f32 %v2284, %v2285
    %2379 = vmax.xlane.f32.xlu0 %v2378
    %v2380 = vpop.xlane.xlu0 %2379
    %v2381 = vmax.f32 %v2286, %v2287
    %2382 = vmax.xlane.f32.xlu0 %v2381
    %v2383 = vpop.xlane.xlu0 %2382
    %v2384 = vsub.f32 %v2224, %v2290
    %v2385 = vsub.f32 %v2225, %v2290
    %v2386 = vsub.f32 %v2226, %v2293
    %v2387 = vsub.f32 %v2227, %v2293
    %v2388 = vsub.f32 %v2228, %v2296
    %v2389 = vsub.f32 %v2229, %v2296
    %v2390 = vsub.f32 %v2230, %v2299
    %v2391 = vsub.f32 %v2231, %v2299
    %v2392 = vsub.f32 %v2232, %v2302
    %v2393 = vsub.f32 %v2233, %v2302
    %v2394 = vsub.f32 %v2234, %v2305
    %v2395 = vsub.f32 %v2235, %v2305
    %v2396 = vsub.f32 %v2236, %v2308
    %v2397 = vsub.f32 %v2237, %v2308
    %v2398 = vsub.f32 %v2238, %v2311
    %v2399 = vsub.f32 %v2239, %v2311
    %v2400 = vsub.f32 %v2240, %v2314
    %v2401 = vsub.f32 %v2241, %v2314
    %v2402 = vsub.f32 %v2242, %v2317
    %v2403 = vsub.f32 %v2243, %v2317
    %v2404 = vsub.f32 %v2244, %v2320
    %v2405 = vsub.f32 %v2245, %v2320
    %v2406 = vsub.f32 %v2246, %v2323
    %v2407 = vsub.f32 %v2247, %v2323
    %v2408 = vsub.f32 %v2248, %v2326
    %v2409 = vsub.f32 %v2249, %v2326
    %v2410 = vsub.f32 %v2250, %v2329
    %v2411 = vsub.f32 %v2251, %v2329
    %v2412 = vsub.f32 %v2252, %v2332
    %v2413 = vsub.f32 %v2253, %v2332
    %v2414 = vsub.f32 %v2254, %v2335
    %v2415 = vsub.f32 %v2255, %v2335
    %v2416 = vsub.f32 %v2256, %v2338
    %v2417 = vsub.f32 %v2257, %v2338
    %v2418 = vsub.f32 %v2258, %v2341
    %v2419 = vsub.f32 %v2259, %v2341
    %v2420 = vsub.f32 %v2260, %v2344
    %v2421 = vsub.f32 %v2261, %v2344
    %v2422 = vsub.f32 %v2262, %v2347
    %v2423 = vsub.f32 %v2263, %v2347
    %v2424 = vsub.f32 %v2264, %v2350
    %v2425 = vsub.f32 %v2265, %v2350
    %v2426 = vsub.f32 %v2266, %v2353
    %v2427 = vsub.f32 %v2267, %v2353
    %v2428 = vsub.f32 %v2268, %v2356
    %v2429 = vsub.f32 %v2269, %v2356
    %v2430 = vsub.f32 %v2270, %v2359
    %v2431 = vsub.f32 %v2271, %v2359
    %v2432 = vsub.f32 %v2272, %v2362
    %v2433 = vsub.f32 %v2273, %v2362
    %v2434 = vsub.f32 %v2274, %v2365
    %v2435 = vsub.f32 %v2275, %v2365
    %v2436 = vsub.f32 %v2276, %v2368
    %v2437 = vsub.f32 %v2277, %v2368
    %v2438 = vsub.f32 %v2278, %v2371
    %v2439 = vsub.f32 %v2279, %v2371
    %v2440 = vsub.f32 %v2280, %v2374
    %v2441 = vsub.f32 %v2281, %v2374
    %v2442 = vsub.f32 %v2282, %v2377
    %v2443 = vsub.f32 %v2283, %v2377
    %v2444 = vsub.f32 %v2284, %v2380
    %v2445 = vsub.f32 %v2285, %v2380
    %v2446 = vsub.f32 %v2286, %v2383
    %v2447 = vsub.f32 %v2287, %v2383
    %v2448 = vmul.f32 %v2384, 1.442695
    %v2449 = vpow.pop %v2448
    %v2450 = vmul.f32 %v2385, 1.442695
    %v2451 = vpow.pop %v2450
    %v2452 = vmul.f32 %v2386, 1.442695
    %v2453 = vpow.pop %v2452
    %v2454 = vmul.f32 %v2387, 1.442695
    %v2455 = vpow.pop %v2454
    %v2456 = vmul.f32 %v2388, 1.442695
    %v2457 = vpow.pop %v2456
    %v2458 = vmul.f32 %v2389, 1.442695
    %v2459 = vpow.pop %v2458
    %v2460 = vmul.f32 %v2390, 1.442695
    %v2461 = vpow.pop %v2460
    %v2462 = vmul.f32 %v2391, 1.442695
    %v2463 = vpow.pop %v2462
    %v2464 = vmul.f32 %v2392, 1.442695
    %v2465 = vpow.pop %v2464
    %v2466 = vmul.f32 %v2393, 1.442695
    %v2467 = vpow.pop %v2466
    %v2468 = vmul.f32 %v2394, 1.442695
    %v2469 = vpow.pop %v2468
    %v2470 = vmul.f32 %v2395, 1.442695
    %v2471 = vpow.pop %v2470
    %v2472 = vmul.f32 %v2396, 1.442695
    %v2473 = vpow.pop %v2472
    %v2474 = vmul.f32 %v2397, 1.442695
    %v2475 = vpow.pop %v2474
    %v2476 = vmul.f32 %v2398, 1.442695
    %v2477 = vpow.pop %v2476
    %v2478 = vmul.f32 %v2399, 1.442695
    %v2479 = vpow.pop %v2478
    %v2480 = vmul.f32 %v2400, 1.442695
    %v2481 = vpow.pop %v2480
    %v2482 = vmul.f32 %v2401, 1.442695
    %v2483 = vpow.pop %v2482
    %v2484 = vmul.f32 %v2402, 1.442695
    %v2485 = vpow.pop %v2484
    %v2486 = vmul.f32 %v2403, 1.442695
    %v2487 = vpow.pop %v2486
    %v2488 = vmul.f32 %v2404, 1.442695
    %v2489 = vpow.pop %v2488
    %v2490 = vmul.f32 %v2405, 1.442695
    %v2491 = vpow.pop %v2490
    %v2492 = vmul.f32 %v2406, 1.442695
    %v2493 = vpow.pop %v2492
    %v2494 = vmul.f32 %v2407, 1.442695
    %v2495 = vpow.pop %v2494
    %v2496 = vmul.f32 %v2408, 1.442695
    %v2497 = vpow.pop %v2496
    %v2498 = vmul.f32 %v2409, 1.442695
    %v2499 = vpow.pop %v2498
    %v2500 = vmul.f32 %v2410, 1.442695
    %v2501 = vpow.pop %v2500
    %v2502 = vmul.f32 %v2411, 1.442695
    %v2503 = vpow.pop %v2502
    %v2504 = vmul.f32 %v2412, 1.442695
    %v2505 = vpow.pop %v2504
    %v2506 = vmul.f32 %v2413, 1.442695
    %v2507 = vpow.pop %v2506
    %v2508 = vmul.f32 %v2414, 1.442695
    %v2509 = vpow.pop %v2508
    %v2510 = vmul.f32 %v2415, 1.442695
    %v2511 = vpow.pop %v2510
    %v2512 = vmul.f32 %v2416, 1.442695
    %v2513 = vpow.pop %v2512
    %v2514 = vmul.f32 %v2417, 1.442695
    %v2515 = vpow.pop %v2514
    %v2516 = vmul.f32 %v2418, 1.442695
    %v2517 = vpow.pop %v2516
    %v2518 = vmul.f32 %v2419, 1.442695
    %v2519 = vpow.pop %v2518
    %v2520 = vmul.f32 %v2420, 1.442695
    %v2521 = vpow.pop %v2520
    %v2522 = vmul.f32 %v2421, 1.442695
    %v2523 = vpow.pop %v2522
    %v2524 = vmul.f32 %v2422, 1.442695
    %v2525 = vpow.pop %v2524
    %v2526 = vmul.f32 %v2423, 1.442695
    %v2527 = vpow.pop %v2526
    %v2528 = vmul.f32 %v2424, 1.442695
    %v2529 = vpow.pop %v2528
    %v2530 = vmul.f32 %v2425, 1.442695
    %v2531 = vpow.pop %v2530
    %v2532 = vmul.f32 %v2426, 1.442695
    %v2533 = vpow.pop %v2532
    %v2534 = vmul.f32 %v2427, 1.442695
    %v2535 = vpow.pop %v2534
    %v2536 = vmul.f32 %v2428, 1.442695
    %v2537 = vpow.pop %v2536
    %v2538 = vmul.f32 %v2429, 1.442695
    %v2539 = vpow.pop %v2538
    %v2540 = vmul.f32 %v2430, 1.442695
    %v2541 = vpow.pop %v2540
    %v2542 = vmul.f32 %v2431, 1.442695
    %v2543 = vpow.pop %v2542
    %v2544 = vmul.f32 %v2432, 1.442695
    %v2545 = vpow.pop %v2544
    %v2546 = vmul.f32 %v2433, 1.442695
    %v2547 = vpow.pop %v2546
    %v2548 = vmul.f32 %v2434, 1.442695
    %v2549 = vpow.pop %v2548
    %v2550 = vmul.f32 %v2435, 1.442695
    %v2551 = vpow.pop %v2550
    %v2552 = vmul.f32 %v2436, 1.442695
    %v2553 = vpow.pop %v2552
    %v2554 = vmul.f32 %v2437, 1.442695
    %v2555 = vpow.pop %v2554
    %v2556 = vmul.f32 %v2438, 1.442695
    %v2557 = vpow.pop %v2556
    %v2558 = vmul.f32 %v2439, 1.442695
    %v2559 = vpow.pop %v2558
    %v2560 = vmul.f32 %v2440, 1.442695
    %v2561 = vpow.pop %v2560
    %v2562 = vmul.f32 %v2441, 1.442695
    %v2563 = vpow.pop %v2562
    %v2564 = vmul.f32 %v2442, 1.442695
    %v2565 = vpow.pop %v2564
    %v2566 = vmul.f32 %v2443, 1.442695
    %v2567 = vpow.pop %v2566
    %v2568 = vmul.f32 %v2444, 1.442695
    %v2569 = vpow.pop %v2568
    %v2570 = vmul.f32 %v2445, 1.442695
    %v2571 = vpow.pop %v2570
    %v2572 = vmul.f32 %v2446, 1.442695
    %v2573 = vpow.pop %v2572
    %v2574 = vmul.f32 %v2447, 1.442695
    %v2575 = vpow.pop %v2574
    %v2576 = vadd.f32 %v2449, %v2451
    %2577 = vadd.xlane.f32.xlu0 %v2576
    %v2578 = vpop.xlane.xlu0 %2577
    %v2579 = vadd.f32 %v2453, %v2455
    %2580 = vadd.xlane.f32.xlu0 %v2579
    %v2581 = vpop.xlane.xlu0 %2580
    %v2582 = vadd.f32 %v2457, %v2459
    %2583 = vadd.xlane.f32.xlu0 %v2582
    %v2584 = vpop.xlane.xlu0 %2583
    %v2585 = vadd.f32 %v2461, %v2463
    %2586 = vadd.xlane.f32.xlu0 %v2585
    %v2587 = vpop.xlane.xlu0 %2586
    %v2588 = vadd.f32 %v2465, %v2467
    %2589 = vadd.xlane.f32.xlu0 %v2588
    %v2590 = vpop.xlane.xlu0 %2589
    %v2591 = vadd.f32 %v2469, %v2471
    %2592 = vadd.xlane.f32.xlu0 %v2591
    %v2593 = vpop.xlane.xlu0 %2592
    %v2594 = vadd.f32 %v2473, %v2475
    %2595 = vadd.xlane.f32.xlu0 %v2594
    %v2596 = vpop.xlane.xlu0 %2595
    %v2597 = vadd.f32 %v2477, %v2479
    %2598 = vadd.xlane.f32.xlu0 %v2597
    %v2599 = vpop.xlane.xlu0 %2598
    %v2600 = vadd.f32 %v2481, %v2483
    %2601 = vadd.xlane.f32.xlu0 %v2600
    %v2602 = vpop.xlane.xlu0 %2601
    %v2603 = vadd.f32 %v2485, %v2487
    %2604 = vadd.xlane.f32.xlu0 %v2603
    %v2605 = vpop.xlane.xlu0 %2604
    %v2606 = vadd.f32 %v2489, %v2491
    %2607 = vadd.xlane.f32.xlu0 %v2606
    %v2608 = vpop.xlane.xlu0 %2607
    %v2609 = vadd.f32 %v2493, %v2495
    %2610 = vadd.xlane.f32.xlu0 %v2609
    %v2611 = vpop.xlane.xlu0 %2610
    %v2612 = vadd.f32 %v2497, %v2499
    %2613 = vadd.xlane.f32.xlu0 %v2612
    %v2614 = vpop.xlane.xlu0 %2613
    %v2615 = vadd.f32 %v2501, %v2503
    %2616 = vadd.xlane.f32.xlu0 %v2615
    %v2617 = vpop.xlane.xlu0 %2616
    %v2618 = vadd.f32 %v2505, %v2507
    %2619 = vadd.xlane.f32.xlu0 %v2618
    %v2620 = vpop.xlane.xlu0 %2619
    %v2621 = vadd.f32 %v2509, %v2511
    %2622 = vadd.xlane.f32.xlu0 %v2621
    %v2623 = vpop.xlane.xlu0 %2622
    %v2624 = vadd.f32 %v2513, %v2515
    %2625 = vadd.xlane.f32.xlu0 %v2624
    %v2626 = vpop.xlane.xlu0 %2625
    %v2627 = vadd.f32 %v2517, %v2519
    %2628 = vadd.xlane.f32.xlu0 %v2627
    %v2629 = vpop.xlane.xlu0 %2628
    %v2630 = vadd.f32 %v2521, %v2523
    %2631 = vadd.xlane.f32.xlu0 %v2630
    %v2632 = vpop.xlane.xlu0 %2631
    %v2633 = vadd.f32 %v2525, %v2527
    %2634 = vadd.xlane.f32.xlu0 %v2633
    %v2635 = vpop.xlane.xlu0 %2634
    %v2636 = vadd.f32 %v2529, %v2531
    %2637 = vadd.xlane.f32.xlu0 %v2636
    %v2638 = vpop.xlane.xlu0 %2637
    %v2639 = vadd.f32 %v2533, %v2535
    %2640 = vadd.xlane.f32.xlu0 %v2639
    %v2641 = vpop.xlane.xlu0 %2640
    %v2642 = vadd.f32 %v2537, %v2539
    %2643 = vadd.xlane.f32.xlu0 %v2642
    %v2644 = vpop.xlane.xlu0 %2643
    %v2645 = vadd.f32 %v2541, %v2543
    %2646 = vadd.xlane.f32.xlu0 %v2645
    %v2647 = vpop.xlane.xlu0 %2646
    %v2648 = vadd.f32 %v2545, %v2547
    %2649 = vadd.xlane.f32.xlu0 %v2648
    %v2650 = vpop.xlane.xlu0 %2649
    %v2651 = vadd.f32 %v2549, %v2551
    %2652 = vadd.xlane.f32.xlu0 %v2651
    %v2653 = vpop.xlane.xlu0 %2652
    %v2654 = vadd.f32 %v2553, %v2555
    %2655 = vadd.xlane.f32.xlu0 %v2654
    %v2656 = vpop.xlane.xlu0 %2655
    %v2657 = vadd.f32 %v2557, %v2559
    %2658 = vadd.xlane.f32.xlu0 %v2657
    %v2659 = vpop.xlane.xlu0 %2658
    %v2660 = vadd.f32 %v2561, %v2563
    %2661 = vadd.xlane.f32.xlu0 %v2660
    %v2662 = vpop.xlane.xlu0 %2661
    %v2663 = vadd.f32 %v2565, %v2567
    %2664 = vadd.xlane.f32.xlu0 %v2663
    %v2665 = vpop.xlane.xlu0 %2664
    %v2666 = vadd.f32 %v2569, %v2571
    %2667 = vadd.xlane.f32.xlu0 %v2666
    %v2668 = vpop.xlane.xlu0 %2667
    %v2669 = vadd.f32 %v2573, %v2575
    %2670 = vadd.xlane.f32.xlu0 %v2669
    %v2671 = vpop.xlane.xlu0 %2670
    %v2672 = vpack.c.bf16 %v2453, %v2449
    %v2673 = vpack.c.bf16 %v2455, %v2451
    %v2674 = vpack.c.bf16 %v2461, %v2457
    %v2675 = vpack.c.bf16 %v2463, %v2459
    %v2676 = vpack.c.bf16 %v2469, %v2465
    %v2677 = vpack.c.bf16 %v2471, %v2467
    %v2678 = vpack.c.bf16 %v2477, %v2473
    %v2679 = vpack.c.bf16 %v2479, %v2475
    %v2680 = vpack.c.bf16 %v2485, %v2481
    %v2681 = vpack.c.bf16 %v2487, %v2483
    %v2682 = vpack.c.bf16 %v2493, %v2489
    %v2683 = vpack.c.bf16 %v2495, %v2491
    %v2684 = vpack.c.bf16 %v2501, %v2497
    %v2685 = vpack.c.bf16 %v2503, %v2499
    %v2686 = vpack.c.bf16 %v2509, %v2505
    %v2687 = vpack.c.bf16 %v2511, %v2507
    %v2688 = vpack.c.bf16 %v2517, %v2513
    %v2689 = vpack.c.bf16 %v2519, %v2515
    %v2690 = vpack.c.bf16 %v2525, %v2521
    %v2691 = vpack.c.bf16 %v2527, %v2523
    %v2692 = vpack.c.bf16 %v2533, %v2529
    %v2693 = vpack.c.bf16 %v2535, %v2531
    %v2694 = vpack.c.bf16 %v2541, %v2537
    %v2695 = vpack.c.bf16 %v2543, %v2539
    %v2696 = vpack.c.bf16 %v2549, %v2545
    %v2697 = vpack.c.bf16 %v2551, %v2547
    %v2698 = vpack.c.bf16 %v2557, %v2553
    %v2699 = vpack.c.bf16 %v2559, %v2555
    %v2700 = vpack.c.bf16 %v2565, %v2561
    %v2701 = vpack.c.bf16 %v2567, %v2563
    %v2702 = vpack.c.bf16 %v2573, %v2569
    %v2703 = vpack.c.bf16 %v2575, %v2571
    %v2704 = vpack.c.bf16 %v1646, %v1643
    %v2705 = vpack.c.bf16 %v1654, %v1651
    %v2706 = vpack.c.bf16 %v1662, %v1659
    %v2707 = vpack.c.bf16 %v1670, %v1667
    %v2708 = vpack.c.bf16 %v1678, %v1675
    %v2709 = vpack.c.bf16 %v1686, %v1683
    %v2710 = vpack.c.bf16 %v1694, %v1691
    %v2711 = vpack.c.bf16 %v1702, %v1699
    %v2712 = vpack.c.bf16 %v1710, %v1707
    %v2713 = vpack.c.bf16 %v1718, %v1715
    %v2714 = vpack.c.bf16 %v1726, %v1723
    %v2715 = vpack.c.bf16 %v1734, %v1731
    %v2716 = vpack.c.bf16 %v1742, %v1739
    %v2717 = vpack.c.bf16 %v1750, %v1747
    %v2718 = vpack.c.bf16 %v1758, %v1755
    %v2719 = vpack.c.bf16 %v1766, %v1763
    %2720 = vmatprep.subr.bf16.mxu0 0
    %2721 = vmatpush1.bf16.msra.mxu0 %v2704
    %2722 = vmatprep.subr.bf16.mxu0 0
    %2723 = vmatpush1.bf16.msra.mxu0 %v2705
    %2724 = vmatprep.subr.bf16.mxu0 0
    %2725 = vmatpush1.bf16.msra.mxu0 %v2706
    %2726 = vmatprep.subr.bf16.mxu0 0
    %2727 = vmatpush1.bf16.msra.mxu0 %v2707
    %2728 = vmatprep.subr.bf16.mxu0 0
    %2729 = vmatpush1.bf16.msra.mxu0 %v2708
    %2730 = vmatprep.subr.bf16.mxu0 0
    %2731 = vmatpush1.bf16.msra.mxu0 %v2709
    %2732 = vmatprep.subr.bf16.mxu0 0
    %2733 = vmatpush1.bf16.msra.mxu0 %v2710
    %2734 = vmatprep.subr.bf16.mxu0 0
    %2735 = vmatpush1.bf16.msra.mxu0 %v2711
    %2736 = vmatprep.subr.bf16.mxu0 0
    %2737 = vmatpush1.bf16.msra.mxu0 %v2712
    %2738 = vmatprep.subr.bf16.mxu0 0
    %2739 = vmatpush1.bf16.msra.mxu0 %v2713
    %2740 = vmatprep.subr.bf16.mxu0 0
    %2741 = vmatpush1.bf16.msra.mxu0 %v2714
    %2742 = vmatprep.subr.bf16.mxu0 0
    %2743 = vmatpush1.bf16.msra.mxu0 %v2715
    %2744 = vmatprep.subr.bf16.mxu0 0
    %2745 = vmatpush1.bf16.msra.mxu0 %v2716
    %2746 = vmatprep.subr.bf16.mxu0 0
    %2747 = vmatpush1.bf16.msra.mxu0 %v2717
    %2748 = vmatprep.subr.bf16.mxu0 0
    %2749 = vmatpush1.bf16.msra.mxu0 %v2718
    %2750 = vmatprep.subr.bf16.mxu0 0
    %2751 = vmatpush1.bf16.msra.mxu0 %v2719
    %2752 = vmatprep.mubr.bf16.mxu0 %v2673
    %2753 = vmatmul.mubr.bf16.gmra.mrb[0].mxu0 %v2672
    %v2754 = vpop.f32.mrb[0].mxu0
    %v2755 = vadd.f32 0.0, %v2754
    %v2756 = vpop.f32.mrb[0].mxu0
    %v2757 = vpop.f32.mrb[0].mxu0
    %v2758 = vadd.f32 0.0, %v2757
    %v2759 = vpop.f32.mrb[0].mxu0
    %2760 = vmatprep.mubr.bf16.mxu0 %v2675
    %2761 = vmatmul.mubr.bf16.gmra.mrb[0].mxu0 %v2674
    %v2762 = vpop.f32.mrb[0].mxu0
    %v2763 = vadd.f32 0.0, %v2762
    %v2764 = vpop.f32.mrb[0].mxu0
    %v2765 = vpop.f32.mrb[0].mxu0
    %v2766 = vadd.f32 0.0, %v2765
    %v2767 = vpop.f32.mrb[0].mxu0
    %2768 = vmatprep.mubr.bf16.mxu0 %v2677
    %2769 = vmatmul.mubr.bf16.gmra.mrb[0].mxu0 %v2676
    %v2770 = vpop.f32.mrb[0].mxu0
    %v2771 = vadd.f32 0.0, %v2770
    %v2772 = vpop.f32.mrb[0].mxu0
    %v2773 = vpop.f32.mrb[0].mxu0
    %v2774 = vadd.f32 0.0, %v2773
    %v2775 = vpop.f32.mrb[0].mxu0
    %2776 = vmatprep.mubr.bf16.mxu0 %v2679
    %2777 = vmatmul.mubr.bf16.gmra.mrb[0].mxu0 %v2678
    %v2778 = vpop.f32.mrb[0].mxu0
    %v2779 = vadd.f32 0.0, %v2778
    %v2780 = vpop.f32.mrb[0].mxu0
    %v2781 = vpop.f32.mrb[0].mxu0
    %v2782 = vadd.f32 0.0, %v2781
    %v2783 = vpop.f32.mrb[0].mxu0
    %2784 = vmatprep.mubr.bf16.mxu0 %v2681
    %2785 = vmatmul.mubr.bf16.gmra.mrb[0].mxu0 %v2680
    %v2786 = vpop.f32.mrb[0].mxu0
    %v2787 = vadd.f32 0.0, %v2786
    %v2788 = vpop.f32.mrb[0].mxu0
    %v2789 = vpop.f32.mrb[0].mxu0
    %v2790 = vadd.f32 0.0, %v2789
    %v2791 = vpop.f32.mrb[0].mxu0
    %2792 = vmatprep.mubr.bf16.mxu0 %v2683
    %2793 = vmatmul.mubr.bf16.gmra.mrb[0].mxu0 %v2682
    %v2794 = vpop.f32.mrb[0].mxu0
    %v2795 = vadd.f32 0.0, %v2794
    %v2796 = vpop.f32.mrb[0].mxu0
    %v2797 = vpop.f32.mrb[0].mxu0
    %v2798 = vadd.f32 0.0, %v2797
    %v2799 = vpop.f32.mrb[0].mxu0
    %2800 = vmatprep.mubr.bf16.mxu0 %v2685
    %2801 = vmatmul.mubr.bf16.gmra.mrb[0].mxu0 %v2684
    %v2802 = vpop.f32.mrb[0].mxu0
    %v2803 = vadd.f32 0.0, %v2802
    %v2804 = vpop.f32.mrb[0].mxu0
    %v2805 = vpop.f32.mrb[0].mxu0
    %v2806 = vadd.f32 0.0, %v2805
    %v2807 = vpop.f32.mrb[0].mxu0
    %2808 = vmatprep.mubr.bf16.mxu0 %v2687
    %2809 = vmatmul.mubr.bf16.gmra.mrb[0].mxu0 %v2686
    %v2810 = vpop.f32.mrb[0].mxu0
    %v2811 = vadd.f32 0.0, %v2810
    %v2812 = vpop.f32.mrb[0].mxu0
    %v2813 = vpop.f32.mrb[0].mxu0
    %v2814 = vadd.f32 0.0, %v2813
    %v2815 = vpop.f32.mrb[0].mxu0
    %2816 = vmatprep.mubr.bf16.mxu0 %v2689
    %2817 = vmatmul.mubr.bf16.gmra.mrb[0].mxu0 %v2688
    %v2818 = vpop.f32.mrb[0].mxu0
    %v2819 = vadd.f32 0.0, %v2818
    %v2820 = vpop.f32.mrb[0].mxu0
    %v2821 = vpop.f32.mrb[0].mxu0
    %v2822 = vadd.f32 0.0, %v2821
    %v2823 = vpop.f32.mrb[0].mxu0
    %2824 = vmatprep.mubr.bf16.mxu0 %v2691
    %2825 = vmatmul.mubr.bf16.gmra.mrb[0].mxu0 %v2690
    %v2826 = vpop.f32.mrb[0].mxu0
    %v2827 = vadd.f32 0.0, %v2826
    %v2828 = vpop.f32.mrb[0].mxu0
    %v2829 = vpop.f32.mrb[0].mxu0
    %v2830 = vadd.f32 0.0, %v2829
    %v2831 = vpop.f32.mrb[0].mxu0
    %2832 = vmatprep.mubr.bf16.mxu0 %v2693
    %2833 = vmatmul.mubr.bf16.gmra.mrb[0].mxu0 %v2692
    %v2834 = vpop.f32.mrb[0].mxu0
    %v2835 = vadd.f32 0.0, %v2834
    %v2836 = vpop.f32.mrb[0].mxu0
    %v2837 = vpop.f32.mrb[0].mxu0
    %v2838 = vadd.f32 0.0, %v2837
    %v2839 = vpop.f32.mrb[0].mxu0
    %2840 = vmatprep.mubr.bf16.mxu0 %v2695
    %2841 = vmatmul.mubr.bf16.gmra.mrb[0].mxu0 %v2694
    %v2842 = vpop.f32.mrb[0].mxu0
    %v2843 = vadd.f32 0.0, %v2842
    %v2844 = vpop.f32.mrb[0].mxu0
    %v2845 = vpop.f32.mrb[0].mxu0
    %v2846 = vadd.f32 0.0, %v2845
    %v2847 = vpop.f32.mrb[0].mxu0
    %2848 = vmatprep.mubr.bf16.mxu0 %v2697
    %2849 = vmatmul.mubr.bf16.gmra.mrb[0].mxu0 %v2696
    %v2850 = vpop.f32.mrb[0].mxu0
    %v2851 = vadd.f32 0.0, %v2850
    %v2852 = vpop.f32.mrb[0].mxu0
    %v2853 = vpop.f32.mrb[0].mxu0
    %v2854 = vadd.f32 0.0, %v2853
    %v2855 = vpop.f32.mrb[0].mxu0
    %2856 = vmatprep.mubr.bf16.mxu0 %v2699
    %2857 = vmatmul.mubr.bf16.gmra.mrb[0].mxu0 %v2698
    %v2858 = vpop.f32.mrb[0].mxu0
    %v2859 = vadd.f32 0.0, %v2858
    %v2860 = vpop.f32.mrb[0].mxu0
    %v2861 = vpop.f32.mrb[0].mxu0
    %v2862 = vadd.f32 0.0, %v2861
    %v2863 = vpop.f32.mrb[0].mxu0
    %2864 = vmatprep.mubr.bf16.mxu0 %v2701
    %2865 = vmatmul.mubr.bf16.gmra.mrb[0].mxu0 %v2700
    %v2866 = vpop.f32.mrb[0].mxu0
    %v2867 = vadd.f32 0.0, %v2866
    %v2868 = vpop.f32.mrb[0].mxu0
    %v2869 = vpop.f32.mrb[0].mxu0
    %v2870 = vadd.f32 0.0, %v2869
    %v2871 = vpop.f32.mrb[0].mxu0
    %2872 = vmatprep.mubr.bf16.mxu0 %v2703
    %2873 = vmatmul.mubr.bf16.gmra.mrb[0].mxu0 %v2702
    %v2874 = vpop.f32.mrb[0].mxu0
    %v2875 = vadd.f32 0.0, %v2874
    %v2876 = vpop.f32.mrb[0].mxu0
    %v2877 = vpop.f32.mrb[0].mxu0
    %v2878 = vadd.f32 0.0, %v2877
    %v2879 = vpop.f32.mrb[0].mxu0
    %2880 = vdwg.mxu0
    %v2881 = vrcp.pop %v2578
    %v2882 = vrcp.pop %v2581
    %v2883 = vrcp.pop %v2584
    %v2884 = vrcp.pop %v2587
    %v2885 = vrcp.pop %v2590
    %v2886 = vrcp.pop %v2593
    %v2887 = vrcp.pop %v2596
    %v2888 = vrcp.pop %v2599
    %v2889 = vrcp.pop %v2602
    %v2890 = vrcp.pop %v2605
    %v2891 = vrcp.pop %v2608
    %v2892 = vrcp.pop %v2611
    %v2893 = vrcp.pop %v2614
    %v2894 = vrcp.pop %v2617
    %v2895 = vrcp.pop %v2620
    %v2896 = vrcp.pop %v2623
    %v2897 = vrcp.pop %v2626
    %v2898 = vrcp.pop %v2629
    %v2899 = vrcp.pop %v2632
    %v2900 = vrcp.pop %v2635
    %v2901 = vrcp.pop %v2638
    %v2902 = vrcp.pop %v2641
    %v2903 = vrcp.pop %v2644
    %v2904 = vrcp.pop %v2647
    %v2905 = vrcp.pop %v2650
    %v2906 = vrcp.pop %v2653
    %v2907 = vrcp.pop %v2656
    %v2908 = vrcp.pop %v2659
    %v2909 = vrcp.pop %v2662
    %v2910 = vrcp.pop %v2665
    %v2911 = vrcp.pop %v2668
    %v2912 = vrcp.pop %v2671
    %v2913 = vmul.f32 %v2755, %v2881
    %v2914 = vmul.f32 %v2758, %v2882
    %v2915 = vmul.f32 %v2763, %v2883
    %v2916 = vmul.f32 %v2766, %v2884
    %v2917 = vmul.f32 %v2771, %v2885
    %v2918 = vmul.f32 %v2774, %v2886
    %v2919 = vmul.f32 %v2779, %v2887
    %v2920 = vmul.f32 %v2782, %v2888
    %v2921 = vmul.f32 %v2787, %v2889
    %v2922 = vmul.f32 %v2790, %v2890
    %v2923 = vmul.f32 %v2795, %v2891
    %v2924 = vmul.f32 %v2798, %v2892
    %v2925 = vmul.f32 %v2803, %v2893
    %v2926 = vmul.f32 %v2806, %v2894
    %v2927 = vmul.f32 %v2811, %v2895
    %v2928 = vmul.f32 %v2814, %v2896
    %v2929 = vmul.f32 %v2819, %v2897
    %v2930 = vmul.f32 %v2822, %v2898
    %v2931 = vmul.f32 %v2827, %v2899
    %v2932 = vmul.f32 %v2830, %v2900
    %v2933 = vmul.f32 %v2835, %v2901
    %v2934 = vmul.f32 %v2838, %v2902
    %v2935 = vmul.f32 %v2843, %v2903
    %v2936 = vmul.f32 %v2846, %v2904
    %v2937 = vmul.f32 %v2851, %v2905
    %v2938 = vmul.f32 %v2854, %v2906
    %v2939 = vmul.f32 %v2859, %v2907
    %v2940 = vmul.f32 %v2862, %v2908
    %v2941 = vmul.f32 %v2867, %v2909
    %v2942 = vmul.f32 %v2870, %v2910
    %v2943 = vmul.f32 %v2875, %v2911
    %v2944 = vmul.f32 %v2878, %v2912
    %v2945 = vpack.c.bf16 %v2914, %v2913
    %v2946 = vpack.c.bf16 %v2916, %v2915
    %v2947 = vpack.c.bf16 %v2918, %v2917
    %v2948 = vpack.c.bf16 %v2920, %v2919
    %v2949 = vpack.c.bf16 %v2922, %v2921
    %v2950 = vpack.c.bf16 %v2924, %v2923
    %v2951 = vpack.c.bf16 %v2926, %v2925
    %v2952 = vpack.c.bf16 %v2928, %v2927
    %v2953 = vpack.c.bf16 %v2930, %v2929
    %v2954 = vpack.c.bf16 %v2932, %v2931
    %v2955 = vpack.c.bf16 %v2934, %v2933
    %v2956 = vpack.c.bf16 %v2936, %v2935
    %v2957 = vpack.c.bf16 %v2938, %v2937
    %v2958 = vpack.c.bf16 %v2940, %v2939
    %v2959 = vpack.c.bf16 %v2942, %v2941
    %v2960 = vpack.c.bf16 %v2944, %v2943
    %v2961 = vlaneseq
    %v2962 = vshrl.u32 %v2961, 7
    %v2963 = vsub.s32 0, %v2962
    %v2964 = vrot.slane %v484, %v2963
    %v2973 = vunpack.c.l.b16 %v95
    %v2974 = vunpack.c.h.b16 %v95
    %v2975 = vunpack.c.l.b16 %v96
    %v2976 = vunpack.c.h.b16 %v96
    %v2977 = vunpack.c.l.b16 %v97
    %v2978 = vunpack.c.h.b16 %v97
    %v2979 = vunpack.c.l.b16 %v98
    %v2980 = vunpack.c.h.b16 %v98
    %v2981 = vunpack.c.l.b16 %v99
    %v2982 = vunpack.c.h.b16 %v99
    %v2983 = vunpack.c.l.b16 %v100
    %v2984 = vunpack.c.h.b16 %v100
    %v2985 = vunpack.c.l.b16 %v101
    %v2986 = vunpack.c.h.b16 %v101
    %v2987 = vunpack.c.l.b16 %v102
    %v2988 = vunpack.c.h.b16 %v102
    %v2989 = vpack.c.b16 %v2975, %v2973
    %v2990 = vpack.c.b16 %v2976, %v2974
    %v2991 = vpack.c.b16 %v2979, %v2977
    %v2992 = vpack.c.b16 %v2980, %v2978
    %v2993 = vpack.c.b16 %v2983, %v2981
    %v2994 = vpack.c.b16 %v2984, %v2982
    %v2995 = vpack.c.b16 %v2987, %v2985
    %v2996 = vpack.c.b16 %v2988, %v2986
    %3005 = vmatprep.subr.bf16.mxu0 0
    %3006 = vmatpush1.bf16.msra.mxu0 %v2945
    %3007 = vmatprep.subr.bf16.mxu0 0
    %3008 = vmatpush1.bf16.msra.mxu0 %v2946
    %3009 = vmatprep.subr.bf16.mxu0 0
    %3010 = vmatpush1.bf16.msra.mxu0 %v2947
    %3011 = vmatprep.subr.bf16.mxu0 0
    %3012 = vmatpush1.bf16.msra.mxu0 %v2948
    %3013 = vmatprep.subr.bf16.mxu0 0
    %3014 = vmatpush1.bf16.msra.mxu0 %v2949
    %3015 = vmatprep.subr.bf16.mxu0 0
    %3016 = vmatpush1.bf16.msra.mxu0 %v2950
    %3017 = vmatprep.subr.bf16.mxu0 0
    %3018 = vmatpush1.bf16.msra.mxu0 %v2951
    %3019 = vmatprep.subr.bf16.mxu0 0
    %3020 = vmatpush1.bf16.msra.mxu0 %v2952
    %3021 = vmatprep.subr.bf16.mxu0 0
    %3022 = vmatpush1.bf16.msra.mxu0 %v2953
    %3023 = vmatprep.subr.bf16.mxu0 0
    %3024 = vmatpush1.bf16.msra.mxu0 %v2954
    %3025 = vmatprep.subr.bf16.mxu0 0
    %3026 = vmatpush1.bf16.msra.mxu0 %v2955
    %3027 = vmatprep.subr.bf16.mxu0 0
    %3028 = vmatpush1.bf16.msra.mxu0 %v2956
    %3029 = vmatprep.subr.bf16.mxu0 0
    %3030 = vmatpush1.bf16.msra.mxu0 %v2957
    %3031 = vmatprep.subr.bf16.mxu0 0
    %3032 = vmatpush1.bf16.msra.mxu0 %v2958
    %3033 = vmatprep.subr.bf16.mxu0 0
    %3034 = vmatpush1.bf16.msra.mxu0 %v2959
    %3035 = vmatprep.subr.bf16.mxu0 0
    %3036 = vmatpush1.bf16.msra.mxu0 %v2960
    %3037 = vmatprep.mubr.bf16.mxu0 %v2990
    %3038 = vmatmul.mubr.bf16.gmra.mrb[0].mxu0 %v2989
    %v3039 = vpop.f32.mrb[0].mxu0
    %v3040 = vadd.f32 %v2964, %v3039
    %v3041 = vpop.f32.mrb[0].mxu0
    %v3042 = vpop.f32.mrb[0].mxu0
    %v3043 = vadd.f32 %v2964, %v3042
    %v3044 = vpop.f32.mrb[0].mxu0
    %3045 = vmatprep.mubr.bf16.mxu0 %v2992
    %3046 = vmatmul.mubr.bf16.gmra.mrb[0].mxu0 %v2991
    %v3047 = vpop.f32.mrb[0].mxu0
    %v3048 = vadd.f32 %v2964, %v3047
    %v3049 = vpop.f32.mrb[0].mxu0
    %v3050 = vpop.f32.mrb[0].mxu0
    %v3051 = vadd.f32 %v2964, %v3050
    %v3052 = vpop.f32.mrb[0].mxu0
    %3053 = vmatprep.mubr.bf16.mxu0 %v2994
    %3054 = vmatmul.mubr.bf16.gmra.mrb[0].mxu0 %v2993
    %v3055 = vpop.f32.mrb[0].mxu0
    %v3056 = vadd.f32 %v2964, %v3055
    %v3057 = vpop.f32.mrb[0].mxu0
    %v3058 = vpop.f32.mrb[0].mxu0
    %v3059 = vadd.f32 %v2964, %v3058
    %v3060 = vpop.f32.mrb[0].mxu0
    %3061 = vmatprep.mubr.bf16.mxu0 %v2996
    %3062 = vmatmul.mubr.bf16.gmra.mrb[0].mxu0 %v2995
    %v3063 = vpop.f32.mrb[0].mxu0
    %v3064 = vadd.f32 %v2964, %v3063
    %v3065 = vpop.f32.mrb[0].mxu0
    %v3066 = vpop.f32.mrb[0].mxu0
    %v3067 = vadd.f32 %v2964, %v3066
    %v3068 = vpop.f32.mrb[0].mxu0
    %3069 = vdwg.mxu0
    %v3070 = vmax.f32 %v3040, 0.0
    %v3071 = vmax.f32 %v3043, 0.0
    %v3072 = vmax.f32 %v3048, 0.0
    %v3073 = vmax.f32 %v3051, 0.0
    %v3074 = vmax.f32 %v3056, 0.0
    %v3075 = vmax.f32 %v3059, 0.0
    %v3076 = vmax.f32 %v3064, 0.0
    %v3077 = vmax.f32 %v3067, 0.0
    %v3078 = vsel %vm120, %v3070, 0.0
    %3079 = vadd.xlane.f32.xlu0 %v3078
    %v3080 = vpop.xlane.xlu0 %3079
    %v3081 = vsel %vm120, %v3071, 0.0
    %3082 = vadd.xlane.f32.xlu0 %v3081
    %v3083 = vpop.xlane.xlu0 %3082
    %v3084 = vsel %vm120, %v3072, 0.0
    %3085 = vadd.xlane.f32.xlu0 %v3084
    %v3086 = vpop.xlane.xlu0 %3085
    %v3087 = vsel %vm120, %v3073, 0.0
    %3088 = vadd.xlane.f32.xlu0 %v3087
    %v3089 = vpop.xlane.xlu0 %3088
    %v3090 = vsel %vm120, %v3074, 0.0
    %3091 = vadd.xlane.f32.xlu0 %v3090
    %v3092 = vpop.xlane.xlu0 %3091
    %v3093 = vsel %vm120, %v3075, 0.0
    %3094 = vadd.xlane.f32.xlu0 %v3093
    %v3095 = vpop.xlane.xlu0 %3094
    %v3096 = vsel %vm120, %v3076, 0.0
    %3097 = vadd.xlane.f32.xlu0 %v3096
    %v3098 = vpop.xlane.xlu0 %3097
    %v3099 = vsel %vm120, %v3077, 0.0
    %3100 = vadd.xlane.f32.xlu0 %v3099
    %v3101 = vpop.xlane.xlu0 %3100
    %v3102 = vmul.f32 %v3080, %v284
    %v3103 = vmul.f32 %v3083, %v284
    %v3104 = vmul.f32 %v3086, %v284
    %v3105 = vmul.f32 %v3089, %v284
    %v3106 = vmul.f32 %v3092, %v284
    %v3107 = vmul.f32 %v3095, %v284
    %v3108 = vmul.f32 %v3098, %v284
    %v3109 = vmul.f32 %v3101, %v284
    %v3110 = vsub.f32 %v3070, %v3102
    %v3111 = vsub.f32 %v3071, %v3103
    %v3112 = vsub.f32 %v3072, %v3104
    %v3113 = vsub.f32 %v3073, %v3105
    %v3114 = vsub.f32 %v3074, %v3106
    %v3115 = vsub.f32 %v3075, %v3107
    %v3116 = vsub.f32 %v3076, %v3108
    %v3117 = vsub.f32 %v3077, %v3109
    %v3118 = vmul.f32 %v3110, %v3110
    %v3119 = vmul.f32 %v3111, %v3111
    %v3120 = vmul.f32 %v3112, %v3112
    %v3121 = vmul.f32 %v3113, %v3113
    %v3122 = vmul.f32 %v3114, %v3114
    %v3123 = vmul.f32 %v3115, %v3115
    %v3124 = vmul.f32 %v3116, %v3116
    %v3125 = vmul.f32 %v3117, %v3117
    %v3126 = vsel %vm120, %v3118, 0.0
    %3127 = vadd.xlane.f32.xlu0 %v3126
    %v3128 = vpop.xlane.xlu0 %3127
    %v3129 = vsel %vm120, %v3119, 0.0
    %3130 = vadd.xlane.f32.xlu0 %v3129
    %v3131 = vpop.xlane.xlu0 %3130
    %v3132 = vsel %vm120, %v3120, 0.0
    %3133 = vadd.xlane.f32.xlu0 %v3132
    %v3134 = vpop.xlane.xlu0 %3133
    %v3135 = vsel %vm120, %v3121, 0.0
    %3136 = vadd.xlane.f32.xlu0 %v3135
    %v3137 = vpop.xlane.xlu0 %3136
    %v3138 = vsel %vm120, %v3122, 0.0
    %3139 = vadd.xlane.f32.xlu0 %v3138
    %v3140 = vpop.xlane.xlu0 %3139
    %v3141 = vsel %vm120, %v3123, 0.0
    %3142 = vadd.xlane.f32.xlu0 %v3141
    %v3143 = vpop.xlane.xlu0 %3142
    %v3144 = vsel %vm120, %v3124, 0.0
    %3145 = vadd.xlane.f32.xlu0 %v3144
    %v3146 = vpop.xlane.xlu0 %3145
    %v3147 = vsel %vm120, %v3125, 0.0
    %3148 = vadd.xlane.f32.xlu0 %v3147
    %v3149 = vpop.xlane.xlu0 %3148
    %v3150 = vmul.f32 %v3128, 0.032258064
    %v3151 = vmul.f32 %v3131, 0.032258064
    %v3152 = vmul.f32 %v3134, 0.032258064
    %v3153 = vmul.f32 %v3137, 0.032258064
    %v3154 = vmul.f32 %v3140, 0.032258064
    %v3155 = vmul.f32 %v3143, 0.032258064
    %v3156 = vmul.f32 %v3146, 0.032258064
    %v3157 = vmul.f32 %v3149, 0.032258064
    %v3158 = vrsqrt.pop %v3150
    %v3159 = vmul.f32 %v3150, %v3158
    %vm3160 = vcmp.eq.f32.partialorder %v3150, inf
    %v3161 = vsel %vm3160, %v3150, %v3159
    %vm3162 = vcmp.eq.f32.partialorder %v3150, 0.0
    %v3163 = vand.u32 %v3150, 2147483648
    %v3164 = vsel %vm3162, %v3163, %v3161
    %v3165 = vrsqrt.pop %v3151
    %v3166 = vmul.f32 %v3151, %v3165
    %vm3167 = vcmp.eq.f32.partialorder %v3151, inf
    %v3168 = vsel %vm3167, %v3151, %v3166
    %vm3169 = vcmp.eq.f32.partialorder %v3151, 0.0
    %v3170 = vand.u32 %v3151, 2147483648
    %v3171 = vsel %vm3169, %v3170, %v3168
    %v3172 = vrsqrt.pop %v3152
    %v3173 = vmul.f32 %v3152, %v3172
    %vm3174 = vcmp.eq.f32.partialorder %v3152, inf
    %v3175 = vsel %vm3174, %v3152, %v3173
    %vm3176 = vcmp.eq.f32.partialorder %v3152, 0.0
    %v3177 = vand.u32 %v3152, 2147483648
    %v3178 = vsel %vm3176, %v3177, %v3175
    %v3179 = vrsqrt.pop %v3153
    %v3180 = vmul.f32 %v3153, %v3179
    %vm3181 = vcmp.eq.f32.partialorder %v3153, inf
    %v3182 = vsel %vm3181, %v3153, %v3180
    %vm3183 = vcmp.eq.f32.partialorder %v3153, 0.0
    %v3184 = vand.u32 %v3153, 2147483648
    %v3185 = vsel %vm3183, %v3184, %v3182
    %v3186 = vrsqrt.pop %v3154
    %v3187 = vmul.f32 %v3154, %v3186
    %vm3188 = vcmp.eq.f32.partialorder %v3154, inf
    %v3189 = vsel %vm3188, %v3154, %v3187
    %vm3190 = vcmp.eq.f32.partialorder %v3154, 0.0
    %v3191 = vand.u32 %v3154, 2147483648
    %v3192 = vsel %vm3190, %v3191, %v3189
    %v3193 = vrsqrt.pop %v3155
    %v3194 = vmul.f32 %v3155, %v3193
    %vm3195 = vcmp.eq.f32.partialorder %v3155, inf
    %v3196 = vsel %vm3195, %v3155, %v3194
    %vm3197 = vcmp.eq.f32.partialorder %v3155, 0.0
    %v3198 = vand.u32 %v3155, 2147483648
    %v3199 = vsel %vm3197, %v3198, %v3196
    %v3200 = vrsqrt.pop %v3156
    %v3201 = vmul.f32 %v3156, %v3200
    %vm3202 = vcmp.eq.f32.partialorder %v3156, inf
    %v3203 = vsel %vm3202, %v3156, %v3201
    %vm3204 = vcmp.eq.f32.partialorder %v3156, 0.0
    %v3205 = vand.u32 %v3156, 2147483648
    %v3206 = vsel %vm3204, %v3205, %v3203
    %v3207 = vrsqrt.pop %v3157
    %v3208 = vmul.f32 %v3157, %v3207
    %vm3209 = vcmp.eq.f32.partialorder %v3157, inf
    %v3210 = vsel %vm3209, %v3157, %v3208
    %vm3211 = vcmp.eq.f32.partialorder %v3157, 0.0
    %v3212 = vand.u32 %v3157, 2147483648
    %v3213 = vsel %vm3211, %v3212, %v3210
    %v3214 = vadd.f32 %v3164, 1e-06
    %v3215 = vadd.f32 %v3171, 1e-06
    %v3216 = vadd.f32 %v3178, 1e-06
    %v3217 = vadd.f32 %v3185, 1e-06
    %v3218 = vadd.f32 %v3192, 1e-06
    %v3219 = vadd.f32 %v3199, 1e-06
    %v3220 = vadd.f32 %v3206, 1e-06
    %v3221 = vadd.f32 %v3213, 1e-06
    %v3222 = vrcp.pop %v3214
    %v3223 = vmul.f32 1.0, %v3222
    %v3224 = vrcp.pop %v3215
    %v3225 = vmul.f32 1.0, %v3224
    %v3226 = vrcp.pop %v3216
    %v3227 = vmul.f32 1.0, %v3226
    %v3228 = vrcp.pop %v3217
    %v3229 = vmul.f32 1.0, %v3228
    %v3230 = vrcp.pop %v3218
    %v3231 = vmul.f32 1.0, %v3230
    %v3232 = vrcp.pop %v3219
    %v3233 = vmul.f32 1.0, %v3232
    %v3234 = vrcp.pop %v3220
    %v3235 = vmul.f32 1.0, %v3234
    %v3236 = vrcp.pop %v3221
    %v3237 = vmul.f32 1.0, %v3236
    %v3238 = vlaneseq
    %v3239 = vshrl.u32 %v3238, 7
    %v3240 = vsub.s32 0, %v3239
    %v3241 = vrot.slane %v485, %v3240
    %v3242 = vmul.f32 %v3241, %v3110
    %v3243 = vmul.f32 %v3241, %v3111
    %v3244 = vmul.f32 %v3241, %v3112
    %v3245 = vmul.f32 %v3241, %v3113
    %v3246 = vmul.f32 %v3241, %v3114
    %v3247 = vmul.f32 %v3241, %v3115
    %v3248 = vmul.f32 %v3241, %v3116
    %v3249 = vmul.f32 %v3241, %v3117
    %v3250 = vmul.f32 %v3242, %v3223
    %v3251 = vmul.f32 %v3243, %v3225
    %v3252 = vmul.f32 %v3244, %v3227
    %v3253 = vmul.f32 %v3245, %v3229
    %v3254 = vmul.f32 %v3246, %v3231
    %v3255 = vmul.f32 %v3247, %v3233
    %v3256 = vmul.f32 %v3248, %v3235
    %v3257 = vmul.f32 %v3249, %v3237
    %v3258 = vlaneseq
    %v3259 = vshrl.u32 %v3258, 7
    %v3260 = vsub.s32 0, %v3259
    %v3261 = vrot.slane %v486, %v3260
    %v3262 = vadd.f32 %v3250, %v3261
    %v3263 = vadd.f32 %v3251, %v3261
    %v3264 = vadd.f32 %v3252, %v3261
    %v3265 = vadd.f32 %v3253, %v3261
    %v3266 = vadd.f32 %v3254, %v3261
    %v3267 = vadd.f32 %v3255, %v3261
    %v3268 = vadd.f32 %v3256, %v3261
    %v3269 = vadd.f32 %v3257, %v3261
    %s3270 = scalar_lea.vmem %s3, 64
    %v3271 = vld [vmem:[%s3270] sm:$0xff]
    %v3272 = vld [vmem:[%s3270 + $0x8] sm:$0xff]
    %v3273 = vld [vmem:[%s3270 + $0x10] sm:$0xff]
    %v3274 = vld [vmem:[%s3270 + $0x18] sm:$0xff]
    %v3275 = vld [vmem:[%s3270 + $0x20] sm:$0xff]
    %v3276 = vld [vmem:[%s3270 + $0x28] sm:$0xff]
    %v3277 = vld [vmem:[%s3270 + $0x30] sm:$0xff]
    %v3278 = vld [vmem:[%s3270 + $0x38] sm:$0xff]
    %s3279 = scalar_lea.vmem %s1, 160
    %v3280 = vld [vmem:[%s3279] sm:$0xff]
    %v3281 = vld [vmem:[%s3279 + $0x8] sm:$0xff]
    %v3282 = vld [vmem:[%s3279 + $0x10] sm:$0xff]
    %v3283 = vld [vmem:[%s3279 + $0x18] sm:$0xff]
    %v3284 = vld [vmem:[%s2 + $0x9] sm:$0x1]
    %s3285 = scalar_lea.vmem %s1, 192
    %v3286 = vld [vmem:[%s3285] sm:$0xff]
    %v3287 = vld [vmem:[%s3285 + $0x8] sm:$0xff]
    %v3288 = vld [vmem:[%s3285 + $0x10] sm:$0xff]
    %v3289 = vld [vmem:[%s3285 + $0x18] sm:$0xff]
    %v3290 = vld [vmem:[%s2 + $0xa] sm:$0x1]
    %s3291 = scalar_lea.vmem %s1, 224
    %v3292 = vld [vmem:[%s3291] sm:$0xff]
    %v3293 = vld [vmem:[%s3291 + $0x8] sm:$0xff]
    %v3294 = vld [vmem:[%s3291 + $0x10] sm:$0xff]
    %v3295 = vld [vmem:[%s3291 + $0x18] sm:$0xff]
    %v3296 = vld [vmem:[%s2 + $0xb] sm:$0x1]
    %s3297 = scalar_lea.vmem %s1, 256
    %v3298 = vld [vmem:[%s3297] sm:$0xff]
    %v3299 = vld [vmem:[%s3297 + $0x8] sm:$0xff]
    %v3300 = vld [vmem:[%s3297 + $0x10] sm:$0xff]
    %v3301 = vld [vmem:[%s3297 + $0x18] sm:$0xff]
    %v3302 = vld [vmem:[%s2 + $0xc] sm:$0x1]
    %v3303 = vld [vmem:[%s2 + $0xd] sm:$0x1]
    %v3304 = vld [vmem:[%s2 + $0xe] sm:$0x1]
    %v3305 = vadd.f32 %v3262, %v3271
    %v3306 = vadd.f32 %v3263, %v3272
    %v3307 = vadd.f32 %v3264, %v3273
    %v3308 = vadd.f32 %v3265, %v3274
    %v3309 = vadd.f32 %v3266, %v3275
    %v3310 = vadd.f32 %v3267, %v3276
    %v3311 = vadd.f32 %v3268, %v3277
    %v3312 = vadd.f32 %v3269, %v3278
    %v3313 = vlaneseq
    %v3314 = vshrl.u32 %v3313, 7
    %v3315 = vsub.s32 0, %v3314
    %v3316 = vrot.slane %v3284, %v3315
    %v3318 = vsel %vm120, %v3305, 0
    %v3321 = vsel %vm120, %v3306, 0
    %v3324 = vsel %vm120, %v3307, 0
    %v3327 = vsel %vm120, %v3308, 0
    %v3330 = vsel %vm120, %v3309, 0
    %v3333 = vsel %vm120, %v3310, 0
    %v3336 = vsel %vm120, %v3311, 0
    %v3339 = vsel %vm120, %v3312, 0
    %3341 = vmatprep.subr.mxu0 0.0
    %3342 = vmatpush1.msra.mxu0 %v3280
    %3343 = vmatprep.subr.mxu0 0.0
    %3344 = vmatpush1.msra.mxu0 %v3281
    %3345 = vmatprep.subr.mxu0 0.0
    %3346 = vmatpush1.msra.mxu0 %v3282
    %3347 = vmatprep.subr.mxu0 0.0
    %3348 = vmatpush1.msra.mxu0 %v3283
    %3349 = vmatprep.subr.mxu0 0.0
    %3350 = vmatpush1.msra.mxu0 0.0
    %3351 = vmatprep.subr.mxu0 0.0
    %3352 = vmatpush1.msra.mxu0 0.0
    %3353 = vmatprep.subr.mxu0 0.0
    %3354 = vmatpush1.msra.mxu0 0.0
    %3355 = vmatprep.subr.mxu0 0.0
    %3356 = vmatpush1.msra.mxu0 0.0
    %3357 = vmatprep.subr.mxu0 0.0
    %3358 = vmatpush1.msra.mxu0 0.0
    %3359 = vmatprep.subr.mxu0 0.0
    %3360 = vmatpush1.msra.mxu0 0.0
    %3361 = vmatprep.subr.mxu0 0.0
    %3362 = vmatpush1.msra.mxu0 0.0
    %3363 = vmatprep.subr.mxu0 0.0
    %3364 = vmatpush1.msra.mxu0 0.0
    %3365 = vmatprep.subr.mxu0 0.0
    %3366 = vmatpush1.msra.mxu0 0.0
    %3367 = vmatprep.subr.mxu0 0.0
    %3368 = vmatpush1.msra.mxu0 0.0
    %3369 = vmatprep.subr.mxu0 0.0
    %3370 = vmatpush1.msra.mxu0 0.0
    %3371 = vmatprep.subr.mxu0 0.0
    %3372 = vmatpush1.msra.mxu0 0.0
    %3373 = vmatprep.subr.mxu0 0.0
    %3374 = vmatpush1.msra.mxu0 0.0
    %3375 = vmatprep.subr.mxu0 0.0
    %3376 = vmatpush1.msra.mxu0 0.0
    %3377 = vmatprep.subr.mxu0 0.0
    %3378 = vmatpush1.msra.mxu0 0.0
    %3379 = vmatprep.subr.mxu0 0.0
    %3380 = vmatpush1.msra.mxu0 0.0
    %3381 = vmatprep.subr.mxu0 0.0
    %3382 = vmatpush1.msra.mxu0 0.0
    %3383 = vmatprep.subr.mxu0 0.0
    %3384 = vmatpush1.msra.mxu0 0.0
    %3385 = vmatprep.subr.mxu0 0.0
    %3386 = vmatpush1.msra.mxu0 0.0
    %3387 = vmatprep.subr.mxu0 0.0
    %3388 = vmatpush1.msra.mxu0 0.0
    %3389 = vmatprep.subr.mxu0 0.0
    %3390 = vmatpush1.msra.mxu0 0.0
    %3391 = vmatprep.subr.mxu0 0.0
    %3392 = vmatpush1.msra.mxu0 0.0
    %3393 = vmatprep.subr.mxu0 0.0
    %3394 = vmatpush1.msra.mxu0 0.0
    %3395 = vmatprep.subr.mxu0 0.0
    %3396 = vmatpush1.msra.mxu0 0.0
    %3397 = vmatprep.subr.mxu0 0.0
    %3398 = vmatpush1.msra.mxu0 0.0
    %3399 = vmatprep.subr.mxu0 0.0
    %3400 = vmatpush1.msra.mxu0 0.0
    %3401 = vmatprep.subr.mxu0 0.0
    %3402 = vmatpush1.msra.mxu0 0.0
    %3403 = vmatprep.subr.mxu0 0.0
    %3404 = vmatpush1.msra.mxu0 0.0
    %3405 = vmatprep.mubr.f32.mxu0 0.0
    %3406 = vmatmul.mubr.f32.gmra.mrb[0].mxu0 %v3318
    %v3407 = vpop.f32.mrb[0].mxu0
    %v3408 = vadd.f32 %v3316, %v3407
    %v3409 = vpop.f32.mrb[0].mxu0
    %3410 = vmatprep.mubr.f32.mxu0 0.0
    %3411 = vmatmul.mubr.f32.gmra.mrb[0].mxu0 %v3321
    %v3412 = vpop.f32.mrb[0].mxu0
    %v3413 = vadd.f32 %v3316, %v3412
    %v3414 = vpop.f32.mrb[0].mxu0
    %3415 = vmatprep.mubr.f32.mxu0 0.0
    %3416 = vmatmul.mubr.f32.gmra.mrb[0].mxu0 %v3324
    %v3417 = vpop.f32.mrb[0].mxu0
    %v3418 = vadd.f32 %v3316, %v3417
    %v3419 = vpop.f32.mrb[0].mxu0
    %3420 = vmatprep.mubr.f32.mxu0 0.0
    %3421 = vmatmul.mubr.f32.gmra.mrb[0].mxu0 %v3327
    %v3422 = vpop.f32.mrb[0].mxu0
    %v3423 = vadd.f32 %v3316, %v3422
    %v3424 = vpop.f32.mrb[0].mxu0
    %3425 = vmatprep.mubr.f32.mxu0 0.0
    %3426 = vmatmul.mubr.f32.gmra.mrb[0].mxu0 %v3330
    %v3427 = vpop.f32.mrb[0].mxu0
    %v3428 = vadd.f32 %v3316, %v3427
    %v3429 = vpop.f32.mrb[0].mxu0
    %3430 = vmatprep.mubr.f32.mxu0 0.0
    %3431 = vmatmul.mubr.f32.gmra.mrb[0].mxu0 %v3333
    %v3432 = vpop.f32.mrb[0].mxu0
    %v3433 = vadd.f32 %v3316, %v3432
    %v3434 = vpop.f32.mrb[0].mxu0
    %3435 = vmatprep.mubr.f32.mxu0 0.0
    %3436 = vmatmul.mubr.f32.gmra.mrb[0].mxu0 %v3336
    %v3437 = vpop.f32.mrb[0].mxu0
    %v3438 = vadd.f32 %v3316, %v3437
    %v3439 = vpop.f32.mrb[0].mxu0
    %3440 = vmatprep.mubr.f32.mxu0 0.0
    %3441 = vmatmul.mubr.f32.gmra.mrb[0].mxu0 %v3339
    %v3442 = vpop.f32.mrb[0].mxu0
    %v3443 = vadd.f32 %v3316, %v3442
    %v3444 = vpop.f32.mrb[0].mxu0
    %3445 = vdwg.mxu0
    %v3446 = vlaneseq
    %v3447 = vshrl.u32 %v3446, 7
    %v3448 = vsub.s32 0, %v3447
    %v3449 = vrot.slane %v3290, %v3448
    %3450 = vmatprep.subr.mxu0 0.0
    %3451 = vmatpush1.msra.mxu0 %v3286
    %3452 = vmatprep.subr.mxu0 0.0
    %3453 = vmatpush1.msra.mxu0 %v3287
    %3454 = vmatprep.subr.mxu0 0.0
    %3455 = vmatpush1.msra.mxu0 %v3288
    %3456 = vmatprep.subr.mxu0 0.0
    %3457 = vmatpush1.msra.mxu0 %v3289
    %3458 = vmatprep.subr.mxu0 0.0
    %3459 = vmatpush1.msra.mxu0 0.0
    %3460 = vmatprep.subr.mxu0 0.0
    %3461 = vmatpush1.msra.mxu0 0.0
    %3462 = vmatprep.subr.mxu0 0.0
    %3463 = vmatpush1.msra.mxu0 0.0
    %3464 = vmatprep.subr.mxu0 0.0
    %3465 = vmatpush1.msra.mxu0 0.0
    %3466 = vmatprep.subr.mxu0 0.0
    %3467 = vmatpush1.msra.mxu0 0.0
    %3468 = vmatprep.subr.mxu0 0.0
    %3469 = vmatpush1.msra.mxu0 0.0
    %3470 = vmatprep.subr.mxu0 0.0
    %3471 = vmatpush1.msra.mxu0 0.0
    %3472 = vmatprep.subr.mxu0 0.0
    %3473 = vmatpush1.msra.mxu0 0.0
    %3474 = vmatprep.subr.mxu0 0.0
    %3475 = vmatpush1.msra.mxu0 0.0
    %3476 = vmatprep.subr.mxu0 0.0
    %3477 = vmatpush1.msra.mxu0 0.0
    %3478 = vmatprep.subr.mxu0 0.0
    %3479 = vmatpush1.msra.mxu0 0.0
    %3480 = vmatprep.subr.mxu0 0.0
    %3481 = vmatpush1.msra.mxu0 0.0
    %3482 = vmatprep.subr.mxu0 0.0
    %3483 = vmatpush1.msra.mxu0 0.0
    %3484 = vmatprep.subr.mxu0 0.0
    %3485 = vmatpush1.msra.mxu0 0.0
    %3486 = vmatprep.subr.mxu0 0.0
    %3487 = vmatpush1.msra.mxu0 0.0
    %3488 = vmatprep.subr.mxu0 0.0
    %3489 = vmatpush1.msra.mxu0 0.0
    %3490 = vmatprep.subr.mxu0 0.0
    %3491 = vmatpush1.msra.mxu0 0.0
    %3492 = vmatprep.subr.mxu0 0.0
    %3493 = vmatpush1.msra.mxu0 0.0
    %3494 = vmatprep.subr.mxu0 0.0
    %3495 = vmatpush1.msra.mxu0 0.0
    %3496 = vmatprep.subr.mxu0 0.0
    %3497 = vmatpush1.msra.mxu0 0.0
    %3498 = vmatprep.subr.mxu0 0.0
    %3499 = vmatpush1.msra.mxu0 0.0
    %3500 = vmatprep.subr.mxu0 0.0
    %3501 = vmatpush1.msra.mxu0 0.0
    %3502 = vmatprep.subr.mxu0 0.0
    %3503 = vmatpush1.msra.mxu0 0.0
    %3504 = vmatprep.subr.mxu0 0.0
    %3505 = vmatpush1.msra.mxu0 0.0
    %3506 = vmatprep.subr.mxu0 0.0
    %3507 = vmatpush1.msra.mxu0 0.0
    %3508 = vmatprep.subr.mxu0 0.0
    %3509 = vmatpush1.msra.mxu0 0.0
    %3510 = vmatprep.subr.mxu0 0.0
    %3511 = vmatpush1.msra.mxu0 0.0
    %3512 = vmatprep.subr.mxu0 0.0
    %3513 = vmatpush1.msra.mxu0 0.0
    %3514 = vmatprep.mubr.f32.mxu0 0.0
    %3515 = vmatmul.mubr.f32.gmra.mrb[0].mxu0 %v3318
    %v3516 = vpop.f32.mrb[0].mxu0
    %v3517 = vadd.f32 %v3449, %v3516
    %v3518 = vpop.f32.mrb[0].mxu0
    %3519 = vmatprep.mubr.f32.mxu0 0.0
    %3520 = vmatmul.mubr.f32.gmra.mrb[0].mxu0 %v3321
    %v3521 = vpop.f32.mrb[0].mxu0
    %v3522 = vadd.f32 %v3449, %v3521
    %v3523 = vpop.f32.mrb[0].mxu0
    %3524 = vmatprep.mubr.f32.mxu0 0.0
    %3525 = vmatmul.mubr.f32.gmra.mrb[0].mxu0 %v3324
    %v3526 = vpop.f32.mrb[0].mxu0
    %v3527 = vadd.f32 %v3449, %v3526
    %v3528 = vpop.f32.mrb[0].mxu0
    %3529 = vmatprep.mubr.f32.mxu0 0.0
    %3530 = vmatmul.mubr.f32.gmra.mrb[0].mxu0 %v3327
    %v3531 = vpop.f32.mrb[0].mxu0
    %v3532 = vadd.f32 %v3449, %v3531
    %v3533 = vpop.f32.mrb[0].mxu0
    %3534 = vmatprep.mubr.f32.mxu0 0.0
    %3535 = vmatmul.mubr.f32.gmra.mrb[0].mxu0 %v3330
    %v3536 = vpop.f32.mrb[0].mxu0
    %v3537 = vadd.f32 %v3449, %v3536
    %v3538 = vpop.f32.mrb[0].mxu0
    %3539 = vmatprep.mubr.f32.mxu0 0.0
    %3540 = vmatmul.mubr.f32.gmra.mrb[0].mxu0 %v3333
    %v3541 = vpop.f32.mrb[0].mxu0
    %v3542 = vadd.f32 %v3449, %v3541
    %v3543 = vpop.f32.mrb[0].mxu0
    %3544 = vmatprep.mubr.f32.mxu0 0.0
    %3545 = vmatmul.mubr.f32.gmra.mrb[0].mxu0 %v3336
    %v3546 = vpop.f32.mrb[0].mxu0
    %v3547 = vadd.f32 %v3449, %v3546
    %v3548 = vpop.f32.mrb[0].mxu0
    %3549 = vmatprep.mubr.f32.mxu0 0.0
    %3550 = vmatmul.mubr.f32.gmra.mrb[0].mxu0 %v3339
    %v3551 = vpop.f32.mrb[0].mxu0
    %v3552 = vadd.f32 %v3449, %v3551
    %v3553 = vpop.f32.mrb[0].mxu0
    %3554 = vdwg.mxu0
    %v3555 = vlaneseq
    %v3556 = vshrl.u32 %v3555, 7
    %v3557 = vsub.s32 0, %v3556
    %v3558 = vrot.slane %v3296, %v3557
    %3559 = vmatprep.subr.mxu0 0.0
    %3560 = vmatpush1.msra.mxu0 %v3292
    %3561 = vmatprep.subr.mxu0 0.0
    %3562 = vmatpush1.msra.mxu0 %v3293
    %3563 = vmatprep.subr.mxu0 0.0
    %3564 = vmatpush1.msra.mxu0 %v3294
    %3565 = vmatprep.subr.mxu0 0.0
    %3566 = vmatpush1.msra.mxu0 %v3295
    %3567 = vmatprep.subr.mxu0 0.0
    %3568 = vmatpush1.msra.mxu0 0.0
    %3569 = vmatprep.subr.mxu0 0.0
    %3570 = vmatpush1.msra.mxu0 0.0
    %3571 = vmatprep.subr.mxu0 0.0
    %3572 = vmatpush1.msra.mxu0 0.0
    %3573 = vmatprep.subr.mxu0 0.0
    %3574 = vmatpush1.msra.mxu0 0.0
    %3575 = vmatprep.subr.mxu0 0.0
    %3576 = vmatpush1.msra.mxu0 0.0
    %3577 = vmatprep.subr.mxu0 0.0
    %3578 = vmatpush1.msra.mxu0 0.0
    %3579 = vmatprep.subr.mxu0 0.0
    %3580 = vmatpush1.msra.mxu0 0.0
    %3581 = vmatprep.subr.mxu0 0.0
    %3582 = vmatpush1.msra.mxu0 0.0
    %3583 = vmatprep.subr.mxu0 0.0
    %3584 = vmatpush1.msra.mxu0 0.0
    %3585 = vmatprep.subr.mxu0 0.0
    %3586 = vmatpush1.msra.mxu0 0.0
    %3587 = vmatprep.subr.mxu0 0.0
    %3588 = vmatpush1.msra.mxu0 0.0
    %3589 = vmatprep.subr.mxu0 0.0
    %3590 = vmatpush1.msra.mxu0 0.0
    %3591 = vmatprep.subr.mxu0 0.0
    %3592 = vmatpush1.msra.mxu0 0.0
    %3593 = vmatprep.subr.mxu0 0.0
    %3594 = vmatpush1.msra.mxu0 0.0
    %3595 = vmatprep.subr.mxu0 0.0
    %3596 = vmatpush1.msra.mxu0 0.0
    %3597 = vmatprep.subr.mxu0 0.0
    %3598 = vmatpush1.msra.mxu0 0.0
    %3599 = vmatprep.subr.mxu0 0.0
    %3600 = vmatpush1.msra.mxu0 0.0
    %3601 = vmatprep.subr.mxu0 0.0
    %3602 = vmatpush1.msra.mxu0 0.0
    %3603 = vmatprep.subr.mxu0 0.0
    %3604 = vmatpush1.msra.mxu0 0.0
    %3605 = vmatprep.subr.mxu0 0.0
    %3606 = vmatpush1.msra.mxu0 0.0
    %3607 = vmatprep.subr.mxu0 0.0
    %3608 = vmatpush1.msra.mxu0 0.0
    %3609 = vmatprep.subr.mxu0 0.0
    %3610 = vmatpush1.msra.mxu0 0.0
    %3611 = vmatprep.subr.mxu0 0.0
    %3612 = vmatpush1.msra.mxu0 0.0
    %3613 = vmatprep.subr.mxu0 0.0
    %3614 = vmatpush1.msra.mxu0 0.0
    %3615 = vmatprep.subr.mxu0 0.0
    %3616 = vmatpush1.msra.mxu0 0.0
    %3617 = vmatprep.subr.mxu0 0.0
    %3618 = vmatpush1.msra.mxu0 0.0
    %3619 = vmatprep.subr.mxu0 0.0
    %3620 = vmatpush1.msra.mxu0 0.0
    %3621 = vmatprep.subr.mxu0 0.0
    %3622 = vmatpush1.msra.mxu0 0.0
    %3623 = vmatprep.mubr.f32.mxu0 0.0
    %3624 = vmatmul.mubr.f32.gmra.mrb[0].mxu0 %v3318
    %v3625 = vpop.f32.mrb[0].mxu0
    %v3626 = vadd.f32 %v3558, %v3625
    %v3627 = vpop.f32.mrb[0].mxu0
    %3628 = vmatprep.mubr.f32.mxu0 0.0
    %3629 = vmatmul.mubr.f32.gmra.mrb[0].mxu0 %v3321
    %v3630 = vpop.f32.mrb[0].mxu0
    %v3631 = vadd.f32 %v3558, %v3630
    %v3632 = vpop.f32.mrb[0].mxu0
    %3633 = vmatprep.mubr.f32.mxu0 0.0
    %3634 = vmatmul.mubr.f32.gmra.mrb[0].mxu0 %v3324
    %v3635 = vpop.f32.mrb[0].mxu0
    %v3636 = vadd.f32 %v3558, %v3635
    %v3637 = vpop.f32.mrb[0].mxu0
    %3638 = vmatprep.mubr.f32.mxu0 0.0
    %3639 = vmatmul.mubr.f32.gmra.mrb[0].mxu0 %v3327
    %v3640 = vpop.f32.mrb[0].mxu0
    %v3641 = vadd.f32 %v3558, %v3640
    %v3642 = vpop.f32.mrb[0].mxu0
    %3643 = vmatprep.mubr.f32.mxu0 0.0
    %3644 = vmatmul.mubr.f32.gmra.mrb[0].mxu0 %v3330
    %v3645 = vpop.f32.mrb[0].mxu0
    %v3646 = vadd.f32 %v3558, %v3645
    %v3647 = vpop.f32.mrb[0].mxu0
    %3648 = vmatprep.mubr.f32.mxu0 0.0
    %3649 = vmatmul.mubr.f32.gmra.mrb[0].mxu0 %v3333
    %v3650 = vpop.f32.mrb[0].mxu0
    %v3651 = vadd.f32 %v3558, %v3650
    %v3652 = vpop.f32.mrb[0].mxu0
    %3653 = vmatprep.mubr.f32.mxu0 0.0
    %3654 = vmatmul.mubr.f32.gmra.mrb[0].mxu0 %v3336
    %v3655 = vpop.f32.mrb[0].mxu0
    %v3656 = vadd.f32 %v3558, %v3655
    %v3657 = vpop.f32.mrb[0].mxu0
    %3658 = vmatprep.mubr.f32.mxu0 0.0
    %3659 = vmatmul.mubr.f32.gmra.mrb[0].mxu0 %v3339
    %v3660 = vpop.f32.mrb[0].mxu0
    %v3661 = vadd.f32 %v3558, %v3660
    %v3662 = vpop.f32.mrb[0].mxu0
    %3663 = vdwg.mxu0
    %v3664 = vmax.f32 %v3626, 0.0
    %v3665 = vmax.f32 %v3631, 0.0
    %v3666 = vmax.f32 %v3636, 0.0
    %v3667 = vmax.f32 %v3641, 0.0
    %v3668 = vmax.f32 %v3646, 0.0
    %v3669 = vmax.f32 %v3651, 0.0
    %v3670 = vmax.f32 %v3656, 0.0
    %v3671 = vmax.f32 %v3661, 0.0
    %v3672 = vpack.c.bf16 %v3413, %v3408
    %v3673 = vpack.c.bf16 %v3423, %v3418
    %v3674 = vpack.c.bf16 %v3433, %v3428
    %v3675 = vpack.c.bf16 %v3443, %v3438
    %3676 = vmatprep.subr.bf16.mxu0 0
    %3677 = vmatpush1.bf16.msra.mxu0 %v3672
    %3678 = vmatprep.subr.bf16.mxu0 0
    %3679 = vmatpush1.bf16.msra.mxu0 %v3673
    %3680 = vmatprep.subr.bf16.mxu0 0
    %3681 = vmatpush1.bf16.msra.mxu0 %v3674
    %3682 = vmatprep.subr.bf16.mxu0 0
    %3683 = vmatpush1.bf16.msra.mxu0 %v3675
    %3684 = vmatprep.subr.bf16.mxu0 0
    %3685 = vmatpush1.bf16.msra.mxu0 0
    %3686 = vmatprep.subr.bf16.mxu0 0
    %3687 = vmatpush1.bf16.msra.mxu0 0
    %3688 = vmatprep.subr.bf16.mxu0 0
    %3689 = vmatpush1.bf16.msra.mxu0 0
    %3690 = vmatprep.subr.bf16.mxu0 0
    %3691 = vmatpush1.bf16.msra.mxu0 0
    %3692 = vmatprep.subr.bf16.mxu0 0
    %3693 = vmatpush1.bf16.msra.mxu0 0
    %3694 = vmatprep.subr.bf16.mxu0 0
    %3695 = vmatpush1.bf16.msra.mxu0 0
    %3696 = vmatprep.subr.bf16.mxu0 0
    %3697 = vmatpush1.bf16.msra.mxu0 0
    %3698 = vmatprep.subr.bf16.mxu0 0
    %3699 = vmatpush1.bf16.msra.mxu0 0
    %3700 = vmatprep.subr.bf16.mxu0 0
    %3701 = vmatpush1.bf16.msra.mxu0 0
    %3702 = vmatprep.subr.bf16.mxu0 0
    %3703 = vmatpush1.bf16.msra.mxu0 0
    %3704 = vmatprep.subr.bf16.mxu0 0
    %3705 = vmatpush1.bf16.msra.mxu0 0
    %3706 = vmatprep.subr.bf16.mxu0 0
    %3707 = vmatpush1.bf16.msra.mxu0 0
    %3708 = vmatprep.mubr.bf16.mxu0 0
    %3709 = vmatmul.mubr.bf16.gmra.mrb[0].mxu0 %v940
    %v3710 = vpop.f32.mrb[0].mxu0
    %v3711 = vadd.f32 0.0, %v3710
    %v3712 = vpop.f32.mrb[0].mxu0
    %v3713 = vpop.f32.mrb[0].mxu0
    %v3714 = vadd.f32 0.0, %v3713
    %v3715 = vpop.f32.mrb[0].mxu0
    %3716 = vmatprep.mubr.bf16.mxu0 0
    %3717 = vmatmul.mubr.bf16.gmra.mrb[0].mxu0 %v943
    %v3718 = vpop.f32.mrb[0].mxu0
    %v3719 = vadd.f32 0.0, %v3718
    %v3720 = vpop.f32.mrb[0].mxu0
    %v3721 = vpop.f32.mrb[0].mxu0
    %v3722 = vadd.f32 0.0, %v3721
    %v3723 = vpop.f32.mrb[0].mxu0
    %3724 = vmatprep.mubr.bf16.mxu0 0
    %3725 = vmatmul.mubr.bf16.gmra.mrb[0].mxu0 %v946
    %v3726 = vpop.f32.mrb[0].mxu0
    %v3727 = vadd.f32 0.0, %v3726
    %v3728 = vpop.f32.mrb[0].mxu0
    %v3729 = vpop.f32.mrb[0].mxu0
    %v3730 = vadd.f32 0.0, %v3729
    %v3731 = vpop.f32.mrb[0].mxu0
    %3732 = vmatprep.mubr.bf16.mxu0 0
    %3733 = vmatmul.mubr.bf16.gmra.mrb[0].mxu0 %v949
    %v3734 = vpop.f32.mrb[0].mxu0
    %v3735 = vadd.f32 0.0, %v3734
    %v3736 = vpop.f32.mrb[0].mxu0
    %v3737 = vpop.f32.mrb[0].mxu0
    %v3738 = vadd.f32 0.0, %v3737
    %v3739 = vpop.f32.mrb[0].mxu0
    %3740 = vmatprep.mubr.bf16.mxu0 0
    %3741 = vmatmul.mubr.bf16.gmra.mrb[0].mxu0 %v952
    %v3742 = vpop.f32.mrb[0].mxu0
    %v3743 = vadd.f32 0.0, %v3742
    %v3744 = vpop.f32.mrb[0].mxu0
    %v3745 = vpop.f32.mrb[0].mxu0
    %v3746 = vadd.f32 0.0, %v3745
    %v3747 = vpop.f32.mrb[0].mxu0
    %3748 = vmatprep.mubr.bf16.mxu0 0
    %3749 = vmatmul.mubr.bf16.gmra.mrb[0].mxu0 %v955
    %v3750 = vpop.f32.mrb[0].mxu0
    %v3751 = vadd.f32 0.0, %v3750
    %v3752 = vpop.f32.mrb[0].mxu0
    %v3753 = vpop.f32.mrb[0].mxu0
    %v3754 = vadd.f32 0.0, %v3753
    %v3755 = vpop.f32.mrb[0].mxu0
    %3756 = vmatprep.mubr.bf16.mxu0 0
    %3757 = vmatmul.mubr.bf16.gmra.mrb[0].mxu0 %v958
    %v3758 = vpop.f32.mrb[0].mxu0
    %v3759 = vadd.f32 0.0, %v3758
    %v3760 = vpop.f32.mrb[0].mxu0
    %v3761 = vpop.f32.mrb[0].mxu0
    %v3762 = vadd.f32 0.0, %v3761
    %v3763 = vpop.f32.mrb[0].mxu0
    %3764 = vmatprep.mubr.bf16.mxu0 0
    %3765 = vmatmul.mubr.bf16.gmra.mrb[0].mxu0 %v961
    %v3766 = vpop.f32.mrb[0].mxu0
    %v3767 = vadd.f32 0.0, %v3766
    %v3768 = vpop.f32.mrb[0].mxu0
    %v3769 = vpop.f32.mrb[0].mxu0
    %v3770 = vadd.f32 0.0, %v3769
    %v3771 = vpop.f32.mrb[0].mxu0
    %3772 = vmatprep.mubr.bf16.mxu0 0
    %3773 = vmatmul.mubr.bf16.gmra.mrb[0].mxu0 %v964
    %v3774 = vpop.f32.mrb[0].mxu0
    %v3775 = vadd.f32 0.0, %v3774
    %v3776 = vpop.f32.mrb[0].mxu0
    %v3777 = vpop.f32.mrb[0].mxu0
    %v3778 = vadd.f32 0.0, %v3777
    %v3779 = vpop.f32.mrb[0].mxu0
    %3780 = vmatprep.mubr.bf16.mxu0 0
    %3781 = vmatmul.mubr.bf16.gmra.mrb[0].mxu0 %v967
    %v3782 = vpop.f32.mrb[0].mxu0
    %v3783 = vadd.f32 0.0, %v3782
    %v3784 = vpop.f32.mrb[0].mxu0
    %v3785 = vpop.f32.mrb[0].mxu0
    %v3786 = vadd.f32 0.0, %v3785
    %v3787 = vpop.f32.mrb[0].mxu0
    %3788 = vmatprep.mubr.bf16.mxu0 0
    %3789 = vmatmul.mubr.bf16.gmra.mrb[0].mxu0 %v970
    %v3790 = vpop.f32.mrb[0].mxu0
    %v3791 = vadd.f32 0.0, %v3790
    %v3792 = vpop.f32.mrb[0].mxu0
    %v3793 = vpop.f32.mrb[0].mxu0
    %v3794 = vadd.f32 0.0, %v3793
    %v3795 = vpop.f32.mrb[0].mxu0
    %3796 = vmatprep.mubr.bf16.mxu0 0
    %3797 = vmatmul.mubr.bf16.gmra.mrb[0].mxu0 %v973
    %v3798 = vpop.f32.mrb[0].mxu0
    %v3799 = vadd.f32 0.0, %v3798
    %v3800 = vpop.f32.mrb[0].mxu0
    %v3801 = vpop.f32.mrb[0].mxu0
    %v3802 = vadd.f32 0.0, %v3801
    %v3803 = vpop.f32.mrb[0].mxu0
    %3804 = vmatprep.mubr.bf16.mxu0 0
    %3805 = vmatmul.mubr.bf16.gmra.mrb[0].mxu0 %v976
    %v3806 = vpop.f32.mrb[0].mxu0
    %v3807 = vadd.f32 0.0, %v3806
    %v3808 = vpop.f32.mrb[0].mxu0
    %v3809 = vpop.f32.mrb[0].mxu0
    %v3810 = vadd.f32 0.0, %v3809
    %v3811 = vpop.f32.mrb[0].mxu0
    %3812 = vmatprep.mubr.bf16.mxu0 0
    %3813 = vmatmul.mubr.bf16.gmra.mrb[0].mxu0 %v979
    %v3814 = vpop.f32.mrb[0].mxu0
    %v3815 = vadd.f32 0.0, %v3814
    %v3816 = vpop.f32.mrb[0].mxu0
    %v3817 = vpop.f32.mrb[0].mxu0
    %v3818 = vadd.f32 0.0, %v3817
    %v3819 = vpop.f32.mrb[0].mxu0
    %3820 = vmatprep.mubr.bf16.mxu0 0
    %3821 = vmatmul.mubr.bf16.gmra.mrb[0].mxu0 %v982
    %v3822 = vpop.f32.mrb[0].mxu0
    %v3823 = vadd.f32 0.0, %v3822
    %v3824 = vpop.f32.mrb[0].mxu0
    %v3825 = vpop.f32.mrb[0].mxu0
    %v3826 = vadd.f32 0.0, %v3825
    %v3827 = vpop.f32.mrb[0].mxu0
    %3828 = vmatprep.mubr.bf16.mxu0 0
    %3829 = vmatmul.mubr.bf16.gmra.mrb[0].mxu0 %v985
    %v3830 = vpop.f32.mrb[0].mxu0
    %v3831 = vadd.f32 0.0, %v3830
    %v3832 = vpop.f32.mrb[0].mxu0
    %v3833 = vpop.f32.mrb[0].mxu0
    %v3834 = vadd.f32 0.0, %v3833
    %v3835 = vpop.f32.mrb[0].mxu0
    %3836 = vdwg.mxu0
    %v3837 = vpack.c.bf16 %v3522, %v3517
    %v3838 = vpack.c.bf16 %v3532, %v3527
    %v3839 = vpack.c.bf16 %v3542, %v3537
    %v3840 = vpack.c.bf16 %v3552, %v3547
    %3841 = vmatprep.subr.bf16.mxu0 0
    %3842 = vmatpush1.bf16.msra.mxu0 %v3837
    %3843 = vmatprep.subr.bf16.mxu0 0
    %3844 = vmatpush1.bf16.msra.mxu0 %v3838
    %3845 = vmatprep.subr.bf16.mxu0 0
    %3846 = vmatpush1.bf16.msra.mxu0 %v3839
    %3847 = vmatprep.subr.bf16.mxu0 0
    %3848 = vmatpush1.bf16.msra.mxu0 %v3840
    %3849 = vmatprep.subr.bf16.mxu0 0
    %3850 = vmatpush1.bf16.msra.mxu0 0
    %3851 = vmatprep.subr.bf16.mxu0 0
    %3852 = vmatpush1.bf16.msra.mxu0 0
    %3853 = vmatprep.subr.bf16.mxu0 0
    %3854 = vmatpush1.bf16.msra.mxu0 0
    %3855 = vmatprep.subr.bf16.mxu0 0
    %3856 = vmatpush1.bf16.msra.mxu0 0
    %3857 = vmatprep.subr.bf16.mxu0 0
    %3858 = vmatpush1.bf16.msra.mxu0 0
    %3859 = vmatprep.subr.bf16.mxu0 0
    %3860 = vmatpush1.bf16.msra.mxu0 0
    %3861 = vmatprep.subr.bf16.mxu0 0
    %3862 = vmatpush1.bf16.msra.mxu0 0
    %3863 = vmatprep.subr.bf16.mxu0 0
    %3864 = vmatpush1.bf16.msra.mxu0 0
    %3865 = vmatprep.subr.bf16.mxu0 0
    %3866 = vmatpush1.bf16.msra.mxu0 0
    %3867 = vmatprep.subr.bf16.mxu0 0
    %3868 = vmatpush1.bf16.msra.mxu0 0
    %3869 = vmatprep.subr.bf16.mxu0 0
    %3870 = vmatpush1.bf16.msra.mxu0 0
    %3871 = vmatprep.subr.bf16.mxu0 0
    %3872 = vmatpush1.bf16.msra.mxu0 0
    %3873 = vmatprep.mubr.bf16.mxu0 0
    %3874 = vmatmul.mubr.bf16.gmra.mrb[0].mxu0 %v940
    %v3875 = vpop.f32.mrb[0].mxu0
    %v3876 = vadd.f32 0.0, %v3875
    %v3877 = vpop.f32.mrb[0].mxu0
    %v3878 = vpop.f32.mrb[0].mxu0
    %v3879 = vadd.f32 0.0, %v3878
    %v3880 = vpop.f32.mrb[0].mxu0
    %3881 = vmatprep.mubr.bf16.mxu0 0
    %3882 = vmatmul.mubr.bf16.gmra.mrb[0].mxu0 %v943
    %v3883 = vpop.f32.mrb[0].mxu0
    %v3884 = vadd.f32 0.0, %v3883
    %v3885 = vpop.f32.mrb[0].mxu0
    %v3886 = vpop.f32.mrb[0].mxu0
    %v3887 = vadd.f32 0.0, %v3886
    %v3888 = vpop.f32.mrb[0].mxu0
    %3889 = vmatprep.mubr.bf16.mxu0 0
    %3890 = vmatmul.mubr.bf16.gmra.mrb[0].mxu0 %v946
    %v3891 = vpop.f32.mrb[0].mxu0
    %v3892 = vadd.f32 0.0, %v3891
    %v3893 = vpop.f32.mrb[0].mxu0
    %v3894 = vpop.f32.mrb[0].mxu0
    %v3895 = vadd.f32 0.0, %v3894
    %v3896 = vpop.f32.mrb[0].mxu0
    %3897 = vmatprep.mubr.bf16.mxu0 0
    %3898 = vmatmul.mubr.bf16.gmra.mrb[0].mxu0 %v949
    %v3899 = vpop.f32.mrb[0].mxu0
    %v3900 = vadd.f32 0.0, %v3899
    %v3901 = vpop.f32.mrb[0].mxu0
    %v3902 = vpop.f32.mrb[0].mxu0
    %v3903 = vadd.f32 0.0, %v3902
    %v3904 = vpop.f32.mrb[0].mxu0
    %3905 = vmatprep.mubr.bf16.mxu0 0
    %3906 = vmatmul.mubr.bf16.gmra.mrb[0].mxu0 %v952
    %v3907 = vpop.f32.mrb[0].mxu0
    %v3908 = vadd.f32 0.0, %v3907
    %v3909 = vpop.f32.mrb[0].mxu0
    %v3910 = vpop.f32.mrb[0].mxu0
    %v3911 = vadd.f32 0.0, %v3910
    %v3912 = vpop.f32.mrb[0].mxu0
    %3913 = vmatprep.mubr.bf16.mxu0 0
    %3914 = vmatmul.mubr.bf16.gmra.mrb[0].mxu0 %v955
    %v3915 = vpop.f32.mrb[0].mxu0
    %v3916 = vadd.f32 0.0, %v3915
    %v3917 = vpop.f32.mrb[0].mxu0
    %v3918 = vpop.f32.mrb[0].mxu0
    %v3919 = vadd.f32 0.0, %v3918
    %v3920 = vpop.f32.mrb[0].mxu0
    %3921 = vmatprep.mubr.bf16.mxu0 0
    %3922 = vmatmul.mubr.bf16.gmra.mrb[0].mxu0 %v958
    %v3923 = vpop.f32.mrb[0].mxu0
    %v3924 = vadd.f32 0.0, %v3923
    %v3925 = vpop.f32.mrb[0].mxu0
    %v3926 = vpop.f32.mrb[0].mxu0
    %v3927 = vadd.f32 0.0, %v3926
    %v3928 = vpop.f32.mrb[0].mxu0
    %3929 = vmatprep.mubr.bf16.mxu0 0
    %3930 = vmatmul.mubr.bf16.gmra.mrb[0].mxu0 %v961
    %v3931 = vpop.f32.mrb[0].mxu0
    %v3932 = vadd.f32 0.0, %v3931
    %v3933 = vpop.f32.mrb[0].mxu0
    %v3934 = vpop.f32.mrb[0].mxu0
    %v3935 = vadd.f32 0.0, %v3934
    %v3936 = vpop.f32.mrb[0].mxu0
    %3937 = vmatprep.mubr.bf16.mxu0 0
    %3938 = vmatmul.mubr.bf16.gmra.mrb[0].mxu0 %v964
    %v3939 = vpop.f32.mrb[0].mxu0
    %v3940 = vadd.f32 0.0, %v3939
    %v3941 = vpop.f32.mrb[0].mxu0
    %v3942 = vpop.f32.mrb[0].mxu0
    %v3943 = vadd.f32 0.0, %v3942
    %v3944 = vpop.f32.mrb[0].mxu0
    %3945 = vmatprep.mubr.bf16.mxu0 0
    %3946 = vmatmul.mubr.bf16.gmra.mrb[0].mxu0 %v967
    %v3947 = vpop.f32.mrb[0].mxu0
    %v3948 = vadd.f32 0.0, %v3947
    %v3949 = vpop.f32.mrb[0].mxu0
    %v3950 = vpop.f32.mrb[0].mxu0
    %v3951 = vadd.f32 0.0, %v3950
    %v3952 = vpop.f32.mrb[0].mxu0
    %3953 = vmatprep.mubr.bf16.mxu0 0
    %3954 = vmatmul.mubr.bf16.gmra.mrb[0].mxu0 %v970
    %v3955 = vpop.f32.mrb[0].mxu0
    %v3956 = vadd.f32 0.0, %v3955
    %v3957 = vpop.f32.mrb[0].mxu0
    %v3958 = vpop.f32.mrb[0].mxu0
    %v3959 = vadd.f32 0.0, %v3958
    %v3960 = vpop.f32.mrb[0].mxu0
    %3961 = vmatprep.mubr.bf16.mxu0 0
    %3962 = vmatmul.mubr.bf16.gmra.mrb[0].mxu0 %v973
    %v3963 = vpop.f32.mrb[0].mxu0
    %v3964 = vadd.f32 0.0, %v3963
    %v3965 = vpop.f32.mrb[0].mxu0
    %v3966 = vpop.f32.mrb[0].mxu0
    %v3967 = vadd.f32 0.0, %v3966
    %v3968 = vpop.f32.mrb[0].mxu0
    %3969 = vmatprep.mubr.bf16.mxu0 0
    %3970 = vmatmul.mubr.bf16.gmra.mrb[0].mxu0 %v976
    %v3971 = vpop.f32.mrb[0].mxu0
    %v3972 = vadd.f32 0.0, %v3971
    %v3973 = vpop.f32.mrb[0].mxu0
    %v3974 = vpop.f32.mrb[0].mxu0
    %v3975 = vadd.f32 0.0, %v3974
    %v3976 = vpop.f32.mrb[0].mxu0
    %3977 = vmatprep.mubr.bf16.mxu0 0
    %3978 = vmatmul.mubr.bf16.gmra.mrb[0].mxu0 %v979
    %v3979 = vpop.f32.mrb[0].mxu0
    %v3980 = vadd.f32 0.0, %v3979
    %v3981 = vpop.f32.mrb[0].mxu0
    %v3982 = vpop.f32.mrb[0].mxu0
    %v3983 = vadd.f32 0.0, %v3982
    %v3984 = vpop.f32.mrb[0].mxu0
    %3985 = vmatprep.mubr.bf16.mxu0 0
    %3986 = vmatmul.mubr.bf16.gmra.mrb[0].mxu0 %v982
    %v3987 = vpop.f32.mrb[0].mxu0
    %v3988 = vadd.f32 0.0, %v3987
    %v3989 = vpop.f32.mrb[0].mxu0
    %v3990 = vpop.f32.mrb[0].mxu0
    %v3991 = vadd.f32 0.0, %v3990
    %v3992 = vpop.f32.mrb[0].mxu0
    %3993 = vmatprep.mubr.bf16.mxu0 0
    %3994 = vmatmul.mubr.bf16.gmra.mrb[0].mxu0 %v985
    %v3995 = vpop.f32.mrb[0].mxu0
    %v3996 = vadd.f32 0.0, %v3995
    %v3997 = vpop.f32.mrb[0].mxu0
    %v3998 = vpop.f32.mrb[0].mxu0
    %v3999 = vadd.f32 0.0, %v3998
    %v4000 = vpop.f32.mrb[0].mxu0
    %4001 = vdwg.mxu0
    %v4002 = vmul.f32 %v3876, %v63
    %v4003 = vmul.f32 %v3879, %v64
    %v4004 = vmul.f32 %v3884, %v65
    %v4005 = vmul.f32 %v3887, %v66
    %v4006 = vmul.f32 %v3892, %v67
    %v4007 = vmul.f32 %v3895, %v68
    %v4008 = vmul.f32 %v3900, %v69
    %v4009 = vmul.f32 %v3903, %v70
    %v4010 = vmul.f32 %v3908, %v71
    %v4011 = vmul.f32 %v3911, %v72
    %v4012 = vmul.f32 %v3916, %v73
    %v4013 = vmul.f32 %v3919, %v74
    %v4014 = vmul.f32 %v3924, %v75
    %v4015 = vmul.f32 %v3927, %v76
    %v4016 = vmul.f32 %v3932, %v77
    %v4017 = vmul.f32 %v3935, %v78
    %v4018 = vmul.f32 %v3940, %v79
    %v4019 = vmul.f32 %v3943, %v80
    %v4020 = vmul.f32 %v3948, %v81
    %v4021 = vmul.f32 %v3951, %v82
    %v4022 = vmul.f32 %v3956, %v83
    %v4023 = vmul.f32 %v3959, %v84
    %v4024 = vmul.f32 %v3964, %v85
    %v4025 = vmul.f32 %v3967, %v86
    %v4026 = vmul.f32 %v3972, %v87
    %v4027 = vmul.f32 %v3975, %v88
    %v4028 = vmul.f32 %v3980, %v89
    %v4029 = vmul.f32 %v3983, %v90
    %v4030 = vmul.f32 %v3988, %v91
    %v4031 = vmul.f32 %v3991, %v92
    %v4032 = vmul.f32 %v3996, %v93
    %v4033 = vmul.f32 %v3999, %v94
    %v4034 = vpack.c.bf16 %v3665, %v3664
    %v4035 = vpack.c.bf16 %v3667, %v3666
    %v4036 = vpack.c.bf16 %v3669, %v3668
    %v4037 = vpack.c.bf16 %v3671, %v3670
    %4038 = vmatprep.subr.bf16.mxu0 0
    %4039 = vmatpush1.bf16.msra.mxu0 %v4034
    %4040 = vmatprep.subr.bf16.mxu0 0
    %4041 = vmatpush1.bf16.msra.mxu0 %v4035
    %4042 = vmatprep.subr.bf16.mxu0 0
    %4043 = vmatpush1.bf16.msra.mxu0 %v4036
    %4044 = vmatprep.subr.bf16.mxu0 0
    %4045 = vmatpush1.bf16.msra.mxu0 %v4037
    %4046 = vmatprep.subr.bf16.mxu0 0
    %4047 = vmatpush1.bf16.msra.mxu0 0
    %4048 = vmatprep.subr.bf16.mxu0 0
    %4049 = vmatpush1.bf16.msra.mxu0 0
    %4050 = vmatprep.subr.bf16.mxu0 0
    %4051 = vmatpush1.bf16.msra.mxu0 0
    %4052 = vmatprep.subr.bf16.mxu0 0
    %4053 = vmatpush1.bf16.msra.mxu0 0
    %4054 = vmatprep.subr.bf16.mxu0 0
    %4055 = vmatpush1.bf16.msra.mxu0 0
    %4056 = vmatprep.subr.bf16.mxu0 0
    %4057 = vmatpush1.bf16.msra.mxu0 0
    %4058 = vmatprep.subr.bf16.mxu0 0
    %4059 = vmatpush1.bf16.msra.mxu0 0
    %4060 = vmatprep.subr.bf16.mxu0 0
    %4061 = vmatpush1.bf16.msra.mxu0 0
    %4062 = vmatprep.subr.bf16.mxu0 0
    %4063 = vmatpush1.bf16.msra.mxu0 0
    %4064 = vmatprep.subr.bf16.mxu0 0
    %4065 = vmatpush1.bf16.msra.mxu0 0
    %4066 = vmatprep.subr.bf16.mxu0 0
    %4067 = vmatpush1.bf16.msra.mxu0 0
    %4068 = vmatprep.subr.bf16.mxu0 0
    %4069 = vmatpush1.bf16.msra.mxu0 0
    %4070 = vmatprep.mubr.bf16.mxu0 0
    %4071 = vmatmul.mubr.bf16.gmra.mrb[0].mxu0 %v940
    %v4072 = vpop.f32.mrb[0].mxu0
    %v4073 = vadd.f32 0.0, %v4072
    %v4074 = vpop.f32.mrb[0].mxu0
    %v4075 = vpop.f32.mrb[0].mxu0
    %v4076 = vadd.f32 0.0, %v4075
    %v4077 = vpop.f32.mrb[0].mxu0
    %4078 = vmatprep.mubr.bf16.mxu0 0
    %4079 = vmatmul.mubr.bf16.gmra.mrb[0].mxu0 %v943
    %v4080 = vpop.f32.mrb[0].mxu0
    %v4081 = vadd.f32 0.0, %v4080
    %v4082 = vpop.f32.mrb[0].mxu0
    %v4083 = vpop.f32.mrb[0].mxu0
    %v4084 = vadd.f32 0.0, %v4083
    %v4085 = vpop.f32.mrb[0].mxu0
    %4086 = vmatprep.mubr.bf16.mxu0 0
    %4087 = vmatmul.mubr.bf16.gmra.mrb[0].mxu0 %v946
    %v4088 = vpop.f32.mrb[0].mxu0
    %v4089 = vadd.f32 0.0, %v4088
    %v4090 = vpop.f32.mrb[0].mxu0
    %v4091 = vpop.f32.mrb[0].mxu0
    %v4092 = vadd.f32 0.0, %v4091
    %v4093 = vpop.f32.mrb[0].mxu0
    %4094 = vmatprep.mubr.bf16.mxu0 0
    %4095 = vmatmul.mubr.bf16.gmra.mrb[0].mxu0 %v949
    %v4096 = vpop.f32.mrb[0].mxu0
    %v4097 = vadd.f32 0.0, %v4096
    %v4098 = vpop.f32.mrb[0].mxu0
    %v4099 = vpop.f32.mrb[0].mxu0
    %v4100 = vadd.f32 0.0, %v4099
    %v4101 = vpop.f32.mrb[0].mxu0
    %4102 = vmatprep.mubr.bf16.mxu0 0
    %4103 = vmatmul.mubr.bf16.gmra.mrb[0].mxu0 %v952
    %v4104 = vpop.f32.mrb[0].mxu0
    %v4105 = vadd.f32 0.0, %v4104
    %v4106 = vpop.f32.mrb[0].mxu0
    %v4107 = vpop.f32.mrb[0].mxu0
    %v4108 = vadd.f32 0.0, %v4107
    %v4109 = vpop.f32.mrb[0].mxu0
    %4110 = vmatprep.mubr.bf16.mxu0 0
    %4111 = vmatmul.mubr.bf16.gmra.mrb[0].mxu0 %v955
    %v4112 = vpop.f32.mrb[0].mxu0
    %v4113 = vadd.f32 0.0, %v4112
    %v4114 = vpop.f32.mrb[0].mxu0
    %v4115 = vpop.f32.mrb[0].mxu0
    %v4116 = vadd.f32 0.0, %v4115
    %v4117 = vpop.f32.mrb[0].mxu0
    %4118 = vmatprep.mubr.bf16.mxu0 0
    %4119 = vmatmul.mubr.bf16.gmra.mrb[0].mxu0 %v958
    %v4120 = vpop.f32.mrb[0].mxu0
    %v4121 = vadd.f32 0.0, %v4120
    %v4122 = vpop.f32.mrb[0].mxu0
    %v4123 = vpop.f32.mrb[0].mxu0
    %v4124 = vadd.f32 0.0, %v4123
    %v4125 = vpop.f32.mrb[0].mxu0
    %4126 = vmatprep.mubr.bf16.mxu0 0
    %4127 = vmatmul.mubr.bf16.gmra.mrb[0].mxu0 %v961
    %v4128 = vpop.f32.mrb[0].mxu0
    %v4129 = vadd.f32 0.0, %v4128
    %v4130 = vpop.f32.mrb[0].mxu0
    %v4131 = vpop.f32.mrb[0].mxu0
    %v4132 = vadd.f32 0.0, %v4131
    %v4133 = vpop.f32.mrb[0].mxu0
    %4134 = vmatprep.mubr.bf16.mxu0 0
    %4135 = vmatmul.mubr.bf16.gmra.mrb[0].mxu0 %v964
    %v4136 = vpop.f32.mrb[0].mxu0
    %v4137 = vadd.f32 0.0, %v4136
    %v4138 = vpop.f32.mrb[0].mxu0
    %v4139 = vpop.f32.mrb[0].mxu0
    %v4140 = vadd.f32 0.0, %v4139
    %v4141 = vpop.f32.mrb[0].mxu0
    %4142 = vmatprep.mubr.bf16.mxu0 0
    %4143 = vmatmul.mubr.bf16.gmra.mrb[0].mxu0 %v967
    %v4144 = vpop.f32.mrb[0].mxu0
    %v4145 = vadd.f32 0.0, %v4144
    %v4146 = vpop.f32.mrb[0].mxu0
    %v4147 = vpop.f32.mrb[0].mxu0
    %v4148 = vadd.f32 0.0, %v4147
    %v4149 = vpop.f32.mrb[0].mxu0
    %4150 = vmatprep.mubr.bf16.mxu0 0
    %4151 = vmatmul.mubr.bf16.gmra.mrb[0].mxu0 %v970
    %v4152 = vpop.f32.mrb[0].mxu0
    %v4153 = vadd.f32 0.0, %v4152
    %v4154 = vpop.f32.mrb[0].mxu0
    %v4155 = vpop.f32.mrb[0].mxu0
    %v4156 = vadd.f32 0.0, %v4155
    %v4157 = vpop.f32.mrb[0].mxu0
    %4158 = vmatprep.mubr.bf16.mxu0 0
    %4159 = vmatmul.mubr.bf16.gmra.mrb[0].mxu0 %v973
    %v4160 = vpop.f32.mrb[0].mxu0
    %v4161 = vadd.f32 0.0, %v4160
    %v4162 = vpop.f32.mrb[0].mxu0
    %v4163 = vpop.f32.mrb[0].mxu0
    %v4164 = vadd.f32 0.0, %v4163
    %v4165 = vpop.f32.mrb[0].mxu0
    %4166 = vmatprep.mubr.bf16.mxu0 0
    %4167 = vmatmul.mubr.bf16.gmra.mrb[0].mxu0 %v976
    %v4168 = vpop.f32.mrb[0].mxu0
    %v4169 = vadd.f32 0.0, %v4168
    %v4170 = vpop.f32.mrb[0].mxu0
    %v4171 = vpop.f32.mrb[0].mxu0
    %v4172 = vadd.f32 0.0, %v4171
    %v4173 = vpop.f32.mrb[0].mxu0
    %4174 = vmatprep.mubr.bf16.mxu0 0
    %4175 = vmatmul.mubr.bf16.gmra.mrb[0].mxu0 %v979
    %v4176 = vpop.f32.mrb[0].mxu0
    %v4177 = vadd.f32 0.0, %v4176
    %v4178 = vpop.f32.mrb[0].mxu0
    %v4179 = vpop.f32.mrb[0].mxu0
    %v4180 = vadd.f32 0.0, %v4179
    %v4181 = vpop.f32.mrb[0].mxu0
    %4182 = vmatprep.mubr.bf16.mxu0 0
    %4183 = vmatmul.mubr.bf16.gmra.mrb[0].mxu0 %v982
    %v4184 = vpop.f32.mrb[0].mxu0
    %v4185 = vadd.f32 0.0, %v4184
    %v4186 = vpop.f32.mrb[0].mxu0
    %v4187 = vpop.f32.mrb[0].mxu0
    %v4188 = vadd.f32 0.0, %v4187
    %v4189 = vpop.f32.mrb[0].mxu0
    %4190 = vmatprep.mubr.bf16.mxu0 0
    %4191 = vmatmul.mubr.bf16.gmra.mrb[0].mxu0 %v985
    %v4192 = vpop.f32.mrb[0].mxu0
    %v4193 = vadd.f32 0.0, %v4192
    %v4194 = vpop.f32.mrb[0].mxu0
    %v4195 = vpop.f32.mrb[0].mxu0
    %v4196 = vadd.f32 0.0, %v4195
    %v4197 = vpop.f32.mrb[0].mxu0
    %4198 = vdwg.mxu0
    %v4199 = vmul.f32 %v4073, %v63
    %v4200 = vmul.f32 %v4076, %v64
    %v4201 = vmul.f32 %v4081, %v65
    %v4202 = vmul.f32 %v4084, %v66
    %v4203 = vmul.f32 %v4089, %v67
    %v4204 = vmul.f32 %v4092, %v68
    %v4205 = vmul.f32 %v4097, %v69
    %v4206 = vmul.f32 %v4100, %v70
    %v4207 = vmul.f32 %v4105, %v71
    %v4208 = vmul.f32 %v4108, %v72
    %v4209 = vmul.f32 %v4113, %v73
    %v4210 = vmul.f32 %v4116, %v74
    %v4211 = vmul.f32 %v4121, %v75
    %v4212 = vmul.f32 %v4124, %v76
    %v4213 = vmul.f32 %v4129, %v77
    %v4214 = vmul.f32 %v4132, %v78
    %v4215 = vmul.f32 %v4137, %v79
    %v4216 = vmul.f32 %v4140, %v80
    %v4217 = vmul.f32 %v4145, %v81
    %v4218 = vmul.f32 %v4148, %v82
    %v4219 = vmul.f32 %v4153, %v83
    %v4220 = vmul.f32 %v4156, %v84
    %v4221 = vmul.f32 %v4161, %v85
    %v4222 = vmul.f32 %v4164, %v86
    %v4223 = vmul.f32 %v4169, %v87
    %v4224 = vmul.f32 %v4172, %v88
    %v4225 = vmul.f32 %v4177, %v89
    %v4226 = vmul.f32 %v4180, %v90
    %v4227 = vmul.f32 %v4185, %v91
    %v4228 = vmul.f32 %v4188, %v92
    %v4229 = vmul.f32 %v4193, %v93
    %v4230 = vmul.f32 %v4196, %v94
    %v4231 = vpack.c.bf16 %v4200, %v4199
    %v4232 = vpack.c.bf16 %v4202, %v4201
    %v4233 = vpack.c.bf16 %v4204, %v4203
    %v4234 = vpack.c.bf16 %v4206, %v4205
    %v4235 = vpack.c.bf16 %v4208, %v4207
    %v4236 = vpack.c.bf16 %v4210, %v4209
    %v4237 = vpack.c.bf16 %v4212, %v4211
    %v4238 = vpack.c.bf16 %v4214, %v4213
    %v4239 = vpack.c.bf16 %v4216, %v4215
    %v4240 = vpack.c.bf16 %v4218, %v4217
    %v4241 = vpack.c.bf16 %v4220, %v4219
    %v4242 = vpack.c.bf16 %v4222, %v4221
    %v4243 = vpack.c.bf16 %v4224, %v4223
    %v4244 = vpack.c.bf16 %v4226, %v4225
    %v4245 = vpack.c.bf16 %v4228, %v4227
    %v4246 = vpack.c.bf16 %v4230, %v4229
    %v4247 = vpack.c.bf16 %v3299, %v3298
    %v4248 = vpack.c.bf16 %v3301, %v3300
    %v4250 = vsel %vm120, %v4231, 0
    %v4253 = vsel %vm120, %v4232, 0
    %v4256 = vsel %vm120, %v4233, 0
    %v4259 = vsel %vm120, %v4234, 0
    %v4262 = vsel %vm120, %v4235, 0
    %v4265 = vsel %vm120, %v4236, 0
    %v4268 = vsel %vm120, %v4237, 0
    %v4271 = vsel %vm120, %v4238, 0
    %v4274 = vsel %vm120, %v4239, 0
    %v4277 = vsel %vm120, %v4240, 0
    %v4280 = vsel %vm120, %v4241, 0
    %v4283 = vsel %vm120, %v4242, 0
    %v4286 = vsel %vm120, %v4243, 0
    %v4289 = vsel %vm120, %v4244, 0
    %v4292 = vsel %vm120, %v4245, 0
    %v4295 = vsel %vm120, %v4246, 0
    %4297 = vmatprep.subr.bf16.mxu0 0
    %4298 = vmatpush1.bf16.msra.mxu0 %v4247
    %4299 = vmatprep.subr.bf16.mxu0 0
    %4300 = vmatpush1.bf16.msra.mxu0 %v4248
    %4301 = vmatprep.subr.bf16.mxu0 0
    %4302 = vmatpush1.bf16.msra.mxu0 0
    %4303 = vmatprep.subr.bf16.mxu0 0
    %4304 = vmatpush1.bf16.msra.mxu0 0
    %4305 = vmatprep.subr.bf16.mxu0 0
    %4306 = vmatpush1.bf16.msra.mxu0 0
    %4307 = vmatprep.subr.bf16.mxu0 0
    %4308 = vmatpush1.bf16.msra.mxu0 0
    %4309 = vmatprep.subr.bf16.mxu0 0
    %4310 = vmatpush1.bf16.msra.mxu0 0
    %4311 = vmatprep.subr.bf16.mxu0 0
    %4312 = vmatpush1.bf16.msra.mxu0 0
    %4313 = vmatprep.subr.bf16.mxu0 0
    %4314 = vmatpush1.bf16.msra.mxu0 0
    %4315 = vmatprep.subr.bf16.mxu0 0
    %4316 = vmatpush1.bf16.msra.mxu0 0
    %4317 = vmatprep.subr.bf16.mxu0 0
    %4318 = vmatpush1.bf16.msra.mxu0 0
    %4319 = vmatprep.subr.bf16.mxu0 0
    %4320 = vmatpush1.bf16.msra.mxu0 0
    %4321 = vmatprep.subr.bf16.mxu0 0
    %4322 = vmatpush1.bf16.msra.mxu0 0
    %4323 = vmatprep.subr.bf16.mxu0 0
    %4324 = vmatpush1.bf16.msra.mxu0 0
    %4325 = vmatprep.subr.bf16.mxu0 0
    %4326 = vmatpush1.bf16.msra.mxu0 0
    %4327 = vmatprep.subr.bf16.mxu0 0
    %4328 = vmatpush1.bf16.msra.mxu0 0
    %4329 = vmatprep.mubr.bf16.mxu0 0
    %4330 = vmatmul.mubr.bf16.gmra.mrb[0].mxu0 %v4250
    %v4331 = vpop.f32.mrb[0].mxu0
    %v4332 = vadd.f32 0.0, %v4331
    %v4333 = vpop.f32.mrb[0].mxu0
    %v4334 = vpop.f32.mrb[0].mxu0
    %v4335 = vadd.f32 0.0, %v4334
    %v4336 = vpop.f32.mrb[0].mxu0
    %4337 = vmatprep.mubr.bf16.mxu0 0
    %4338 = vmatmul.mubr.bf16.gmra.mrb[0].mxu0 %v4253
    %v4339 = vpop.f32.mrb[0].mxu0
    %v4340 = vadd.f32 0.0, %v4339
    %v4341 = vpop.f32.mrb[0].mxu0
    %v4342 = vpop.f32.mrb[0].mxu0
    %v4343 = vadd.f32 0.0, %v4342
    %v4344 = vpop.f32.mrb[0].mxu0
    %4345 = vmatprep.mubr.bf16.mxu0 0
    %4346 = vmatmul.mubr.bf16.gmra.mrb[0].mxu0 %v4256
    %v4347 = vpop.f32.mrb[0].mxu0
    %v4348 = vadd.f32 0.0, %v4347
    %v4349 = vpop.f32.mrb[0].mxu0
    %v4350 = vpop.f32.mrb[0].mxu0
    %v4351 = vadd.f32 0.0, %v4350
    %v4352 = vpop.f32.mrb[0].mxu0
    %4353 = vmatprep.mubr.bf16.mxu0 0
    %4354 = vmatmul.mubr.bf16.gmra.mrb[0].mxu0 %v4259
    %v4355 = vpop.f32.mrb[0].mxu0
    %v4356 = vadd.f32 0.0, %v4355
    %v4357 = vpop.f32.mrb[0].mxu0
    %v4358 = vpop.f32.mrb[0].mxu0
    %v4359 = vadd.f32 0.0, %v4358
    %v4360 = vpop.f32.mrb[0].mxu0
    %4361 = vmatprep.mubr.bf16.mxu0 0
    %4362 = vmatmul.mubr.bf16.gmra.mrb[0].mxu0 %v4262
    %v4363 = vpop.f32.mrb[0].mxu0
    %v4364 = vadd.f32 0.0, %v4363
    %v4365 = vpop.f32.mrb[0].mxu0
    %v4366 = vpop.f32.mrb[0].mxu0
    %v4367 = vadd.f32 0.0, %v4366
    %v4368 = vpop.f32.mrb[0].mxu0
    %4369 = vmatprep.mubr.bf16.mxu0 0
    %4370 = vmatmul.mubr.bf16.gmra.mrb[0].mxu0 %v4265
    %v4371 = vpop.f32.mrb[0].mxu0
    %v4372 = vadd.f32 0.0, %v4371
    %v4373 = vpop.f32.mrb[0].mxu0
    %v4374 = vpop.f32.mrb[0].mxu0
    %v4375 = vadd.f32 0.0, %v4374
    %v4376 = vpop.f32.mrb[0].mxu0
    %4377 = vmatprep.mubr.bf16.mxu0 0
    %4378 = vmatmul.mubr.bf16.gmra.mrb[0].mxu0 %v4268
    %v4379 = vpop.f32.mrb[0].mxu0
    %v4380 = vadd.f32 0.0, %v4379
    %v4381 = vpop.f32.mrb[0].mxu0
    %v4382 = vpop.f32.mrb[0].mxu0
    %v4383 = vadd.f32 0.0, %v4382
    %v4384 = vpop.f32.mrb[0].mxu0
    %4385 = vmatprep.mubr.bf16.mxu0 0
    %4386 = vmatmul.mubr.bf16.gmra.mrb[0].mxu0 %v4271
    %v4387 = vpop.f32.mrb[0].mxu0
    %v4388 = vadd.f32 0.0, %v4387
    %v4389 = vpop.f32.mrb[0].mxu0
    %v4390 = vpop.f32.mrb[0].mxu0
    %v4391 = vadd.f32 0.0, %v4390
    %v4392 = vpop.f32.mrb[0].mxu0
    %4393 = vmatprep.mubr.bf16.mxu0 0
    %4394 = vmatmul.mubr.bf16.gmra.mrb[0].mxu0 %v4274
    %v4395 = vpop.f32.mrb[0].mxu0
    %v4396 = vadd.f32 0.0, %v4395
    %v4397 = vpop.f32.mrb[0].mxu0
    %v4398 = vpop.f32.mrb[0].mxu0
    %v4399 = vadd.f32 0.0, %v4398
    %v4400 = vpop.f32.mrb[0].mxu0
    %4401 = vmatprep.mubr.bf16.mxu0 0
    %4402 = vmatmul.mubr.bf16.gmra.mrb[0].mxu0 %v4277
    %v4403 = vpop.f32.mrb[0].mxu0
    %v4404 = vadd.f32 0.0, %v4403
    %v4405 = vpop.f32.mrb[0].mxu0
    %v4406 = vpop.f32.mrb[0].mxu0
    %v4407 = vadd.f32 0.0, %v4406
    %v4408 = vpop.f32.mrb[0].mxu0
    %4409 = vmatprep.mubr.bf16.mxu0 0
    %4410 = vmatmul.mubr.bf16.gmra.mrb[0].mxu0 %v4280
    %v4411 = vpop.f32.mrb[0].mxu0
    %v4412 = vadd.f32 0.0, %v4411
    %v4413 = vpop.f32.mrb[0].mxu0
    %v4414 = vpop.f32.mrb[0].mxu0
    %v4415 = vadd.f32 0.0, %v4414
    %v4416 = vpop.f32.mrb[0].mxu0
    %4417 = vmatprep.mubr.bf16.mxu0 0
    %4418 = vmatmul.mubr.bf16.gmra.mrb[0].mxu0 %v4283
    %v4419 = vpop.f32.mrb[0].mxu0
    %v4420 = vadd.f32 0.0, %v4419
    %v4421 = vpop.f32.mrb[0].mxu0
    %v4422 = vpop.f32.mrb[0].mxu0
    %v4423 = vadd.f32 0.0, %v4422
    %v4424 = vpop.f32.mrb[0].mxu0
    %4425 = vmatprep.mubr.bf16.mxu0 0
    %4426 = vmatmul.mubr.bf16.gmra.mrb[0].mxu0 %v4286
    %v4427 = vpop.f32.mrb[0].mxu0
    %v4428 = vadd.f32 0.0, %v4427
    %v4429 = vpop.f32.mrb[0].mxu0
    %v4430 = vpop.f32.mrb[0].mxu0
    %v4431 = vadd.f32 0.0, %v4430
    %v4432 = vpop.f32.mrb[0].mxu0
    %4433 = vmatprep.mubr.bf16.mxu0 0
    %4434 = vmatmul.mubr.bf16.gmra.mrb[0].mxu0 %v4289
    %v4435 = vpop.f32.mrb[0].mxu0
    %v4436 = vadd.f32 0.0, %v4435
    %v4437 = vpop.f32.mrb[0].mxu0
    %v4438 = vpop.f32.mrb[0].mxu0
    %v4439 = vadd.f32 0.0, %v4438
    %v4440 = vpop.f32.mrb[0].mxu0
    %4441 = vmatprep.mubr.bf16.mxu0 0
    %4442 = vmatmul.mubr.bf16.gmra.mrb[0].mxu0 %v4292
    %v4443 = vpop.f32.mrb[0].mxu0
    %v4444 = vadd.f32 0.0, %v4443
    %v4445 = vpop.f32.mrb[0].mxu0
    %v4446 = vpop.f32.mrb[0].mxu0
    %v4447 = vadd.f32 0.0, %v4446
    %v4448 = vpop.f32.mrb[0].mxu0
    %4449 = vmatprep.mubr.bf16.mxu0 0
    %4450 = vmatmul.mubr.bf16.gmra.mrb[0].mxu0 %v4295
    %v4451 = vpop.f32.mrb[0].mxu0
    %v4452 = vadd.f32 0.0, %v4451
    %v4453 = vpop.f32.mrb[0].mxu0
    %v4454 = vpop.f32.mrb[0].mxu0
    %v4455 = vadd.f32 0.0, %v4454
    %v4456 = vpop.f32.mrb[0].mxu0
    %4457 = vdwg.mxu0
    %v4458 = vpack.c.bf16 %v3714, %v3711
    %v4459 = vpack.c.bf16 %v3722, %v3719
    %v4460 = vpack.c.bf16 %v3730, %v3727
    %v4461 = vpack.c.bf16 %v3738, %v3735
    %v4462 = vpack.c.bf16 %v3746, %v3743
    %v4463 = vpack.c.bf16 %v3754, %v3751
    %v4464 = vpack.c.bf16 %v3762, %v3759
    %v4465 = vpack.c.bf16 %v3770, %v3767
    %v4466 = vpack.c.bf16 %v3778, %v3775
    %v4467 = vpack.c.bf16 %v3786, %v3783
    %v4468 = vpack.c.bf16 %v3794, %v3791
    %v4469 = vpack.c.bf16 %v3802, %v3799
    %v4470 = vpack.c.bf16 %v3810, %v3807
    %v4471 = vpack.c.bf16 %v3818, %v3815
    %v4472 = vpack.c.bf16 %v3826, %v3823
    %v4473 = vpack.c.bf16 %v3834, %v3831
    %v4474 = vpack.c.bf16 %v4003, %v4002
    %v4475 = vpack.c.bf16 %v4005, %v4004
    %v4476 = vpack.c.bf16 %v4007, %v4006
    %v4477 = vpack.c.bf16 %v4009, %v4008
    %v4478 = vpack.c.bf16 %v4011, %v4010
    %v4479 = vpack.c.bf16 %v4013, %v4012
    %v4480 = vpack.c.bf16 %v4015, %v4014
    %v4481 = vpack.c.bf16 %v4017, %v4016
    %v4482 = vpack.c.bf16 %v4019, %v4018
    %v4483 = vpack.c.bf16 %v4021, %v4020
    %v4484 = vpack.c.bf16 %v4023, %v4022
    %v4485 = vpack.c.bf16 %v4025, %v4024
    %v4486 = vpack.c.bf16 %v4027, %v4026
    %v4487 = vpack.c.bf16 %v4029, %v4028
    %v4488 = vpack.c.bf16 %v4031, %v4030
    %v4489 = vpack.c.bf16 %v4033, %v4032
    %v4491 = vsel %vm120, %v4458, 0
    %v4494 = vsel %vm120, %v4459, 0
    %v4497 = vsel %vm120, %v4460, 0
    %v4500 = vsel %vm120, %v4461, 0
    %v4503 = vsel %vm120, %v4462, 0
    %v4506 = vsel %vm120, %v4463, 0
    %v4509 = vsel %vm120, %v4464, 0
    %v4512 = vsel %vm120, %v4465, 0
    %v4515 = vsel %vm120, %v4466, 0
    %v4518 = vsel %vm120, %v4467, 0
    %v4521 = vsel %vm120, %v4468, 0
    %v4524 = vsel %vm120, %v4469, 0
    %v4527 = vsel %vm120, %v4470, 0
    %v4530 = vsel %vm120, %v4471, 0
    %v4533 = vsel %vm120, %v4472, 0
    %v4536 = vsel %vm120, %v4473, 0
    %v4539 = vsel %vm120, %v4474, 0
    %v4542 = vsel %vm120, %v4475, 0
    %v4545 = vsel %vm120, %v4476, 0
    %v4548 = vsel %vm120, %v4477, 0
    %v4551 = vsel %vm120, %v4478, 0
    %v4554 = vsel %vm120, %v4479, 0
    %v4557 = vsel %vm120, %v4480, 0
    %v4560 = vsel %vm120, %v4481, 0
    %v4563 = vsel %vm120, %v4482, 0
    %v4566 = vsel %vm120, %v4483, 0
    %v4569 = vsel %vm120, %v4484, 0
    %v4572 = vsel %vm120, %v4485, 0
    %v4575 = vsel %vm120, %v4486, 0
    %v4578 = vsel %vm120, %v4487, 0
    %v4581 = vsel %vm120, %v4488, 0
    %v4584 = vsel %vm120, %v4489, 0
    %4586 = vmatprep.subr.bf16.mxu0 0
    %4587 = vmatpush1.bf16.xpose.msra.mxu0 %v4539
    %4588 = vmatprep.subr.bf16.mxu0 0
    %4589 = vmatpush1.bf16.xpose.msra.mxu0 %v4542
    %4590 = vmatprep.subr.bf16.mxu0 0
    %4591 = vmatpush1.bf16.xpose.msra.mxu0 %v4545
    %4592 = vmatprep.subr.bf16.mxu0 0
    %4593 = vmatpush1.bf16.xpose.msra.mxu0 %v4548
    %4594 = vmatprep.subr.bf16.mxu0 0
    %4595 = vmatpush1.bf16.xpose.msra.mxu0 %v4551
    %4596 = vmatprep.subr.bf16.mxu0 0
    %4597 = vmatpush1.bf16.xpose.msra.mxu0 %v4554
    %4598 = vmatprep.subr.bf16.mxu0 0
    %4599 = vmatpush1.bf16.xpose.msra.mxu0 %v4557
    %4600 = vmatprep.subr.bf16.mxu0 0
    %4601 = vmatpush1.bf16.xpose.msra.mxu0 %v4560
    %4602 = vmatprep.subr.bf16.mxu0 0
    %4603 = vmatpush1.bf16.xpose.msra.mxu0 %v4563
    %4604 = vmatprep.subr.bf16.mxu0 0
    %4605 = vmatpush1.bf16.xpose.msra.mxu0 %v4566
    %4606 = vmatprep.subr.bf16.mxu0 0
    %4607 = vmatpush1.bf16.xpose.msra.mxu0 %v4569
    %4608 = vmatprep.subr.bf16.mxu0 0
    %4609 = vmatpush1.bf16.xpose.msra.mxu0 %v4572
    %4610 = vmatprep.subr.bf16.mxu0 0
    %4611 = vmatpush1.bf16.xpose.msra.mxu0 %v4575
    %4612 = vmatprep.subr.bf16.mxu0 0
    %4613 = vmatpush1.bf16.xpose.msra.mxu0 %v4578
    %4614 = vmatprep.subr.bf16.mxu0 0
    %4615 = vmatpush1.bf16.xpose.msra.mxu0 %v4581
    %4616 = vmatprep.subr.bf16.mxu0 0
    %4617 = vmatpush1.bf16.xpose.msra.mxu0 %v4584
    %4618 = vmatprep.mubr.bf16.mxu0 0
    %4619 = vmatmul.mubr.bf16.gmra.mrb[0].mxu0 %v4491
    %v4620 = vpop.f32.mrb[0].mxu0
    %v4621 = vadd.f32 0.0, %v4620
    %v4622 = vpop.f32.mrb[0].mxu0
    %v4623 = vadd.f32 0.0, %v4622
    %v4624 = vpop.f32.mrb[0].mxu0
    %v4625 = vadd.f32 0.0, %v4624
    %v4626 = vpop.f32.mrb[0].mxu0
    %v4627 = vadd.f32 0.0, %v4626
    %4628 = vmatprep.mubr.bf16.mxu0 0
    %4629 = vmatmul.mubr.bf16.gmra.mrb[0].mxu0 %v4494
    %v4630 = vpop.f32.mrb[0].mxu0
    %v4631 = vadd.f32 0.0, %v4630
    %v4632 = vpop.f32.mrb[0].mxu0
    %v4633 = vadd.f32 0.0, %v4632
    %v4634 = vpop.f32.mrb[0].mxu0
    %v4635 = vadd.f32 0.0, %v4634
    %v4636 = vpop.f32.mrb[0].mxu0
    %v4637 = vadd.f32 0.0, %v4636
    %4638 = vmatprep.mubr.bf16.mxu0 0
    %4639 = vmatmul.mubr.bf16.gmra.mrb[0].mxu0 %v4497
    %v4640 = vpop.f32.mrb[0].mxu0
    %v4641 = vadd.f32 0.0, %v4640
    %v4642 = vpop.f32.mrb[0].mxu0
    %v4643 = vadd.f32 0.0, %v4642
    %v4644 = vpop.f32.mrb[0].mxu0
    %v4645 = vadd.f32 0.0, %v4644
    %v4646 = vpop.f32.mrb[0].mxu0
    %v4647 = vadd.f32 0.0, %v4646
    %4648 = vmatprep.mubr.bf16.mxu0 0
    %4649 = vmatmul.mubr.bf16.gmra.mrb[0].mxu0 %v4500
    %v4650 = vpop.f32.mrb[0].mxu0
    %v4651 = vadd.f32 0.0, %v4650
    %v4652 = vpop.f32.mrb[0].mxu0
    %v4653 = vadd.f32 0.0, %v4652
    %v4654 = vpop.f32.mrb[0].mxu0
    %v4655 = vadd.f32 0.0, %v4654
    %v4656 = vpop.f32.mrb[0].mxu0
    %v4657 = vadd.f32 0.0, %v4656
    %4658 = vmatprep.mubr.bf16.mxu0 0
    %4659 = vmatmul.mubr.bf16.gmra.mrb[0].mxu0 %v4503
    %v4660 = vpop.f32.mrb[0].mxu0
    %v4661 = vadd.f32 0.0, %v4660
    %v4662 = vpop.f32.mrb[0].mxu0
    %v4663 = vadd.f32 0.0, %v4662
    %v4664 = vpop.f32.mrb[0].mxu0
    %v4665 = vadd.f32 0.0, %v4664
    %v4666 = vpop.f32.mrb[0].mxu0
    %v4667 = vadd.f32 0.0, %v4666
    %4668 = vmatprep.mubr.bf16.mxu0 0
    %4669 = vmatmul.mubr.bf16.gmra.mrb[0].mxu0 %v4506
    %v4670 = vpop.f32.mrb[0].mxu0
    %v4671 = vadd.f32 0.0, %v4670
    %v4672 = vpop.f32.mrb[0].mxu0
    %v4673 = vadd.f32 0.0, %v4672
    %v4674 = vpop.f32.mrb[0].mxu0
    %v4675 = vadd.f32 0.0, %v4674
    %v4676 = vpop.f32.mrb[0].mxu0
    %v4677 = vadd.f32 0.0, %v4676
    %4678 = vmatprep.mubr.bf16.mxu0 0
    %4679 = vmatmul.mubr.bf16.gmra.mrb[0].mxu0 %v4509
    %v4680 = vpop.f32.mrb[0].mxu0
    %v4681 = vadd.f32 0.0, %v4680
    %v4682 = vpop.f32.mrb[0].mxu0
    %v4683 = vadd.f32 0.0, %v4682
    %v4684 = vpop.f32.mrb[0].mxu0
    %v4685 = vadd.f32 0.0, %v4684
    %v4686 = vpop.f32.mrb[0].mxu0
    %v4687 = vadd.f32 0.0, %v4686
    %4688 = vmatprep.mubr.bf16.mxu0 0
    %4689 = vmatmul.mubr.bf16.gmra.mrb[0].mxu0 %v4512
    %v4690 = vpop.f32.mrb[0].mxu0
    %v4691 = vadd.f32 0.0, %v4690
    %v4692 = vpop.f32.mrb[0].mxu0
    %v4693 = vadd.f32 0.0, %v4692
    %v4694 = vpop.f32.mrb[0].mxu0
    %v4695 = vadd.f32 0.0, %v4694
    %v4696 = vpop.f32.mrb[0].mxu0
    %v4697 = vadd.f32 0.0, %v4696
    %4698 = vmatprep.mubr.bf16.mxu0 0
    %4699 = vmatmul.mubr.bf16.gmra.mrb[0].mxu0 %v4515
    %v4700 = vpop.f32.mrb[0].mxu0
    %v4701 = vadd.f32 0.0, %v4700
    %v4702 = vpop.f32.mrb[0].mxu0
    %v4703 = vadd.f32 0.0, %v4702
    %v4704 = vpop.f32.mrb[0].mxu0
    %v4705 = vadd.f32 0.0, %v4704
    %v4706 = vpop.f32.mrb[0].mxu0
    %v4707 = vadd.f32 0.0, %v4706
    %4708 = vmatprep.mubr.bf16.mxu0 0
    %4709 = vmatmul.mubr.bf16.gmra.mrb[0].mxu0 %v4518
    %v4710 = vpop.f32.mrb[0].mxu0
    %v4711 = vadd.f32 0.0, %v4710
    %v4712 = vpop.f32.mrb[0].mxu0
    %v4713 = vadd.f32 0.0, %v4712
    %v4714 = vpop.f32.mrb[0].mxu0
    %v4715 = vadd.f32 0.0, %v4714
    %v4716 = vpop.f32.mrb[0].mxu0
    %v4717 = vadd.f32 0.0, %v4716
    %4718 = vmatprep.mubr.bf16.mxu0 0
    %4719 = vmatmul.mubr.bf16.gmra.mrb[0].mxu0 %v4521
    %v4720 = vpop.f32.mrb[0].mxu0
    %v4721 = vadd.f32 0.0, %v4720
    %v4722 = vpop.f32.mrb[0].mxu0
    %v4723 = vadd.f32 0.0, %v4722
    %v4724 = vpop.f32.mrb[0].mxu0
    %v4725 = vadd.f32 0.0, %v4724
    %v4726 = vpop.f32.mrb[0].mxu0
    %v4727 = vadd.f32 0.0, %v4726
    %4728 = vmatprep.mubr.bf16.mxu0 0
    %4729 = vmatmul.mubr.bf16.gmra.mrb[0].mxu0 %v4524
    %v4730 = vpop.f32.mrb[0].mxu0
    %v4731 = vadd.f32 0.0, %v4730
    %v4732 = vpop.f32.mrb[0].mxu0
    %v4733 = vadd.f32 0.0, %v4732
    %v4734 = vpop.f32.mrb[0].mxu0
    %v4735 = vadd.f32 0.0, %v4734
    %v4736 = vpop.f32.mrb[0].mxu0
    %v4737 = vadd.f32 0.0, %v4736
    %4738 = vmatprep.mubr.bf16.mxu0 0
    %4739 = vmatmul.mubr.bf16.gmra.mrb[0].mxu0 %v4527
    %v4740 = vpop.f32.mrb[0].mxu0
    %v4741 = vadd.f32 0.0, %v4740
    %v4742 = vpop.f32.mrb[0].mxu0
    %v4743 = vadd.f32 0.0, %v4742
    %v4744 = vpop.f32.mrb[0].mxu0
    %v4745 = vadd.f32 0.0, %v4744
    %v4746 = vpop.f32.mrb[0].mxu0
    %v4747 = vadd.f32 0.0, %v4746
    %4748 = vmatprep.mubr.bf16.mxu0 0
    %4749 = vmatmul.mubr.bf16.gmra.mrb[0].mxu0 %v4530
    %v4750 = vpop.f32.mrb[0].mxu0
    %v4751 = vadd.f32 0.0, %v4750
    %v4752 = vpop.f32.mrb[0].mxu0
    %v4753 = vadd.f32 0.0, %v4752
    %v4754 = vpop.f32.mrb[0].mxu0
    %v4755 = vadd.f32 0.0, %v4754
    %v4756 = vpop.f32.mrb[0].mxu0
    %v4757 = vadd.f32 0.0, %v4756
    %4758 = vmatprep.mubr.bf16.mxu0 0
    %4759 = vmatmul.mubr.bf16.gmra.mrb[0].mxu0 %v4533
    %v4760 = vpop.f32.mrb[0].mxu0
    %v4761 = vadd.f32 0.0, %v4760
    %v4762 = vpop.f32.mrb[0].mxu0
    %v4763 = vadd.f32 0.0, %v4762
    %v4764 = vpop.f32.mrb[0].mxu0
    %v4765 = vadd.f32 0.0, %v4764
    %v4766 = vpop.f32.mrb[0].mxu0
    %v4767 = vadd.f32 0.0, %v4766
    %4768 = vmatprep.mubr.bf16.mxu0 0
    %4769 = vmatmul.mubr.bf16.gmra.mrb[0].mxu0 %v4536
    %v4770 = vpop.f32.mrb[0].mxu0
    %v4771 = vadd.f32 0.0, %v4770
    %v4772 = vpop.f32.mrb[0].mxu0
    %v4773 = vadd.f32 0.0, %v4772
    %v4774 = vpop.f32.mrb[0].mxu0
    %v4775 = vadd.f32 0.0, %v4774
    %v4776 = vpop.f32.mrb[0].mxu0
    %v4777 = vadd.f32 0.0, %v4776
    %4778 = vdwg.mxu0
    %v4779 = vshra.s32 %v2091, 5
    %v4780 = vshra.s32 %v2092, 5
    %v4781 = vshra.s32 %v2093, 5
    %v4782 = vshra.s32 %v2094, 5
    %v4783 = vshra.s32 %v2095, 5
    %v4784 = vshra.s32 %v2096, 5
    %v4785 = vshra.s32 %v2097, 5
    %v4786 = vshra.s32 %v2098, 5
    %v4787 = vshra.s32 %v2099, 5
    %v4788 = vshra.s32 %v2100, 5
    %v4789 = vshra.s32 %v2101, 5
    %v4790 = vshra.s32 %v2102, 5
    %v4791 = vshra.s32 %v2103, 5
    %v4792 = vshra.s32 %v2104, 5
    %v4793 = vshra.s32 %v2105, 5
    %v4794 = vshra.s32 %v2106, 5
    %v4795 = vshra.s32 %v2107, 5
    %v4796 = vshra.s32 %v2108, 5
    %v4797 = vshra.s32 %v2109, 5
    %v4798 = vshra.s32 %v2110, 5
    %v4799 = vshra.s32 %v2111, 5
    %v4800 = vshra.s32 %v2112, 5
    %v4801 = vshra.s32 %v2113, 5
    %v4802 = vshra.s32 %v2114, 5
    %v4803 = vshra.s32 %v2115, 5
    %v4804 = vshra.s32 %v2116, 5
    %v4805 = vshra.s32 %v2117, 5
    %v4806 = vshra.s32 %v2118, 5
    %v4807 = vshra.s32 %v2119, 5
    %v4808 = vshra.s32 %v2120, 5
    %v4809 = vshra.s32 %v2121, 5
    %v4810 = vshra.s32 %v2122, 5
    %v4811 = vshra.s32 %v2124, 5
    %v4812 = vshra.s32 %v2125, 5
    %vm4813 = vcmp.eq.s32.totalorder %v4779, %v4811
    %vm4814 = vcmp.eq.s32.totalorder %v4779, %v4812
    %vm4815 = vcmp.eq.s32.totalorder %v4780, %v4811
    %vm4816 = vcmp.eq.s32.totalorder %v4780, %v4812
    %vm4817 = vcmp.eq.s32.totalorder %v4781, %v4811
    %vm4818 = vcmp.eq.s32.totalorder %v4781, %v4812
    %vm4819 = vcmp.eq.s32.totalorder %v4782, %v4811
    %vm4820 = vcmp.eq.s32.totalorder %v4782, %v4812
    %vm4821 = vcmp.eq.s32.totalorder %v4783, %v4811
    %vm4822 = vcmp.eq.s32.totalorder %v4783, %v4812
    %vm4823 = vcmp.eq.s32.totalorder %v4784, %v4811
    %vm4824 = vcmp.eq.s32.totalorder %v4784, %v4812
    %vm4825 = vcmp.eq.s32.totalorder %v4785, %v4811
    %vm4826 = vcmp.eq.s32.totalorder %v4785, %v4812
    %vm4827 = vcmp.eq.s32.totalorder %v4786, %v4811
    %vm4828 = vcmp.eq.s32.totalorder %v4786, %v4812
    %vm4829 = vcmp.eq.s32.totalorder %v4787, %v4811
    %vm4830 = vcmp.eq.s32.totalorder %v4787, %v4812
    %vm4831 = vcmp.eq.s32.totalorder %v4788, %v4811
    %vm4832 = vcmp.eq.s32.totalorder %v4788, %v4812
    %vm4833 = vcmp.eq.s32.totalorder %v4789, %v4811
    %vm4834 = vcmp.eq.s32.totalorder %v4789, %v4812
    %vm4835 = vcmp.eq.s32.totalorder %v4790, %v4811
    %vm4836 = vcmp.eq.s32.totalorder %v4790, %v4812
    %vm4837 = vcmp.eq.s32.totalorder %v4791, %v4811
    %vm4838 = vcmp.eq.s32.totalorder %v4791, %v4812
    %vm4839 = vcmp.eq.s32.totalorder %v4792, %v4811
    %vm4840 = vcmp.eq.s32.totalorder %v4792, %v4812
    %vm4841 = vcmp.eq.s32.totalorder %v4793, %v4811
    %vm4842 = vcmp.eq.s32.totalorder %v4793, %v4812
    %vm4843 = vcmp.eq.s32.totalorder %v4794, %v4811
    %vm4844 = vcmp.eq.s32.totalorder %v4794, %v4812
    %vm4845 = vcmp.eq.s32.totalorder %v4795, %v4811
    %vm4846 = vcmp.eq.s32.totalorder %v4795, %v4812
    %vm4847 = vcmp.eq.s32.totalorder %v4796, %v4811
    %vm4848 = vcmp.eq.s32.totalorder %v4796, %v4812
    %vm4849 = vcmp.eq.s32.totalorder %v4797, %v4811
    %vm4850 = vcmp.eq.s32.totalorder %v4797, %v4812
    %vm4851 = vcmp.eq.s32.totalorder %v4798, %v4811
    %vm4852 = vcmp.eq.s32.totalorder %v4798, %v4812
    %vm4853 = vcmp.eq.s32.totalorder %v4799, %v4811
    %vm4854 = vcmp.eq.s32.totalorder %v4799, %v4812
    %vm4855 = vcmp.eq.s32.totalorder %v4800, %v4811
    %vm4856 = vcmp.eq.s32.totalorder %v4800, %v4812
    %vm4857 = vcmp.eq.s32.totalorder %v4801, %v4811
    %vm4858 = vcmp.eq.s32.totalorder %v4801, %v4812
    %vm4859 = vcmp.eq.s32.totalorder %v4802, %v4811
    %vm4860 = vcmp.eq.s32.totalorder %v4802, %v4812
    %vm4861 = vcmp.eq.s32.totalorder %v4803, %v4811
    %vm4862 = vcmp.eq.s32.totalorder %v4803, %v4812
    %vm4863 = vcmp.eq.s32.totalorder %v4804, %v4811
    %vm4864 = vcmp.eq.s32.totalorder %v4804, %v4812
    %vm4865 = vcmp.eq.s32.totalorder %v4805, %v4811
    %vm4866 = vcmp.eq.s32.totalorder %v4805, %v4812
    %vm4867 = vcmp.eq.s32.totalorder %v4806, %v4811
    %vm4868 = vcmp.eq.s32.totalorder %v4806, %v4812
    %vm4869 = vcmp.eq.s32.totalorder %v4807, %v4811
    %vm4870 = vcmp.eq.s32.totalorder %v4807, %v4812
    %vm4871 = vcmp.eq.s32.totalorder %v4808, %v4811
    %vm4872 = vcmp.eq.s32.totalorder %v4808, %v4812
    %vm4873 = vcmp.eq.s32.totalorder %v4809, %v4811
    %vm4874 = vcmp.eq.s32.totalorder %v4809, %v4812
    %vm4875 = vcmp.eq.s32.totalorder %v4810, %v4811
    %vm4876 = vcmp.eq.s32.totalorder %v4810, %v4812
    %vm4877 = vmxor %vm2160, 1
    %vm4878 = vmxor %vm2161, 1
    %vm4879 = vmxor %vm2162, 1
    %vm4880 = vmxor %vm2163, 1
    %vm4881 = vmxor %vm2164, 1
    %vm4882 = vmxor %vm2165, 1
    %vm4883 = vmxor %vm2166, 1
    %vm4884 = vmxor %vm2167, 1
    %vm4885 = vmxor %vm2168, 1
    %vm4886 = vmxor %vm2169, 1
    %vm4887 = vmxor %vm2170, 1
    %vm4888 = vmxor %vm2171, 1
    %vm4889 = vmxor %vm2172, 1
    %vm4890 = vmxor %vm2173, 1
    %vm4891 = vmxor %vm2174, 1
    %vm4892 = vmxor %vm2175, 1
    %vm4893 = vmxor %vm2176, 1
    %vm4894 = vmxor %vm2177, 1
    %vm4895 = vmxor %vm2178, 1
    %vm4896 = vmxor %vm2179, 1
    %vm4897 = vmxor %vm2180, 1
    %vm4898 = vmxor %vm2181, 1
    %vm4899 = vmxor %vm2182, 1
    %vm4900 = vmxor %vm2183, 1
    %vm4901 = vmxor %vm2184, 1
    %vm4902 = vmxor %vm2185, 1
    %vm4903 = vmxor %vm2186, 1
    %vm4904 = vmxor %vm2187, 1
    %vm4905 = vmxor %vm2188, 1
    %vm4906 = vmxor %vm2189, 1
    %vm4907 = vmxor %vm2190, 1
    %vm4908 = vmxor %vm2191, 1
    %vm4909 = vmxor %vm2192, 1
    %vm4910 = vmxor %vm2193, 1
    %vm4911 = vmxor %vm2194, 1
    %vm4912 = vmxor %vm2195, 1
    %vm4913 = vmxor %vm2196, 1
    %vm4914 = vmxor %vm2197, 1
    %vm4915 = vmxor %vm2198, 1
    %vm4916 = vmxor %vm2199, 1
    %vm4917 = vmxor %vm2200, 1
    %vm4918 = vmxor %vm2201, 1
    %vm4919 = vmxor %vm2202, 1
    %vm4920 = vmxor %vm2203, 1
    %vm4921 = vmxor %vm2204, 1
    %vm4922 = vmxor %vm2205, 1
    %vm4923 = vmxor %vm2206, 1
    %vm4924 = vmxor %vm2207, 1
    %vm4925 = vmxor %vm2208, 1
    %vm4926 = vmxor %vm2209, 1
    %vm4927 = vmxor %vm2210, 1
    %vm4928 = vmxor %vm2211, 1
    %vm4929 = vmxor %vm2212, 1
    %vm4930 = vmxor %vm2213, 1
    %vm4931 = vmxor %vm2214, 1
    %vm4932 = vmxor %vm2215, 1
    %vm4933 = vmxor %vm2216, 1
    %vm4934 = vmxor %vm2217, 1
    %vm4935 = vmxor %vm2218, 1
    %vm4936 = vmxor %vm2219, 1
    %vm4937 = vmxor %vm2220, 1
    %vm4938 = vmxor %vm2221, 1
    %vm4939 = vmxor %vm2222, 1
    %vm4940 = vmxor %vm2223, 1
    %vm4941 = vcmp.eq.s32.totalorder %v2091, %v2124
    %vm4942 = vcmp.eq.s32.totalorder %v2091, %v2125
    %vm4943 = vcmp.eq.s32.totalorder %v2092, %v2124
    %vm4944 = vcmp.eq.s32.totalorder %v2092, %v2125
    %vm4945 = vcmp.eq.s32.totalorder %v2093, %v2124
    %vm4946 = vcmp.eq.s32.totalorder %v2093, %v2125
    %vm4947 = vcmp.eq.s32.totalorder %v2094, %v2124
    %vm4948 = vcmp.eq.s32.totalorder %v2094, %v2125
    %vm4949 = vcmp.eq.s32.totalorder %v2095, %v2124
    %vm4950 = vcmp.eq.s32.totalorder %v2095, %v2125
    %vm4951 = vcmp.eq.s32.totalorder %v2096, %v2124
    %vm4952 = vcmp.eq.s32.totalorder %v2096, %v2125
    %vm4953 = vcmp.eq.s32.totalorder %v2097, %v2124
    %vm4954 = vcmp.eq.s32.totalorder %v2097, %v2125
    %vm4955 = vcmp.eq.s32.totalorder %v2098, %v2124
    %vm4956 = vcmp.eq.s32.totalorder %v2098, %v2125
    %vm4957 = vcmp.eq.s32.totalorder %v2099, %v2124
    %vm4958 = vcmp.eq.s32.totalorder %v2099, %v2125
    %vm4959 = vcmp.eq.s32.totalorder %v2100, %v2124
    %vm4960 = vcmp.eq.s32.totalorder %v2100, %v2125
    %vm4961 = vcmp.eq.s32.totalorder %v2101, %v2124
    %vm4962 = vcmp.eq.s32.totalorder %v2101, %v2125
    %vm4963 = vcmp.eq.s32.totalorder %v2102, %v2124
    %vm4964 = vcmp.eq.s32.totalorder %v2102, %v2125
    %vm4965 = vcmp.eq.s32.totalorder %v2103, %v2124
    %vm4966 = vcmp.eq.s32.totalorder %v2103, %v2125
    %vm4967 = vcmp.eq.s32.totalorder %v2104, %v2124
    %vm4968 = vcmp.eq.s32.totalorder %v2104, %v2125
    %vm4969 = vcmp.eq.s32.totalorder %v2105, %v2124
    %vm4970 = vcmp.eq.s32.totalorder %v2105, %v2125
    %vm4971 = vcmp.eq.s32.totalorder %v2106, %v2124
    %vm4972 = vcmp.eq.s32.totalorder %v2106, %v2125
    %vm4973 = vcmp.eq.s32.totalorder %v2107, %v2124
    %vm4974 = vcmp.eq.s32.totalorder %v2107, %v2125
    %vm4975 = vcmp.eq.s32.totalorder %v2108, %v2124
    %vm4976 = vcmp.eq.s32.totalorder %v2108, %v2125
    %vm4977 = vcmp.eq.s32.totalorder %v2109, %v2124
    %vm4978 = vcmp.eq.s32.totalorder %v2109, %v2125
    %vm4979 = vcmp.eq.s32.totalorder %v2110, %v2124
    %vm4980 = vcmp.eq.s32.totalorder %v2110, %v2125
    %vm4981 = vcmp.eq.s32.totalorder %v2111, %v2124
    %vm4982 = vcmp.eq.s32.totalorder %v2111, %v2125
    %vm4983 = vcmp.eq.s32.totalorder %v2112, %v2124
    %vm4984 = vcmp.eq.s32.totalorder %v2112, %v2125
    %vm4985 = vcmp.eq.s32.totalorder %v2113, %v2124
    %vm4986 = vcmp.eq.s32.totalorder %v2113, %v2125
    %vm4987 = vcmp.eq.s32.totalorder %v2114, %v2124
    %vm4988 = vcmp.eq.s32.totalorder %v2114, %v2125
    %vm4989 = vcmp.eq.s32.totalorder %v2115, %v2124
    %vm4990 = vcmp.eq.s32.totalorder %v2115, %v2125
    %vm4991 = vcmp.eq.s32.totalorder %v2116, %v2124
    %vm4992 = vcmp.eq.s32.totalorder %v2116, %v2125
    %vm4993 = vcmp.eq.s32.totalorder %v2117, %v2124
    %vm4994 = vcmp.eq.s32.totalorder %v2117, %v2125
    %vm4995 = vcmp.eq.s32.totalorder %v2118, %v2124
    %vm4996 = vcmp.eq.s32.totalorder %v2118, %v2125
    %vm4997 = vcmp.eq.s32.totalorder %v2119, %v2124
    %vm4998 = vcmp.eq.s32.totalorder %v2119, %v2125
    %vm4999 = vcmp.eq.s32.totalorder %v2120, %v2124
    %vm5000 = vcmp.eq.s32.totalorder %v2120, %v2125
    %vm5001 = vcmp.eq.s32.totalorder %v2121, %v2124
    %vm5002 = vcmp.eq.s32.totalorder %v2121, %v2125
    %vm5003 = vcmp.eq.s32.totalorder %v2122, %v2124
    %vm5004 = vcmp.eq.s32.totalorder %v2122, %v2125
    %vm5005 = vmor %vm4877, %vm4941
    %vm5006 = vmor %vm4878, %vm4942
    %vm5007 = vmor %vm4879, %vm4943
    %vm5008 = vmor %vm4880, %vm4944
    %vm5009 = vmor %vm4881, %vm4945
    %vm5010 = vmor %vm4882, %vm4946
    %vm5011 = vmor %vm4883, %vm4947
    %vm5012 = vmor %vm4884, %vm4948
    %vm5013 = vmor %vm4885, %vm4949
    %vm5014 = vmor %vm4886, %vm4950
    %vm5015 = vmor %vm4887, %vm4951
    %vm5016 = vmor %vm4888, %vm4952
    %vm5017 = vmor %vm4889, %vm4953
    %vm5018 = vmor %vm4890, %vm4954
    %vm5019 = vmor %vm4891, %vm4955
    %vm5020 = vmor %vm4892, %vm4956
    %vm5021 = vmor %vm4893, %vm4957
    %vm5022 = vmor %vm4894, %vm4958
    %vm5023 = vmor %vm4895, %vm4959
    %vm5024 = vmor %vm4896, %vm4960
    %vm5025 = vmor %vm4897, %vm4961
    %vm5026 = vmor %vm4898, %vm4962
    %vm5027 = vmor %vm4899, %vm4963
    %vm5028 = vmor %vm4900, %vm4964
    %vm5029 = vmor %vm4901, %vm4965
    %vm5030 = vmor %vm4902, %vm4966
    %vm5031 = vmor %vm4903, %vm4967
    %vm5032 = vmor %vm4904, %vm4968
    %vm5033 = vmor %vm4905, %vm4969
    %vm5034 = vmor %vm4906, %vm4970
    %vm5035 = vmor %vm4907, %vm4971
    %vm5036 = vmor %vm4908, %vm4972
    %vm5037 = vmor %vm4909, %vm4973
    %vm5038 = vmor %vm4910, %vm4974
    %vm5039 = vmor %vm4911, %vm4975
    %vm5040 = vmor %vm4912, %vm4976
    %vm5041 = vmor %vm4913, %vm4977
    %vm5042 = vmor %vm4914, %vm4978
    %vm5043 = vmor %vm4915, %vm4979
    %vm5044 = vmor %vm4916, %vm4980
    %vm5045 = vmor %vm4917, %vm4981
    %vm5046 = vmor %vm4918, %vm4982
    %vm5047 = vmor %vm4919, %vm4983
    %vm5048 = vmor %vm4920, %vm4984
    %vm5049 = vmor %vm4921, %vm4985
    %vm5050 = vmor %vm4922, %vm4986
    %vm5051 = vmor %vm4923, %vm4987
    %vm5052 = vmor %vm4924, %vm4988
    %vm5053 = vmor %vm4925, %vm4989
    %vm5054 = vmor %vm4926, %vm4990
    %vm5055 = vmor %vm4927, %vm4991
    %vm5056 = vmor %vm4928, %vm4992
    %vm5057 = vmor %vm4929, %vm4993
    %vm5058 = vmor %vm4930, %vm4994
    %vm5059 = vmor %vm4931, %vm4995
    %vm5060 = vmor %vm4932, %vm4996
    %vm5061 = vmor %vm4933, %vm4997
    %vm5062 = vmor %vm4934, %vm4998
    %vm5063 = vmor %vm4935, %vm4999
    %vm5064 = vmor %vm4936, %vm5000
    %vm5065 = vmor %vm4937, %vm5001
    %vm5066 = vmor %vm4938, %vm5002
    %vm5067 = vmor %vm4939, %vm5003
    %vm5068 = vmor %vm4940, %vm5004
    %vm5069 = vmand %vm4813, %vm5005
    %vm5070 = vmand %vm4814, %vm5006
    %vm5071 = vmand %vm4815, %vm5007
    %vm5072 = vmand %vm4816, %vm5008
    %vm5073 = vmand %vm4817, %vm5009
    %vm5074 = vmand %vm4818, %vm5010
    %vm5075 = vmand %vm4819, %vm5011
    %vm5076 = vmand %vm4820, %vm5012
    %vm5077 = vmand %vm4821, %vm5013
    %vm5078 = vmand %vm4822, %vm5014
    %vm5079 = vmand %vm4823, %vm5015
    %vm5080 = vmand %vm4824, %vm5016
    %vm5081 = vmand %vm4825, %vm5017
    %vm5082 = vmand %vm4826, %vm5018
    %vm5083 = vmand %vm4827, %vm5019
    %vm5084 = vmand %vm4828, %vm5020
    %vm5085 = vmand %vm4829, %vm5021
    %vm5086 = vmand %vm4830, %vm5022
    %vm5087 = vmand %vm4831, %vm5023
    %vm5088 = vmand %vm4832, %vm5024
    %vm5089 = vmand %vm4833, %vm5025
    %vm5090 = vmand %vm4834, %vm5026
    %vm5091 = vmand %vm4835, %vm5027
    %vm5092 = vmand %vm4836, %vm5028
    %vm5093 = vmand %vm4837, %vm5029
    %vm5094 = vmand %vm4838, %vm5030
    %vm5095 = vmand %vm4839, %vm5031
    %vm5096 = vmand %vm4840, %vm5032
    %vm5097 = vmand %vm4841, %vm5033
    %vm5098 = vmand %vm4842, %vm5034
    %vm5099 = vmand %vm4843, %vm5035
    %vm5100 = vmand %vm4844, %vm5036
    %vm5101 = vmand %vm4845, %vm5037
    %vm5102 = vmand %vm4846, %vm5038
    %vm5103 = vmand %vm4847, %vm5039
    %vm5104 = vmand %vm4848, %vm5040
    %vm5105 = vmand %vm4849, %vm5041
    %vm5106 = vmand %vm4850, %vm5042
    %vm5107 = vmand %vm4851, %vm5043
    %vm5108 = vmand %vm4852, %vm5044
    %vm5109 = vmand %vm4853, %vm5045
    %vm5110 = vmand %vm4854, %vm5046
    %vm5111 = vmand %vm4855, %vm5047
    %vm5112 = vmand %vm4856, %vm5048
    %vm5113 = vmand %vm4857, %vm5049
    %vm5114 = vmand %vm4858, %vm5050
    %vm5115 = vmand %vm4859, %vm5051
    %vm5116 = vmand %vm4860, %vm5052
    %vm5117 = vmand %vm4861, %vm5053
    %vm5118 = vmand %vm4862, %vm5054
    %vm5119 = vmand %vm4863, %vm5055
    %vm5120 = vmand %vm4864, %vm5056
    %vm5121 = vmand %vm4865, %vm5057
    %vm5122 = vmand %vm4866, %vm5058
    %vm5123 = vmand %vm4867, %vm5059
    %vm5124 = vmand %vm4868, %vm5060
    %vm5125 = vmand %vm4869, %vm5061
    %vm5126 = vmand %vm4870, %vm5062
    %vm5127 = vmand %vm4871, %vm5063
    %vm5128 = vmand %vm4872, %vm5064
    %vm5129 = vmand %vm4873, %vm5065
    %vm5130 = vmand %vm4874, %vm5066
    %vm5131 = vmand %vm4875, %vm5067
    %vm5132 = vmand %vm4876, %vm5068
    %v5133 = vsel %vm5069, %v4621, -9e+15
    %v5134 = vsel %vm5070, %v4623, -9e+15
    %v5135 = vsel %vm5071, %v4625, -9e+15
    %v5136 = vsel %vm5072, %v4627, -9e+15
    %v5137 = vsel %vm5073, %v4631, -9e+15
    %v5138 = vsel %vm5074, %v4633, -9e+15
    %v5139 = vsel %vm5075, %v4635, -9e+15
    %v5140 = vsel %vm5076, %v4637, -9e+15
    %v5141 = vsel %vm5077, %v4641, -9e+15
    %v5142 = vsel %vm5078, %v4643, -9e+15
    %v5143 = vsel %vm5079, %v4645, -9e+15
    %v5144 = vsel %vm5080, %v4647, -9e+15
    %v5145 = vsel %vm5081, %v4651, -9e+15
    %v5146 = vsel %vm5082, %v4653, -9e+15
    %v5147 = vsel %vm5083, %v4655, -9e+15
    %v5148 = vsel %vm5084, %v4657, -9e+15
    %v5149 = vsel %vm5085, %v4661, -9e+15
    %v5150 = vsel %vm5086, %v4663, -9e+15
    %v5151 = vsel %vm5087, %v4665, -9e+15
    %v5152 = vsel %vm5088, %v4667, -9e+15
    %v5153 = vsel %vm5089, %v4671, -9e+15
    %v5154 = vsel %vm5090, %v4673, -9e+15
    %v5155 = vsel %vm5091, %v4675, -9e+15
    %v5156 = vsel %vm5092, %v4677, -9e+15
    %v5157 = vsel %vm5093, %v4681, -9e+15
    %v5158 = vsel %vm5094, %v4683, -9e+15
    %v5159 = vsel %vm5095, %v4685, -9e+15
    %v5160 = vsel %vm5096, %v4687, -9e+15
    %v5161 = vsel %vm5097, %v4691, -9e+15
    %v5162 = vsel %vm5098, %v4693, -9e+15
    %v5163 = vsel %vm5099, %v4695, -9e+15
    %v5164 = vsel %vm5100, %v4697, -9e+15
    %v5165 = vsel %vm5101, %v4701, -9e+15
    %v5166 = vsel %vm5102, %v4703, -9e+15
    %v5167 = vsel %vm5103, %v4705, -9e+15
    %v5168 = vsel %vm5104, %v4707, -9e+15
    %v5169 = vsel %vm5105, %v4711, -9e+15
    %v5170 = vsel %vm5106, %v4713, -9e+15
    %v5171 = vsel %vm5107, %v4715, -9e+15
    %v5172 = vsel %vm5108, %v4717, -9e+15
    %v5173 = vsel %vm5109, %v4721, -9e+15
    %v5174 = vsel %vm5110, %v4723, -9e+15
    %v5175 = vsel %vm5111, %v4725, -9e+15
    %v5176 = vsel %vm5112, %v4727, -9e+15
    %v5177 = vsel %vm5113, %v4731, -9e+15
    %v5178 = vsel %vm5114, %v4733, -9e+15
    %v5179 = vsel %vm5115, %v4735, -9e+15
    %v5180 = vsel %vm5116, %v4737, -9e+15
    %v5181 = vsel %vm5117, %v4741, -9e+15
    %v5182 = vsel %vm5118, %v4743, -9e+15
    %v5183 = vsel %vm5119, %v4745, -9e+15
    %v5184 = vsel %vm5120, %v4747, -9e+15
    %v5185 = vsel %vm5121, %v4751, -9e+15
    %v5186 = vsel %vm5122, %v4753, -9e+15
    %v5187 = vsel %vm5123, %v4755, -9e+15
    %v5188 = vsel %vm5124, %v4757, -9e+15
    %v5189 = vsel %vm5125, %v4761, -9e+15
    %v5190 = vsel %vm5126, %v4763, -9e+15
    %v5191 = vsel %vm5127, %v4765, -9e+15
    %v5192 = vsel %vm5128, %v4767, -9e+15
    %v5193 = vsel %vm5129, %v4771, -9e+15
    %v5194 = vsel %vm5130, %v4773, -9e+15
    %v5195 = vsel %vm5131, %v4775, -9e+15
    %v5196 = vsel %vm5132, %v4777, -9e+15
    %v5197 = vmax.f32 %v5133, %v5134
    %5198 = vmax.xlane.f32.xlu0 %v5197
    %v5199 = vpop.xlane.xlu0 %5198
    %v5200 = vmax.f32 %v5135, %v5136
    %5201 = vmax.xlane.f32.xlu0 %v5200
    %v5202 = vpop.xlane.xlu0 %5201
    %v5203 = vmax.f32 %v5137, %v5138
    %5204 = vmax.xlane.f32.xlu0 %v5203
    %v5205 = vpop.xlane.xlu0 %5204
    %v5206 = vmax.f32 %v5139, %v5140
    %5207 = vmax.xlane.f32.xlu0 %v5206
    %v5208 = vpop.xlane.xlu0 %5207
    %v5209 = vmax.f32 %v5141, %v5142
    %5210 = vmax.xlane.f32.xlu0 %v5209
    %v5211 = vpop.xlane.xlu0 %5210
    %v5212 = vmax.f32 %v5143, %v5144
    %5213 = vmax.xlane.f32.xlu0 %v5212
    %v5214 = vpop.xlane.xlu0 %5213
    %v5215 = vmax.f32 %v5145, %v5146
    %5216 = vmax.xlane.f32.xlu0 %v5215
    %v5217 = vpop.xlane.xlu0 %5216
    %v5218 = vmax.f32 %v5147, %v5148
    %5219 = vmax.xlane.f32.xlu0 %v5218
    %v5220 = vpop.xlane.xlu0 %5219
    %v5221 = vmax.f32 %v5149, %v5150
    %5222 = vmax.xlane.f32.xlu0 %v5221
    %v5223 = vpop.xlane.xlu0 %5222
    %v5224 = vmax.f32 %v5151, %v5152
    %5225 = vmax.xlane.f32.xlu0 %v5224
    %v5226 = vpop.xlane.xlu0 %5225
    %v5227 = vmax.f32 %v5153, %v5154
    %5228 = vmax.xlane.f32.xlu0 %v5227
    %v5229 = vpop.xlane.xlu0 %5228
    %v5230 = vmax.f32 %v5155, %v5156
    %5231 = vmax.xlane.f32.xlu0 %v5230
    %v5232 = vpop.xlane.xlu0 %5231
    %v5233 = vmax.f32 %v5157, %v5158
    %5234 = vmax.xlane.f32.xlu0 %v5233
    %v5235 = vpop.xlane.xlu0 %5234
    %v5236 = vmax.f32 %v5159, %v5160
    %5237 = vmax.xlane.f32.xlu0 %v5236
    %v5238 = vpop.xlane.xlu0 %5237
    %v5239 = vmax.f32 %v5161, %v5162
    %5240 = vmax.xlane.f32.xlu0 %v5239
    %v5241 = vpop.xlane.xlu0 %5240
    %v5242 = vmax.f32 %v5163, %v5164
    %5243 = vmax.xlane.f32.xlu0 %v5242
    %v5244 = vpop.xlane.xlu0 %5243
    %v5245 = vmax.f32 %v5165, %v5166
    %5246 = vmax.xlane.f32.xlu0 %v5245
    %v5247 = vpop.xlane.xlu0 %5246
    %v5248 = vmax.f32 %v5167, %v5168
    %5249 = vmax.xlane.f32.xlu0 %v5248
    %v5250 = vpop.xlane.xlu0 %5249
    %v5251 = vmax.f32 %v5169, %v5170
    %5252 = vmax.xlane.f32.xlu0 %v5251
    %v5253 = vpop.xlane.xlu0 %5252
    %v5254 = vmax.f32 %v5171, %v5172
    %5255 = vmax.xlane.f32.xlu0 %v5254
    %v5256 = vpop.xlane.xlu0 %5255
    %v5257 = vmax.f32 %v5173, %v5174
    %5258 = vmax.xlane.f32.xlu0 %v5257
    %v5259 = vpop.xlane.xlu0 %5258
    %v5260 = vmax.f32 %v5175, %v5176
    %5261 = vmax.xlane.f32.xlu0 %v5260
    %v5262 = vpop.xlane.xlu0 %5261
    %v5263 = vmax.f32 %v5177, %v5178
    %5264 = vmax.xlane.f32.xlu0 %v5263
    %v5265 = vpop.xlane.xlu0 %5264
    %v5266 = vmax.f32 %v5179, %v5180
    %5267 = vmax.xlane.f32.xlu0 %v5266
    %v5268 = vpop.xlane.xlu0 %5267
    %v5269 = vmax.f32 %v5181, %v5182
    %5270 = vmax.xlane.f32.xlu0 %v5269
    %v5271 = vpop.xlane.xlu0 %5270
    %v5272 = vmax.f32 %v5183, %v5184
    %5273 = vmax.xlane.f32.xlu0 %v5272
    %v5274 = vpop.xlane.xlu0 %5273
    %v5275 = vmax.f32 %v5185, %v5186
    %5276 = vmax.xlane.f32.xlu0 %v5275
    %v5277 = vpop.xlane.xlu0 %5276
    %v5278 = vmax.f32 %v5187, %v5188
    %5279 = vmax.xlane.f32.xlu0 %v5278
    %v5280 = vpop.xlane.xlu0 %5279
    %v5281 = vmax.f32 %v5189, %v5190
    %5282 = vmax.xlane.f32.xlu0 %v5281
    %v5283 = vpop.xlane.xlu0 %5282
    %v5284 = vmax.f32 %v5191, %v5192
    %5285 = vmax.xlane.f32.xlu0 %v5284
    %v5286 = vpop.xlane.xlu0 %5285
    %v5287 = vmax.f32 %v5193, %v5194
    %5288 = vmax.xlane.f32.xlu0 %v5287
    %v5289 = vpop.xlane.xlu0 %5288
    %v5290 = vmax.f32 %v5195, %v5196
    %5291 = vmax.xlane.f32.xlu0 %v5290
    %v5292 = vpop.xlane.xlu0 %5291
    %v5293 = vsub.f32 %v5133, %v5199
    %v5294 = vsub.f32 %v5134, %v5199
    %v5295 = vsub.f32 %v5135, %v5202
    %v5296 = vsub.f32 %v5136, %v5202
    %v5297 = vsub.f32 %v5137, %v5205
    %v5298 = vsub.f32 %v5138, %v5205
    %v5299 = vsub.f32 %v5139, %v5208
    %v5300 = vsub.f32 %v5140, %v5208
    %v5301 = vsub.f32 %v5141, %v5211
    %v5302 = vsub.f32 %v5142, %v5211
    %v5303 = vsub.f32 %v5143, %v5214
    %v5304 = vsub.f32 %v5144, %v5214
    %v5305 = vsub.f32 %v5145, %v5217
    %v5306 = vsub.f32 %v5146, %v5217
    %v5307 = vsub.f32 %v5147, %v5220
    %v5308 = vsub.f32 %v5148, %v5220
    %v5309 = vsub.f32 %v5149, %v5223
    %v5310 = vsub.f32 %v5150, %v5223
    %v5311 = vsub.f32 %v5151, %v5226
    %v5312 = vsub.f32 %v5152, %v5226
    %v5313 = vsub.f32 %v5153, %v5229
    %v5314 = vsub.f32 %v5154, %v5229
    %v5315 = vsub.f32 %v5155, %v5232
    %v5316 = vsub.f32 %v5156, %v5232
    %v5317 = vsub.f32 %v5157, %v5235
    %v5318 = vsub.f32 %v5158, %v5235
    %v5319 = vsub.f32 %v5159, %v5238
    %v5320 = vsub.f32 %v5160, %v5238
    %v5321 = vsub.f32 %v5161, %v5241
    %v5322 = vsub.f32 %v5162, %v5241
    %v5323 = vsub.f32 %v5163, %v5244
    %v5324 = vsub.f32 %v5164, %v5244
    %v5325 = vsub.f32 %v5165, %v5247
    %v5326 = vsub.f32 %v5166, %v5247
    %v5327 = vsub.f32 %v5167, %v5250
    %v5328 = vsub.f32 %v5168, %v5250
    %v5329 = vsub.f32 %v5169, %v5253
    %v5330 = vsub.f32 %v5170, %v5253
    %v5331 = vsub.f32 %v5171, %v5256
    %v5332 = vsub.f32 %v5172, %v5256
    %v5333 = vsub.f32 %v5173, %v5259
    %v5334 = vsub.f32 %v5174, %v5259
    %v5335 = vsub.f32 %v5175, %v5262
    %v5336 = vsub.f32 %v5176, %v5262
    %v5337 = vsub.f32 %v5177, %v5265
    %v5338 = vsub.f32 %v5178, %v5265
    %v5339 = vsub.f32 %v5179, %v5268
    %v5340 = vsub.f32 %v5180, %v5268
    %v5341 = vsub.f32 %v5181, %v5271
    %v5342 = vsub.f32 %v5182, %v5271
    %v5343 = vsub.f32 %v5183, %v5274
    %v5344 = vsub.f32 %v5184, %v5274
    %v5345 = vsub.f32 %v5185, %v5277
    %v5346 = vsub.f32 %v5186, %v5277
    %v5347 = vsub.f32 %v5187, %v5280
    %v5348 = vsub.f32 %v5188, %v5280
    %v5349 = vsub.f32 %v5189, %v5283
    %v5350 = vsub.f32 %v5190, %v5283
    %v5351 = vsub.f32 %v5191, %v5286
    %v5352 = vsub.f32 %v5192, %v5286
    %v5353 = vsub.f32 %v5193, %v5289
    %v5354 = vsub.f32 %v5194, %v5289
    %v5355 = vsub.f32 %v5195, %v5292
    %v5356 = vsub.f32 %v5196, %v5292
    %v5357 = vmul.f32 %v5293, 1.442695
    %v5358 = vpow.pop %v5357
    %v5359 = vmul.f32 %v5294, 1.442695
    %v5360 = vpow.pop %v5359
    %v5361 = vmul.f32 %v5295, 1.442695
    %v5362 = vpow.pop %v5361
    %v5363 = vmul.f32 %v5296, 1.442695
    %v5364 = vpow.pop %v5363
    %v5365 = vmul.f32 %v5297, 1.442695
    %v5366 = vpow.pop %v5365
    %v5367 = vmul.f32 %v5298, 1.442695
    %v5368 = vpow.pop %v5367
    %v5369 = vmul.f32 %v5299, 1.442695
    %v5370 = vpow.pop %v5369
    %v5371 = vmul.f32 %v5300, 1.442695
    %v5372 = vpow.pop %v5371
    %v5373 = vmul.f32 %v5301, 1.442695
    %v5374 = vpow.pop %v5373
    %v5375 = vmul.f32 %v5302, 1.442695
    %v5376 = vpow.pop %v5375
    %v5377 = vmul.f32 %v5303, 1.442695
    %v5378 = vpow.pop %v5377
    %v5379 = vmul.f32 %v5304, 1.442695
    %v5380 = vpow.pop %v5379
    %v5381 = vmul.f32 %v5305, 1.442695
    %v5382 = vpow.pop %v5381
    %v5383 = vmul.f32 %v5306, 1.442695
    %v5384 = vpow.pop %v5383
    %v5385 = vmul.f32 %v5307, 1.442695
    %v5386 = vpow.pop %v5385
    %v5387 = vmul.f32 %v5308, 1.442695
    %v5388 = vpow.pop %v5387
    %v5389 = vmul.f32 %v5309, 1.442695
    %v5390 = vpow.pop %v5389
    %v5391 = vmul.f32 %v5310, 1.442695
    %v5392 = vpow.pop %v5391
    %v5393 = vmul.f32 %v5311, 1.442695
    %v5394 = vpow.pop %v5393
    %v5395 = vmul.f32 %v5312, 1.442695
    %v5396 = vpow.pop %v5395
    %v5397 = vmul.f32 %v5313, 1.442695
    %v5398 = vpow.pop %v5397
    %v5399 = vmul.f32 %v5314, 1.442695
    %v5400 = vpow.pop %v5399
    %v5401 = vmul.f32 %v5315, 1.442695
    %v5402 = vpow.pop %v5401
    %v5403 = vmul.f32 %v5316, 1.442695
    %v5404 = vpow.pop %v5403
    %v5405 = vmul.f32 %v5317, 1.442695
    %v5406 = vpow.pop %v5405
    %v5407 = vmul.f32 %v5318, 1.442695
    %v5408 = vpow.pop %v5407
    %v5409 = vmul.f32 %v5319, 1.442695
    %v5410 = vpow.pop %v5409
    %v5411 = vmul.f32 %v5320, 1.442695
    %v5412 = vpow.pop %v5411
    %v5413 = vmul.f32 %v5321, 1.442695
    %v5414 = vpow.pop %v5413
    %v5415 = vmul.f32 %v5322, 1.442695
    %v5416 = vpow.pop %v5415
    %v5417 = vmul.f32 %v5323, 1.442695
    %v5418 = vpow.pop %v5417
    %v5419 = vmul.f32 %v5324, 1.442695
    %v5420 = vpow.pop %v5419
    %v5421 = vmul.f32 %v5325, 1.442695
    %v5422 = vpow.pop %v5421
    %v5423 = vmul.f32 %v5326, 1.442695
    %v5424 = vpow.pop %v5423
    %v5425 = vmul.f32 %v5327, 1.442695
    %v5426 = vpow.pop %v5425
    %v5427 = vmul.f32 %v5328, 1.442695
    %v5428 = vpow.pop %v5427
    %v5429 = vmul.f32 %v5329, 1.442695
    %v5430 = vpow.pop %v5429
    %v5431 = vmul.f32 %v5330, 1.442695
    %v5432 = vpow.pop %v5431
    %v5433 = vmul.f32 %v5331, 1.442695
    %v5434 = vpow.pop %v5433
    %v5435 = vmul.f32 %v5332, 1.442695
    %v5436 = vpow.pop %v5435
    %v5437 = vmul.f32 %v5333, 1.442695
    %v5438 = vpow.pop %v5437
    %v5439 = vmul.f32 %v5334, 1.442695
    %v5440 = vpow.pop %v5439
    %v5441 = vmul.f32 %v5335, 1.442695
    %v5442 = vpow.pop %v5441
    %v5443 = vmul.f32 %v5336, 1.442695
    %v5444 = vpow.pop %v5443
    %v5445 = vmul.f32 %v5337, 1.442695
    %v5446 = vpow.pop %v5445
    %v5447 = vmul.f32 %v5338, 1.442695
    %v5448 = vpow.pop %v5447
    %v5449 = vmul.f32 %v5339, 1.442695
    %v5450 = vpow.pop %v5449
    %v5451 = vmul.f32 %v5340, 1.442695
    %v5452 = vpow.pop %v5451
    %v5453 = vmul.f32 %v5341, 1.442695
    %v5454 = vpow.pop %v5453
    %v5455 = vmul.f32 %v5342, 1.442695
    %v5456 = vpow.pop %v5455
    %v5457 = vmul.f32 %v5343, 1.442695
    %v5458 = vpow.pop %v5457
    %v5459 = vmul.f32 %v5344, 1.442695
    %v5460 = vpow.pop %v5459
    %v5461 = vmul.f32 %v5345, 1.442695
    %v5462 = vpow.pop %v5461
    %v5463 = vmul.f32 %v5346, 1.442695
    %v5464 = vpow.pop %v5463
    %v5465 = vmul.f32 %v5347, 1.442695
    %v5466 = vpow.pop %v5465
    %v5467 = vmul.f32 %v5348, 1.442695
    %v5468 = vpow.pop %v5467
    %v5469 = vmul.f32 %v5349, 1.442695
    %v5470 = vpow.pop %v5469
    %v5471 = vmul.f32 %v5350, 1.442695
    %v5472 = vpow.pop %v5471
    %v5473 = vmul.f32 %v5351, 1.442695
    %v5474 = vpow.pop %v5473
    %v5475 = vmul.f32 %v5352, 1.442695
    %v5476 = vpow.pop %v5475
    %v5477 = vmul.f32 %v5353, 1.442695
    %v5478 = vpow.pop %v5477
    %v5479 = vmul.f32 %v5354, 1.442695
    %v5480 = vpow.pop %v5479
    %v5481 = vmul.f32 %v5355, 1.442695
    %v5482 = vpow.pop %v5481
    %v5483 = vmul.f32 %v5356, 1.442695
    %v5484 = vpow.pop %v5483
    %v5485 = vadd.f32 %v5358, %v5360
    %5486 = vadd.xlane.f32.xlu0 %v5485
    %v5487 = vpop.xlane.xlu0 %5486
    %v5488 = vadd.f32 %v5362, %v5364
    %5489 = vadd.xlane.f32.xlu0 %v5488
    %v5490 = vpop.xlane.xlu0 %5489
    %v5491 = vadd.f32 %v5366, %v5368
    %5492 = vadd.xlane.f32.xlu0 %v5491
    %v5493 = vpop.xlane.xlu0 %5492
    %v5494 = vadd.f32 %v5370, %v5372
    %5495 = vadd.xlane.f32.xlu0 %v5494
    %v5496 = vpop.xlane.xlu0 %5495
    %v5497 = vadd.f32 %v5374, %v5376
    %5498 = vadd.xlane.f32.xlu0 %v5497
    %v5499 = vpop.xlane.xlu0 %5498
    %v5500 = vadd.f32 %v5378, %v5380
    %5501 = vadd.xlane.f32.xlu0 %v5500
    %v5502 = vpop.xlane.xlu0 %5501
    %v5503 = vadd.f32 %v5382, %v5384
    %5504 = vadd.xlane.f32.xlu0 %v5503
    %v5505 = vpop.xlane.xlu0 %5504
    %v5506 = vadd.f32 %v5386, %v5388
    %5507 = vadd.xlane.f32.xlu0 %v5506
    %v5508 = vpop.xlane.xlu0 %5507
    %v5509 = vadd.f32 %v5390, %v5392
    %5510 = vadd.xlane.f32.xlu0 %v5509
    %v5511 = vpop.xlane.xlu0 %5510
    %v5512 = vadd.f32 %v5394, %v5396
    %5513 = vadd.xlane.f32.xlu0 %v5512
    %v5514 = vpop.xlane.xlu0 %5513
    %v5515 = vadd.f32 %v5398, %v5400
    %5516 = vadd.xlane.f32.xlu0 %v5515
    %v5517 = vpop.xlane.xlu0 %5516
    %v5518 = vadd.f32 %v5402, %v5404
    %5519 = vadd.xlane.f32.xlu0 %v5518
    %v5520 = vpop.xlane.xlu0 %5519
    %v5521 = vadd.f32 %v5406, %v5408
    %5522 = vadd.xlane.f32.xlu0 %v5521
    %v5523 = vpop.xlane.xlu0 %5522
    %v5524 = vadd.f32 %v5410, %v5412
    %5525 = vadd.xlane.f32.xlu0 %v5524
    %v5526 = vpop.xlane.xlu0 %5525
    %v5527 = vadd.f32 %v5414, %v5416
    %5528 = vadd.xlane.f32.xlu0 %v5527
    %v5529 = vpop.xlane.xlu0 %5528
    %v5530 = vadd.f32 %v5418, %v5420
    %5531 = vadd.xlane.f32.xlu0 %v5530
    %v5532 = vpop.xlane.xlu0 %5531
    %v5533 = vadd.f32 %v5422, %v5424
    %5534 = vadd.xlane.f32.xlu0 %v5533
    %v5535 = vpop.xlane.xlu0 %5534
    %v5536 = vadd.f32 %v5426, %v5428
    %5537 = vadd.xlane.f32.xlu0 %v5536
    %v5538 = vpop.xlane.xlu0 %5537
    %v5539 = vadd.f32 %v5430, %v5432
    %5540 = vadd.xlane.f32.xlu0 %v5539
    %v5541 = vpop.xlane.xlu0 %5540
    %v5542 = vadd.f32 %v5434, %v5436
    %5543 = vadd.xlane.f32.xlu0 %v5542
    %v5544 = vpop.xlane.xlu0 %5543
    %v5545 = vadd.f32 %v5438, %v5440
    %5546 = vadd.xlane.f32.xlu0 %v5545
    %v5547 = vpop.xlane.xlu0 %5546
    %v5548 = vadd.f32 %v5442, %v5444
    %5549 = vadd.xlane.f32.xlu0 %v5548
    %v5550 = vpop.xlane.xlu0 %5549
    %v5551 = vadd.f32 %v5446, %v5448
    %5552 = vadd.xlane.f32.xlu0 %v5551
    %v5553 = vpop.xlane.xlu0 %5552
    %v5554 = vadd.f32 %v5450, %v5452
    %5555 = vadd.xlane.f32.xlu0 %v5554
    %v5556 = vpop.xlane.xlu0 %5555
    %v5557 = vadd.f32 %v5454, %v5456
    %5558 = vadd.xlane.f32.xlu0 %v5557
    %v5559 = vpop.xlane.xlu0 %5558
    %v5560 = vadd.f32 %v5458, %v5460
    %5561 = vadd.xlane.f32.xlu0 %v5560
    %v5562 = vpop.xlane.xlu0 %5561
    %v5563 = vadd.f32 %v5462, %v5464
    %5564 = vadd.xlane.f32.xlu0 %v5563
    %v5565 = vpop.xlane.xlu0 %5564
    %v5566 = vadd.f32 %v5466, %v5468
    %5567 = vadd.xlane.f32.xlu0 %v5566
    %v5568 = vpop.xlane.xlu0 %5567
    %v5569 = vadd.f32 %v5470, %v5472
    %5570 = vadd.xlane.f32.xlu0 %v5569
    %v5571 = vpop.xlane.xlu0 %5570
    %v5572 = vadd.f32 %v5474, %v5476
    %5573 = vadd.xlane.f32.xlu0 %v5572
    %v5574 = vpop.xlane.xlu0 %5573
    %v5575 = vadd.f32 %v5478, %v5480
    %5576 = vadd.xlane.f32.xlu0 %v5575
    %v5577 = vpop.xlane.xlu0 %5576
    %v5578 = vadd.f32 %v5482, %v5484
    %5579 = vadd.xlane.f32.xlu0 %v5578
    %v5580 = vpop.xlane.xlu0 %5579
    %v5581 = vpack.c.bf16 %v5362, %v5358
    %v5582 = vpack.c.bf16 %v5364, %v5360
    %v5583 = vpack.c.bf16 %v5370, %v5366
    %v5584 = vpack.c.bf16 %v5372, %v5368
    %v5585 = vpack.c.bf16 %v5378, %v5374
    %v5586 = vpack.c.bf16 %v5380, %v5376
    %v5587 = vpack.c.bf16 %v5386, %v5382
    %v5588 = vpack.c.bf16 %v5388, %v5384
    %v5589 = vpack.c.bf16 %v5394, %v5390
    %v5590 = vpack.c.bf16 %v5396, %v5392
    %v5591 = vpack.c.bf16 %v5402, %v5398
    %v5592 = vpack.c.bf16 %v5404, %v5400
    %v5593 = vpack.c.bf16 %v5410, %v5406
    %v5594 = vpack.c.bf16 %v5412, %v5408
    %v5595 = vpack.c.bf16 %v5418, %v5414
    %v5596 = vpack.c.bf16 %v5420, %v5416
    %v5597 = vpack.c.bf16 %v5426, %v5422
    %v5598 = vpack.c.bf16 %v5428, %v5424
    %v5599 = vpack.c.bf16 %v5434, %v5430
    %v5600 = vpack.c.bf16 %v5436, %v5432
    %v5601 = vpack.c.bf16 %v5442, %v5438
    %v5602 = vpack.c.bf16 %v5444, %v5440
    %v5603 = vpack.c.bf16 %v5450, %v5446
    %v5604 = vpack.c.bf16 %v5452, %v5448
    %v5605 = vpack.c.bf16 %v5458, %v5454
    %v5606 = vpack.c.bf16 %v5460, %v5456
    %v5607 = vpack.c.bf16 %v5466, %v5462
    %v5608 = vpack.c.bf16 %v5468, %v5464
    %v5609 = vpack.c.bf16 %v5474, %v5470
    %v5610 = vpack.c.bf16 %v5476, %v5472
    %v5611 = vpack.c.bf16 %v5482, %v5478
    %v5612 = vpack.c.bf16 %v5484, %v5480
    %v5613 = vpack.c.bf16 %v4335, %v4332
    %v5614 = vpack.c.bf16 %v4343, %v4340
    %v5615 = vpack.c.bf16 %v4351, %v4348
    %v5616 = vpack.c.bf16 %v4359, %v4356
    %v5617 = vpack.c.bf16 %v4367, %v4364
    %v5618 = vpack.c.bf16 %v4375, %v4372
    %v5619 = vpack.c.bf16 %v4383, %v4380
    %v5620 = vpack.c.bf16 %v4391, %v4388
    %v5621 = vpack.c.bf16 %v4399, %v4396
    %v5622 = vpack.c.bf16 %v4407, %v4404
    %v5623 = vpack.c.bf16 %v4415, %v4412
    %v5624 = vpack.c.bf16 %v4423, %v4420
    %v5625 = vpack.c.bf16 %v4431, %v4428
    %v5626 = vpack.c.bf16 %v4439, %v4436
    %v5627 = vpack.c.bf16 %v4447, %v4444
    %v5628 = vpack.c.bf16 %v4455, %v4452
    %5629 = vmatprep.subr.bf16.mxu0 0
    %5630 = vmatpush1.bf16.msra.mxu0 %v5613
    %5631 = vmatprep.subr.bf16.mxu0 0
    %5632 = vmatpush1.bf16.msra.mxu0 %v5614
    %5633 = vmatprep.subr.bf16.mxu0 0
    %5634 = vmatpush1.bf16.msra.mxu0 %v5615
    %5635 = vmatprep.subr.bf16.mxu0 0
    %5636 = vmatpush1.bf16.msra.mxu0 %v5616
    %5637 = vmatprep.subr.bf16.mxu0 0
    %5638 = vmatpush1.bf16.msra.mxu0 %v5617
    %5639 = vmatprep.subr.bf16.mxu0 0
    %5640 = vmatpush1.bf16.msra.mxu0 %v5618
    %5641 = vmatprep.subr.bf16.mxu0 0
    %5642 = vmatpush1.bf16.msra.mxu0 %v5619
    %5643 = vmatprep.subr.bf16.mxu0 0
    %5644 = vmatpush1.bf16.msra.mxu0 %v5620
    %5645 = vmatprep.subr.bf16.mxu0 0
    %5646 = vmatpush1.bf16.msra.mxu0 %v5621
    %5647 = vmatprep.subr.bf16.mxu0 0
    %5648 = vmatpush1.bf16.msra.mxu0 %v5622
    %5649 = vmatprep.subr.bf16.mxu0 0
    %5650 = vmatpush1.bf16.msra.mxu0 %v5623
    %5651 = vmatprep.subr.bf16.mxu0 0
    %5652 = vmatpush1.bf16.msra.mxu0 %v5624
    %5653 = vmatprep.subr.bf16.mxu0 0
    %5654 = vmatpush1.bf16.msra.mxu0 %v5625
    %5655 = vmatprep.subr.bf16.mxu0 0
    %5656 = vmatpush1.bf16.msra.mxu0 %v5626
    %5657 = vmatprep.subr.bf16.mxu0 0
    %5658 = vmatpush1.bf16.msra.mxu0 %v5627
    %5659 = vmatprep.subr.bf16.mxu0 0
    %5660 = vmatpush1.bf16.msra.mxu0 %v5628
    %5661 = vmatprep.mubr.bf16.mxu0 %v5582
    %5662 = vmatmul.mubr.bf16.gmra.mrb[0].mxu0 %v5581
    %v5663 = vpop.f32.mrb[0].mxu0
    %v5664 = vadd.f32 0.0, %v5663
    %v5665 = vpop.f32.mrb[0].mxu0
    %v5666 = vpop.f32.mrb[0].mxu0
    %v5667 = vadd.f32 0.0, %v5666
    %v5668 = vpop.f32.mrb[0].mxu0
    %5669 = vmatprep.mubr.bf16.mxu0 %v5584
    %5670 = vmatmul.mubr.bf16.gmra.mrb[0].mxu0 %v5583
    %v5671 = vpop.f32.mrb[0].mxu0
    %v5672 = vadd.f32 0.0, %v5671
    %v5673 = vpop.f32.mrb[0].mxu0
    %v5674 = vpop.f32.mrb[0].mxu0
    %v5675 = vadd.f32 0.0, %v5674
    %v5676 = vpop.f32.mrb[0].mxu0
    %5677 = vmatprep.mubr.bf16.mxu0 %v5586
    %5678 = vmatmul.mubr.bf16.gmra.mrb[0].mxu0 %v5585
    %v5679 = vpop.f32.mrb[0].mxu0
    %v5680 = vadd.f32 0.0, %v5679
    %v5681 = vpop.f32.mrb[0].mxu0
    %v5682 = vpop.f32.mrb[0].mxu0
    %v5683 = vadd.f32 0.0, %v5682
    %v5684 = vpop.f32.mrb[0].mxu0
    %5685 = vmatprep.mubr.bf16.mxu0 %v5588
    %5686 = vmatmul.mubr.bf16.gmra.mrb[0].mxu0 %v5587
    %v5687 = vpop.f32.mrb[0].mxu0
    %v5688 = vadd.f32 0.0, %v5687
    %v5689 = vpop.f32.mrb[0].mxu0
    %v5690 = vpop.f32.mrb[0].mxu0
    %v5691 = vadd.f32 0.0, %v5690
    %v5692 = vpop.f32.mrb[0].mxu0
    %5693 = vmatprep.mubr.bf16.mxu0 %v5590
    %5694 = vmatmul.mubr.bf16.gmra.mrb[0].mxu0 %v5589
    %v5695 = vpop.f32.mrb[0].mxu0
    %v5696 = vadd.f32 0.0, %v5695
    %v5697 = vpop.f32.mrb[0].mxu0
    %v5698 = vpop.f32.mrb[0].mxu0
    %v5699 = vadd.f32 0.0, %v5698
    %v5700 = vpop.f32.mrb[0].mxu0
    %5701 = vmatprep.mubr.bf16.mxu0 %v5592
    %5702 = vmatmul.mubr.bf16.gmra.mrb[0].mxu0 %v5591
    %v5703 = vpop.f32.mrb[0].mxu0
    %v5704 = vadd.f32 0.0, %v5703
    %v5705 = vpop.f32.mrb[0].mxu0
    %v5706 = vpop.f32.mrb[0].mxu0
    %v5707 = vadd.f32 0.0, %v5706
    %v5708 = vpop.f32.mrb[0].mxu0
    %5709 = vmatprep.mubr.bf16.mxu0 %v5594
    %5710 = vmatmul.mubr.bf16.gmra.mrb[0].mxu0 %v5593
    %v5711 = vpop.f32.mrb[0].mxu0
    %v5712 = vadd.f32 0.0, %v5711
    %v5713 = vpop.f32.mrb[0].mxu0
    %v5714 = vpop.f32.mrb[0].mxu0
    %v5715 = vadd.f32 0.0, %v5714
    %v5716 = vpop.f32.mrb[0].mxu0
    %5717 = vmatprep.mubr.bf16.mxu0 %v5596
    %5718 = vmatmul.mubr.bf16.gmra.mrb[0].mxu0 %v5595
    %v5719 = vpop.f32.mrb[0].mxu0
    %v5720 = vadd.f32 0.0, %v5719
    %v5721 = vpop.f32.mrb[0].mxu0
    %v5722 = vpop.f32.mrb[0].mxu0
    %v5723 = vadd.f32 0.0, %v5722
    %v5724 = vpop.f32.mrb[0].mxu0
    %5725 = vmatprep.mubr.bf16.mxu0 %v5598
    %5726 = vmatmul.mubr.bf16.gmra.mrb[0].mxu0 %v5597
    %v5727 = vpop.f32.mrb[0].mxu0
    %v5728 = vadd.f32 0.0, %v5727
    %v5729 = vpop.f32.mrb[0].mxu0
    %v5730 = vpop.f32.mrb[0].mxu0
    %v5731 = vadd.f32 0.0, %v5730
    %v5732 = vpop.f32.mrb[0].mxu0
    %5733 = vmatprep.mubr.bf16.mxu0 %v5600
    %5734 = vmatmul.mubr.bf16.gmra.mrb[0].mxu0 %v5599
    %v5735 = vpop.f32.mrb[0].mxu0
    %v5736 = vadd.f32 0.0, %v5735
    %v5737 = vpop.f32.mrb[0].mxu0
    %v5738 = vpop.f32.mrb[0].mxu0
    %v5739 = vadd.f32 0.0, %v5738
    %v5740 = vpop.f32.mrb[0].mxu0
    %5741 = vmatprep.mubr.bf16.mxu0 %v5602
    %5742 = vmatmul.mubr.bf16.gmra.mrb[0].mxu0 %v5601
    %v5743 = vpop.f32.mrb[0].mxu0
    %v5744 = vadd.f32 0.0, %v5743
    %v5745 = vpop.f32.mrb[0].mxu0
    %v5746 = vpop.f32.mrb[0].mxu0
    %v5747 = vadd.f32 0.0, %v5746
    %v5748 = vpop.f32.mrb[0].mxu0
    %5749 = vmatprep.mubr.bf16.mxu0 %v5604
    %5750 = vmatmul.mubr.bf16.gmra.mrb[0].mxu0 %v5603
    %v5751 = vpop.f32.mrb[0].mxu0
    %v5752 = vadd.f32 0.0, %v5751
    %v5753 = vpop.f32.mrb[0].mxu0
    %v5754 = vpop.f32.mrb[0].mxu0
    %v5755 = vadd.f32 0.0, %v5754
    %v5756 = vpop.f32.mrb[0].mxu0
    %5757 = vmatprep.mubr.bf16.mxu0 %v5606
    %5758 = vmatmul.mubr.bf16.gmra.mrb[0].mxu0 %v5605
    %v5759 = vpop.f32.mrb[0].mxu0
    %v5760 = vadd.f32 0.0, %v5759
    %v5761 = vpop.f32.mrb[0].mxu0
    %v5762 = vpop.f32.mrb[0].mxu0
    %v5763 = vadd.f32 0.0, %v5762
    %v5764 = vpop.f32.mrb[0].mxu0
    %5765 = vmatprep.mubr.bf16.mxu0 %v5608
    %5766 = vmatmul.mubr.bf16.gmra.mrb[0].mxu0 %v5607
    %v5767 = vpop.f32.mrb[0].mxu0
    %v5768 = vadd.f32 0.0, %v5767
    %v5769 = vpop.f32.mrb[0].mxu0
    %v5770 = vpop.f32.mrb[0].mxu0
    %v5771 = vadd.f32 0.0, %v5770
    %v5772 = vpop.f32.mrb[0].mxu0
    %5773 = vmatprep.mubr.bf16.mxu0 %v5610
    %5774 = vmatmul.mubr.bf16.gmra.mrb[0].mxu0 %v5609
    %v5775 = vpop.f32.mrb[0].mxu0
    %v5776 = vadd.f32 0.0, %v5775
    %v5777 = vpop.f32.mrb[0].mxu0
    %v5778 = vpop.f32.mrb[0].mxu0
    %v5779 = vadd.f32 0.0, %v5778
    %v5780 = vpop.f32.mrb[0].mxu0
    %5781 = vmatprep.mubr.bf16.mxu0 %v5612
    %5782 = vmatmul.mubr.bf16.gmra.mrb[0].mxu0 %v5611
    %v5783 = vpop.f32.mrb[0].mxu0
    %v5784 = vadd.f32 0.0, %v5783
    %v5785 = vpop.f32.mrb[0].mxu0
    %v5786 = vpop.f32.mrb[0].mxu0
    %v5787 = vadd.f32 0.0, %v5786
    %v5788 = vpop.f32.mrb[0].mxu0
    %5789 = vdwg.mxu0
    %v5790 = vrcp.pop %v5487
    %v5791 = vrcp.pop %v5490
    %v5792 = vrcp.pop %v5493
    %v5793 = vrcp.pop %v5496
    %v5794 = vrcp.pop %v5499
    %v5795 = vrcp.pop %v5502
    %v5796 = vrcp.pop %v5505
    %v5797 = vrcp.pop %v5508
    %v5798 = vrcp.pop %v5511
    %v5799 = vrcp.pop %v5514
    %v5800 = vrcp.pop %v5517
    %v5801 = vrcp.pop %v5520
    %v5802 = vrcp.pop %v5523
    %v5803 = vrcp.pop %v5526
    %v5804 = vrcp.pop %v5529
    %v5805 = vrcp.pop %v5532
    %v5806 = vrcp.pop %v5535
    %v5807 = vrcp.pop %v5538
    %v5808 = vrcp.pop %v5541
    %v5809 = vrcp.pop %v5544
    %v5810 = vrcp.pop %v5547
    %v5811 = vrcp.pop %v5550
    %v5812 = vrcp.pop %v5553
    %v5813 = vrcp.pop %v5556
    %v5814 = vrcp.pop %v5559
    %v5815 = vrcp.pop %v5562
    %v5816 = vrcp.pop %v5565
    %v5817 = vrcp.pop %v5568
    %v5818 = vrcp.pop %v5571
    %v5819 = vrcp.pop %v5574
    %v5820 = vrcp.pop %v5577
    %v5821 = vrcp.pop %v5580
    %v5822 = vmul.f32 %v5664, %v5790
    %v5823 = vmul.f32 %v5667, %v5791
    %v5824 = vmul.f32 %v5672, %v5792
    %v5825 = vmul.f32 %v5675, %v5793
    %v5826 = vmul.f32 %v5680, %v5794
    %v5827 = vmul.f32 %v5683, %v5795
    %v5828 = vmul.f32 %v5688, %v5796
    %v5829 = vmul.f32 %v5691, %v5797
    %v5830 = vmul.f32 %v5696, %v5798
    %v5831 = vmul.f32 %v5699, %v5799
    %v5832 = vmul.f32 %v5704, %v5800
    %v5833 = vmul.f32 %v5707, %v5801
    %v5834 = vmul.f32 %v5712, %v5802
    %v5835 = vmul.f32 %v5715, %v5803
    %v5836 = vmul.f32 %v5720, %v5804
    %v5837 = vmul.f32 %v5723, %v5805
    %v5838 = vmul.f32 %v5728, %v5806
    %v5839 = vmul.f32 %v5731, %v5807
    %v5840 = vmul.f32 %v5736, %v5808
    %v5841 = vmul.f32 %v5739, %v5809
    %v5842 = vmul.f32 %v5744, %v5810
    %v5843 = vmul.f32 %v5747, %v5811
    %v5844 = vmul.f32 %v5752, %v5812
    %v5845 = vmul.f32 %v5755, %v5813
    %v5846 = vmul.f32 %v5760, %v5814
    %v5847 = vmul.f32 %v5763, %v5815
    %v5848 = vmul.f32 %v5768, %v5816
    %v5849 = vmul.f32 %v5771, %v5817
    %v5850 = vmul.f32 %v5776, %v5818
    %v5851 = vmul.f32 %v5779, %v5819
    %v5852 = vmul.f32 %v5784, %v5820
    %v5853 = vmul.f32 %v5787, %v5821
    %v5854 = vpack.c.bf16 %v5823, %v5822
    %v5855 = vpack.c.bf16 %v5825, %v5824
    %v5856 = vpack.c.bf16 %v5827, %v5826
    %v5857 = vpack.c.bf16 %v5829, %v5828
    %v5858 = vpack.c.bf16 %v5831, %v5830
    %v5859 = vpack.c.bf16 %v5833, %v5832
    %v5860 = vpack.c.bf16 %v5835, %v5834
    %v5861 = vpack.c.bf16 %v5837, %v5836
    %v5862 = vpack.c.bf16 %v5839, %v5838
    %v5863 = vpack.c.bf16 %v5841, %v5840
    %v5864 = vpack.c.bf16 %v5843, %v5842
    %v5865 = vpack.c.bf16 %v5845, %v5844
    %v5866 = vpack.c.bf16 %v5847, %v5846
    %v5867 = vpack.c.bf16 %v5849, %v5848
    %v5868 = vpack.c.bf16 %v5851, %v5850
    %v5869 = vpack.c.bf16 %v5853, %v5852
    %v5870 = vlaneseq
    %v5871 = vshrl.u32 %v5870, 7
    %v5872 = vsub.s32 0, %v5871
    %v5873 = vrot.slane %v3302, %v5872
    %5874 = vmatprep.subr.bf16.mxu0 0
    %5875 = vmatpush1.bf16.msra.mxu0 %v5854
    %5876 = vmatprep.subr.bf16.mxu0 0
    %5877 = vmatpush1.bf16.msra.mxu0 %v5855
    %5878 = vmatprep.subr.bf16.mxu0 0
    %5879 = vmatpush1.bf16.msra.mxu0 %v5856
    %5880 = vmatprep.subr.bf16.mxu0 0
    %5881 = vmatpush1.bf16.msra.mxu0 %v5857
    %5882 = vmatprep.subr.bf16.mxu0 0
    %5883 = vmatpush1.bf16.msra.mxu0 %v5858
    %5884 = vmatprep.subr.bf16.mxu0 0
    %5885 = vmatpush1.bf16.msra.mxu0 %v5859
    %5886 = vmatprep.subr.bf16.mxu0 0
    %5887 = vmatpush1.bf16.msra.mxu0 %v5860
    %5888 = vmatprep.subr.bf16.mxu0 0
    %5889 = vmatpush1.bf16.msra.mxu0 %v5861
    %5890 = vmatprep.subr.bf16.mxu0 0
    %5891 = vmatpush1.bf16.msra.mxu0 %v5862
    %5892 = vmatprep.subr.bf16.mxu0 0
    %5893 = vmatpush1.bf16.msra.mxu0 %v5863
    %5894 = vmatprep.subr.bf16.mxu0 0
    %5895 = vmatpush1.bf16.msra.mxu0 %v5864
    %5896 = vmatprep.subr.bf16.mxu0 0
    %5897 = vmatpush1.bf16.msra.mxu0 %v5865
    %5898 = vmatprep.subr.bf16.mxu0 0
    %5899 = vmatpush1.bf16.msra.mxu0 %v5866
    %5900 = vmatprep.subr.bf16.mxu0 0
    %5901 = vmatpush1.bf16.msra.mxu0 %v5867
    %5902 = vmatprep.subr.bf16.mxu0 0
    %5903 = vmatpush1.bf16.msra.mxu0 %v5868
    %5904 = vmatprep.subr.bf16.mxu0 0
    %5905 = vmatpush1.bf16.msra.mxu0 %v5869
    %5906 = vmatprep.mubr.bf16.mxu0 %v2990
    %5907 = vmatmul.mubr.bf16.gmra.mrb[0].mxu0 %v2989
    %v5908 = vpop.f32.mrb[0].mxu0
    %v5909 = vadd.f32 %v5873, %v5908
    %v5910 = vpop.f32.mrb[0].mxu0
    %v5911 = vpop.f32.mrb[0].mxu0
    %v5912 = vadd.f32 %v5873, %v5911
    %v5913 = vpop.f32.mrb[0].mxu0
    %5914 = vmatprep.mubr.bf16.mxu0 %v2992
    %5915 = vmatmul.mubr.bf16.gmra.mrb[0].mxu0 %v2991
    %v5916 = vpop.f32.mrb[0].mxu0
    %v5917 = vadd.f32 %v5873, %v5916
    %v5918 = vpop.f32.mrb[0].mxu0
    %v5919 = vpop.f32.mrb[0].mxu0
    %v5920 = vadd.f32 %v5873, %v5919
    %v5921 = vpop.f32.mrb[0].mxu0
    %5922 = vmatprep.mubr.bf16.mxu0 %v2994
    %5923 = vmatmul.mubr.bf16.gmra.mrb[0].mxu0 %v2993
    %v5924 = vpop.f32.mrb[0].mxu0
    %v5925 = vadd.f32 %v5873, %v5924
    %v5926 = vpop.f32.mrb[0].mxu0
    %v5927 = vpop.f32.mrb[0].mxu0
    %v5928 = vadd.f32 %v5873, %v5927
    %v5929 = vpop.f32.mrb[0].mxu0
    %5930 = vmatprep.mubr.bf16.mxu0 %v2996
    %5931 = vmatmul.mubr.bf16.gmra.mrb[0].mxu0 %v2995
    %v5932 = vpop.f32.mrb[0].mxu0
    %v5933 = vadd.f32 %v5873, %v5932
    %v5934 = vpop.f32.mrb[0].mxu0
    %v5935 = vpop.f32.mrb[0].mxu0
    %v5936 = vadd.f32 %v5873, %v5935
    %v5937 = vpop.f32.mrb[0].mxu0
    %5938 = vdwg.mxu0
    %v5939 = vmax.f32 %v5909, 0.0
    %v5940 = vmax.f32 %v5912, 0.0
    %v5941 = vmax.f32 %v5917, 0.0
    %v5942 = vmax.f32 %v5920, 0.0
    %v5943 = vmax.f32 %v5925, 0.0
    %v5944 = vmax.f32 %v5928, 0.0
    %v5945 = vmax.f32 %v5933, 0.0
    %v5946 = vmax.f32 %v5936, 0.0
    %v5947 = vsel %vm120, %v5939, 0.0
    %5948 = vadd.xlane.f32.xlu0 %v5947
    %v5949 = vpop.xlane.xlu0 %5948
    %v5950 = vsel %vm120, %v5940, 0.0
    %5951 = vadd.xlane.f32.xlu0 %v5950
    %v5952 = vpop.xlane.xlu0 %5951
    %v5953 = vsel %vm120, %v5941, 0.0
    %5954 = vadd.xlane.f32.xlu0 %v5953
    %v5955 = vpop.xlane.xlu0 %5954
    %v5956 = vsel %vm120, %v5942, 0.0
    %5957 = vadd.xlane.f32.xlu0 %v5956
    %v5958 = vpop.xlane.xlu0 %5957
    %v5959 = vsel %vm120, %v5943, 0.0
    %5960 = vadd.xlane.f32.xlu0 %v5959
    %v5961 = vpop.xlane.xlu0 %5960
    %v5962 = vsel %vm120, %v5944, 0.0
    %5963 = vadd.xlane.f32.xlu0 %v5962
    %v5964 = vpop.xlane.xlu0 %5963
    %v5965 = vsel %vm120, %v5945, 0.0
    %5966 = vadd.xlane.f32.xlu0 %v5965
    %v5967 = vpop.xlane.xlu0 %5966
    %v5968 = vsel %vm120, %v5946, 0.0
    %5969 = vadd.xlane.f32.xlu0 %v5968
    %v5970 = vpop.xlane.xlu0 %5969
    %v5971 = vmul.f32 %v5949, %v284
    %v5972 = vmul.f32 %v5952, %v284
    %v5973 = vmul.f32 %v5955, %v284
    %v5974 = vmul.f32 %v5958, %v284
    %v5975 = vmul.f32 %v5961, %v284
    %v5976 = vmul.f32 %v5964, %v284
    %v5977 = vmul.f32 %v5967, %v284
    %v5978 = vmul.f32 %v5970, %v284
    %v5979 = vsub.f32 %v5939, %v5971
    %v5980 = vsub.f32 %v5940, %v5972
    %v5981 = vsub.f32 %v5941, %v5973
    %v5982 = vsub.f32 %v5942, %v5974
    %v5983 = vsub.f32 %v5943, %v5975
    %v5984 = vsub.f32 %v5944, %v5976
    %v5985 = vsub.f32 %v5945, %v5977
    %v5986 = vsub.f32 %v5946, %v5978
    %v5987 = vmul.f32 %v5979, %v5979
    %v5988 = vmul.f32 %v5980, %v5980
    %v5989 = vmul.f32 %v5981, %v5981
    %v5990 = vmul.f32 %v5982, %v5982
    %v5991 = vmul.f32 %v5983, %v5983
    %v5992 = vmul.f32 %v5984, %v5984
    %v5993 = vmul.f32 %v5985, %v5985
    %v5994 = vmul.f32 %v5986, %v5986
    %v5995 = vsel %vm120, %v5987, 0.0
    %5996 = vadd.xlane.f32.xlu0 %v5995
    %v5997 = vpop.xlane.xlu0 %5996
    %v5998 = vsel %vm120, %v5988, 0.0
    %5999 = vadd.xlane.f32.xlu0 %v5998
    %v6000 = vpop.xlane.xlu0 %5999
    %v6001 = vsel %vm120, %v5989, 0.0
    %6002 = vadd.xlane.f32.xlu0 %v6001
    %v6003 = vpop.xlane.xlu0 %6002
    %v6004 = vsel %vm120, %v5990, 0.0
    %6005 = vadd.xlane.f32.xlu0 %v6004
    %v6006 = vpop.xlane.xlu0 %6005
    %v6007 = vsel %vm120, %v5991, 0.0
    %6008 = vadd.xlane.f32.xlu0 %v6007
    %v6009 = vpop.xlane.xlu0 %6008
    %v6010 = vsel %vm120, %v5992, 0.0
    %6011 = vadd.xlane.f32.xlu0 %v6010
    %v6012 = vpop.xlane.xlu0 %6011
    %v6013 = vsel %vm120, %v5993, 0.0
    %6014 = vadd.xlane.f32.xlu0 %v6013
    %v6015 = vpop.xlane.xlu0 %6014
    %v6016 = vsel %vm120, %v5994, 0.0
    %6017 = vadd.xlane.f32.xlu0 %v6016
    %v6018 = vpop.xlane.xlu0 %6017
    %v6019 = vmul.f32 %v5997, 0.032258064
    %v6020 = vmul.f32 %v6000, 0.032258064
    %v6021 = vmul.f32 %v6003, 0.032258064
    %v6022 = vmul.f32 %v6006, 0.032258064
    %v6023 = vmul.f32 %v6009, 0.032258064
    %v6024 = vmul.f32 %v6012, 0.032258064
    %v6025 = vmul.f32 %v6015, 0.032258064
    %v6026 = vmul.f32 %v6018, 0.032258064
    %v6027 = vrsqrt.pop %v6019
    %v6028 = vmul.f32 %v6019, %v6027
    %vm6029 = vcmp.eq.f32.partialorder %v6019, inf
    %v6030 = vsel %vm6029, %v6019, %v6028
    %vm6031 = vcmp.eq.f32.partialorder %v6019, 0.0
    %v6032 = vand.u32 %v6019, 2147483648
    %v6033 = vsel %vm6031, %v6032, %v6030
    %v6034 = vrsqrt.pop %v6020
    %v6035 = vmul.f32 %v6020, %v6034
    %vm6036 = vcmp.eq.f32.partialorder %v6020, inf
    %v6037 = vsel %vm6036, %v6020, %v6035
    %vm6038 = vcmp.eq.f32.partialorder %v6020, 0.0
    %v6039 = vand.u32 %v6020, 2147483648
    %v6040 = vsel %vm6038, %v6039, %v6037
    %v6041 = vrsqrt.pop %v6021
    %v6042 = vmul.f32 %v6021, %v6041
    %vm6043 = vcmp.eq.f32.partialorder %v6021, inf
    %v6044 = vsel %vm6043, %v6021, %v6042
    %vm6045 = vcmp.eq.f32.partialorder %v6021, 0.0
    %v6046 = vand.u32 %v6021, 2147483648
    %v6047 = vsel %vm6045, %v6046, %v6044
    %v6048 = vrsqrt.pop %v6022
    %v6049 = vmul.f32 %v6022, %v6048
    %vm6050 = vcmp.eq.f32.partialorder %v6022, inf
    %v6051 = vsel %vm6050, %v6022, %v6049
    %vm6052 = vcmp.eq.f32.partialorder %v6022, 0.0
    %v6053 = vand.u32 %v6022, 2147483648
    %v6054 = vsel %vm6052, %v6053, %v6051
    %v6055 = vrsqrt.pop %v6023
    %v6056 = vmul.f32 %v6023, %v6055
    %vm6057 = vcmp.eq.f32.partialorder %v6023, inf
    %v6058 = vsel %vm6057, %v6023, %v6056
    %vm6059 = vcmp.eq.f32.partialorder %v6023, 0.0
    %v6060 = vand.u32 %v6023, 2147483648
    %v6061 = vsel %vm6059, %v6060, %v6058
    %v6062 = vrsqrt.pop %v6024
    %v6063 = vmul.f32 %v6024, %v6062
    %vm6064 = vcmp.eq.f32.partialorder %v6024, inf
    %v6065 = vsel %vm6064, %v6024, %v6063
    %vm6066 = vcmp.eq.f32.partialorder %v6024, 0.0
    %v6067 = vand.u32 %v6024, 2147483648
    %v6068 = vsel %vm6066, %v6067, %v6065
    %v6069 = vrsqrt.pop %v6025
    %v6070 = vmul.f32 %v6025, %v6069
    %vm6071 = vcmp.eq.f32.partialorder %v6025, inf
    %v6072 = vsel %vm6071, %v6025, %v6070
    %vm6073 = vcmp.eq.f32.partialorder %v6025, 0.0
    %v6074 = vand.u32 %v6025, 2147483648
    %v6075 = vsel %vm6073, %v6074, %v6072
    %v6076 = vrsqrt.pop %v6026
    %v6077 = vmul.f32 %v6026, %v6076
    %vm6078 = vcmp.eq.f32.partialorder %v6026, inf
    %v6079 = vsel %vm6078, %v6026, %v6077
    %vm6080 = vcmp.eq.f32.partialorder %v6026, 0.0
    %v6081 = vand.u32 %v6026, 2147483648
    %v6082 = vsel %vm6080, %v6081, %v6079
    %v6083 = vadd.f32 %v6033, 1e-06
    %v6084 = vadd.f32 %v6040, 1e-06
    %v6085 = vadd.f32 %v6047, 1e-06
    %v6086 = vadd.f32 %v6054, 1e-06
    %v6087 = vadd.f32 %v6061, 1e-06
    %v6088 = vadd.f32 %v6068, 1e-06
    %v6089 = vadd.f32 %v6075, 1e-06
    %v6090 = vadd.f32 %v6082, 1e-06
    %v6091 = vrcp.pop %v6083
    %v6092 = vmul.f32 1.0, %v6091
    %v6093 = vrcp.pop %v6084
    %v6094 = vmul.f32 1.0, %v6093
    %v6095 = vrcp.pop %v6085
    %v6096 = vmul.f32 1.0, %v6095
    %v6097 = vrcp.pop %v6086
    %v6098 = vmul.f32 1.0, %v6097
    %v6099 = vrcp.pop %v6087
    %v6100 = vmul.f32 1.0, %v6099
    %v6101 = vrcp.pop %v6088
    %v6102 = vmul.f32 1.0, %v6101
    %v6103 = vrcp.pop %v6089
    %v6104 = vmul.f32 1.0, %v6103
    %v6105 = vrcp.pop %v6090
    %v6106 = vmul.f32 1.0, %v6105
    %v6107 = vlaneseq
    %v6108 = vshrl.u32 %v6107, 7
    %v6109 = vsub.s32 0, %v6108
    %v6110 = vrot.slane %v3303, %v6109
    %v6111 = vmul.f32 %v6110, %v5979
    %v6112 = vmul.f32 %v6110, %v5980
    %v6113 = vmul.f32 %v6110, %v5981
    %v6114 = vmul.f32 %v6110, %v5982
    %v6115 = vmul.f32 %v6110, %v5983
    %v6116 = vmul.f32 %v6110, %v5984
    %v6117 = vmul.f32 %v6110, %v5985
    %v6118 = vmul.f32 %v6110, %v5986
    %v6119 = vmul.f32 %v6111, %v6092
    %v6120 = vmul.f32 %v6112, %v6094
    %v6121 = vmul.f32 %v6113, %v6096
    %v6122 = vmul.f32 %v6114, %v6098
    %v6123 = vmul.f32 %v6115, %v6100
    %v6124 = vmul.f32 %v6116, %v6102
    %v6125 = vmul.f32 %v6117, %v6104
    %v6126 = vmul.f32 %v6118, %v6106
    %v6127 = vlaneseq
    %v6128 = vshrl.u32 %v6127, 7
    %v6129 = vsub.s32 0, %v6128
    %v6130 = vrot.slane %v3304, %v6129
    %v6131 = vadd.f32 %v6119, %v6130
    %v6132 = vadd.f32 %v6120, %v6130
    %v6133 = vadd.f32 %v6121, %v6130
    %v6134 = vadd.f32 %v6122, %v6130
    %v6135 = vadd.f32 %v6123, %v6130
    %v6136 = vadd.f32 %v6124, %v6130
    %v6137 = vadd.f32 %v6125, %v6130
    %v6138 = vadd.f32 %v6126, %v6130
    %v6139 = vld [vmem:[%s7] sm:$0xff]
    %v6141 = vsel %vm938, %v6139, 0
    %6143 = vmatprep.subr.mxu0 0.0
    %6144 = vmatpush1.msra.mxu0 %v6131
    %6145 = vmatprep.subr.mxu0 0.0
    %6146 = vmatpush1.msra.mxu0 %v6132
    %6147 = vmatprep.subr.mxu0 0.0
    %6148 = vmatpush1.msra.mxu0 %v6133
    %6149 = vmatprep.subr.mxu0 0.0
    %6150 = vmatpush1.msra.mxu0 %v6134
    %6151 = vmatprep.subr.mxu0 0.0
    %6152 = vmatpush1.msra.mxu0 %v6135
    %6153 = vmatprep.subr.mxu0 0.0
    %6154 = vmatpush1.msra.mxu0 %v6136
    %6155 = vmatprep.subr.mxu0 0.0
    %6156 = vmatpush1.msra.mxu0 %v6137
    %6157 = vmatprep.subr.mxu0 0.0
    %6158 = vmatpush1.msra.mxu0 %v6138
    %6159 = vmatprep.subr.mxu0 0.0
    %6160 = vmatpush1.msra.mxu0 0.0
    %6161 = vmatprep.subr.mxu0 0.0
    %6162 = vmatpush1.msra.mxu0 0.0
    %6163 = vmatprep.subr.mxu0 0.0
    %6164 = vmatpush1.msra.mxu0 0.0
    %6165 = vmatprep.subr.mxu0 0.0
    %6166 = vmatpush1.msra.mxu0 0.0
    %6167 = vmatprep.subr.mxu0 0.0
    %6168 = vmatpush1.msra.mxu0 0.0
    %6169 = vmatprep.subr.mxu0 0.0
    %6170 = vmatpush1.msra.mxu0 0.0
    %6171 = vmatprep.subr.mxu0 0.0
    %6172 = vmatpush1.msra.mxu0 0.0
    %6173 = vmatprep.subr.mxu0 0.0
    %6174 = vmatpush1.msra.mxu0 0.0
    %6175 = vmatprep.subr.mxu0 0.0
    %6176 = vmatpush1.msra.mxu0 0.0
    %6177 = vmatprep.subr.mxu0 0.0
    %6178 = vmatpush1.msra.mxu0 0.0
    %6179 = vmatprep.subr.mxu0 0.0
    %6180 = vmatpush1.msra.mxu0 0.0
    %6181 = vmatprep.subr.mxu0 0.0
    %6182 = vmatpush1.msra.mxu0 0.0
    %6183 = vmatprep.subr.mxu0 0.0
    %6184 = vmatpush1.msra.mxu0 0.0
    %6185 = vmatprep.subr.mxu0 0.0
    %6186 = vmatpush1.msra.mxu0 0.0
    %6187 = vmatprep.subr.mxu0 0.0
    %6188 = vmatpush1.msra.mxu0 0.0
    %6189 = vmatprep.subr.mxu0 0.0
    %6190 = vmatpush1.msra.mxu0 0.0
    %6191 = vmatprep.subr.mxu0 0.0
    %6192 = vmatpush1.msra.mxu0 0.0
    %6193 = vmatprep.subr.mxu0 0.0
    %6194 = vmatpush1.msra.mxu0 0.0
    %6195 = vmatprep.subr.mxu0 0.0
    %6196 = vmatpush1.msra.mxu0 0.0
    %6197 = vmatprep.subr.mxu0 0.0
    %6198 = vmatpush1.msra.mxu0 0.0
    %6199 = vmatprep.subr.mxu0 0.0
    %6200 = vmatpush1.msra.mxu0 0.0
    %6201 = vmatprep.subr.mxu0 0.0
    %6202 = vmatpush1.msra.mxu0 0.0
    %6203 = vmatprep.subr.mxu0 0.0
    %6204 = vmatpush1.msra.mxu0 0.0
    %6205 = vmatprep.subr.mxu0 0.0
    %6206 = vmatpush1.msra.mxu0 0.0
    %6207 = vmatprep.mubr.f32.mxu0 0.0
    %6208 = vmatmul.mubr.f32.gmra.mrb[0].mxu0 %v6141
    %v6209 = vpop.f32.mrb[0].mxu0
    %v6210 = vadd.f32 0.0, %v6209
    %v6211 = vpop.f32.mrb[0].mxu0
    %6212 = vdwg.mxu0
    %s6213 = scalar_lea.vmem %s1, 288
    %v6214 = vld [vmem:[%s6213] sm:$0xff]
    %v6215 = vld [vmem:[%s6213 + $0x8] sm:$0xff]
    %v6216 = vld [vmem:[%s6213 + $0x10] sm:$0xff]
    %v6217 = vld [vmem:[%s6213 + $0x18] sm:$0xff]
    %v6218 = vld [vmem:[%s2 + $0xf] sm:$0x1]
    %v6219 = vlaneseq
    %v6220 = vshrl.u32 %v6219, 7
    %v6221 = vsub.s32 0, %v6220
    %v6222 = vrot.slane %v6218, %v6221
    %v6224 = vsel %vm120, %v6210, 0
    %6226 = vmatprep.subr.mxu0 0.0
    %6227 = vmatpush1.msra.mxu0 %v6214
    %6228 = vmatprep.subr.mxu0 0.0
    %6229 = vmatpush1.msra.mxu0 %v6215
    %6230 = vmatprep.subr.mxu0 0.0
    %6231 = vmatpush1.msra.mxu0 %v6216
    %6232 = vmatprep.subr.mxu0 0.0
    %6233 = vmatpush1.msra.mxu0 %v6217
    %6234 = vmatprep.subr.mxu0 0.0
    %6235 = vmatpush1.msra.mxu0 0.0
    %6236 = vmatprep.subr.mxu0 0.0
    %6237 = vmatpush1.msra.mxu0 0.0
    %6238 = vmatprep.subr.mxu0 0.0
    %6239 = vmatpush1.msra.mxu0 0.0
    %6240 = vmatprep.subr.mxu0 0.0
    %6241 = vmatpush1.msra.mxu0 0.0
    %6242 = vmatprep.subr.mxu0 0.0
    %6243 = vmatpush1.msra.mxu0 0.0
    %6244 = vmatprep.subr.mxu0 0.0
    %6245 = vmatpush1.msra.mxu0 0.0
    %6246 = vmatprep.subr.mxu0 0.0
    %6247 = vmatpush1.msra.mxu0 0.0
    %6248 = vmatprep.subr.mxu0 0.0
    %6249 = vmatpush1.msra.mxu0 0.0
    %6250 = vmatprep.subr.mxu0 0.0
    %6251 = vmatpush1.msra.mxu0 0.0
    %6252 = vmatprep.subr.mxu0 0.0
    %6253 = vmatpush1.msra.mxu0 0.0
    %6254 = vmatprep.subr.mxu0 0.0
    %6255 = vmatpush1.msra.mxu0 0.0
    %6256 = vmatprep.subr.mxu0 0.0
    %6257 = vmatpush1.msra.mxu0 0.0
    %6258 = vmatprep.subr.mxu0 0.0
    %6259 = vmatpush1.msra.mxu0 0.0
    %6260 = vmatprep.subr.mxu0 0.0
    %6261 = vmatpush1.msra.mxu0 0.0
    %6262 = vmatprep.subr.mxu0 0.0
    %6263 = vmatpush1.msra.mxu0 0.0
    %6264 = vmatprep.subr.mxu0 0.0
    %6265 = vmatpush1.msra.mxu0 0.0
    %6266 = vmatprep.subr.mxu0 0.0
    %6267 = vmatpush1.msra.mxu0 0.0
    %6268 = vmatprep.subr.mxu0 0.0
    %6269 = vmatpush1.msra.mxu0 0.0
    %6270 = vmatprep.subr.mxu0 0.0
    %6271 = vmatpush1.msra.mxu0 0.0
    %6272 = vmatprep.subr.mxu0 0.0
    %6273 = vmatpush1.msra.mxu0 0.0
    %6274 = vmatprep.subr.mxu0 0.0
    %6275 = vmatpush1.msra.mxu0 0.0
    %6276 = vmatprep.subr.mxu0 0.0
    %6277 = vmatpush1.msra.mxu0 0.0
    %6278 = vmatprep.subr.mxu0 0.0
    %6279 = vmatpush1.msra.mxu0 0.0
    %6280 = vmatprep.subr.mxu0 0.0
    %6281 = vmatpush1.msra.mxu0 0.0
    %6282 = vmatprep.subr.mxu0 0.0
    %6283 = vmatpush1.msra.mxu0 0.0
    %6284 = vmatprep.subr.mxu0 0.0
    %6285 = vmatpush1.msra.mxu0 0.0
    %6286 = vmatprep.subr.mxu0 0.0
    %6287 = vmatpush1.msra.mxu0 0.0
    %6288 = vmatprep.subr.mxu0 0.0
    %6289 = vmatpush1.msra.mxu0 0.0
    %6290 = vmatprep.mubr.f32.mxu0 0.0
    %6291 = vmatmul.mubr.f32.gmra.mrb[0].mxu0 %v6224
    %v6292 = vpop.f32.mrb[0].mxu0
    %v6293 = vadd.f32 %v6222, %v6292
    %v6294 = vpop.f32.mrb[0].mxu0
    %6295 = vdwg.mxu0
    %6296 = vst.msk [vmem:[#allocation2] sm:$0xff] %vm120, %v6293
    // Predicated region
    $region34: #{tpu_custom_call.1} parent=1 // pred_check
      _
    $region35: #{tpu_custom_call.1} parent=1 // pred_check_branch
      %6298 = sbr.rel (0) target = $region37
    $region36: #{tpu_custom_call.1} parent=1 // pred_region
      %s6300 = ssub.s32 128, 128
      %6301 = vsyncadd [#allocation3], %s6300
      %s6303 = sshll.u32 [#allocation2], 4
      %s6304 = int_to_ptr.vmem [resolvable:$true] %s6303
      %6306 = dma.vmem_to_hbm [thread:$0]  %s6304, 128, %s8, [#allocation3]
    $region37: #{tpu_custom_call.1} parent=1 // pred_fallthru
      _
    // Predicated region
    $region38: #{tpu_custom_call.1} parent=1 // pred_check
      _
    $region39: #{tpu_custom_call.1} parent=1 // pred_check_branch
      %6308 = sbr.rel (0) target = $region41
    $region40: #{tpu_custom_call.1} parent=1 // pred_region
      %6309 = dma.done [#allocation3], 128
    $region41: #{tpu_custom_call.1} parent=1 // pred_fallthru
      _
    %6310 = vsyncpa [#allocation3], 1

</llo_original>
